<compile_context>
chip_gen: v5e
topology: v5e:2x2
jax: 0.10.0
libtpu: 0.0.40
codegen_flags: <defaults>
</compile_context>

<pallas_src>
import math

import jax
import jax.numpy as jnp
from jax import lax
from jax.experimental import pallas as pl
from jax.experimental.pallas import tpu as pltpu


def _linear_kernel(x_ref, w_ref, o_ref, acc_ref):
    """One K-tile of y = x @ W^T, accumulated in f32 VMEM scratch.

    x_ref: (B, tk)   lane-major activations tile
    w_ref: (N, tk)   lane-major weight tile (PyTorch [N, K] layout)
    o_ref: (B, N)    partial output for this K-split (leading axis squeezed)
    """
    k = pl.program_id(1)

    @pl.when(k == 0)
    def _():
        acc_ref[...] = jnp.zeros_like(acc_ref)

    # Contract the (lane-major) K axis of both operands: (B,tk)x(N,tk)->(B,N).
    acc_ref[...] += lax.dot_general(
        x_ref[...],
        w_ref[...],
        dimension_numbers=(((1,), (1,)), ((), ())),
        preferred_element_type=jnp.float32,
    )

    @pl.when(k == pl.num_programs(1) - 1)
    def _():
        o_ref[...] = acc_ref[...].astype(o_ref.dtype)


def pallas_linear(x, weight, bias, *, tk=49152, num_splits=2):
    """x: [B, K] f32, weight: [N, K] f32 (PyTorch layout), bias: [N] f32 -> [B, N]."""
    B, K = x.shape
    N, Kw = weight.shape
    assert K == Kw
    assert K % (num_splits * tk) == 0, "pick tk from divisors of K/num_splits"
    kc = K // (num_splits * tk)  # K-steps per split (per TensorCore on v7x)

    partials = pl.pallas_call(
        _linear_kernel,
        out_shape=jax.ShapeDtypeStruct((num_splits, B, N), jnp.float32),
        grid_spec=pltpu.PrefetchScalarGridSpec(
            num_scalar_prefetch=0,
            grid=(num_splits, kc),
            in_specs=[
                # activations tile: (B, tk), dense on the lane axis
                pl.BlockSpec((B, tk), lambda c, k: (0, c * kc + k)),
                # weight tile: (N, tk), lane-major -> no 10->128 lane padding
                pl.BlockSpec((N, tk), lambda c, k: (0, c * kc + k)),
            ],
            # one partial (B, N) slab per K-split; leading dim squeezed
            out_specs=pl.BlockSpec((None, B, N), lambda c, k: (c, 0, 0)),
            scratch_shapes=[pltpu.VMEM((B, N), jnp.float32)],
        ),
        compiler_params=pltpu.CompilerParams(
            dimension_semantics=("parallel", "arbitrary"),
        ),
    )(x, weight)

    # Combine the per-split partial sums and add bias (tiny, done in XLA).
    return partials.sum(axis=0) + bias.astype(jnp.float32)


if __name__ == "__main__":
    IN_FEATURES = 196608   # as in nn.Linear(196608, 10); 196608 = 4 * 49152
    OUT_FEATURES = 10
    BATCH = 2

    key = jax.random.PRNGKey(0)
    kx, kw, kb = jax.random.split(key, 3)

    # Deterministic parameter init (PyTorch-default-style uniform bounds).
    bound = 1.0 / math.sqrt(IN_FEATURES)
    weight = jax.random.uniform(
        kw, (OUT_FEATURES, IN_FEATURES), jnp.float32, -bound, bound
    )  # PyTorch layout [N, K] — kept as-is (lane-major)
    bias = jax.random.uniform(
        kb, (OUT_FEATURES,), jnp.float32, -bound, bound
    )

    x = jax.random.normal(kx, (BATCH, IN_FEATURES), jnp.float32)

    y = pallas_linear(x, weight, bias)
    y = jax.block_until_ready(y)

    # Correctness check against plain JAX reference.
    y_ref = x @ weight.T + bias
    assert y.shape == (BATCH, OUT_FEATURES)
    assert jnp.allclose(y, y_ref, rtol=1e-4, atol=1e-4), "mismatch vs reference"

    print("KERNEL_OK")
</pallas_src>

<mosaic_0001>
module attributes {stable_mosaic.version = 11 : i64} {
  func.func @_linear_kernel(%arg0: i32, %arg1: i32, %arg2: memref<2x49152xf32, #tpu.memory_space<vmem>>, %arg3: memref<10x49152xf32, #tpu.memory_space<vmem>>, %arg4: memref<1x2x10xf32, #tpu.memory_space<vmem>>, %arg5: memref<2x10xf32, #tpu.memory_space<vmem>>) attributes {dimension_semantics = [#tpu.dimension_semantics<parallel>, #tpu.dimension_semantics<arbitrary>], iteration_bounds = array<i64: 2, 2>, scalar_prefetch = 0 : i64, scratch_operands = 1 : i64, tpu.core_type = #tpu.core_type<tc>, window_params = [{transform_indices = @transform_0, window_bounds = array<i64: 2, 49152>}, {transform_indices = @transform_1, window_bounds = array<i64: 10, 49152>}, {transform_indices = @transform_2, window_bounds = array<i64: 1, 2, 10>}]} {
    %c0_i32 = arith.constant 0 : i32
    %0 = arith.cmpi eq, %arg1, %c0_i32 : i32
    %1 = arith.extui %0 : i1 to i32
    %c0_i32_0 = arith.constant 0 : i32
    %2 = arith.cmpi ne, %1, %c0_i32_0 : i32
    scf.if %2 {
      %cst_9 = arith.constant 0.000000e+00 : f32
      %12 = vector.broadcast %cst_9 : f32 to vector<2x10xf32>
      %c0_10 = arith.constant 0 : index
      %c0_11 = arith.constant 0 : index
      %13 = vector.load %arg5[%c0_10, %c0_11] : memref<2x10xf32, #tpu.memory_space<vmem>>, vector<2x10xf32>
      tpu.vector_store %arg5[%c0_10, %c0_11], %12 {strides = array<i32>} : memref<2x10xf32, #tpu.memory_space<vmem>>, vector<2x10xf32>,
    } else {
    }
    %c0 = arith.constant 0 : index
    %c0_1 = arith.constant 0 : index
    %3 = vector.load %arg5[%c0, %c0_1] : memref<2x10xf32, #tpu.memory_space<vmem>>, vector<2x10xf32>
    %c0_2 = arith.constant 0 : index
    %c0_3 = arith.constant 0 : index
    %4 = vector.load %arg2[%c0_2, %c0_3] : memref<2x49152xf32, #tpu.memory_space<vmem>>, vector<2x49152xf32>
    %c0_4 = arith.constant 0 : index
    %c0_5 = arith.constant 0 : index
    %5 = vector.load %arg3[%c0_4, %c0_5] : memref<10x49152xf32, #tpu.memory_space<vmem>>, vector<10x49152xf32>
    %cst = arith.constant dense<0.000000e+00> : vector<2x10xf32>
    %6 = tpu.matmul %4, %5, %cst {dimension_numbers = #tpu.dot_dimension_numbers<[1], [1], [0], [0], [0, 0, 1, 0], [], []>} : vector<2x49152xf32>, vector<10x49152xf32>, vector<2x10xf32> -> vector<2x10xf32>
    %7 = arith.addf %3, %6 : vector<2x10xf32>
    %c0_6 = arith.constant 0 : index
    %c0_7 = arith.constant 0 : index
    %8 = vector.load %arg5[%c0_6, %c0_7] : memref<2x10xf32, #tpu.memory_space<vmem>>, vector<2x10xf32>
    tpu.vector_store %arg5[%c0_6, %c0_7], %7 {strides = array<i32>} : memref<2x10xf32, #tpu.memory_space<vmem>>, vector<2x10xf32>,
    %c1_i32 = arith.constant 1 : i32
    %9 = arith.cmpi eq, %arg1, %c1_i32 : i32
    %10 = arith.extui %9 : i1 to i32
    %c0_i32_8 = arith.constant 0 : i32
    %11 = arith.cmpi ne, %10, %c0_i32_8 : i32
    scf.if %11 {
      %c0_9 = arith.constant 0 : index
      %c0_10 = arith.constant 0 : index
      %12 = vector.load %arg5[%c0_9, %c0_10] : memref<2x10xf32, #tpu.memory_space<vmem>>, vector<2x10xf32>
      %c0_11 = arith.constant 0 : index
      %c0_12 = arith.constant 0 : index
      %c0_13 = arith.constant 0 : index
      %13 = vector.load %arg4[%c0_11, %c0_12, %c0_13] : memref<1x2x10xf32, #tpu.memory_space<vmem>>, vector<1x2x10xf32>
      %14 = vector.shape_cast %13 : vector<1x2x10xf32> to vector<2x10xf32>
      %15 = vector.shape_cast %12 : vector<2x10xf32> to vector<1x2x10xf32>
      tpu.vector_store %arg4[%c0_11, %c0_12, %c0_13], %15 {strides = array<i32>} : memref<1x2x10xf32, #tpu.memory_space<vmem>>, vector<1x2x10xf32>,
    } else {
    }
    return
  }
  func.func @transform_0(%arg0: i32, %arg1: i32) -> (i32, i32) {
    %c2_i32 = arith.constant 2 : i32
    %0 = arith.muli %arg0, %c2_i32 : i32
    %1 = arith.addi %0, %arg1 : i32
    %c0_i32 = arith.constant 0 : i32
    %c0_i32_0 = arith.constant 0 : i32
    return %c0_i32, %1 : i32, i32
  }
  func.func @transform_1(%arg0: i32, %arg1: i32) -> (i32, i32) {
    %c2_i32 = arith.constant 2 : i32
    %0 = arith.muli %arg0, %c2_i32 : i32
    %1 = arith.addi %0, %arg1 : i32
    %c0_i32 = arith.constant 0 : i32
    %c0_i32_0 = arith.constant 0 : i32
    return %c0_i32, %1 : i32, i32
  }
  func.func @transform_2(%arg0: i32, %arg1: i32) -> (i32, i32, i32) {
    %c0_i32 = arith.constant 0 : i32
    %c0_i32_0 = arith.constant 0 : i32
    %c0_i32_1 = arith.constant 0 : i32
    return %arg0, %c0_i32, %c0_i32_0 : i32, i32, i32
  }
}

</mosaic_0001>

<llo_original>
// kernel: tpu_custom_call.1
$region0: #{tpu_custom_call.1}
  #allocation0 [shape = 'u32[]', space=smem, size = 0x4, offset = 0x4, fixed_abs, tag = 'smem constant byte address 0x4 - core index']
  #allocation1 [shape = 'u32[72,128]{1,0:T(1,128)}', space=vmem, size = 0x9000, scoped, tag = 'internal scratch']
  #allocation2 [shape = 'f32[2,10]{1,0:T(2,128)}', space=vmem, size = 0x400, scoped, tag = 'scratch operand']
  %s0 = inlined_call_operand.hbm [shape: f32[2,196608], index: 0, kind: input, shape index: {}]
  %s1 = inlined_call_operand.hbm [shape: f32[10,196608], index: 1, kind: input, shape index: {}]
  %s2 = inlined_call_operand.hbm [shape: f32[2,2,10], index: 2, kind: output, shape index: {}]
  %s3 = sld [smem:[#allocation0]]
  $region57: #{tpu_custom_call.1} parent=0
    _
  %s5 = ssub.s32 1, %s3
  %s6 = scalar_select 0, %s5, %s3
  $region1: #{tpu_custom_call.1} parent=0
    #allocation3 [shape = 'u8[786432]{0}', space=vmem, size = 0xc0000, scoped, tag = 'input window, operand 0']
    #allocation4 [shape = 's32[2]{0}', space=sflag, size = 0x8, scoped, tag = 'scoped memory for tpu_custom_call.1']
    #allocation5 [shape = 's32[2]{0}', space=sflag, size = 0x8, scoped, tag = 'scoped memory for tpu_custom_call.1']
    #allocation6 [shape = 'u8[6291456]{0}', space=vmem, size = 0x600000, scoped, tag = 'input window, operand 1']
    #allocation7 [shape = 's32[2]{0}', space=sflag, size = 0x8, scoped, tag = 'scoped memory for tpu_custom_call.1']
    #allocation8 [shape = 'u8[2048]{0}', space=vmem, size = 0x800, scoped, tag = 'output window, operand 0']
    %7 = vsyncpa [#allocation4], 0
    %s8 = scalar_lea.sflag [#allocation4], 1
    %9 = vsyncpa %s8, 0
    %10 = vsyncpa [#allocation7], 0
    %s11 = scalar_lea.sflag [#allocation7], 1
    %12 = vsyncpa %s11, 0
    %13 = vsyncpa [#allocation5], 0
    %s14 = scalar_lea.sflag [#allocation5], 1
    %15 = vsyncpa %s14, 0
    loop: start=0, step=1, limit=6
    $region2: #{tpu_custom_call.1} parent=1 // loop_pre_header
      _
    $region3: #{tpu_custom_call.1} parent=1 // loop_header
      %s17 = sphi 0, %s21
      %p18 = scmp.ge.s32.totalorder %s17, 6
      %s24 = sphi 0, %s36
      %s25 = sphi 0, %s32
      %s26 = sphi 0, %s24
      %s27 = sphi 0, %s25
      %s28 = sphi 0, %s26
      %s29 = sphi 0, %s27
      %s43 = sphi 0, %s45
      %s46 = sphi 0, %s43
      %s47 = sphi 0, %s46
      %s63 = sphi 0, %s47
      %s73 = sphi 0, %s75
      %s76 = sphi 0, %s73
      %s77 = sphi 0, %s76
      %s93 = sphi 0, %s77
      %s99 = sphi 0, %s101
      %s102 = sphi 0, %s99
      %s103 = sphi 0, %s102
      %s119 = sphi 0, %s103
    $region4: #{tpu_custom_call.1} parent=1 // loop_header_branch
      %20 = sbr.rel (%p18) target = $region8
    $region5: #{tpu_custom_call.1} parent=1 // loop_body
      %s22 = ssub.s32 %s17, 1
      %s23 = ssub.s32 %s17, 2
      %s30 = sadd.s32 1, %s25
      %p31 = scmp.ge.s32.totalorder %s30, 2
      %s32 = scalar_select %p31, 0, %s30
      %s33 = sadd.s32 1, %s24
      %s34 = scalar_select %p31, %s33, %s24
      %p35 = scmp.ge.s32.totalorder %s34, 2
      %s36 = scalar_select %p35, 0, %s34
      %s37 = smul.u32 %s24, 2
      %s38 = sadd.s32 %s37, %s25
      %s39 = smul.u32 %s36, 2
      %s40 = sadd.s32 %s39, %s32
      %s41 = ssub.s32 %s38, %s40
      %p42 = scmp.eq.s32.totalorder %s41, 0
      %s44 = sadd.s32 %s43, 1
      %s45 = scalar_select %p42, %s43, %s44
      %p48 = pneg %p42
      %p49 = scmp.eq.s32.totalorder %s17, 3
      %p50 = por %p48, %p49
      %p51 = scmp.ne.s32.totalorder %s43, %s46
      %p52 = scmp.eq.s32.totalorder %s17, 0
      %p53 = por %p51, %p52
      %p54 = scmp.ne.s32.totalorder %s43, %s46
      %p55 = scmp.eq.s32.totalorder %s22, 3
      %p56 = por %p54, %p55
      %p57 = scmp.ne.s32.totalorder %s46, %s47
      %p58 = scmp.eq.s32.totalorder %s22, 0
      %p59 = por %p57, %p58
      %p60 = scmp.ne.s32.totalorder %s46, %s47
      %p61 = scmp.eq.s32.totalorder %s23, 3
      %p62 = por %p60, %p61
      %p64 = scmp.ne.s32.totalorder %s47, %s63
      %p65 = scmp.eq.s32.totalorder %s23, 0
      %p66 = por %p64, %p65
      %s67 = smul.u32 %s24, 2
      %s68 = sadd.s32 %s67, %s25
      %s69 = smul.u32 %s36, 2
      %s70 = sadd.s32 %s69, %s32
      %s71 = ssub.s32 %s68, %s70
      %p72 = scmp.eq.s32.totalorder %s71, 0
      %s74 = sadd.s32 %s73, 1
      %s75 = scalar_select %p72, %s73, %s74
      %p78 = pneg %p72
      %p79 = scmp.eq.s32.totalorder %s17, 3
      %p80 = por %p78, %p79
      %p81 = scmp.ne.s32.totalorder %s73, %s76
      %p82 = scmp.eq.s32.totalorder %s17, 0
      %p83 = por %p81, %p82
      %p84 = scmp.ne.s32.totalorder %s73, %s76
      %p85 = scmp.eq.s32.totalorder %s22, 3
      %p86 = por %p84, %p85
      %p87 = scmp.ne.s32.totalorder %s76, %s77
      %p88 = scmp.eq.s32.totalorder %s22, 0
      %p89 = por %p87, %p88
      %p90 = scmp.ne.s32.totalorder %s76, %s77
      %p91 = scmp.eq.s32.totalorder %s23, 3
      %p92 = por %p90, %p91
      %p94 = scmp.ne.s32.totalorder %s77, %s93
      %p95 = scmp.eq.s32.totalorder %s23, 0
      %p96 = por %p94, %p95
      %s97 = ssub.s32 %s24, %s36
      %p98 = scmp.eq.s32.totalorder %s97, 0
      %s100 = sadd.s32 %s99, 1
      %s101 = scalar_select %p98, %s99, %s100
      %p104 = pneg %p98
      %p105 = scmp.eq.s32.totalorder %s17, 3
      %p106 = por %p104, %p105
      %p107 = scmp.ne.s32.totalorder %s99, %s102
      %p108 = scmp.eq.s32.totalorder %s17, 0
      %p109 = por %p107, %p108
      %p110 = scmp.ne.s32.totalorder %s99, %s102
      %p111 = scmp.eq.s32.totalorder %s22, 3
      %p112 = por %p110, %p111
      %p113 = scmp.ne.s32.totalorder %s102, %s103
      %p114 = scmp.eq.s32.totalorder %s22, 0
      %p115 = por %p113, %p114
      %p116 = scmp.ne.s32.totalorder %s102, %s103
      %p117 = scmp.eq.s32.totalorder %s23, 3
      %p118 = por %p116, %p117
      %p120 = scmp.ne.s32.totalorder %s103, %s119
      %p121 = scmp.eq.s32.totalorder %s23, 0
      %p122 = por %p120, %p121
      %p123 = scmp.le.s32.totalorder 1, %s17
      %p124 = scmp.lt.s32.totalorder %s17, 5
      %p125 = pnand %p123, %p124
      %p126 = pneg %p125
      // Predicated region
      $region9: #{tpu_custom_call.1} parent=5 // pred_check
        _
      $region10: #{tpu_custom_call.1} parent=5 // pred_check_branch
        %128 = sbr.rel (%p125) target = $region12
      $region11: #{tpu_custom_call.1} parent=5 // pred_region
        %s129 = ssub.s32 %s17, 1
      $region12: #{tpu_custom_call.1} parent=5 // pred_fallthru
        _
      %p130 = scmp.lt.s32.totalorder %s17, 4
      // Predicated region
      $region13: #{tpu_custom_call.1} parent=5 // pred_check
        %p131 = pneg %p130
      $region14: #{tpu_custom_call.1} parent=5 // pred_check_branch
        %133 = sbr.rel (%p131) target = $region16
      $region15: #{tpu_custom_call.1} parent=5 // pred_region
        // Predicated region
        $region17: #{tpu_custom_call.1} parent=15 // pred_check
          %p134 = pneg %p53
        $region18: #{tpu_custom_call.1} parent=15 // pred_check_branch
          %136 = sbr.rel (%p134) target = $region20
        $region19: #{tpu_custom_call.1} parent=15 // pred_region
          %s137 = sand.u32 %s43, 1
          %s138 = scalar_lea.sflag [#allocation4], %s137
          %s139 = sand.u32 %s43, 1
          %s140 = smul.addr %s139, 768
          %s141 = scalar_lea.vmem [#allocation3], %s140
          %s142 = smul.u32 %s24, 2
          %s143 = sadd.s32 %s142, %s25
          %s144 = smul.u32 384, %s143
          %146 = vsyncadd %s138, 0
          %s147 = smul.addr %s144, 2
          %s148 = scalar_lea.hbm %s0, %s147
          %s150 = sshll.u32 %s148, 4
          %s151 = int_to_ptr.hbm [resolvable:$true] %s150
          %s152 = sshll.u32 %s141, 4
          %s153 = int_to_ptr.vmem [resolvable:$true] %s152
          %155 = dma.hbm_to_vmem [thread:$0]  %s151, 12288, %s153, %s138
        $region20: #{tpu_custom_call.1} parent=15 // pred_fallthru
          _
        // Predicated region
        $region21: #{tpu_custom_call.1} parent=15 // pred_check
          %p156 = pneg %p83
        $region22: #{tpu_custom_call.1} parent=15 // pred_check_branch
          %158 = sbr.rel (%p156) target = $region24
        $region23: #{tpu_custom_call.1} parent=15 // pred_region
          %s159 = sand.u32 %s73, 1
          %s160 = scalar_lea.sflag [#allocation7], %s159
          %s161 = sand.u32 %s73, 1
          %s162 = smul.addr %s161, 6144
          %s163 = scalar_lea.vmem [#allocation6], %s162
          %s164 = smul.u32 %s24, 2
          %s165 = sadd.s32 %s164, %s25
          %s166 = smul.u32 384, %s165
          %168 = vsyncadd %s160, 0
          %s169 = smul.addr %s166, 8
          %s170 = scalar_lea.hbm %s1, %s169
          %s171 = sshll.u32 %s170, 4
          %s172 = int_to_ptr.hbm [resolvable:$true] %s171
          %s173 = sshll.u32 %s163, 4
          %s174 = int_to_ptr.vmem [resolvable:$true] %s173
          %179 = dma.hbm_to_vmem [thread:$0]  %s172, 98304, %s174, %s160, 196608, 49152, 3072
        $region24: #{tpu_custom_call.1} parent=15 // pred_fallthru
          _
      $region16: #{tpu_custom_call.1} parent=5 // pred_fallthru
        _
      %p180 = scmp.le.s32.totalorder 1, %s17
      %p181 = scmp.lt.s32.totalorder %s17, 5
      %p182 = pnand %p180, %p181
      %p183 = pneg %p182
      // Predicated region
      $region25: #{tpu_custom_call.1} parent=5 // pred_check
        _
      $region26: #{tpu_custom_call.1} parent=5 // pred_check_branch
        %185 = sbr.rel (%p182) target = $region28
      $region27: #{tpu_custom_call.1} parent=5 // pred_region
        %s186 = ssub.s32 %s17, 1
        %s187 = sand.u32 %s46, 1
        %s188 = scalar_lea.sflag [#allocation4], %s187
        %s189 = sand.u32 %s46, 1
        %s190 = smul.addr %s189, 768
        %s191 = scalar_lea.vmem [#allocation3], %s190
        // Predicated region
        $region29: #{tpu_custom_call.1} parent=27 // pred_check
          %p192 = pneg %p59
        $region30: #{tpu_custom_call.1} parent=27 // pred_check_branch
          %194 = sbr.rel (%p192) target = $region32
        $region31: #{tpu_custom_call.1} parent=27 // pred_region
          %196 = dma.done %s188, 12288
        $region32: #{tpu_custom_call.1} parent=27 // pred_fallthru
          _
        %s197 = sand.u32 %s76, 1
        %s198 = scalar_lea.sflag [#allocation7], %s197
        %s199 = sand.u32 %s76, 1
        %s200 = smul.addr %s199, 6144
        %s201 = scalar_lea.vmem [#allocation6], %s200
        // Predicated region
        $region33: #{tpu_custom_call.1} parent=27 // pred_check
          %p202 = pneg %p89
        $region34: #{tpu_custom_call.1} parent=27 // pred_check_branch
          %204 = sbr.rel (%p202) target = $region36
        $region35: #{tpu_custom_call.1} parent=27 // pred_region
          %206 = dma.done %s198, 98304
        $region36: #{tpu_custom_call.1} parent=27 // pred_fallthru
          _
        %s207 = sand.u32 %s46, 1
        %s208 = scalar_lea.sflag [#allocation4], %s207
        %s209 = sand.u32 %s46, 1
        %s210 = smul.addr %s209, 768
        %s211 = scalar_lea.vmem [#allocation3], %s210
        %p212 = pneg %p59
        %p213 = pneg %p56
        %s214 = sand.u32 %s76, 1
        %s215 = scalar_lea.sflag [#allocation7], %s214
        %s216 = sand.u32 %s76, 1
        %s217 = smul.addr %s216, 6144
        %s218 = scalar_lea.vmem [#allocation6], %s217
        %p219 = pneg %p89
        %p220 = pneg %p86
        %p221 = pneg %p115
        %p222 = pneg %p112
        %s223 = sand.u32 %s102, 1
        %s224 = scalar_lea.sflag [#allocation5], %s223
        %s225 = sand.u32 %s102, 1
        %s226 = smul.addr %s225, 2
        %s227 = scalar_lea.vmem [#allocation8], %s226
        %s228 = smul.u32 %s26, 2
        %s229 = sadd.s32 %s228, %s27
        %s230 = smul.u32 384, %s229
        %s231 = smul.u32 %s26, 2
        %s232 = sadd.s32 %s231, %s27
        %s233 = smul.u32 384, %s232
        %p234 = scmp.eq.s32.totalorder %s27, 0
        // Predicated region
        $region37: #{tpu_custom_call.1} parent=27 // pred_check
          %p235 = pneg %p234
        $region38: #{tpu_custom_call.1} parent=27 // pred_check_branch
          %237 = sbr.rel (%p235) target = $region40
        $region39: #{tpu_custom_call.1} parent=27 // pred_region
          %vm238 = vcmask 74752
          %239 = vst.msk [vmem:[#allocation2] sm:$0x3] %vm238, 0.0
        $region40: #{tpu_custom_call.1} parent=27 // pred_fallthru
          _
        %v240 = vld [vmem:[#allocation2] sm:$0x3]
        %v241 = vld [vmem:[%s191] sm:$0xff]
        %v242 = vld [vmem:[%s191 + $0x8] sm:$0xff]
        %v243 = vld [vmem:[%s191 + $0x10] sm:$0xff]
        %v244 = vld [vmem:[%s191 + $0x18] sm:$0xff]
        %v245 = vld [vmem:[%s191 + $0x20] sm:$0xff]
        %v246 = vld [vmem:[%s191 + $0x28] sm:$0xff]
        %v247 = vld [vmem:[%s191 + $0x30] sm:$0xff]
        %v248 = vld [vmem:[%s191 + $0x38] sm:$0xff]
        %v249 = vld [vmem:[%s191 + $0x40] sm:$0xff]
        %v250 = vld [vmem:[%s191 + $0x48] sm:$0xff]
        %v251 = vld [vmem:[%s191 + $0x50] sm:$0xff]
        %v252 = vld [vmem:[%s191 + $0x58] sm:$0xff]
        %v253 = vld [vmem:[%s191 + $0x60] sm:$0xff]
        %v254 = vld [vmem:[%s191 + $0x68] sm:$0xff]
        %v255 = vld [vmem:[%s191 + $0x70] sm:$0xff]
        %v256 = vld [vmem:[%s191 + $0x78] sm:$0xff]
        %v257 = vld [vmem:[%s191 + $0x80] sm:$0xff]
        %v258 = vld [vmem:[%s191 + $0x88] sm:$0xff]
        %v259 = vld [vmem:[%s191 + $0x90] sm:$0xff]
        %v260 = vld [vmem:[%s191 + $0x98] sm:$0xff]
        %v261 = vld [vmem:[%s191 + $0xa0] sm:$0xff]
        %v262 = vld [vmem:[%s191 + $0xa8] sm:$0xff]
        %v263 = vld [vmem:[%s191 + $0xb0] sm:$0xff]
        %v264 = vld [vmem:[%s191 + $0xb8] sm:$0xff]
        %v265 = vld [vmem:[%s191 + $0xc0] sm:$0xff]
        %v266 = vld [vmem:[%s191 + $0xc8] sm:$0xff]
        %v267 = vld [vmem:[%s191 + $0xd0] sm:$0xff]
        %v268 = vld [vmem:[%s191 + $0xd8] sm:$0xff]
        %v269 = vld [vmem:[%s191 + $0xe0] sm:$0xff]
        %v270 = vld [vmem:[%s191 + $0xe8] sm:$0xff]
        %v271 = vld [vmem:[%s191 + $0xf0] sm:$0xff]
        %v272 = vld [vmem:[%s191 + $0xf8] sm:$0xff]
        %v273 = vld [vmem:[%s191 + $0x100] sm:$0xff]
        %v274 = vld [vmem:[%s191 + $0x108] sm:$0xff]
        %v275 = vld [vmem:[%s191 + $0x110] sm:$0xff]
        %v276 = vld [vmem:[%s191 + $0x118] sm:$0xff]
        %v277 = vld [vmem:[%s191 + $0x120] sm:$0xff]
        %v278 = vld [vmem:[%s191 + $0x128] sm:$0xff]
        %v279 = vld [vmem:[%s191 + $0x130] sm:$0xff]
        %v280 = vld [vmem:[%s191 + $0x138] sm:$0xff]
        %v281 = vld [vmem:[%s191 + $0x140] sm:$0xff]
        %v282 = vld [vmem:[%s191 + $0x148] sm:$0xff]
        %v283 = vld [vmem:[%s191 + $0x150] sm:$0xff]
        %v284 = vld [vmem:[%s191 + $0x158] sm:$0xff]
        %v285 = vld [vmem:[%s191 + $0x160] sm:$0xff]
        %v286 = vld [vmem:[%s191 + $0x168] sm:$0xff]
        %v287 = vld [vmem:[%s191 + $0x170] sm:$0xff]
        %v288 = vld [vmem:[%s191 + $0x178] sm:$0xff]
        %v289 = vld [vmem:[%s191 + $0x180] sm:$0xff]
        %v290 = vld [vmem:[%s191 + $0x188] sm:$0xff]
        %v291 = vld [vmem:[%s191 + $0x190] sm:$0xff]
        %v292 = vld [vmem:[%s191 + $0x198] sm:$0xff]
        %v293 = vld [vmem:[%s191 + $0x1a0] sm:$0xff]
        %v294 = vld [vmem:[%s191 + $0x1a8] sm:$0xff]
        %v295 = vld [vmem:[%s191 + $0x1b0] sm:$0xff]
        %v296 = vld [vmem:[%s191 + $0x1b8] sm:$0xff]
        %v297 = vld [vmem:[%s191 + $0x1c0] sm:$0xff]
        %v298 = vld [vmem:[%s191 + $0x1c8] sm:$0xff]
        %v299 = vld [vmem:[%s191 + $0x1d0] sm:$0xff]
        %v300 = vld [vmem:[%s191 + $0x1d8] sm:$0xff]
        %v301 = vld [vmem:[%s191 + $0x1e0] sm:$0xff]
        %v302 = vld [vmem:[%s191 + $0x1e8] sm:$0xff]
        %v303 = vld [vmem:[%s191 + $0x1f0] sm:$0xff]
        %v304 = vld [vmem:[%s191 + $0x1f8] sm:$0xff]
        %v305 = vld [vmem:[%s191 + $0x200] sm:$0xff]
        %v306 = vld [vmem:[%s191 + $0x208] sm:$0xff]
        %v307 = vld [vmem:[%s191 + $0x210] sm:$0xff]
        %v308 = vld [vmem:[%s191 + $0x218] sm:$0xff]
        %v309 = vld [vmem:[%s191 + $0x220] sm:$0xff]
        %v310 = vld [vmem:[%s191 + $0x228] sm:$0xff]
        %v311 = vld [vmem:[%s191 + $0x230] sm:$0xff]
        %v312 = vld [vmem:[%s191 + $0x238] sm:$0xff]
        %v313 = vld [vmem:[%s191 + $0x240] sm:$0xff]
        %v314 = vld [vmem:[%s191 + $0x248] sm:$0xff]
        %v315 = vld [vmem:[%s191 + $0x250] sm:$0xff]
        %v316 = vld [vmem:[%s191 + $0x258] sm:$0xff]
        %v317 = vld [vmem:[%s191 + $0x260] sm:$0xff]
        %v318 = vld [vmem:[%s191 + $0x268] sm:$0xff]
        %v319 = vld [vmem:[%s191 + $0x270] sm:$0xff]
        %v320 = vld [vmem:[%s191 + $0x278] sm:$0xff]
        %v321 = vld [vmem:[%s191 + $0x280] sm:$0xff]
        %v322 = vld [vmem:[%s191 + $0x288] sm:$0xff]
        %v323 = vld [vmem:[%s191 + $0x290] sm:$0xff]
        %v324 = vld [vmem:[%s191 + $0x298] sm:$0xff]
        %v325 = vld [vmem:[%s191 + $0x2a0] sm:$0xff]
        %v326 = vld [vmem:[%s191 + $0x2a8] sm:$0xff]
        %v327 = vld [vmem:[%s191 + $0x2b0] sm:$0xff]
        %v328 = vld [vmem:[%s191 + $0x2b8] sm:$0xff]
        %v329 = vld [vmem:[%s191 + $0x2c0] sm:$0xff]
        %v330 = vld [vmem:[%s191 + $0x2c8] sm:$0xff]
        %v331 = vld [vmem:[%s191 + $0x2d0] sm:$0xff]
        %v332 = vld [vmem:[%s191 + $0x2d8] sm:$0xff]
        %v333 = vld [vmem:[%s191 + $0x2e0] sm:$0xff]
        %v334 = vld [vmem:[%s191 + $0x2e8] sm:$0xff]
        %v335 = vld [vmem:[%s191 + $0x2f0] sm:$0xff]
        %v336 = vld [vmem:[%s191 + $0x2f8] sm:$0xff]
        %v337 = vld [vmem:[%s201] sm:$0xff]
        %v338 = vld [vmem:[%s201 + $0x8] sm:$0xff]
        %v339 = vld [vmem:[%s201 + $0x10] sm:$0xff]
        %v340 = vld [vmem:[%s201 + $0x18] sm:$0xff]
        %v341 = vld [vmem:[%s201 + $0x20] sm:$0xff]
        %v342 = vld [vmem:[%s201 + $0x28] sm:$0xff]
        %v343 = vld [vmem:[%s201 + $0x30] sm:$0xff]
        %v344 = vld [vmem:[%s201 + $0x38] sm:$0xff]
        %v345 = vld [vmem:[%s201 + $0x40] sm:$0xff]
        %v346 = vld [vmem:[%s201 + $0x48] sm:$0xff]
        %v347 = vld [vmem:[%s201 + $0x50] sm:$0xff]
        %v348 = vld [vmem:[%s201 + $0x58] sm:$0xff]
        %v349 = vld [vmem:[%s201 + $0x60] sm:$0xff]
        %v350 = vld [vmem:[%s201 + $0x68] sm:$0xff]
        %v351 = vld [vmem:[%s201 + $0x70] sm:$0xff]
        %v352 = vld [vmem:[%s201 + $0x78] sm:$0xff]
        %v353 = vld [vmem:[%s201 + $0x80] sm:$0xff]
        %v354 = vld [vmem:[%s201 + $0x88] sm:$0xff]
        %v355 = vld [vmem:[%s201 + $0x90] sm:$0xff]
        %v356 = vld [vmem:[%s201 + $0x98] sm:$0xff]
        %v357 = vld [vmem:[%s201 + $0xa0] sm:$0xff]
        %v358 = vld [vmem:[%s201 + $0xa8] sm:$0xff]
        %v359 = vld [vmem:[%s201 + $0xb0] sm:$0xff]
        %v360 = vld [vmem:[%s201 + $0xb8] sm:$0xff]
        %v361 = vld [vmem:[%s201 + $0xc0] sm:$0xff]
        %v362 = vld [vmem:[%s201 + $0xc8] sm:$0xff]
        %v363 = vld [vmem:[%s201 + $0xd0] sm:$0xff]
        %v364 = vld [vmem:[%s201 + $0xd8] sm:$0xff]
        %v365 = vld [vmem:[%s201 + $0xe0] sm:$0xff]
        %v366 = vld [vmem:[%s201 + $0xe8] sm:$0xff]
        %v367 = vld [vmem:[%s201 + $0xf0] sm:$0xff]
        %v368 = vld [vmem:[%s201 + $0xf8] sm:$0xff]
        %v369 = vld [vmem:[%s201 + $0x100] sm:$0xff]
        %v370 = vld [vmem:[%s201 + $0x108] sm:$0xff]
        %v371 = vld [vmem:[%s201 + $0x110] sm:$0xff]
        %v372 = vld [vmem:[%s201 + $0x118] sm:$0xff]
        %v373 = vld [vmem:[%s201 + $0x120] sm:$0xff]
        %v374 = vld [vmem:[%s201 + $0x128] sm:$0xff]
        %v375 = vld [vmem:[%s201 + $0x130] sm:$0xff]
        %v376 = vld [vmem:[%s201 + $0x138] sm:$0xff]
        %v377 = vld [vmem:[%s201 + $0x140] sm:$0xff]
        %v378 = vld [vmem:[%s201 + $0x148] sm:$0xff]
        %v379 = vld [vmem:[%s201 + $0x150] sm:$0xff]
        %v380 = vld [vmem:[%s201 + $0x158] sm:$0xff]
        %v381 = vld [vmem:[%s201 + $0x160] sm:$0xff]
        %v382 = vld [vmem:[%s201 + $0x168] sm:$0xff]
        %v383 = vld [vmem:[%s201 + $0x170] sm:$0xff]
        %v384 = vld [vmem:[%s201 + $0x178] sm:$0xff]
        %v385 = vld [vmem:[%s201 + $0x180] sm:$0xff]
        %v386 = vld [vmem:[%s201 + $0x188] sm:$0xff]
        %v387 = vld [vmem:[%s201 + $0x190] sm:$0xff]
        %v388 = vld [vmem:[%s201 + $0x198] sm:$0xff]
        %v389 = vld [vmem:[%s201 + $0x1a0] sm:$0xff]
        %v390 = vld [vmem:[%s201 + $0x1a8] sm:$0xff]
        %v391 = vld [vmem:[%s201 + $0x1b0] sm:$0xff]
        %v392 = vld [vmem:[%s201 + $0x1b8] sm:$0xff]
        %v393 = vld [vmem:[%s201 + $0x1c0] sm:$0xff]
        %v394 = vld [vmem:[%s201 + $0x1c8] sm:$0xff]
        %v395 = vld [vmem:[%s201 + $0x1d0] sm:$0xff]
        %v396 = vld [vmem:[%s201 + $0x1d8] sm:$0xff]
        %v397 = vld [vmem:[%s201 + $0x1e0] sm:$0xff]
        %v398 = vld [vmem:[%s201 + $0x1e8] sm:$0xff]
        %v399 = vld [vmem:[%s201 + $0x1f0] sm:$0xff]
        %v400 = vld [vmem:[%s201 + $0x1f8] sm:$0xff]
        %v401 = vld [vmem:[%s201 + $0x200] sm:$0xff]
        %v402 = vld [vmem:[%s201 + $0x208] sm:$0xff]
        %v403 = vld [vmem:[%s201 + $0x210] sm:$0xff]
        %v404 = vld [vmem:[%s201 + $0x218] sm:$0xff]
        %v405 = vld [vmem:[%s201 + $0x220] sm:$0xff]
        %v406 = vld [vmem:[%s201 + $0x228] sm:$0xff]
        %v407 = vld [vmem:[%s201 + $0x230] sm:$0xff]
        %v408 = vld [vmem:[%s201 + $0x238] sm:$0xff]
        %v409 = vld [vmem:[%s201 + $0x240] sm:$0xff]
        %v410 = vld [vmem:[%s201 + $0x248] sm:$0xff]
        %v411 = vld [vmem:[%s201 + $0x250] sm:$0xff]
        %v412 = vld [vmem:[%s201 + $0x258] sm:$0xff]
        %v413 = vld [vmem:[%s201 + $0x260] sm:$0xff]
        %v414 = vld [vmem:[%s201 + $0x268] sm:$0xff]
        %v415 = vld [vmem:[%s201 + $0x270] sm:$0xff]
        %v416 = vld [vmem:[%s201 + $0x278] sm:$0xff]
        %v417 = vld [vmem:[%s201 + $0x280] sm:$0xff]
        %v418 = vld [vmem:[%s201 + $0x288] sm:$0xff]
        %v419 = vld [vmem:[%s201 + $0x290] sm:$0xff]
        %v420 = vld [vmem:[%s201 + $0x298] sm:$0xff]
        %v421 = vld [vmem:[%s201 + $0x2a0] sm:$0xff]
        %v422 = vld [vmem:[%s201 + $0x2a8] sm:$0xff]
        %v423 = vld [vmem:[%s201 + $0x2b0] sm:$0xff]
        %v424 = vld [vmem:[%s201 + $0x2b8] sm:$0xff]
        %v425 = vld [vmem:[%s201 + $0x2c0] sm:$0xff]
        %v426 = vld [vmem:[%s201 + $0x2c8] sm:$0xff]
        %v427 = vld [vmem:[%s201 + $0x2d0] sm:$0xff]
        %v428 = vld [vmem:[%s201 + $0x2d8] sm:$0xff]
        %v429 = vld [vmem:[%s201 + $0x2e0] sm:$0xff]
        %v430 = vld [vmem:[%s201 + $0x2e8] sm:$0xff]
        %v431 = vld [vmem:[%s201 + $0x2f0] sm:$0xff]
        %v432 = vld [vmem:[%s201 + $0x2f8] sm:$0xff]
        %v433 = vld [vmem:[%s201 + $0x300] sm:$0xff]
        %v434 = vld [vmem:[%s201 + $0x308] sm:$0xff]
        %v435 = vld [vmem:[%s201 + $0x310] sm:$0xff]
        %v436 = vld [vmem:[%s201 + $0x318] sm:$0xff]
        %v437 = vld [vmem:[%s201 + $0x320] sm:$0xff]
        %v438 = vld [vmem:[%s201 + $0x328] sm:$0xff]
        %v439 = vld [vmem:[%s201 + $0x330] sm:$0xff]
        %v440 = vld [vmem:[%s201 + $0x338] sm:$0xff]
        %v441 = vld [vmem:[%s201 + $0x340] sm:$0xff]
        %v442 = vld [vmem:[%s201 + $0x348] sm:$0xff]
        %v443 = vld [vmem:[%s201 + $0x350] sm:$0xff]
        %v444 = vld [vmem:[%s201 + $0x358] sm:$0xff]
        %v445 = vld [vmem:[%s201 + $0x360] sm:$0xff]
        %v446 = vld [vmem:[%s201 + $0x368] sm:$0xff]
        %v447 = vld [vmem:[%s201 + $0x370] sm:$0xff]
        %v448 = vld [vmem:[%s201 + $0x378] sm:$0xff]
        %v449 = vld [vmem:[%s201 + $0x380] sm:$0xff]
        %v450 = vld [vmem:[%s201 + $0x388] sm:$0xff]
        %v451 = vld [vmem:[%s201 + $0x390] sm:$0xff]
        %v452 = vld [vmem:[%s201 + $0x398] sm:$0xff]
        %v453 = vld [vmem:[%s201 + $0x3a0] sm:$0xff]
        %v454 = vld [vmem:[%s201 + $0x3a8] sm:$0xff]
        %v455 = vld [vmem:[%s201 + $0x3b0] sm:$0xff]
        %v456 = vld [vmem:[%s201 + $0x3b8] sm:$0xff]
        %v457 = vld [vmem:[%s201 + $0x3c0] sm:$0xff]
        %v458 = vld [vmem:[%s201 + $0x3c8] sm:$0xff]
        %v459 = vld [vmem:[%s201 + $0x3d0] sm:$0xff]
        %v460 = vld [vmem:[%s201 + $0x3d8] sm:$0xff]
        %v461 = vld [vmem:[%s201 + $0x3e0] sm:$0xff]
        %v462 = vld [vmem:[%s201 + $0x3e8] sm:$0xff]
        %v463 = vld [vmem:[%s201 + $0x3f0] sm:$0xff]
        %v464 = vld [vmem:[%s201 + $0x3f8] sm:$0xff]
        %v465 = vld [vmem:[%s201 + $0x400] sm:$0xff]
        %v466 = vld [vmem:[%s201 + $0x408] sm:$0xff]
        %v467 = vld [vmem:[%s201 + $0x410] sm:$0xff]
        %v468 = vld [vmem:[%s201 + $0x418] sm:$0xff]
        %v469 = vld [vmem:[%s201 + $0x420] sm:$0xff]
        %v470 = vld [vmem:[%s201 + $0x428] sm:$0xff]
        %v471 = vld [vmem:[%s201 + $0x430] sm:$0xff]
        %v472 = vld [vmem:[%s201 + $0x438] sm:$0xff]
        %v473 = vld [vmem:[%s201 + $0x440] sm:$0xff]
        %v474 = vld [vmem:[%s201 + $0x448] sm:$0xff]
        %v475 = vld [vmem:[%s201 + $0x450] sm:$0xff]
        %v476 = vld [vmem:[%s201 + $0x458] sm:$0xff]
        %v477 = vld [vmem:[%s201 + $0x460] sm:$0xff]
        %v478 = vld [vmem:[%s201 + $0x468] sm:$0xff]
        %v479 = vld [vmem:[%s201 + $0x470] sm:$0xff]
        %v480 = vld [vmem:[%s201 + $0x478] sm:$0xff]
        %v481 = vld [vmem:[%s201 + $0x480] sm:$0xff]
        %v482 = vld [vmem:[%s201 + $0x488] sm:$0xff]
        %v483 = vld [vmem:[%s201 + $0x490] sm:$0xff]
        %v484 = vld [vmem:[%s201 + $0x498] sm:$0xff]
        %v485 = vld [vmem:[%s201 + $0x4a0] sm:$0xff]
        %v486 = vld [vmem:[%s201 + $0x4a8] sm:$0xff]
        %v487 = vld [vmem:[%s201 + $0x4b0] sm:$0xff]
        %v488 = vld [vmem:[%s201 + $0x4b8] sm:$0xff]
        %v489 = vld [vmem:[%s201 + $0x4c0] sm:$0xff]
        %v490 = vld [vmem:[%s201 + $0x4c8] sm:$0xff]
        %v491 = vld [vmem:[%s201 + $0x4d0] sm:$0xff]
        %v492 = vld [vmem:[%s201 + $0x4d8] sm:$0xff]
        %v493 = vld [vmem:[%s201 + $0x4e0] sm:$0xff]
        %v494 = vld [vmem:[%s201 + $0x4e8] sm:$0xff]
        %v495 = vld [vmem:[%s201 + $0x4f0] sm:$0xff]
        %v496 = vld [vmem:[%s201 + $0x4f8] sm:$0xff]
        %v497 = vld [vmem:[%s201 + $0x500] sm:$0xff]
        %v498 = vld [vmem:[%s201 + $0x508] sm:$0xff]
        %v499 = vld [vmem:[%s201 + $0x510] sm:$0xff]
        %v500 = vld [vmem:[%s201 + $0x518] sm:$0xff]
        %v501 = vld [vmem:[%s201 + $0x520] sm:$0xff]
        %v502 = vld [vmem:[%s201 + $0x528] sm:$0xff]
        %v503 = vld [vmem:[%s201 + $0x530] sm:$0xff]
        %v504 = vld [vmem:[%s201 + $0x538] sm:$0xff]
        %v505 = vld [vmem:[%s201 + $0x540] sm:$0xff]
        %v506 = vld [vmem:[%s201 + $0x548] sm:$0xff]
        %v507 = vld [vmem:[%s201 + $0x550] sm:$0xff]
        %v508 = vld [vmem:[%s201 + $0x558] sm:$0xff]
        %v509 = vld [vmem:[%s201 + $0x560] sm:$0xff]
        %v510 = vld [vmem:[%s201 + $0x568] sm:$0xff]
        %v511 = vld [vmem:[%s201 + $0x570] sm:$0xff]
        %v512 = vld [vmem:[%s201 + $0x578] sm:$0xff]
        %v513 = vld [vmem:[%s201 + $0x580] sm:$0xff]
        %v514 = vld [vmem:[%s201 + $0x588] sm:$0xff]
        %v515 = vld [vmem:[%s201 + $0x590] sm:$0xff]
        %v516 = vld [vmem:[%s201 + $0x598] sm:$0xff]
        %v517 = vld [vmem:[%s201 + $0x5a0] sm:$0xff]
        %v518 = vld [vmem:[%s201 + $0x5a8] sm:$0xff]
        %v519 = vld [vmem:[%s201 + $0x5b0] sm:$0xff]
        %v520 = vld [vmem:[%s201 + $0x5b8] sm:$0xff]
        %v521 = vld [vmem:[%s201 + $0x5c0] sm:$0xff]
        %v522 = vld [vmem:[%s201 + $0x5c8] sm:$0xff]
        %v523 = vld [vmem:[%s201 + $0x5d0] sm:$0xff]
        %v524 = vld [vmem:[%s201 + $0x5d8] sm:$0xff]
        %v525 = vld [vmem:[%s201 + $0x5e0] sm:$0xff]
        %v526 = vld [vmem:[%s201 + $0x5e8] sm:$0xff]
        %v527 = vld [vmem:[%s201 + $0x5f0] sm:$0xff]
        %v528 = vld [vmem:[%s201 + $0x5f8] sm:$0xff]
        %v529 = vld [vmem:[%s201 + $0x600] sm:$0xff]
        %v530 = vld [vmem:[%s201 + $0x608] sm:$0xff]
        %v531 = vld [vmem:[%s201 + $0x610] sm:$0xff]
        %v532 = vld [vmem:[%s201 + $0x618] sm:$0xff]
        %v533 = vld [vmem:[%s201 + $0x620] sm:$0xff]
        %v534 = vld [vmem:[%s201 + $0x628] sm:$0xff]
        %v535 = vld [vmem:[%s201 + $0x630] sm:$0xff]
        %v536 = vld [vmem:[%s201 + $0x638] sm:$0xff]
        %v537 = vld [vmem:[%s201 + $0x640] sm:$0xff]
        %v538 = vld [vmem:[%s201 + $0x648] sm:$0xff]
        %v539 = vld [vmem:[%s201 + $0x650] sm:$0xff]
        %v540 = vld [vmem:[%s201 + $0x658] sm:$0xff]
        %v541 = vld [vmem:[%s201 + $0x660] sm:$0xff]
        %v542 = vld [vmem:[%s201 + $0x668] sm:$0xff]
        %v543 = vld [vmem:[%s201 + $0x670] sm:$0xff]
        %v544 = vld [vmem:[%s201 + $0x678] sm:$0xff]
        %v545 = vld [vmem:[%s201 + $0x680] sm:$0xff]
        %v546 = vld [vmem:[%s201 + $0x688] sm:$0xff]
        %v547 = vld [vmem:[%s201 + $0x690] sm:$0xff]
        %v548 = vld [vmem:[%s201 + $0x698] sm:$0xff]
        %v549 = vld [vmem:[%s201 + $0x6a0] sm:$0xff]
        %v550 = vld [vmem:[%s201 + $0x6a8] sm:$0xff]
        %v551 = vld [vmem:[%s201 + $0x6b0] sm:$0xff]
        %v552 = vld [vmem:[%s201 + $0x6b8] sm:$0xff]
        %v553 = vld [vmem:[%s201 + $0x6c0] sm:$0xff]
        %v554 = vld [vmem:[%s201 + $0x6c8] sm:$0xff]
        %v555 = vld [vmem:[%s201 + $0x6d0] sm:$0xff]
        %v556 = vld [vmem:[%s201 + $0x6d8] sm:$0xff]
        %v557 = vld [vmem:[%s201 + $0x6e0] sm:$0xff]
        %v558 = vld [vmem:[%s201 + $0x6e8] sm:$0xff]
        %v559 = vld [vmem:[%s201 + $0x6f0] sm:$0xff]
        %v560 = vld [vmem:[%s201 + $0x6f8] sm:$0xff]
        %v561 = vld [vmem:[%s201 + $0x700] sm:$0xff]
        %v562 = vld [vmem:[%s201 + $0x708] sm:$0xff]
        %v563 = vld [vmem:[%s201 + $0x710] sm:$0xff]
        %v564 = vld [vmem:[%s201 + $0x718] sm:$0xff]
        %v565 = vld [vmem:[%s201 + $0x720] sm:$0xff]
        %v566 = vld [vmem:[%s201 + $0x728] sm:$0xff]
        %v567 = vld [vmem:[%s201 + $0x730] sm:$0xff]
        %v568 = vld [vmem:[%s201 + $0x738] sm:$0xff]
        %v569 = vld [vmem:[%s201 + $0x740] sm:$0xff]
        %v570 = vld [vmem:[%s201 + $0x748] sm:$0xff]
        %v571 = vld [vmem:[%s201 + $0x750] sm:$0xff]
        %v572 = vld [vmem:[%s201 + $0x758] sm:$0xff]
        %v573 = vld [vmem:[%s201 + $0x760] sm:$0xff]
        %v574 = vld [vmem:[%s201 + $0x768] sm:$0xff]
        %v575 = vld [vmem:[%s201 + $0x770] sm:$0xff]
        %v576 = vld [vmem:[%s201 + $0x778] sm:$0xff]
        %v577 = vld [vmem:[%s201 + $0x780] sm:$0xff]
        %v578 = vld [vmem:[%s201 + $0x788] sm:$0xff]
        %v579 = vld [vmem:[%s201 + $0x790] sm:$0xff]
        %v580 = vld [vmem:[%s201 + $0x798] sm:$0xff]
        %v581 = vld [vmem:[%s201 + $0x7a0] sm:$0xff]
        %v582 = vld [vmem:[%s201 + $0x7a8] sm:$0xff]
        %v583 = vld [vmem:[%s201 + $0x7b0] sm:$0xff]
        %v584 = vld [vmem:[%s201 + $0x7b8] sm:$0xff]
        %v585 = vld [vmem:[%s201 + $0x7c0] sm:$0xff]
        %v586 = vld [vmem:[%s201 + $0x7c8] sm:$0xff]
        %v587 = vld [vmem:[%s201 + $0x7d0] sm:$0xff]
        %v588 = vld [vmem:[%s201 + $0x7d8] sm:$0xff]
        %v589 = vld [vmem:[%s201 + $0x7e0] sm:$0xff]
        %v590 = vld [vmem:[%s201 + $0x7e8] sm:$0xff]
        %v591 = vld [vmem:[%s201 + $0x7f0] sm:$0xff]
        %v592 = vld [vmem:[%s201 + $0x7f8] sm:$0xff]
        %v593 = vld [vmem:[%s201 + $0x800] sm:$0xff]
        %v594 = vld [vmem:[%s201 + $0x808] sm:$0xff]
        %v595 = vld [vmem:[%s201 + $0x810] sm:$0xff]
        %v596 = vld [vmem:[%s201 + $0x818] sm:$0xff]
        %v597 = vld [vmem:[%s201 + $0x820] sm:$0xff]
        %v598 = vld [vmem:[%s201 + $0x828] sm:$0xff]
        %v599 = vld [vmem:[%s201 + $0x830] sm:$0xff]
        %v600 = vld [vmem:[%s201 + $0x838] sm:$0xff]
        %v601 = vld [vmem:[%s201 + $0x840] sm:$0xff]
        %v602 = vld [vmem:[%s201 + $0x848] sm:$0xff]
        %v603 = vld [vmem:[%s201 + $0x850] sm:$0xff]
        %v604 = vld [vmem:[%s201 + $0x858] sm:$0xff]
        %v605 = vld [vmem:[%s201 + $0x860] sm:$0xff]
        %v606 = vld [vmem:[%s201 + $0x868] sm:$0xff]
        %v607 = vld [vmem:[%s201 + $0x870] sm:$0xff]
        %v608 = vld [vmem:[%s201 + $0x878] sm:$0xff]
        %v609 = vld [vmem:[%s201 + $0x880] sm:$0xff]
        %v610 = vld [vmem:[%s201 + $0x888] sm:$0xff]
        %v611 = vld [vmem:[%s201 + $0x890] sm:$0xff]
        %v612 = vld [vmem:[%s201 + $0x898] sm:$0xff]
        %v613 = vld [vmem:[%s201 + $0x8a0] sm:$0xff]
        %v614 = vld [vmem:[%s201 + $0x8a8] sm:$0xff]
        %v615 = vld [vmem:[%s201 + $0x8b0] sm:$0xff]
        %v616 = vld [vmem:[%s201 + $0x8b8] sm:$0xff]
        %v617 = vld [vmem:[%s201 + $0x8c0] sm:$0xff]
        %v618 = vld [vmem:[%s201 + $0x8c8] sm:$0xff]
        %v619 = vld [vmem:[%s201 + $0x8d0] sm:$0xff]
        %v620 = vld [vmem:[%s201 + $0x8d8] sm:$0xff]
        %v621 = vld [vmem:[%s201 + $0x8e0] sm:$0xff]
        %v622 = vld [vmem:[%s201 + $0x8e8] sm:$0xff]
        %v623 = vld [vmem:[%s201 + $0x8f0] sm:$0xff]
        %v624 = vld [vmem:[%s201 + $0x8f8] sm:$0xff]
        %v625 = vld [vmem:[%s201 + $0x900] sm:$0xff]
        %v626 = vld [vmem:[%s201 + $0x908] sm:$0xff]
        %v627 = vld [vmem:[%s201 + $0x910] sm:$0xff]
        %v628 = vld [vmem:[%s201 + $0x918] sm:$0xff]
        %v629 = vld [vmem:[%s201 + $0x920] sm:$0xff]
        %v630 = vld [vmem:[%s201 + $0x928] sm:$0xff]
        %v631 = vld [vmem:[%s201 + $0x930] sm:$0xff]
        %v632 = vld [vmem:[%s201 + $0x938] sm:$0xff]
        %v633 = vld [vmem:[%s201 + $0x940] sm:$0xff]
        %v634 = vld [vmem:[%s201 + $0x948] sm:$0xff]
        %v635 = vld [vmem:[%s201 + $0x950] sm:$0xff]
        %v636 = vld [vmem:[%s201 + $0x958] sm:$0xff]
        %v637 = vld [vmem:[%s201 + $0x960] sm:$0xff]
        %v638 = vld [vmem:[%s201 + $0x968] sm:$0xff]
        %v639 = vld [vmem:[%s201 + $0x970] sm:$0xff]
        %v640 = vld [vmem:[%s201 + $0x978] sm:$0xff]
        %v641 = vld [vmem:[%s201 + $0x980] sm:$0xff]
        %v642 = vld [vmem:[%s201 + $0x988] sm:$0xff]
        %v643 = vld [vmem:[%s201 + $0x990] sm:$0xff]
        %v644 = vld [vmem:[%s201 + $0x998] sm:$0xff]
        %v645 = vld [vmem:[%s201 + $0x9a0] sm:$0xff]
        %v646 = vld [vmem:[%s201 + $0x9a8] sm:$0xff]
        %v647 = vld [vmem:[%s201 + $0x9b0] sm:$0xff]
        %v648 = vld [vmem:[%s201 + $0x9b8] sm:$0xff]
        %v649 = vld [vmem:[%s201 + $0x9c0] sm:$0xff]
        %v650 = vld [vmem:[%s201 + $0x9c8] sm:$0xff]
        %v651 = vld [vmem:[%s201 + $0x9d0] sm:$0xff]
        %v652 = vld [vmem:[%s201 + $0x9d8] sm:$0xff]
        %v653 = vld [vmem:[%s201 + $0x9e0] sm:$0xff]
        %v654 = vld [vmem:[%s201 + $0x9e8] sm:$0xff]
        %v655 = vld [vmem:[%s201 + $0x9f0] sm:$0xff]
        %v656 = vld [vmem:[%s201 + $0x9f8] sm:$0xff]
        %v657 = vld [vmem:[%s201 + $0xa00] sm:$0xff]
        %v658 = vld [vmem:[%s201 + $0xa08] sm:$0xff]
        %v659 = vld [vmem:[%s201 + $0xa10] sm:$0xff]
        %v660 = vld [vmem:[%s201 + $0xa18] sm:$0xff]
        %v661 = vld [vmem:[%s201 + $0xa20] sm:$0xff]
        %v662 = vld [vmem:[%s201 + $0xa28] sm:$0xff]
        %v663 = vld [vmem:[%s201 + $0xa30] sm:$0xff]
        %v664 = vld [vmem:[%s201 + $0xa38] sm:$0xff]
        %v665 = vld [vmem:[%s201 + $0xa40] sm:$0xff]
        %v666 = vld [vmem:[%s201 + $0xa48] sm:$0xff]
        %v667 = vld [vmem:[%s201 + $0xa50] sm:$0xff]
        %v668 = vld [vmem:[%s201 + $0xa58] sm:$0xff]
        %v669 = vld [vmem:[%s201 + $0xa60] sm:$0xff]
        %v670 = vld [vmem:[%s201 + $0xa68] sm:$0xff]
        %v671 = vld [vmem:[%s201 + $0xa70] sm:$0xff]
        %v672 = vld [vmem:[%s201 + $0xa78] sm:$0xff]
        %v673 = vld [vmem:[%s201 + $0xa80] sm:$0xff]
        %v674 = vld [vmem:[%s201 + $0xa88] sm:$0xff]
        %v675 = vld [vmem:[%s201 + $0xa90] sm:$0xff]
        %v676 = vld [vmem:[%s201 + $0xa98] sm:$0xff]
        %v677 = vld [vmem:[%s201 + $0xaa0] sm:$0xff]
        %v678 = vld [vmem:[%s201 + $0xaa8] sm:$0xff]
        %v679 = vld [vmem:[%s201 + $0xab0] sm:$0xff]
        %v680 = vld [vmem:[%s201 + $0xab8] sm:$0xff]
        %v681 = vld [vmem:[%s201 + $0xac0] sm:$0xff]
        %v682 = vld [vmem:[%s201 + $0xac8] sm:$0xff]
        %v683 = vld [vmem:[%s201 + $0xad0] sm:$0xff]
        %v684 = vld [vmem:[%s201 + $0xad8] sm:$0xff]
        %v685 = vld [vmem:[%s201 + $0xae0] sm:$0xff]
        %v686 = vld [vmem:[%s201 + $0xae8] sm:$0xff]
        %v687 = vld [vmem:[%s201 + $0xaf0] sm:$0xff]
        %v688 = vld [vmem:[%s201 + $0xaf8] sm:$0xff]
        %v689 = vld [vmem:[%s201 + $0xb00] sm:$0xff]
        %v690 = vld [vmem:[%s201 + $0xb08] sm:$0xff]
        %v691 = vld [vmem:[%s201 + $0xb10] sm:$0xff]
        %v692 = vld [vmem:[%s201 + $0xb18] sm:$0xff]
        %v693 = vld [vmem:[%s201 + $0xb20] sm:$0xff]
        %v694 = vld [vmem:[%s201 + $0xb28] sm:$0xff]
        %v695 = vld [vmem:[%s201 + $0xb30] sm:$0xff]
        %v696 = vld [vmem:[%s201 + $0xb38] sm:$0xff]
        %v697 = vld [vmem:[%s201 + $0xb40] sm:$0xff]
        %v698 = vld [vmem:[%s201 + $0xb48] sm:$0xff]
        %v699 = vld [vmem:[%s201 + $0xb50] sm:$0xff]
        %v700 = vld [vmem:[%s201 + $0xb58] sm:$0xff]
        %v701 = vld [vmem:[%s201 + $0xb60] sm:$0xff]
        %v702 = vld [vmem:[%s201 + $0xb68] sm:$0xff]
        %v703 = vld [vmem:[%s201 + $0xb70] sm:$0xff]
        %v704 = vld [vmem:[%s201 + $0xb78] sm:$0xff]
        %v705 = vld [vmem:[%s201 + $0xb80] sm:$0xff]
        %v706 = vld [vmem:[%s201 + $0xb88] sm:$0xff]
        %v707 = vld [vmem:[%s201 + $0xb90] sm:$0xff]
        %v708 = vld [vmem:[%s201 + $0xb98] sm:$0xff]
        %v709 = vld [vmem:[%s201 + $0xba0] sm:$0xff]
        %v710 = vld [vmem:[%s201 + $0xba8] sm:$0xff]
        %v711 = vld [vmem:[%s201 + $0xbb0] sm:$0xff]
        %v712 = vld [vmem:[%s201 + $0xbb8] sm:$0xff]
        %v713 = vld [vmem:[%s201 + $0xbc0] sm:$0xff]
        %v714 = vld [vmem:[%s201 + $0xbc8] sm:$0xff]
        %v715 = vld [vmem:[%s201 + $0xbd0] sm:$0xff]
        %v716 = vld [vmem:[%s201 + $0xbd8] sm:$0xff]
        %v717 = vld [vmem:[%s201 + $0xbe0] sm:$0xff]
        %v718 = vld [vmem:[%s201 + $0xbe8] sm:$0xff]
        %v719 = vld [vmem:[%s201 + $0xbf0] sm:$0xff]
        %v720 = vld [vmem:[%s201 + $0xbf8] sm:$0xff]
        %v721 = vld [vmem:[%s201 + $0xc00] sm:$0x3]
        %v722 = vld [vmem:[%s201 + $0xc08] sm:$0x3]
        %v723 = vld [vmem:[%s201 + $0xc10] sm:$0x3]
        %v724 = vld [vmem:[%s201 + $0xc18] sm:$0x3]
        %v725 = vld [vmem:[%s201 + $0xc20] sm:$0x3]
        %v726 = vld [vmem:[%s201 + $0xc28] sm:$0x3]
        %v727 = vld [vmem:[%s201 + $0xc30] sm:$0x3]
        %v728 = vld [vmem:[%s201 + $0xc38] sm:$0x3]
        %v729 = vld [vmem:[%s201 + $0xc40] sm:$0x3]
        %v730 = vld [vmem:[%s201 + $0xc48] sm:$0x3]
        %v731 = vld [vmem:[%s201 + $0xc50] sm:$0x3]
        %v732 = vld [vmem:[%s201 + $0xc58] sm:$0x3]
        %v733 = vld [vmem:[%s201 + $0xc60] sm:$0x3]
        %v734 = vld [vmem:[%s201 + $0xc68] sm:$0x3]
        %v735 = vld [vmem:[%s201 + $0xc70] sm:$0x3]
        %v736 = vld [vmem:[%s201 + $0xc78] sm:$0x3]
        %v737 = vld [vmem:[%s201 + $0xc80] sm:$0x3]
        %v738 = vld [vmem:[%s201 + $0xc88] sm:$0x3]
        %v739 = vld [vmem:[%s201 + $0xc90] sm:$0x3]
        %v740 = vld [vmem:[%s201 + $0xc98] sm:$0x3]
        %v741 = vld [vmem:[%s201 + $0xca0] sm:$0x3]
        %v742 = vld [vmem:[%s201 + $0xca8] sm:$0x3]
        %v743 = vld [vmem:[%s201 + $0xcb0] sm:$0x3]
        %v744 = vld [vmem:[%s201 + $0xcb8] sm:$0x3]
        %v745 = vld [vmem:[%s201 + $0xcc0] sm:$0x3]
        %v746 = vld [vmem:[%s201 + $0xcc8] sm:$0x3]
        %v747 = vld [vmem:[%s201 + $0xcd0] sm:$0x3]
        %v748 = vld [vmem:[%s201 + $0xcd8] sm:$0x3]
        %v749 = vld [vmem:[%s201 + $0xce0] sm:$0x3]
        %v750 = vld [vmem:[%s201 + $0xce8] sm:$0x3]
        %v751 = vld [vmem:[%s201 + $0xcf0] sm:$0x3]
        %v752 = vld [vmem:[%s201 + $0xcf8] sm:$0x3]
        %v753 = vld [vmem:[%s201 + $0xd00] sm:$0x3]
        %v754 = vld [vmem:[%s201 + $0xd08] sm:$0x3]
        %v755 = vld [vmem:[%s201 + $0xd10] sm:$0x3]
        %v756 = vld [vmem:[%s201 + $0xd18] sm:$0x3]
        %v757 = vld [vmem:[%s201 + $0xd20] sm:$0x3]
        %v758 = vld [vmem:[%s201 + $0xd28] sm:$0x3]
        %v759 = vld [vmem:[%s201 + $0xd30] sm:$0x3]
        %v760 = vld [vmem:[%s201 + $0xd38] sm:$0x3]
        %v761 = vld [vmem:[%s201 + $0xd40] sm:$0x3]
        %v762 = vld [vmem:[%s201 + $0xd48] sm:$0x3]
        %v763 = vld [vmem:[%s201 + $0xd50] sm:$0x3]
        %v764 = vld [vmem:[%s201 + $0xd58] sm:$0x3]
        %v765 = vld [vmem:[%s201 + $0xd60] sm:$0x3]
        %v766 = vld [vmem:[%s201 + $0xd68] sm:$0x3]
        %v767 = vld [vmem:[%s201 + $0xd70] sm:$0x3]
        %v768 = vld [vmem:[%s201 + $0xd78] sm:$0x3]
        %v769 = vld [vmem:[%s201 + $0xd80] sm:$0x3]
        %v770 = vld [vmem:[%s201 + $0xd88] sm:$0x3]
        %v771 = vld [vmem:[%s201 + $0xd90] sm:$0x3]
        %v772 = vld [vmem:[%s201 + $0xd98] sm:$0x3]
        %v773 = vld [vmem:[%s201 + $0xda0] sm:$0x3]
        %v774 = vld [vmem:[%s201 + $0xda8] sm:$0x3]
        %v775 = vld [vmem:[%s201 + $0xdb0] sm:$0x3]
        %v776 = vld [vmem:[%s201 + $0xdb8] sm:$0x3]
        %v777 = vld [vmem:[%s201 + $0xdc0] sm:$0x3]
        %v778 = vld [vmem:[%s201 + $0xdc8] sm:$0x3]
        %v779 = vld [vmem:[%s201 + $0xdd0] sm:$0x3]
        %v780 = vld [vmem:[%s201 + $0xdd8] sm:$0x3]
        %v781 = vld [vmem:[%s201 + $0xde0] sm:$0x3]
        %v782 = vld [vmem:[%s201 + $0xde8] sm:$0x3]
        %v783 = vld [vmem:[%s201 + $0xdf0] sm:$0x3]
        %v784 = vld [vmem:[%s201 + $0xdf8] sm:$0x3]
        %v785 = vld [vmem:[%s201 + $0xe00] sm:$0x3]
        %v786 = vld [vmem:[%s201 + $0xe08] sm:$0x3]
        %v787 = vld [vmem:[%s201 + $0xe10] sm:$0x3]
        %v788 = vld [vmem:[%s201 + $0xe18] sm:$0x3]
        %v789 = vld [vmem:[%s201 + $0xe20] sm:$0x3]
        %v790 = vld [vmem:[%s201 + $0xe28] sm:$0x3]
        %v791 = vld [vmem:[%s201 + $0xe30] sm:$0x3]
        %v792 = vld [vmem:[%s201 + $0xe38] sm:$0x3]
        %v793 = vld [vmem:[%s201 + $0xe40] sm:$0x3]
        %v794 = vld [vmem:[%s201 + $0xe48] sm:$0x3]
        %v795 = vld [vmem:[%s201 + $0xe50] sm:$0x3]
        %v796 = vld [vmem:[%s201 + $0xe58] sm:$0x3]
        %v797 = vld [vmem:[%s201 + $0xe60] sm:$0x3]
        %v798 = vld [vmem:[%s201 + $0xe68] sm:$0x3]
        %v799 = vld [vmem:[%s201 + $0xe70] sm:$0x3]
        %v800 = vld [vmem:[%s201 + $0xe78] sm:$0x3]
        %v801 = vld [vmem:[%s201 + $0xe80] sm:$0x3]
        %v802 = vld [vmem:[%s201 + $0xe88] sm:$0x3]
        %v803 = vld [vmem:[%s201 + $0xe90] sm:$0x3]
        %v804 = vld [vmem:[%s201 + $0xe98] sm:$0x3]
        %v805 = vld [vmem:[%s201 + $0xea0] sm:$0x3]
        %v806 = vld [vmem:[%s201 + $0xea8] sm:$0x3]
        %v807 = vld [vmem:[%s201 + $0xeb0] sm:$0x3]
        %v808 = vld [vmem:[%s201 + $0xeb8] sm:$0x3]
        %v809 = vld [vmem:[%s201 + $0xec0] sm:$0x3]
        %v810 = vld [vmem:[%s201 + $0xec8] sm:$0x3]
        %v811 = vld [vmem:[%s201 + $0xed0] sm:$0x3]
        %v812 = vld [vmem:[%s201 + $0xed8] sm:$0x3]
        %v813 = vld [vmem:[%s201 + $0xee0] sm:$0x3]
        %v814 = vld [vmem:[%s201 + $0xee8] sm:$0x3]
        %v815 = vld [vmem:[%s201 + $0xef0] sm:$0x3]
        %v816 = vld [vmem:[%s201 + $0xef8] sm:$0x3]
        %v817 = vld [vmem:[%s201 + $0xf00] sm:$0x3]
        %v818 = vld [vmem:[%s201 + $0xf08] sm:$0x3]
        %v819 = vld [vmem:[%s201 + $0xf10] sm:$0x3]
        %v820 = vld [vmem:[%s201 + $0xf18] sm:$0x3]
        %v821 = vld [vmem:[%s201 + $0xf20] sm:$0x3]
        %v822 = vld [vmem:[%s201 + $0xf28] sm:$0x3]
        %v823 = vld [vmem:[%s201 + $0xf30] sm:$0x3]
        %v824 = vld [vmem:[%s201 + $0xf38] sm:$0x3]
        %v825 = vld [vmem:[%s201 + $0xf40] sm:$0x3]
        %v826 = vld [vmem:[%s201 + $0xf48] sm:$0x3]
        %v827 = vld [vmem:[%s201 + $0xf50] sm:$0x3]
        %v828 = vld [vmem:[%s201 + $0xf58] sm:$0x3]
        %v829 = vld [vmem:[%s201 + $0xf60] sm:$0x3]
        %v830 = vld [vmem:[%s201 + $0xf68] sm:$0x3]
        %v831 = vld [vmem:[%s201 + $0xf70] sm:$0x3]
        %v832 = vld [vmem:[%s201 + $0xf78] sm:$0x3]
        %v833 = vld [vmem:[%s201 + $0xf80] sm:$0x3]
        %v834 = vld [vmem:[%s201 + $0xf88] sm:$0x3]
        %v835 = vld [vmem:[%s201 + $0xf90] sm:$0x3]
        %v836 = vld [vmem:[%s201 + $0xf98] sm:$0x3]
        %v837 = vld [vmem:[%s201 + $0xfa0] sm:$0x3]
        %v838 = vld [vmem:[%s201 + $0xfa8] sm:$0x3]
        %v839 = vld [vmem:[%s201 + $0xfb0] sm:$0x3]
        %v840 = vld [vmem:[%s201 + $0xfb8] sm:$0x3]
        %v841 = vld [vmem:[%s201 + $0xfc0] sm:$0x3]
        %v842 = vld [vmem:[%s201 + $0xfc8] sm:$0x3]
        %v843 = vld [vmem:[%s201 + $0xfd0] sm:$0x3]
        %v844 = vld [vmem:[%s201 + $0xfd8] sm:$0x3]
        %v845 = vld [vmem:[%s201 + $0xfe0] sm:$0x3]
        %v846 = vld [vmem:[%s201 + $0xfe8] sm:$0x3]
        %v847 = vld [vmem:[%s201 + $0xff0] sm:$0x3]
        %v848 = vld [vmem:[%s201 + $0xff8] sm:$0x3]
        %v849 = vld [vmem:[%s201 + $0x1000] sm:$0x3]
        %v850 = vld [vmem:[%s201 + $0x1008] sm:$0x3]
        %v851 = vld [vmem:[%s201 + $0x1010] sm:$0x3]
        %v852 = vld [vmem:[%s201 + $0x1018] sm:$0x3]
        %v853 = vld [vmem:[%s201 + $0x1020] sm:$0x3]
        %v854 = vld [vmem:[%s201 + $0x1028] sm:$0x3]
        %v855 = vld [vmem:[%s201 + $0x1030] sm:$0x3]
        %v856 = vld [vmem:[%s201 + $0x1038] sm:$0x3]
        %v857 = vld [vmem:[%s201 + $0x1040] sm:$0x3]
        %v858 = vld [vmem:[%s201 + $0x1048] sm:$0x3]
        %v859 = vld [vmem:[%s201 + $0x1050] sm:$0x3]
        %v860 = vld [vmem:[%s201 + $0x1058] sm:$0x3]
        %v861 = vld [vmem:[%s201 + $0x1060] sm:$0x3]
        %v862 = vld [vmem:[%s201 + $0x1068] sm:$0x3]
        %v863 = vld [vmem:[%s201 + $0x1070] sm:$0x3]
        %v864 = vld [vmem:[%s201 + $0x1078] sm:$0x3]
        %v865 = vld [vmem:[%s201 + $0x1080] sm:$0x3]
        %v866 = vld [vmem:[%s201 + $0x1088] sm:$0x3]
        %v867 = vld [vmem:[%s201 + $0x1090] sm:$0x3]
        %v868 = vld [vmem:[%s201 + $0x1098] sm:$0x3]
        %v869 = vld [vmem:[%s201 + $0x10a0] sm:$0x3]
        %v870 = vld [vmem:[%s201 + $0x10a8] sm:$0x3]
        %v871 = vld [vmem:[%s201 + $0x10b0] sm:$0x3]
        %v872 = vld [vmem:[%s201 + $0x10b8] sm:$0x3]
        %v873 = vld [vmem:[%s201 + $0x10c0] sm:$0x3]
        %v874 = vld [vmem:[%s201 + $0x10c8] sm:$0x3]
        %v875 = vld [vmem:[%s201 + $0x10d0] sm:$0x3]
        %v876 = vld [vmem:[%s201 + $0x10d8] sm:$0x3]
        %v877 = vld [vmem:[%s201 + $0x10e0] sm:$0x3]
        %v878 = vld [vmem:[%s201 + $0x10e8] sm:$0x3]
        %v879 = vld [vmem:[%s201 + $0x10f0] sm:$0x3]
        %v880 = vld [vmem:[%s201 + $0x10f8] sm:$0x3]
        %v881 = vld [vmem:[%s201 + $0x1100] sm:$0x3]
        %v882 = vld [vmem:[%s201 + $0x1108] sm:$0x3]
        %v883 = vld [vmem:[%s201 + $0x1110] sm:$0x3]
        %v884 = vld [vmem:[%s201 + $0x1118] sm:$0x3]
        %v885 = vld [vmem:[%s201 + $0x1120] sm:$0x3]
        %v886 = vld [vmem:[%s201 + $0x1128] sm:$0x3]
        %v887 = vld [vmem:[%s201 + $0x1130] sm:$0x3]
        %v888 = vld [vmem:[%s201 + $0x1138] sm:$0x3]
        %v889 = vld [vmem:[%s201 + $0x1140] sm:$0x3]
        %v890 = vld [vmem:[%s201 + $0x1148] sm:$0x3]
        %v891 = vld [vmem:[%s201 + $0x1150] sm:$0x3]
        %v892 = vld [vmem:[%s201 + $0x1158] sm:$0x3]
        %v893 = vld [vmem:[%s201 + $0x1160] sm:$0x3]
        %v894 = vld [vmem:[%s201 + $0x1168] sm:$0x3]
        %v895 = vld [vmem:[%s201 + $0x1170] sm:$0x3]
        %v896 = vld [vmem:[%s201 + $0x1178] sm:$0x3]
        %v897 = vld [vmem:[%s201 + $0x1180] sm:$0x3]
        %v898 = vld [vmem:[%s201 + $0x1188] sm:$0x3]
        %v899 = vld [vmem:[%s201 + $0x1190] sm:$0x3]
        %v900 = vld [vmem:[%s201 + $0x1198] sm:$0x3]
        %v901 = vld [vmem:[%s201 + $0x11a0] sm:$0x3]
        %v902 = vld [vmem:[%s201 + $0x11a8] sm:$0x3]
        %v903 = vld [vmem:[%s201 + $0x11b0] sm:$0x3]
        %v904 = vld [vmem:[%s201 + $0x11b8] sm:$0x3]
        %v905 = vld [vmem:[%s201 + $0x11c0] sm:$0x3]
        %v906 = vld [vmem:[%s201 + $0x11c8] sm:$0x3]
        %v907 = vld [vmem:[%s201 + $0x11d0] sm:$0x3]
        %v908 = vld [vmem:[%s201 + $0x11d8] sm:$0x3]
        %v909 = vld [vmem:[%s201 + $0x11e0] sm:$0x3]
        %v910 = vld [vmem:[%s201 + $0x11e8] sm:$0x3]
        %v911 = vld [vmem:[%s201 + $0x11f0] sm:$0x3]
        %v912 = vld [vmem:[%s201 + $0x11f8] sm:$0x3]
        %v913 = vld [vmem:[%s201 + $0x1200] sm:$0x3]
        %v914 = vld [vmem:[%s201 + $0x1208] sm:$0x3]
        %v915 = vld [vmem:[%s201 + $0x1210] sm:$0x3]
        %v916 = vld [vmem:[%s201 + $0x1218] sm:$0x3]
        %v917 = vld [vmem:[%s201 + $0x1220] sm:$0x3]
        %v918 = vld [vmem:[%s201 + $0x1228] sm:$0x3]
        %v919 = vld [vmem:[%s201 + $0x1230] sm:$0x3]
        %v920 = vld [vmem:[%s201 + $0x1238] sm:$0x3]
        %v921 = vld [vmem:[%s201 + $0x1240] sm:$0x3]
        %v922 = vld [vmem:[%s201 + $0x1248] sm:$0x3]
        %v923 = vld [vmem:[%s201 + $0x1250] sm:$0x3]
        %v924 = vld [vmem:[%s201 + $0x1258] sm:$0x3]
        %v925 = vld [vmem:[%s201 + $0x1260] sm:$0x3]
        %v926 = vld [vmem:[%s201 + $0x1268] sm:$0x3]
        %v927 = vld [vmem:[%s201 + $0x1270] sm:$0x3]
        %v928 = vld [vmem:[%s201 + $0x1278] sm:$0x3]
        %v929 = vld [vmem:[%s201 + $0x1280] sm:$0x3]
        %v930 = vld [vmem:[%s201 + $0x1288] sm:$0x3]
        %v931 = vld [vmem:[%s201 + $0x1290] sm:$0x3]
        %v932 = vld [vmem:[%s201 + $0x1298] sm:$0x3]
        %v933 = vld [vmem:[%s201 + $0x12a0] sm:$0x3]
        %v934 = vld [vmem:[%s201 + $0x12a8] sm:$0x3]
        %v935 = vld [vmem:[%s201 + $0x12b0] sm:$0x3]
        %v936 = vld [vmem:[%s201 + $0x12b8] sm:$0x3]
        %v937 = vld [vmem:[%s201 + $0x12c0] sm:$0x3]
        %v938 = vld [vmem:[%s201 + $0x12c8] sm:$0x3]
        %v939 = vld [vmem:[%s201 + $0x12d0] sm:$0x3]
        %v940 = vld [vmem:[%s201 + $0x12d8] sm:$0x3]
        %v941 = vld [vmem:[%s201 + $0x12e0] sm:$0x3]
        %v942 = vld [vmem:[%s201 + $0x12e8] sm:$0x3]
        %v943 = vld [vmem:[%s201 + $0x12f0] sm:$0x3]
        %v944 = vld [vmem:[%s201 + $0x12f8] sm:$0x3]
        %v945 = vld [vmem:[%s201 + $0x1300] sm:$0x3]
        %v946 = vld [vmem:[%s201 + $0x1308] sm:$0x3]
        %v947 = vld [vmem:[%s201 + $0x1310] sm:$0x3]
        %v948 = vld [vmem:[%s201 + $0x1318] sm:$0x3]
        %v949 = vld [vmem:[%s201 + $0x1320] sm:$0x3]
        %v950 = vld [vmem:[%s201 + $0x1328] sm:$0x3]
        %v951 = vld [vmem:[%s201 + $0x1330] sm:$0x3]
        %v952 = vld [vmem:[%s201 + $0x1338] sm:$0x3]
        %v953 = vld [vmem:[%s201 + $0x1340] sm:$0x3]
        %v954 = vld [vmem:[%s201 + $0x1348] sm:$0x3]
        %v955 = vld [vmem:[%s201 + $0x1350] sm:$0x3]
        %v956 = vld [vmem:[%s201 + $0x1358] sm:$0x3]
        %v957 = vld [vmem:[%s201 + $0x1360] sm:$0x3]
        %v958 = vld [vmem:[%s201 + $0x1368] sm:$0x3]
        %v959 = vld [vmem:[%s201 + $0x1370] sm:$0x3]
        %v960 = vld [vmem:[%s201 + $0x1378] sm:$0x3]
        %v961 = vld [vmem:[%s201 + $0x1380] sm:$0x3]
        %v962 = vld [vmem:[%s201 + $0x1388] sm:$0x3]
        %v963 = vld [vmem:[%s201 + $0x1390] sm:$0x3]
        %v964 = vld [vmem:[%s201 + $0x1398] sm:$0x3]
        %v965 = vld [vmem:[%s201 + $0x13a0] sm:$0x3]
        %v966 = vld [vmem:[%s201 + $0x13a8] sm:$0x3]
        %v967 = vld [vmem:[%s201 + $0x13b0] sm:$0x3]
        %v968 = vld [vmem:[%s201 + $0x13b8] sm:$0x3]
        %v969 = vld [vmem:[%s201 + $0x13c0] sm:$0x3]
        %v970 = vld [vmem:[%s201 + $0x13c8] sm:$0x3]
        %v971 = vld [vmem:[%s201 + $0x13d0] sm:$0x3]
        %v972 = vld [vmem:[%s201 + $0x13d8] sm:$0x3]
        %v973 = vld [vmem:[%s201 + $0x13e0] sm:$0x3]
        %v974 = vld [vmem:[%s201 + $0x13e8] sm:$0x3]
        %v975 = vld [vmem:[%s201 + $0x13f0] sm:$0x3]
        %v976 = vld [vmem:[%s201 + $0x13f8] sm:$0x3]
        %v977 = vld [vmem:[%s201 + $0x1400] sm:$0x3]
        %v978 = vld [vmem:[%s201 + $0x1408] sm:$0x3]
        %v979 = vld [vmem:[%s201 + $0x1410] sm:$0x3]
        %v980 = vld [vmem:[%s201 + $0x1418] sm:$0x3]
        %v981 = vld [vmem:[%s201 + $0x1420] sm:$0x3]
        %v982 = vld [vmem:[%s201 + $0x1428] sm:$0x3]
        %v983 = vld [vmem:[%s201 + $0x1430] sm:$0x3]
        %v984 = vld [vmem:[%s201 + $0x1438] sm:$0x3]
        %v985 = vld [vmem:[%s201 + $0x1440] sm:$0x3]
        %v986 = vld [vmem:[%s201 + $0x1448] sm:$0x3]
        %v987 = vld [vmem:[%s201 + $0x1450] sm:$0x3]
        %v988 = vld [vmem:[%s201 + $0x1458] sm:$0x3]
        %v989 = vld [vmem:[%s201 + $0x1460] sm:$0x3]
        %v990 = vld [vmem:[%s201 + $0x1468] sm:$0x3]
        %v991 = vld [vmem:[%s201 + $0x1470] sm:$0x3]
        %v992 = vld [vmem:[%s201 + $0x1478] sm:$0x3]
        %v993 = vld [vmem:[%s201 + $0x1480] sm:$0x3]
        %v994 = vld [vmem:[%s201 + $0x1488] sm:$0x3]
        %v995 = vld [vmem:[%s201 + $0x1490] sm:$0x3]
        %v996 = vld [vmem:[%s201 + $0x1498] sm:$0x3]
        %v997 = vld [vmem:[%s201 + $0x14a0] sm:$0x3]
        %v998 = vld [vmem:[%s201 + $0x14a8] sm:$0x3]
        %v999 = vld [vmem:[%s201 + $0x14b0] sm:$0x3]
        %v1000 = vld [vmem:[%s201 + $0x14b8] sm:$0x3]
        %v1001 = vld [vmem:[%s201 + $0x14c0] sm:$0x3]
        %v1002 = vld [vmem:[%s201 + $0x14c8] sm:$0x3]
        %v1003 = vld [vmem:[%s201 + $0x14d0] sm:$0x3]
        %v1004 = vld [vmem:[%s201 + $0x14d8] sm:$0x3]
        %v1005 = vld [vmem:[%s201 + $0x14e0] sm:$0x3]
        %v1006 = vld [vmem:[%s201 + $0x14e8] sm:$0x3]
        %v1007 = vld [vmem:[%s201 + $0x14f0] sm:$0x3]
        %v1008 = vld [vmem:[%s201 + $0x14f8] sm:$0x3]
        %v1009 = vld [vmem:[%s201 + $0x1500] sm:$0x3]
        %v1010 = vld [vmem:[%s201 + $0x1508] sm:$0x3]
        %v1011 = vld [vmem:[%s201 + $0x1510] sm:$0x3]
        %v1012 = vld [vmem:[%s201 + $0x1518] sm:$0x3]
        %v1013 = vld [vmem:[%s201 + $0x1520] sm:$0x3]
        %v1014 = vld [vmem:[%s201 + $0x1528] sm:$0x3]
        %v1015 = vld [vmem:[%s201 + $0x1530] sm:$0x3]
        %v1016 = vld [vmem:[%s201 + $0x1538] sm:$0x3]
        %v1017 = vld [vmem:[%s201 + $0x1540] sm:$0x3]
        %v1018 = vld [vmem:[%s201 + $0x1548] sm:$0x3]
        %v1019 = vld [vmem:[%s201 + $0x1550] sm:$0x3]
        %v1020 = vld [vmem:[%s201 + $0x1558] sm:$0x3]
        %v1021 = vld [vmem:[%s201 + $0x1560] sm:$0x3]
        %v1022 = vld [vmem:[%s201 + $0x1568] sm:$0x3]
        %v1023 = vld [vmem:[%s201 + $0x1570] sm:$0x3]
        %v1024 = vld [vmem:[%s201 + $0x1578] sm:$0x3]
        %v1025 = vld [vmem:[%s201 + $0x1580] sm:$0x3]
        %v1026 = vld [vmem:[%s201 + $0x1588] sm:$0x3]
        %v1027 = vld [vmem:[%s201 + $0x1590] sm:$0x3]
        %v1028 = vld [vmem:[%s201 + $0x1598] sm:$0x3]
        %v1029 = vld [vmem:[%s201 + $0x15a0] sm:$0x3]
        %v1030 = vld [vmem:[%s201 + $0x15a8] sm:$0x3]
        %v1031 = vld [vmem:[%s201 + $0x15b0] sm:$0x3]
        %v1032 = vld [vmem:[%s201 + $0x15b8] sm:$0x3]
        %v1033 = vld [vmem:[%s201 + $0x15c0] sm:$0x3]
        %v1034 = vld [vmem:[%s201 + $0x15c8] sm:$0x3]
        %v1035 = vld [vmem:[%s201 + $0x15d0] sm:$0x3]
        %v1036 = vld [vmem:[%s201 + $0x15d8] sm:$0x3]
        %v1037 = vld [vmem:[%s201 + $0x15e0] sm:$0x3]
        %v1038 = vld [vmem:[%s201 + $0x15e8] sm:$0x3]
        %v1039 = vld [vmem:[%s201 + $0x15f0] sm:$0x3]
        %v1040 = vld [vmem:[%s201 + $0x15f8] sm:$0x3]
        %v1041 = vld [vmem:[%s201 + $0x1600] sm:$0x3]
        %v1042 = vld [vmem:[%s201 + $0x1608] sm:$0x3]
        %v1043 = vld [vmem:[%s201 + $0x1610] sm:$0x3]
        %v1044 = vld [vmem:[%s201 + $0x1618] sm:$0x3]
        %v1045 = vld [vmem:[%s201 + $0x1620] sm:$0x3]
        %v1046 = vld [vmem:[%s201 + $0x1628] sm:$0x3]
        %v1047 = vld [vmem:[%s201 + $0x1630] sm:$0x3]
        %v1048 = vld [vmem:[%s201 + $0x1638] sm:$0x3]
        %v1049 = vld [vmem:[%s201 + $0x1640] sm:$0x3]
        %v1050 = vld [vmem:[%s201 + $0x1648] sm:$0x3]
        %v1051 = vld [vmem:[%s201 + $0x1650] sm:$0x3]
        %v1052 = vld [vmem:[%s201 + $0x1658] sm:$0x3]
        %v1053 = vld [vmem:[%s201 + $0x1660] sm:$0x3]
        %v1054 = vld [vmem:[%s201 + $0x1668] sm:$0x3]
        %v1055 = vld [vmem:[%s201 + $0x1670] sm:$0x3]
        %v1056 = vld [vmem:[%s201 + $0x1678] sm:$0x3]
        %v1057 = vld [vmem:[%s201 + $0x1680] sm:$0x3]
        %v1058 = vld [vmem:[%s201 + $0x1688] sm:$0x3]
        %v1059 = vld [vmem:[%s201 + $0x1690] sm:$0x3]
        %v1060 = vld [vmem:[%s201 + $0x1698] sm:$0x3]
        %v1061 = vld [vmem:[%s201 + $0x16a0] sm:$0x3]
        %v1062 = vld [vmem:[%s201 + $0x16a8] sm:$0x3]
        %v1063 = vld [vmem:[%s201 + $0x16b0] sm:$0x3]
        %v1064 = vld [vmem:[%s201 + $0x16b8] sm:$0x3]
        %v1065 = vld [vmem:[%s201 + $0x16c0] sm:$0x3]
        %v1066 = vld [vmem:[%s201 + $0x16c8] sm:$0x3]
        %v1067 = vld [vmem:[%s201 + $0x16d0] sm:$0x3]
        %v1068 = vld [vmem:[%s201 + $0x16d8] sm:$0x3]
        %v1069 = vld [vmem:[%s201 + $0x16e0] sm:$0x3]
        %v1070 = vld [vmem:[%s201 + $0x16e8] sm:$0x3]
        %v1071 = vld [vmem:[%s201 + $0x16f0] sm:$0x3]
        %v1072 = vld [vmem:[%s201 + $0x16f8] sm:$0x3]
        %v1073 = vld [vmem:[%s201 + $0x1700] sm:$0x3]
        %v1074 = vld [vmem:[%s201 + $0x1708] sm:$0x3]
        %v1075 = vld [vmem:[%s201 + $0x1710] sm:$0x3]
        %v1076 = vld [vmem:[%s201 + $0x1718] sm:$0x3]
        %v1077 = vld [vmem:[%s201 + $0x1720] sm:$0x3]
        %v1078 = vld [vmem:[%s201 + $0x1728] sm:$0x3]
        %v1079 = vld [vmem:[%s201 + $0x1730] sm:$0x3]
        %v1080 = vld [vmem:[%s201 + $0x1738] sm:$0x3]
        %v1081 = vld [vmem:[%s201 + $0x1740] sm:$0x3]
        %v1082 = vld [vmem:[%s201 + $0x1748] sm:$0x3]
        %v1083 = vld [vmem:[%s201 + $0x1750] sm:$0x3]
        %v1084 = vld [vmem:[%s201 + $0x1758] sm:$0x3]
        %v1085 = vld [vmem:[%s201 + $0x1760] sm:$0x3]
        %v1086 = vld [vmem:[%s201 + $0x1768] sm:$0x3]
        %v1087 = vld [vmem:[%s201 + $0x1770] sm:$0x3]
        %v1088 = vld [vmem:[%s201 + $0x1778] sm:$0x3]
        %v1089 = vld [vmem:[%s201 + $0x1780] sm:$0x3]
        %v1090 = vld [vmem:[%s201 + $0x1788] sm:$0x3]
        %v1091 = vld [vmem:[%s201 + $0x1790] sm:$0x3]
        %v1092 = vld [vmem:[%s201 + $0x1798] sm:$0x3]
        %v1093 = vld [vmem:[%s201 + $0x17a0] sm:$0x3]
        %v1094 = vld [vmem:[%s201 + $0x17a8] sm:$0x3]
        %v1095 = vld [vmem:[%s201 + $0x17b0] sm:$0x3]
        %v1096 = vld [vmem:[%s201 + $0x17b8] sm:$0x3]
        %v1097 = vld [vmem:[%s201 + $0x17c0] sm:$0x3]
        %v1098 = vld [vmem:[%s201 + $0x17c8] sm:$0x3]
        %v1099 = vld [vmem:[%s201 + $0x17d0] sm:$0x3]
        %v1100 = vld [vmem:[%s201 + $0x17d8] sm:$0x3]
        %v1101 = vld [vmem:[%s201 + $0x17e0] sm:$0x3]
        %v1102 = vld [vmem:[%s201 + $0x17e8] sm:$0x3]
        %v1103 = vld [vmem:[%s201 + $0x17f0] sm:$0x3]
        %v1104 = vld [vmem:[%s201 + $0x17f8] sm:$0x3]
        %1201 = vst [vmem:[#allocation1] ss:$4 sm:$0xff] %v241
        %s1202 = scalar_lea.vmem [#allocation1], 32
        %1203 = vst [vmem:[%s1202] ss:$4 sm:$0xff] %v242
        %v1204 = vld.sshfl [vmem:[#allocation1] sm:$0xff pattern:$0x73625140]
        %v1205 = vld.sshfl [vmem:[#allocation1 + $0x8] sm:$0xff pattern:$0x73625140]
        %v1206 = vld.sshfl [vmem:[#allocation1 + $0x10] sm:$0xff pattern:$0x73625140]
        %v1207 = vld.sshfl [vmem:[#allocation1 + $0x18] sm:$0xff pattern:$0x73625140]
        %v1208 = vld.sshfl [vmem:[#allocation1 + $0x20] sm:$0xff pattern:$0x73625140]
        %v1209 = vld.sshfl [vmem:[#allocation1 + $0x28] sm:$0xff pattern:$0x73625140]
        %v1210 = vld.sshfl [vmem:[#allocation1 + $0x30] sm:$0xff pattern:$0x73625140]
        %v1211 = vld.sshfl [vmem:[#allocation1 + $0x38] sm:$0xff pattern:$0x73625140]
        %1212 = vst [vmem:[#allocation1] ss:$4 sm:$0xff] %v243
        %1213 = vst [vmem:[%s1202] ss:$4 sm:$0xff] %v244
        %v1214 = vld.sshfl [vmem:[#allocation1] sm:$0xff pattern:$0x73625140]
        %v1215 = vld.sshfl [vmem:[#allocation1 + $0x8] sm:$0xff pattern:$0x73625140]
        %v1216 = vld.sshfl [vmem:[#allocation1 + $0x10] sm:$0xff pattern:$0x73625140]
        %v1217 = vld.sshfl [vmem:[#allocation1 + $0x18] sm:$0xff pattern:$0x73625140]
        %v1218 = vld.sshfl [vmem:[#allocation1 + $0x20] sm:$0xff pattern:$0x73625140]
        %v1219 = vld.sshfl [vmem:[#allocation1 + $0x28] sm:$0xff pattern:$0x73625140]
        %v1220 = vld.sshfl [vmem:[#allocation1 + $0x30] sm:$0xff pattern:$0x73625140]
        %v1221 = vld.sshfl [vmem:[#allocation1 + $0x38] sm:$0xff pattern:$0x73625140]
        %1222 = vst [vmem:[#allocation1] ss:$4 sm:$0xff] %v245
        %1223 = vst [vmem:[%s1202] ss:$4 sm:$0xff] %v246
        %v1224 = vld.sshfl [vmem:[#allocation1] sm:$0xff pattern:$0x73625140]
        %v1225 = vld.sshfl [vmem:[#allocation1 + $0x8] sm:$0xff pattern:$0x73625140]
        %v1226 = vld.sshfl [vmem:[#allocation1 + $0x10] sm:$0xff pattern:$0x73625140]
        %v1227 = vld.sshfl [vmem:[#allocation1 + $0x18] sm:$0xff pattern:$0x73625140]
        %v1228 = vld.sshfl [vmem:[#allocation1 + $0x20] sm:$0xff pattern:$0x73625140]
        %v1229 = vld.sshfl [vmem:[#allocation1 + $0x28] sm:$0xff pattern:$0x73625140]
        %v1230 = vld.sshfl [vmem:[#allocation1 + $0x30] sm:$0xff pattern:$0x73625140]
        %v1231 = vld.sshfl [vmem:[#allocation1 + $0x38] sm:$0xff pattern:$0x73625140]
        %1232 = vst [vmem:[#allocation1] ss:$4 sm:$0xff] %v247
        %1233 = vst [vmem:[%s1202] ss:$4 sm:$0xff] %v248
        %v1234 = vld.sshfl [vmem:[#allocation1] sm:$0xff pattern:$0x73625140]
        %v1235 = vld.sshfl [vmem:[#allocation1 + $0x8] sm:$0xff pattern:$0x73625140]
        %v1236 = vld.sshfl [vmem:[#allocation1 + $0x10] sm:$0xff pattern:$0x73625140]
        %v1237 = vld.sshfl [vmem:[#allocation1 + $0x18] sm:$0xff pattern:$0x73625140]
        %v1238 = vld.sshfl [vmem:[#allocation1 + $0x20] sm:$0xff pattern:$0x73625140]
        %v1239 = vld.sshfl [vmem:[#allocation1 + $0x28] sm:$0xff pattern:$0x73625140]
        %v1240 = vld.sshfl [vmem:[#allocation1 + $0x30] sm:$0xff pattern:$0x73625140]
        %v1241 = vld.sshfl [vmem:[#allocation1 + $0x38] sm:$0xff pattern:$0x73625140]
        %1242 = vst [vmem:[#allocation1] ss:$4 sm:$0xff] %v249
        %1243 = vst [vmem:[%s1202] ss:$4 sm:$0xff] %v250
        %v1244 = vld.sshfl [vmem:[#allocation1] sm:$0xff pattern:$0x73625140]
        %v1245 = vld.sshfl [vmem:[#allocation1 + $0x8] sm:$0xff pattern:$0x73625140]
        %v1246 = vld.sshfl [vmem:[#allocation1 + $0x10] sm:$0xff pattern:$0x73625140]
        %v1247 = vld.sshfl [vmem:[#allocation1 + $0x18] sm:$0xff pattern:$0x73625140]
        %v1248 = vld.sshfl [vmem:[#allocation1 + $0x20] sm:$0xff pattern:$0x73625140]
        %v1249 = vld.sshfl [vmem:[#allocation1 + $0x28] sm:$0xff pattern:$0x73625140]
        %v1250 = vld.sshfl [vmem:[#allocation1 + $0x30] sm:$0xff pattern:$0x73625140]
        %v1251 = vld.sshfl [vmem:[#allocation1 + $0x38] sm:$0xff pattern:$0x73625140]
        %1252 = vst [vmem:[#allocation1] ss:$4 sm:$0xff] %v251
        %1253 = vst [vmem:[%s1202] ss:$4 sm:$0xff] %v252
        %v1254 = vld.sshfl [vmem:[#allocation1] sm:$0xff pattern:$0x73625140]
        %v1255 = vld.sshfl [vmem:[#allocation1 + $0x8] sm:$0xff pattern:$0x73625140]
        %v1256 = vld.sshfl [vmem:[#allocation1 + $0x10] sm:$0xff pattern:$0x73625140]
        %v1257 = vld.sshfl [vmem:[#allocation1 + $0x18] sm:$0xff pattern:$0x73625140]
        %v1258 = vld.sshfl [vmem:[#allocation1 + $0x20] sm:$0xff pattern:$0x73625140]
        %v1259 = vld.sshfl [vmem:[#allocation1 + $0x28] sm:$0xff pattern:$0x73625140]
        %v1260 = vld.sshfl [vmem:[#allocation1 + $0x30] sm:$0xff pattern:$0x73625140]
        %v1261 = vld.sshfl [vmem:[#allocation1 + $0x38] sm:$0xff pattern:$0x73625140]
        %1262 = vst [vmem:[#allocation1] ss:$4 sm:$0xff] %v253
        %1263 = vst [vmem:[%s1202] ss:$4 sm:$0xff] %v254
        %v1264 = vld.sshfl [vmem:[#allocation1] sm:$0xff pattern:$0x73625140]
        %v1265 = vld.sshfl [vmem:[#allocation1 + $0x8] sm:$0xff pattern:$0x73625140]
        %v1266 = vld.sshfl [vmem:[#allocation1 + $0x10] sm:$0xff pattern:$0x73625140]
        %v1267 = vld.sshfl [vmem:[#allocation1 + $0x18] sm:$0xff pattern:$0x73625140]
        %v1268 = vld.sshfl [vmem:[#allocation1 + $0x20] sm:$0xff pattern:$0x73625140]
        %v1269 = vld.sshfl [vmem:[#allocation1 + $0x28] sm:$0xff pattern:$0x73625140]
        %v1270 = vld.sshfl [vmem:[#allocation1 + $0x30] sm:$0xff pattern:$0x73625140]
        %v1271 = vld.sshfl [vmem:[#allocation1 + $0x38] sm:$0xff pattern:$0x73625140]
        %1272 = vst [vmem:[#allocation1] ss:$4 sm:$0xff] %v255
        %1273 = vst [vmem:[%s1202] ss:$4 sm:$0xff] %v256
        %v1274 = vld.sshfl [vmem:[#allocation1] sm:$0xff pattern:$0x73625140]
        %v1275 = vld.sshfl [vmem:[#allocation1 + $0x8] sm:$0xff pattern:$0x73625140]
        %v1276 = vld.sshfl [vmem:[#allocation1 + $0x10] sm:$0xff pattern:$0x73625140]
        %v1277 = vld.sshfl [vmem:[#allocation1 + $0x18] sm:$0xff pattern:$0x73625140]
        %v1278 = vld.sshfl [vmem:[#allocation1 + $0x20] sm:$0xff pattern:$0x73625140]
        %v1279 = vld.sshfl [vmem:[#allocation1 + $0x28] sm:$0xff pattern:$0x73625140]
        %v1280 = vld.sshfl [vmem:[#allocation1 + $0x30] sm:$0xff pattern:$0x73625140]
        %v1281 = vld.sshfl [vmem:[#allocation1 + $0x38] sm:$0xff pattern:$0x73625140]
        %1282 = vst [vmem:[#allocation1] ss:$4 sm:$0xff] %v257
        %1283 = vst [vmem:[%s1202] ss:$4 sm:$0xff] %v258
        %v1284 = vld.sshfl [vmem:[#allocation1] sm:$0xff pattern:$0x73625140]
        %v1285 = vld.sshfl [vmem:[#allocation1 + $0x8] sm:$0xff pattern:$0x73625140]
        %v1286 = vld.sshfl [vmem:[#allocation1 + $0x10] sm:$0xff pattern:$0x73625140]
        %v1287 = vld.sshfl [vmem:[#allocation1 + $0x18] sm:$0xff pattern:$0x73625140]
        %v1288 = vld.sshfl [vmem:[#allocation1 + $0x20] sm:$0xff pattern:$0x73625140]
        %v1289 = vld.sshfl [vmem:[#allocation1 + $0x28] sm:$0xff pattern:$0x73625140]
        %v1290 = vld.sshfl [vmem:[#allocation1 + $0x30] sm:$0xff pattern:$0x73625140]
        %v1291 = vld.sshfl [vmem:[#allocation1 + $0x38] sm:$0xff pattern:$0x73625140]
        %1292 = vst [vmem:[#allocation1] ss:$4 sm:$0xff] %v259
        %1293 = vst [vmem:[%s1202] ss:$4 sm:$0xff] %v260
        %v1294 = vld.sshfl [vmem:[#allocation1] sm:$0xff pattern:$0x73625140]
        %v1295 = vld.sshfl [vmem:[#allocation1 + $0x8] sm:$0xff pattern:$0x73625140]
        %v1296 = vld.sshfl [vmem:[#allocation1 + $0x10] sm:$0xff pattern:$0x73625140]
        %v1297 = vld.sshfl [vmem:[#allocation1 + $0x18] sm:$0xff pattern:$0x73625140]
        %v1298 = vld.sshfl [vmem:[#allocation1 + $0x20] sm:$0xff pattern:$0x73625140]
        %v1299 = vld.sshfl [vmem:[#allocation1 + $0x28] sm:$0xff pattern:$0x73625140]
        %v1300 = vld.sshfl [vmem:[#allocation1 + $0x30] sm:$0xff pattern:$0x73625140]
        %v1301 = vld.sshfl [vmem:[#allocation1 + $0x38] sm:$0xff pattern:$0x73625140]
        %1302 = vst [vmem:[#allocation1] ss:$4 sm:$0xff] %v261
        %1303 = vst [vmem:[%s1202] ss:$4 sm:$0xff] %v262
        %v1304 = vld.sshfl [vmem:[#allocation1] sm:$0xff pattern:$0x73625140]
        %v1305 = vld.sshfl [vmem:[#allocation1 + $0x8] sm:$0xff pattern:$0x73625140]
        %v1306 = vld.sshfl [vmem:[#allocation1 + $0x10] sm:$0xff pattern:$0x73625140]
        %v1307 = vld.sshfl [vmem:[#allocation1 + $0x18] sm:$0xff pattern:$0x73625140]
        %v1308 = vld.sshfl [vmem:[#allocation1 + $0x20] sm:$0xff pattern:$0x73625140]
        %v1309 = vld.sshfl [vmem:[#allocation1 + $0x28] sm:$0xff pattern:$0x73625140]
        %v1310 = vld.sshfl [vmem:[#allocation1 + $0x30] sm:$0xff pattern:$0x73625140]
        %v1311 = vld.sshfl [vmem:[#allocation1 + $0x38] sm:$0xff pattern:$0x73625140]
        %1312 = vst [vmem:[#allocation1] ss:$4 sm:$0xff] %v263
        %1313 = vst [vmem:[%s1202] ss:$4 sm:$0xff] %v264
        %v1314 = vld.sshfl [vmem:[#allocation1] sm:$0xff pattern:$0x73625140]
        %v1315 = vld.sshfl [vmem:[#allocation1 + $0x8] sm:$0xff pattern:$0x73625140]
        %v1316 = vld.sshfl [vmem:[#allocation1 + $0x10] sm:$0xff pattern:$0x73625140]
        %v1317 = vld.sshfl [vmem:[#allocation1 + $0x18] sm:$0xff pattern:$0x73625140]
        %v1318 = vld.sshfl [vmem:[#allocation1 + $0x20] sm:$0xff pattern:$0x73625140]
        %v1319 = vld.sshfl [vmem:[#allocation1 + $0x28] sm:$0xff pattern:$0x73625140]
        %v1320 = vld.sshfl [vmem:[#allocation1 + $0x30] sm:$0xff pattern:$0x73625140]
        %v1321 = vld.sshfl [vmem:[#allocation1 + $0x38] sm:$0xff pattern:$0x73625140]
        %1322 = vst [vmem:[#allocation1] ss:$4 sm:$0xff] %v265
        %1323 = vst [vmem:[%s1202] ss:$4 sm:$0xff] %v266
        %v1324 = vld.sshfl [vmem:[#allocation1] sm:$0xff pattern:$0x73625140]
        %v1325 = vld.sshfl [vmem:[#allocation1 + $0x8] sm:$0xff pattern:$0x73625140]
        %v1326 = vld.sshfl [vmem:[#allocation1 + $0x10] sm:$0xff pattern:$0x73625140]
        %v1327 = vld.sshfl [vmem:[#allocation1 + $0x18] sm:$0xff pattern:$0x73625140]
        %v1328 = vld.sshfl [vmem:[#allocation1 + $0x20] sm:$0xff pattern:$0x73625140]
        %v1329 = vld.sshfl [vmem:[#allocation1 + $0x28] sm:$0xff pattern:$0x73625140]
        %v1330 = vld.sshfl [vmem:[#allocation1 + $0x30] sm:$0xff pattern:$0x73625140]
        %v1331 = vld.sshfl [vmem:[#allocation1 + $0x38] sm:$0xff pattern:$0x73625140]
        %1332 = vst [vmem:[#allocation1] ss:$4 sm:$0xff] %v267
        %1333 = vst [vmem:[%s1202] ss:$4 sm:$0xff] %v268
        %v1334 = vld.sshfl [vmem:[#allocation1] sm:$0xff pattern:$0x73625140]
        %v1335 = vld.sshfl [vmem:[#allocation1 + $0x8] sm:$0xff pattern:$0x73625140]
        %v1336 = vld.sshfl [vmem:[#allocation1 + $0x10] sm:$0xff pattern:$0x73625140]
        %v1337 = vld.sshfl [vmem:[#allocation1 + $0x18] sm:$0xff pattern:$0x73625140]
        %v1338 = vld.sshfl [vmem:[#allocation1 + $0x20] sm:$0xff pattern:$0x73625140]
        %v1339 = vld.sshfl [vmem:[#allocation1 + $0x28] sm:$0xff pattern:$0x73625140]
        %v1340 = vld.sshfl [vmem:[#allocation1 + $0x30] sm:$0xff pattern:$0x73625140]
        %v1341 = vld.sshfl [vmem:[#allocation1 + $0x38] sm:$0xff pattern:$0x73625140]
        %1342 = vst [vmem:[#allocation1] ss:$4 sm:$0xff] %v269
        %1343 = vst [vmem:[%s1202] ss:$4 sm:$0xff] %v270
        %v1344 = vld.sshfl [vmem:[#allocation1] sm:$0xff pattern:$0x73625140]
        %v1345 = vld.sshfl [vmem:[#allocation1 + $0x8] sm:$0xff pattern:$0x73625140]
        %v1346 = vld.sshfl [vmem:[#allocation1 + $0x10] sm:$0xff pattern:$0x73625140]
        %v1347 = vld.sshfl [vmem:[#allocation1 + $0x18] sm:$0xff pattern:$0x73625140]
        %v1348 = vld.sshfl [vmem:[#allocation1 + $0x20] sm:$0xff pattern:$0x73625140]
        %v1349 = vld.sshfl [vmem:[#allocation1 + $0x28] sm:$0xff pattern:$0x73625140]
        %v1350 = vld.sshfl [vmem:[#allocation1 + $0x30] sm:$0xff pattern:$0x73625140]
        %v1351 = vld.sshfl [vmem:[#allocation1 + $0x38] sm:$0xff pattern:$0x73625140]
        %1352 = vst [vmem:[#allocation1] ss:$4 sm:$0xff] %v271
        %1353 = vst [vmem:[%s1202] ss:$4 sm:$0xff] %v272
        %v1354 = vld.sshfl [vmem:[#allocation1] sm:$0xff pattern:$0x73625140]
        %v1355 = vld.sshfl [vmem:[#allocation1 + $0x8] sm:$0xff pattern:$0x73625140]
        %v1356 = vld.sshfl [vmem:[#allocation1 + $0x10] sm:$0xff pattern:$0x73625140]
        %v1357 = vld.sshfl [vmem:[#allocation1 + $0x18] sm:$0xff pattern:$0x73625140]
        %v1358 = vld.sshfl [vmem:[#allocation1 + $0x20] sm:$0xff pattern:$0x73625140]
        %v1359 = vld.sshfl [vmem:[#allocation1 + $0x28] sm:$0xff pattern:$0x73625140]
        %v1360 = vld.sshfl [vmem:[#allocation1 + $0x30] sm:$0xff pattern:$0x73625140]
        %v1361 = vld.sshfl [vmem:[#allocation1 + $0x38] sm:$0xff pattern:$0x73625140]
        %1362 = vst [vmem:[#allocation1] ss:$4 sm:$0xff] %v273
        %1363 = vst [vmem:[%s1202] ss:$4 sm:$0xff] %v274
        %v1364 = vld.sshfl [vmem:[#allocation1] sm:$0xff pattern:$0x73625140]
        %v1365 = vld.sshfl [vmem:[#allocation1 + $0x8] sm:$0xff pattern:$0x73625140]
        %v1366 = vld.sshfl [vmem:[#allocation1 + $0x10] sm:$0xff pattern:$0x73625140]
        %v1367 = vld.sshfl [vmem:[#allocation1 + $0x18] sm:$0xff pattern:$0x73625140]
        %v1368 = vld.sshfl [vmem:[#allocation1 + $0x20] sm:$0xff pattern:$0x73625140]
        %v1369 = vld.sshfl [vmem:[#allocation1 + $0x28] sm:$0xff pattern:$0x73625140]
        %v1370 = vld.sshfl [vmem:[#allocation1 + $0x30] sm:$0xff pattern:$0x73625140]
        %v1371 = vld.sshfl [vmem:[#allocation1 + $0x38] sm:$0xff pattern:$0x73625140]
        %1372 = vst [vmem:[#allocation1] ss:$4 sm:$0xff] %v275
        %1373 = vst [vmem:[%s1202] ss:$4 sm:$0xff] %v276
        %v1374 = vld.sshfl [vmem:[#allocation1] sm:$0xff pattern:$0x73625140]
        %v1375 = vld.sshfl [vmem:[#allocation1 + $0x8] sm:$0xff pattern:$0x73625140]
        %v1376 = vld.sshfl [vmem:[#allocation1 + $0x10] sm:$0xff pattern:$0x73625140]
        %v1377 = vld.sshfl [vmem:[#allocation1 + $0x18] sm:$0xff pattern:$0x73625140]
        %v1378 = vld.sshfl [vmem:[#allocation1 + $0x20] sm:$0xff pattern:$0x73625140]
        %v1379 = vld.sshfl [vmem:[#allocation1 + $0x28] sm:$0xff pattern:$0x73625140]
        %v1380 = vld.sshfl [vmem:[#allocation1 + $0x30] sm:$0xff pattern:$0x73625140]
        %v1381 = vld.sshfl [vmem:[#allocation1 + $0x38] sm:$0xff pattern:$0x73625140]
        %1382 = vst [vmem:[#allocation1] ss:$4 sm:$0xff] %v277
        %1383 = vst [vmem:[%s1202] ss:$4 sm:$0xff] %v278
        %v1384 = vld.sshfl [vmem:[#allocation1] sm:$0xff pattern:$0x73625140]
        %v1385 = vld.sshfl [vmem:[#allocation1 + $0x8] sm:$0xff pattern:$0x73625140]
        %v1386 = vld.sshfl [vmem:[#allocation1 + $0x10] sm:$0xff pattern:$0x73625140]
        %v1387 = vld.sshfl [vmem:[#allocation1 + $0x18] sm:$0xff pattern:$0x73625140]
        %v1388 = vld.sshfl [vmem:[#allocation1 + $0x20] sm:$0xff pattern:$0x73625140]
        %v1389 = vld.sshfl [vmem:[#allocation1 + $0x28] sm:$0xff pattern:$0x73625140]
        %v1390 = vld.sshfl [vmem:[#allocation1 + $0x30] sm:$0xff pattern:$0x73625140]
        %v1391 = vld.sshfl [vmem:[#allocation1 + $0x38] sm:$0xff pattern:$0x73625140]
        %1392 = vst [vmem:[#allocation1] ss:$4 sm:$0xff] %v279
        %1393 = vst [vmem:[%s1202] ss:$4 sm:$0xff] %v280
        %v1394 = vld.sshfl [vmem:[#allocation1] sm:$0xff pattern:$0x73625140]
        %v1395 = vld.sshfl [vmem:[#allocation1 + $0x8] sm:$0xff pattern:$0x73625140]
        %v1396 = vld.sshfl [vmem:[#allocation1 + $0x10] sm:$0xff pattern:$0x73625140]
        %v1397 = vld.sshfl [vmem:[#allocation1 + $0x18] sm:$0xff pattern:$0x73625140]
        %v1398 = vld.sshfl [vmem:[#allocation1 + $0x20] sm:$0xff pattern:$0x73625140]
        %v1399 = vld.sshfl [vmem:[#allocation1 + $0x28] sm:$0xff pattern:$0x73625140]
        %v1400 = vld.sshfl [vmem:[#allocation1 + $0x30] sm:$0xff pattern:$0x73625140]
        %v1401 = vld.sshfl [vmem:[#allocation1 + $0x38] sm:$0xff pattern:$0x73625140]
        %1402 = vst [vmem:[#allocation1] ss:$4 sm:$0xff] %v281
        %1403 = vst [vmem:[%s1202] ss:$4 sm:$0xff] %v282
        %v1404 = vld.sshfl [vmem:[#allocation1] sm:$0xff pattern:$0x73625140]
        %v1405 = vld.sshfl [vmem:[#allocation1 + $0x8] sm:$0xff pattern:$0x73625140]
        %v1406 = vld.sshfl [vmem:[#allocation1 + $0x10] sm:$0xff pattern:$0x73625140]
        %v1407 = vld.sshfl [vmem:[#allocation1 + $0x18] sm:$0xff pattern:$0x73625140]
        %v1408 = vld.sshfl [vmem:[#allocation1 + $0x20] sm:$0xff pattern:$0x73625140]
        %v1409 = vld.sshfl [vmem:[#allocation1 + $0x28] sm:$0xff pattern:$0x73625140]
        %v1410 = vld.sshfl [vmem:[#allocation1 + $0x30] sm:$0xff pattern:$0x73625140]
        %v1411 = vld.sshfl [vmem:[#allocation1 + $0x38] sm:$0xff pattern:$0x73625140]
        %1412 = vst [vmem:[#allocation1] ss:$4 sm:$0xff] %v283
        %1413 = vst [vmem:[%s1202] ss:$4 sm:$0xff] %v284
        %v1414 = vld.sshfl [vmem:[#allocation1] sm:$0xff pattern:$0x73625140]
        %v1415 = vld.sshfl [vmem:[#allocation1 + $0x8] sm:$0xff pattern:$0x73625140]
        %v1416 = vld.sshfl [vmem:[#allocation1 + $0x10] sm:$0xff pattern:$0x73625140]
        %v1417 = vld.sshfl [vmem:[#allocation1 + $0x18] sm:$0xff pattern:$0x73625140]
        %v1418 = vld.sshfl [vmem:[#allocation1 + $0x20] sm:$0xff pattern:$0x73625140]
        %v1419 = vld.sshfl [vmem:[#allocation1 + $0x28] sm:$0xff pattern:$0x73625140]
        %v1420 = vld.sshfl [vmem:[#allocation1 + $0x30] sm:$0xff pattern:$0x73625140]
        %v1421 = vld.sshfl [vmem:[#allocation1 + $0x38] sm:$0xff pattern:$0x73625140]
        %1422 = vst [vmem:[#allocation1] ss:$4 sm:$0xff] %v285
        %1423 = vst [vmem:[%s1202] ss:$4 sm:$0xff] %v286
        %v1424 = vld.sshfl [vmem:[#allocation1] sm:$0xff pattern:$0x73625140]
        %v1425 = vld.sshfl [vmem:[#allocation1 + $0x8] sm:$0xff pattern:$0x73625140]
        %v1426 = vld.sshfl [vmem:[#allocation1 + $0x10] sm:$0xff pattern:$0x73625140]
        %v1427 = vld.sshfl [vmem:[#allocation1 + $0x18] sm:$0xff pattern:$0x73625140]
        %v1428 = vld.sshfl [vmem:[#allocation1 + $0x20] sm:$0xff pattern:$0x73625140]
        %v1429 = vld.sshfl [vmem:[#allocation1 + $0x28] sm:$0xff pattern:$0x73625140]
        %v1430 = vld.sshfl [vmem:[#allocation1 + $0x30] sm:$0xff pattern:$0x73625140]
        %v1431 = vld.sshfl [vmem:[#allocation1 + $0x38] sm:$0xff pattern:$0x73625140]
        %1432 = vst [vmem:[#allocation1] ss:$4 sm:$0xff] %v287
        %1433 = vst [vmem:[%s1202] ss:$4 sm:$0xff] %v288
        %v1434 = vld.sshfl [vmem:[#allocation1] sm:$0xff pattern:$0x73625140]
        %v1435 = vld.sshfl [vmem:[#allocation1 + $0x8] sm:$0xff pattern:$0x73625140]
        %v1436 = vld.sshfl [vmem:[#allocation1 + $0x10] sm:$0xff pattern:$0x73625140]
        %v1437 = vld.sshfl [vmem:[#allocation1 + $0x18] sm:$0xff pattern:$0x73625140]
        %v1438 = vld.sshfl [vmem:[#allocation1 + $0x20] sm:$0xff pattern:$0x73625140]
        %v1439 = vld.sshfl [vmem:[#allocation1 + $0x28] sm:$0xff pattern:$0x73625140]
        %v1440 = vld.sshfl [vmem:[#allocation1 + $0x30] sm:$0xff pattern:$0x73625140]
        %v1441 = vld.sshfl [vmem:[#allocation1 + $0x38] sm:$0xff pattern:$0x73625140]
        %1442 = vst [vmem:[#allocation1] ss:$4 sm:$0xff] %v289
        %1443 = vst [vmem:[%s1202] ss:$4 sm:$0xff] %v290
        %v1444 = vld.sshfl [vmem:[#allocation1] sm:$0xff pattern:$0x73625140]
        %v1445 = vld.sshfl [vmem:[#allocation1 + $0x8] sm:$0xff pattern:$0x73625140]
        %v1446 = vld.sshfl [vmem:[#allocation1 + $0x10] sm:$0xff pattern:$0x73625140]
        %v1447 = vld.sshfl [vmem:[#allocation1 + $0x18] sm:$0xff pattern:$0x73625140]
        %v1448 = vld.sshfl [vmem:[#allocation1 + $0x20] sm:$0xff pattern:$0x73625140]
        %v1449 = vld.sshfl [vmem:[#allocation1 + $0x28] sm:$0xff pattern:$0x73625140]
        %v1450 = vld.sshfl [vmem:[#allocation1 + $0x30] sm:$0xff pattern:$0x73625140]
        %v1451 = vld.sshfl [vmem:[#allocation1 + $0x38] sm:$0xff pattern:$0x73625140]
        %1452 = vst [vmem:[#allocation1] ss:$4 sm:$0xff] %v291
        %1453 = vst [vmem:[%s1202] ss:$4 sm:$0xff] %v292
        %v1454 = vld.sshfl [vmem:[#allocation1] sm:$0xff pattern:$0x73625140]
        %v1455 = vld.sshfl [vmem:[#allocation1 + $0x8] sm:$0xff pattern:$0x73625140]
        %v1456 = vld.sshfl [vmem:[#allocation1 + $0x10] sm:$0xff pattern:$0x73625140]
        %v1457 = vld.sshfl [vmem:[#allocation1 + $0x18] sm:$0xff pattern:$0x73625140]
        %v1458 = vld.sshfl [vmem:[#allocation1 + $0x20] sm:$0xff pattern:$0x73625140]
        %v1459 = vld.sshfl [vmem:[#allocation1 + $0x28] sm:$0xff pattern:$0x73625140]
        %v1460 = vld.sshfl [vmem:[#allocation1 + $0x30] sm:$0xff pattern:$0x73625140]
        %v1461 = vld.sshfl [vmem:[#allocation1 + $0x38] sm:$0xff pattern:$0x73625140]
        %1462 = vst [vmem:[#allocation1] ss:$4 sm:$0xff] %v293
        %1463 = vst [vmem:[%s1202] ss:$4 sm:$0xff] %v294
        %v1464 = vld.sshfl [vmem:[#allocation1] sm:$0xff pattern:$0x73625140]
        %v1465 = vld.sshfl [vmem:[#allocation1 + $0x8] sm:$0xff pattern:$0x73625140]
        %v1466 = vld.sshfl [vmem:[#allocation1 + $0x10] sm:$0xff pattern:$0x73625140]
        %v1467 = vld.sshfl [vmem:[#allocation1 + $0x18] sm:$0xff pattern:$0x73625140]
        %v1468 = vld.sshfl [vmem:[#allocation1 + $0x20] sm:$0xff pattern:$0x73625140]
        %v1469 = vld.sshfl [vmem:[#allocation1 + $0x28] sm:$0xff pattern:$0x73625140]
        %v1470 = vld.sshfl [vmem:[#allocation1 + $0x30] sm:$0xff pattern:$0x73625140]
        %v1471 = vld.sshfl [vmem:[#allocation1 + $0x38] sm:$0xff pattern:$0x73625140]
        %1472 = vst [vmem:[#allocation1] ss:$4 sm:$0xff] %v295
        %1473 = vst [vmem:[%s1202] ss:$4 sm:$0xff] %v296
        %v1474 = vld.sshfl [vmem:[#allocation1] sm:$0xff pattern:$0x73625140]
        %v1475 = vld.sshfl [vmem:[#allocation1 + $0x8] sm:$0xff pattern:$0x73625140]
        %v1476 = vld.sshfl [vmem:[#allocation1 + $0x10] sm:$0xff pattern:$0x73625140]
        %v1477 = vld.sshfl [vmem:[#allocation1 + $0x18] sm:$0xff pattern:$0x73625140]
        %v1478 = vld.sshfl [vmem:[#allocation1 + $0x20] sm:$0xff pattern:$0x73625140]
        %v1479 = vld.sshfl [vmem:[#allocation1 + $0x28] sm:$0xff pattern:$0x73625140]
        %v1480 = vld.sshfl [vmem:[#allocation1 + $0x30] sm:$0xff pattern:$0x73625140]
        %v1481 = vld.sshfl [vmem:[#allocation1 + $0x38] sm:$0xff pattern:$0x73625140]
        %1482 = vst [vmem:[#allocation1] ss:$4 sm:$0xff] %v297
        %1483 = vst [vmem:[%s1202] ss:$4 sm:$0xff] %v298
        %v1484 = vld.sshfl [vmem:[#allocation1] sm:$0xff pattern:$0x73625140]
        %v1485 = vld.sshfl [vmem:[#allocation1 + $0x8] sm:$0xff pattern:$0x73625140]
        %v1486 = vld.sshfl [vmem:[#allocation1 + $0x10] sm:$0xff pattern:$0x73625140]
        %v1487 = vld.sshfl [vmem:[#allocation1 + $0x18] sm:$0xff pattern:$0x73625140]
        %v1488 = vld.sshfl [vmem:[#allocation1 + $0x20] sm:$0xff pattern:$0x73625140]
        %v1489 = vld.sshfl [vmem:[#allocation1 + $0x28] sm:$0xff pattern:$0x73625140]
        %v1490 = vld.sshfl [vmem:[#allocation1 + $0x30] sm:$0xff pattern:$0x73625140]
        %v1491 = vld.sshfl [vmem:[#allocation1 + $0x38] sm:$0xff pattern:$0x73625140]
        %1492 = vst [vmem:[#allocation1] ss:$4 sm:$0xff] %v299
        %1493 = vst [vmem:[%s1202] ss:$4 sm:$0xff] %v300
        %v1494 = vld.sshfl [vmem:[#allocation1] sm:$0xff pattern:$0x73625140]
        %v1495 = vld.sshfl [vmem:[#allocation1 + $0x8] sm:$0xff pattern:$0x73625140]
        %v1496 = vld.sshfl [vmem:[#allocation1 + $0x10] sm:$0xff pattern:$0x73625140]
        %v1497 = vld.sshfl [vmem:[#allocation1 + $0x18] sm:$0xff pattern:$0x73625140]
        %v1498 = vld.sshfl [vmem:[#allocation1 + $0x20] sm:$0xff pattern:$0x73625140]
        %v1499 = vld.sshfl [vmem:[#allocation1 + $0x28] sm:$0xff pattern:$0x73625140]
        %v1500 = vld.sshfl [vmem:[#allocation1 + $0x30] sm:$0xff pattern:$0x73625140]
        %v1501 = vld.sshfl [vmem:[#allocation1 + $0x38] sm:$0xff pattern:$0x73625140]
        %1502 = vst [vmem:[#allocation1] ss:$4 sm:$0xff] %v301
        %1503 = vst [vmem:[%s1202] ss:$4 sm:$0xff] %v302
        %v1504 = vld.sshfl [vmem:[#allocation1] sm:$0xff pattern:$0x73625140]
        %v1505 = vld.sshfl [vmem:[#allocation1 + $0x8] sm:$0xff pattern:$0x73625140]
        %v1506 = vld.sshfl [vmem:[#allocation1 + $0x10] sm:$0xff pattern:$0x73625140]
        %v1507 = vld.sshfl [vmem:[#allocation1 + $0x18] sm:$0xff pattern:$0x73625140]
        %v1508 = vld.sshfl [vmem:[#allocation1 + $0x20] sm:$0xff pattern:$0x73625140]
        %v1509 = vld.sshfl [vmem:[#allocation1 + $0x28] sm:$0xff pattern:$0x73625140]
        %v1510 = vld.sshfl [vmem:[#allocation1 + $0x30] sm:$0xff pattern:$0x73625140]
        %v1511 = vld.sshfl [vmem:[#allocation1 + $0x38] sm:$0xff pattern:$0x73625140]
        %1512 = vst [vmem:[#allocation1] ss:$4 sm:$0xff] %v303
        %1513 = vst [vmem:[%s1202] ss:$4 sm:$0xff] %v304
        %v1514 = vld.sshfl [vmem:[#allocation1] sm:$0xff pattern:$0x73625140]
        %v1515 = vld.sshfl [vmem:[#allocation1 + $0x8] sm:$0xff pattern:$0x73625140]
        %v1516 = vld.sshfl [vmem:[#allocation1 + $0x10] sm:$0xff pattern:$0x73625140]
        %v1517 = vld.sshfl [vmem:[#allocation1 + $0x18] sm:$0xff pattern:$0x73625140]
        %v1518 = vld.sshfl [vmem:[#allocation1 + $0x20] sm:$0xff pattern:$0x73625140]
        %v1519 = vld.sshfl [vmem:[#allocation1 + $0x28] sm:$0xff pattern:$0x73625140]
        %v1520 = vld.sshfl [vmem:[#allocation1 + $0x30] sm:$0xff pattern:$0x73625140]
        %v1521 = vld.sshfl [vmem:[#allocation1 + $0x38] sm:$0xff pattern:$0x73625140]
        %1522 = vst [vmem:[#allocation1] ss:$4 sm:$0xff] %v305
        %1523 = vst [vmem:[%s1202] ss:$4 sm:$0xff] %v306
        %v1524 = vld.sshfl [vmem:[#allocation1] sm:$0xff pattern:$0x73625140]
        %v1525 = vld.sshfl [vmem:[#allocation1 + $0x8] sm:$0xff pattern:$0x73625140]
        %v1526 = vld.sshfl [vmem:[#allocation1 + $0x10] sm:$0xff pattern:$0x73625140]
        %v1527 = vld.sshfl [vmem:[#allocation1 + $0x18] sm:$0xff pattern:$0x73625140]
        %v1528 = vld.sshfl [vmem:[#allocation1 + $0x20] sm:$0xff pattern:$0x73625140]
        %v1529 = vld.sshfl [vmem:[#allocation1 + $0x28] sm:$0xff pattern:$0x73625140]
        %v1530 = vld.sshfl [vmem:[#allocation1 + $0x30] sm:$0xff pattern:$0x73625140]
        %v1531 = vld.sshfl [vmem:[#allocation1 + $0x38] sm:$0xff pattern:$0x73625140]
        %1532 = vst [vmem:[#allocation1] ss:$4 sm:$0xff] %v307
        %1533 = vst [vmem:[%s1202] ss:$4 sm:$0xff] %v308
        %v1534 = vld.sshfl [vmem:[#allocation1] sm:$0xff pattern:$0x73625140]
        %v1535 = vld.sshfl [vmem:[#allocation1 + $0x8] sm:$0xff pattern:$0x73625140]
        %v1536 = vld.sshfl [vmem:[#allocation1 + $0x10] sm:$0xff pattern:$0x73625140]
        %v1537 = vld.sshfl [vmem:[#allocation1 + $0x18] sm:$0xff pattern:$0x73625140]
        %v1538 = vld.sshfl [vmem:[#allocation1 + $0x20] sm:$0xff pattern:$0x73625140]
        %v1539 = vld.sshfl [vmem:[#allocation1 + $0x28] sm:$0xff pattern:$0x73625140]
        %v1540 = vld.sshfl [vmem:[#allocation1 + $0x30] sm:$0xff pattern:$0x73625140]
        %v1541 = vld.sshfl [vmem:[#allocation1 + $0x38] sm:$0xff pattern:$0x73625140]
        %1542 = vst [vmem:[#allocation1] ss:$4 sm:$0xff] %v309
        %1543 = vst [vmem:[%s1202] ss:$4 sm:$0xff] %v310
        %v1544 = vld.sshfl [vmem:[#allocation1] sm:$0xff pattern:$0x73625140]
        %v1545 = vld.sshfl [vmem:[#allocation1 + $0x8] sm:$0xff pattern:$0x73625140]
        %v1546 = vld.sshfl [vmem:[#allocation1 + $0x10] sm:$0xff pattern:$0x73625140]
        %v1547 = vld.sshfl [vmem:[#allocation1 + $0x18] sm:$0xff pattern:$0x73625140]
        %v1548 = vld.sshfl [vmem:[#allocation1 + $0x20] sm:$0xff pattern:$0x73625140]
        %v1549 = vld.sshfl [vmem:[#allocation1 + $0x28] sm:$0xff pattern:$0x73625140]
        %v1550 = vld.sshfl [vmem:[#allocation1 + $0x30] sm:$0xff pattern:$0x73625140]
        %v1551 = vld.sshfl [vmem:[#allocation1 + $0x38] sm:$0xff pattern:$0x73625140]
        %1552 = vst [vmem:[#allocation1] ss:$4 sm:$0xff] %v311
        %1553 = vst [vmem:[%s1202] ss:$4 sm:$0xff] %v312
        %v1554 = vld.sshfl [vmem:[#allocation1] sm:$0xff pattern:$0x73625140]
        %v1555 = vld.sshfl [vmem:[#allocation1 + $0x8] sm:$0xff pattern:$0x73625140]
        %v1556 = vld.sshfl [vmem:[#allocation1 + $0x10] sm:$0xff pattern:$0x73625140]
        %v1557 = vld.sshfl [vmem:[#allocation1 + $0x18] sm:$0xff pattern:$0x73625140]
        %v1558 = vld.sshfl [vmem:[#allocation1 + $0x20] sm:$0xff pattern:$0x73625140]
        %v1559 = vld.sshfl [vmem:[#allocation1 + $0x28] sm:$0xff pattern:$0x73625140]
        %v1560 = vld.sshfl [vmem:[#allocation1 + $0x30] sm:$0xff pattern:$0x73625140]
        %v1561 = vld.sshfl [vmem:[#allocation1 + $0x38] sm:$0xff pattern:$0x73625140]
        %1562 = vst [vmem:[#allocation1] ss:$4 sm:$0xff] %v313
        %1563 = vst [vmem:[%s1202] ss:$4 sm:$0xff] %v314
        %v1564 = vld.sshfl [vmem:[#allocation1] sm:$0xff pattern:$0x73625140]
        %v1565 = vld.sshfl [vmem:[#allocation1 + $0x8] sm:$0xff pattern:$0x73625140]
        %v1566 = vld.sshfl [vmem:[#allocation1 + $0x10] sm:$0xff pattern:$0x73625140]
        %v1567 = vld.sshfl [vmem:[#allocation1 + $0x18] sm:$0xff pattern:$0x73625140]
        %v1568 = vld.sshfl [vmem:[#allocation1 + $0x20] sm:$0xff pattern:$0x73625140]
        %v1569 = vld.sshfl [vmem:[#allocation1 + $0x28] sm:$0xff pattern:$0x73625140]
        %v1570 = vld.sshfl [vmem:[#allocation1 + $0x30] sm:$0xff pattern:$0x73625140]
        %v1571 = vld.sshfl [vmem:[#allocation1 + $0x38] sm:$0xff pattern:$0x73625140]
        %1572 = vst [vmem:[#allocation1] ss:$4 sm:$0xff] %v315
        %1573 = vst [vmem:[%s1202] ss:$4 sm:$0xff] %v316
        %v1574 = vld.sshfl [vmem:[#allocation1] sm:$0xff pattern:$0x73625140]
        %v1575 = vld.sshfl [vmem:[#allocation1 + $0x8] sm:$0xff pattern:$0x73625140]
        %v1576 = vld.sshfl [vmem:[#allocation1 + $0x10] sm:$0xff pattern:$0x73625140]
        %v1577 = vld.sshfl [vmem:[#allocation1 + $0x18] sm:$0xff pattern:$0x73625140]
        %v1578 = vld.sshfl [vmem:[#allocation1 + $0x20] sm:$0xff pattern:$0x73625140]
        %v1579 = vld.sshfl [vmem:[#allocation1 + $0x28] sm:$0xff pattern:$0x73625140]
        %v1580 = vld.sshfl [vmem:[#allocation1 + $0x30] sm:$0xff pattern:$0x73625140]
        %v1581 = vld.sshfl [vmem:[#allocation1 + $0x38] sm:$0xff pattern:$0x73625140]
        %1582 = vst [vmem:[#allocation1] ss:$4 sm:$0xff] %v317
        %1583 = vst [vmem:[%s1202] ss:$4 sm:$0xff] %v318
        %v1584 = vld.sshfl [vmem:[#allocation1] sm:$0xff pattern:$0x73625140]
        %v1585 = vld.sshfl [vmem:[#allocation1 + $0x8] sm:$0xff pattern:$0x73625140]
        %v1586 = vld.sshfl [vmem:[#allocation1 + $0x10] sm:$0xff pattern:$0x73625140]
        %v1587 = vld.sshfl [vmem:[#allocation1 + $0x18] sm:$0xff pattern:$0x73625140]
        %v1588 = vld.sshfl [vmem:[#allocation1 + $0x20] sm:$0xff pattern:$0x73625140]
        %v1589 = vld.sshfl [vmem:[#allocation1 + $0x28] sm:$0xff pattern:$0x73625140]
        %v1590 = vld.sshfl [vmem:[#allocation1 + $0x30] sm:$0xff pattern:$0x73625140]
        %v1591 = vld.sshfl [vmem:[#allocation1 + $0x38] sm:$0xff pattern:$0x73625140]
        %1592 = vst [vmem:[#allocation1] ss:$4 sm:$0xff] %v319
        %1593 = vst [vmem:[%s1202] ss:$4 sm:$0xff] %v320
        %v1594 = vld.sshfl [vmem:[#allocation1] sm:$0xff pattern:$0x73625140]
        %v1595 = vld.sshfl [vmem:[#allocation1 + $0x8] sm:$0xff pattern:$0x73625140]
        %v1596 = vld.sshfl [vmem:[#allocation1 + $0x10] sm:$0xff pattern:$0x73625140]
        %v1597 = vld.sshfl [vmem:[#allocation1 + $0x18] sm:$0xff pattern:$0x73625140]
        %v1598 = vld.sshfl [vmem:[#allocation1 + $0x20] sm:$0xff pattern:$0x73625140]
        %v1599 = vld.sshfl [vmem:[#allocation1 + $0x28] sm:$0xff pattern:$0x73625140]
        %v1600 = vld.sshfl [vmem:[#allocation1 + $0x30] sm:$0xff pattern:$0x73625140]
        %v1601 = vld.sshfl [vmem:[#allocation1 + $0x38] sm:$0xff pattern:$0x73625140]
        %1602 = vst [vmem:[#allocation1] ss:$4 sm:$0xff] %v321
        %1603 = vst [vmem:[%s1202] ss:$4 sm:$0xff] %v322
        %v1604 = vld.sshfl [vmem:[#allocation1] sm:$0xff pattern:$0x73625140]
        %v1605 = vld.sshfl [vmem:[#allocation1 + $0x8] sm:$0xff pattern:$0x73625140]
        %v1606 = vld.sshfl [vmem:[#allocation1 + $0x10] sm:$0xff pattern:$0x73625140]
        %v1607 = vld.sshfl [vmem:[#allocation1 + $0x18] sm:$0xff pattern:$0x73625140]
        %v1608 = vld.sshfl [vmem:[#allocation1 + $0x20] sm:$0xff pattern:$0x73625140]
        %v1609 = vld.sshfl [vmem:[#allocation1 + $0x28] sm:$0xff pattern:$0x73625140]
        %v1610 = vld.sshfl [vmem:[#allocation1 + $0x30] sm:$0xff pattern:$0x73625140]
        %v1611 = vld.sshfl [vmem:[#allocation1 + $0x38] sm:$0xff pattern:$0x73625140]
        %1612 = vst [vmem:[#allocation1] ss:$4 sm:$0xff] %v323
        %1613 = vst [vmem:[%s1202] ss:$4 sm:$0xff] %v324
        %v1614 = vld.sshfl [vmem:[#allocation1] sm:$0xff pattern:$0x73625140]
        %v1615 = vld.sshfl [vmem:[#allocation1 + $0x8] sm:$0xff pattern:$0x73625140]
        %v1616 = vld.sshfl [vmem:[#allocation1 + $0x10] sm:$0xff pattern:$0x73625140]
        %v1617 = vld.sshfl [vmem:[#allocation1 + $0x18] sm:$0xff pattern:$0x73625140]
        %v1618 = vld.sshfl [vmem:[#allocation1 + $0x20] sm:$0xff pattern:$0x73625140]
        %v1619 = vld.sshfl [vmem:[#allocation1 + $0x28] sm:$0xff pattern:$0x73625140]
        %v1620 = vld.sshfl [vmem:[#allocation1 + $0x30] sm:$0xff pattern:$0x73625140]
        %v1621 = vld.sshfl [vmem:[#allocation1 + $0x38] sm:$0xff pattern:$0x73625140]
        %1622 = vst [vmem:[#allocation1] ss:$4 sm:$0xff] %v325
        %1623 = vst [vmem:[%s1202] ss:$4 sm:$0xff] %v326
        %v1624 = vld.sshfl [vmem:[#allocation1] sm:$0xff pattern:$0x73625140]
        %v1625 = vld.sshfl [vmem:[#allocation1 + $0x8] sm:$0xff pattern:$0x73625140]
        %v1626 = vld.sshfl [vmem:[#allocation1 + $0x10] sm:$0xff pattern:$0x73625140]
        %v1627 = vld.sshfl [vmem:[#allocation1 + $0x18] sm:$0xff pattern:$0x73625140]
        %v1628 = vld.sshfl [vmem:[#allocation1 + $0x20] sm:$0xff pattern:$0x73625140]
        %v1629 = vld.sshfl [vmem:[#allocation1 + $0x28] sm:$0xff pattern:$0x73625140]
        %v1630 = vld.sshfl [vmem:[#allocation1 + $0x30] sm:$0xff pattern:$0x73625140]
        %v1631 = vld.sshfl [vmem:[#allocation1 + $0x38] sm:$0xff pattern:$0x73625140]
        %1632 = vst [vmem:[#allocation1] ss:$4 sm:$0xff] %v327
        %1633 = vst [vmem:[%s1202] ss:$4 sm:$0xff] %v328
        %v1634 = vld.sshfl [vmem:[#allocation1] sm:$0xff pattern:$0x73625140]
        %v1635 = vld.sshfl [vmem:[#allocation1 + $0x8] sm:$0xff pattern:$0x73625140]
        %v1636 = vld.sshfl [vmem:[#allocation1 + $0x10] sm:$0xff pattern:$0x73625140]
        %v1637 = vld.sshfl [vmem:[#allocation1 + $0x18] sm:$0xff pattern:$0x73625140]
        %v1638 = vld.sshfl [vmem:[#allocation1 + $0x20] sm:$0xff pattern:$0x73625140]
        %v1639 = vld.sshfl [vmem:[#allocation1 + $0x28] sm:$0xff pattern:$0x73625140]
        %v1640 = vld.sshfl [vmem:[#allocation1 + $0x30] sm:$0xff pattern:$0x73625140]
        %v1641 = vld.sshfl [vmem:[#allocation1 + $0x38] sm:$0xff pattern:$0x73625140]
        %1642 = vst [vmem:[#allocation1] ss:$4 sm:$0xff] %v329
        %1643 = vst [vmem:[%s1202] ss:$4 sm:$0xff] %v330
        %v1644 = vld.sshfl [vmem:[#allocation1] sm:$0xff pattern:$0x73625140]
        %v1645 = vld.sshfl [vmem:[#allocation1 + $0x8] sm:$0xff pattern:$0x73625140]
        %v1646 = vld.sshfl [vmem:[#allocation1 + $0x10] sm:$0xff pattern:$0x73625140]
        %v1647 = vld.sshfl [vmem:[#allocation1 + $0x18] sm:$0xff pattern:$0x73625140]
        %v1648 = vld.sshfl [vmem:[#allocation1 + $0x20] sm:$0xff pattern:$0x73625140]
        %v1649 = vld.sshfl [vmem:[#allocation1 + $0x28] sm:$0xff pattern:$0x73625140]
        %v1650 = vld.sshfl [vmem:[#allocation1 + $0x30] sm:$0xff pattern:$0x73625140]
        %v1651 = vld.sshfl [vmem:[#allocation1 + $0x38] sm:$0xff pattern:$0x73625140]
        %1652 = vst [vmem:[#allocation1] ss:$4 sm:$0xff] %v331
        %1653 = vst [vmem:[%s1202] ss:$4 sm:$0xff] %v332
        %v1654 = vld.sshfl [vmem:[#allocation1] sm:$0xff pattern:$0x73625140]
        %v1655 = vld.sshfl [vmem:[#allocation1 + $0x8] sm:$0xff pattern:$0x73625140]
        %v1656 = vld.sshfl [vmem:[#allocation1 + $0x10] sm:$0xff pattern:$0x73625140]
        %v1657 = vld.sshfl [vmem:[#allocation1 + $0x18] sm:$0xff pattern:$0x73625140]
        %v1658 = vld.sshfl [vmem:[#allocation1 + $0x20] sm:$0xff pattern:$0x73625140]
        %v1659 = vld.sshfl [vmem:[#allocation1 + $0x28] sm:$0xff pattern:$0x73625140]
        %v1660 = vld.sshfl [vmem:[#allocation1 + $0x30] sm:$0xff pattern:$0x73625140]
        %v1661 = vld.sshfl [vmem:[#allocation1 + $0x38] sm:$0xff pattern:$0x73625140]
        %1662 = vst [vmem:[#allocation1] ss:$4 sm:$0xff] %v333
        %1663 = vst [vmem:[%s1202] ss:$4 sm:$0xff] %v334
        %v1664 = vld.sshfl [vmem:[#allocation1] sm:$0xff pattern:$0x73625140]
        %v1665 = vld.sshfl [vmem:[#allocation1 + $0x8] sm:$0xff pattern:$0x73625140]
        %v1666 = vld.sshfl [vmem:[#allocation1 + $0x10] sm:$0xff pattern:$0x73625140]
        %v1667 = vld.sshfl [vmem:[#allocation1 + $0x18] sm:$0xff pattern:$0x73625140]
        %v1668 = vld.sshfl [vmem:[#allocation1 + $0x20] sm:$0xff pattern:$0x73625140]
        %v1669 = vld.sshfl [vmem:[#allocation1 + $0x28] sm:$0xff pattern:$0x73625140]
        %v1670 = vld.sshfl [vmem:[#allocation1 + $0x30] sm:$0xff pattern:$0x73625140]
        %v1671 = vld.sshfl [vmem:[#allocation1 + $0x38] sm:$0xff pattern:$0x73625140]
        %1672 = vst [vmem:[#allocation1] ss:$4 sm:$0xff] %v335
        %1673 = vst [vmem:[%s1202] ss:$4 sm:$0xff] %v336
        %v1674 = vld.sshfl [vmem:[#allocation1] sm:$0xff pattern:$0x73625140]
        %v1675 = vld.sshfl [vmem:[#allocation1 + $0x8] sm:$0xff pattern:$0x73625140]
        %v1676 = vld.sshfl [vmem:[#allocation1 + $0x10] sm:$0xff pattern:$0x73625140]
        %v1677 = vld.sshfl [vmem:[#allocation1 + $0x18] sm:$0xff pattern:$0x73625140]
        %v1678 = vld.sshfl [vmem:[#allocation1 + $0x20] sm:$0xff pattern:$0x73625140]
        %v1679 = vld.sshfl [vmem:[#allocation1 + $0x28] sm:$0xff pattern:$0x73625140]
        %v1680 = vld.sshfl [vmem:[#allocation1 + $0x30] sm:$0xff pattern:$0x73625140]
        %v1681 = vld.sshfl [vmem:[#allocation1 + $0x38] sm:$0xff pattern:$0x73625140]
        %2066 = vmatpush.xpose.msra.mxu0 0.0
        %2067 = vmatpush.xpose.msra.mxu0 0.0
        %2068 = vmatpush.xpose.msra.mxu0 0.0
        %2069 = vmatpush.xpose.msra.mxu0 0.0
        %2070 = vmatpush.xpose.msra.mxu0 0.0
        %2071 = vmatpush.xpose.msra.mxu0 0.0
        %2072 = vmatpush.xpose.msra.mxu0 0.0
        %2073 = vmatpush.xpose.msra.mxu0 0.0
        %2074 = vmatpush.xpose.msra.mxu0 0.0
        %2075 = vmatpush.xpose.msra.mxu0 0.0
        %2076 = vmatpush.xpose.msra.mxu0 0.0
        %2077 = vmatpush.xpose.msra.mxu0 0.0
        %2078 = vmatpush.xpose.msra.mxu0 0.0
        %2079 = vmatpush.xpose.msra.mxu0 0.0
        %2080 = vmatpush.xpose.msra.mxu0 %v721
        %2081 = vmatpush.xpose.msra.mxu0 %v337
        %2082 = vmatmul.f32.gmra.mxu0 %v1204
        %v2083 = vpop.f32.mrf.mxu0
        %v2084 = vadd.f32 0.0, %v2083
        %2085 = vdwg.mxu0
        %2086 = vmatpush.xpose.msra.mxu0 0.0
        %2087 = vmatpush.xpose.msra.mxu0 0.0
        %2088 = vmatpush.xpose.msra.mxu0 0.0
        %2089 = vmatpush.xpose.msra.mxu0 0.0
        %2090 = vmatpush.xpose.msra.mxu0 0.0
        %2091 = vmatpush.xpose.msra.mxu0 0.0
        %2092 = vmatpush.xpose.msra.mxu0 0.0
        %2093 = vmatpush.xpose.msra.mxu0 0.0
        %2094 = vmatpush.xpose.msra.mxu0 0.0
        %2095 = vmatpush.xpose.msra.mxu0 0.0
        %2096 = vmatpush.xpose.msra.mxu0 0.0
        %2097 = vmatpush.xpose.msra.mxu0 0.0
        %2098 = vmatpush.xpose.msra.mxu0 0.0
        %2099 = vmatpush.xpose.msra.mxu0 0.0
        %2100 = vmatpush.xpose.msra.mxu0 %v722
        %2101 = vmatpush.xpose.msra.mxu0 %v338
        %2102 = vmatmul.f32.gmra.mxu0 %v1205
        %v2103 = vpop.f32.mrf.mxu0
        %v2104 = vadd.f32 %v2084, %v2103
        %2105 = vdwg.mxu0
        %2106 = vmatpush.xpose.msra.mxu0 0.0
        %2107 = vmatpush.xpose.msra.mxu0 0.0
        %2108 = vmatpush.xpose.msra.mxu0 0.0
        %2109 = vmatpush.xpose.msra.mxu0 0.0
        %2110 = vmatpush.xpose.msra.mxu0 0.0
        %2111 = vmatpush.xpose.msra.mxu0 0.0
        %2112 = vmatpush.xpose.msra.mxu0 0.0
        %2113 = vmatpush.xpose.msra.mxu0 0.0
        %2114 = vmatpush.xpose.msra.mxu0 0.0
        %2115 = vmatpush.xpose.msra.mxu0 0.0
        %2116 = vmatpush.xpose.msra.mxu0 0.0
        %2117 = vmatpush.xpose.msra.mxu0 0.0
        %2118 = vmatpush.xpose.msra.mxu0 0.0
        %2119 = vmatpush.xpose.msra.mxu0 0.0
        %2120 = vmatpush.xpose.msra.mxu0 %v723
        %2121 = vmatpush.xpose.msra.mxu0 %v339
        %2122 = vmatmul.f32.gmra.mxu0 %v1206
        %v2123 = vpop.f32.mrf.mxu0
        %v2124 = vadd.f32 %v2104, %v2123
        %2125 = vdwg.mxu0
        %2126 = vmatpush.xpose.msra.mxu0 0.0
        %2127 = vmatpush.xpose.msra.mxu0 0.0
        %2128 = vmatpush.xpose.msra.mxu0 0.0
        %2129 = vmatpush.xpose.msra.mxu0 0.0
        %2130 = vmatpush.xpose.msra.mxu0 0.0
        %2131 = vmatpush.xpose.msra.mxu0 0.0
        %2132 = vmatpush.xpose.msra.mxu0 0.0
        %2133 = vmatpush.xpose.msra.mxu0 0.0
        %2134 = vmatpush.xpose.msra.mxu0 0.0
        %2135 = vmatpush.xpose.msra.mxu0 0.0
        %2136 = vmatpush.xpose.msra.mxu0 0.0
        %2137 = vmatpush.xpose.msra.mxu0 0.0
        %2138 = vmatpush.xpose.msra.mxu0 0.0
        %2139 = vmatpush.xpose.msra.mxu0 0.0
        %2140 = vmatpush.xpose.msra.mxu0 %v724
        %2141 = vmatpush.xpose.msra.mxu0 %v340
        %2142 = vmatmul.f32.gmra.mxu0 %v1207
        %v2143 = vpop.f32.mrf.mxu0
        %v2144 = vadd.f32 %v2124, %v2143
        %2145 = vdwg.mxu0
        %2146 = vmatpush.xpose.msra.mxu0 0.0
        %2147 = vmatpush.xpose.msra.mxu0 0.0
        %2148 = vmatpush.xpose.msra.mxu0 0.0
        %2149 = vmatpush.xpose.msra.mxu0 0.0
        %2150 = vmatpush.xpose.msra.mxu0 0.0
        %2151 = vmatpush.xpose.msra.mxu0 0.0
        %2152 = vmatpush.xpose.msra.mxu0 0.0
        %2153 = vmatpush.xpose.msra.mxu0 0.0
        %2154 = vmatpush.xpose.msra.mxu0 0.0
        %2155 = vmatpush.xpose.msra.mxu0 0.0
        %2156 = vmatpush.xpose.msra.mxu0 0.0
        %2157 = vmatpush.xpose.msra.mxu0 0.0
        %2158 = vmatpush.xpose.msra.mxu0 0.0
        %2159 = vmatpush.xpose.msra.mxu0 0.0
        %2160 = vmatpush.xpose.msra.mxu0 %v725
        %2161 = vmatpush.xpose.msra.mxu0 %v341
        %2162 = vmatmul.f32.gmra.mxu0 %v1208
        %v2163 = vpop.f32.mrf.mxu0
        %v2164 = vadd.f32 %v2144, %v2163
        %2165 = vdwg.mxu0
        %2166 = vmatpush.xpose.msra.mxu0 0.0
        %2167 = vmatpush.xpose.msra.mxu0 0.0
        %2168 = vmatpush.xpose.msra.mxu0 0.0
        %2169 = vmatpush.xpose.msra.mxu0 0.0
        %2170 = vmatpush.xpose.msra.mxu0 0.0
        %2171 = vmatpush.xpose.msra.mxu0 0.0
        %2172 = vmatpush.xpose.msra.mxu0 0.0
        %2173 = vmatpush.xpose.msra.mxu0 0.0
        %2174 = vmatpush.xpose.msra.mxu0 0.0
        %2175 = vmatpush.xpose.msra.mxu0 0.0
        %2176 = vmatpush.xpose.msra.mxu0 0.0
        %2177 = vmatpush.xpose.msra.mxu0 0.0
        %2178 = vmatpush.xpose.msra.mxu0 0.0
        %2179 = vmatpush.xpose.msra.mxu0 0.0
        %2180 = vmatpush.xpose.msra.mxu0 %v726
        %2181 = vmatpush.xpose.msra.mxu0 %v342
        %2182 = vmatmul.f32.gmra.mxu0 %v1209
        %v2183 = vpop.f32.mrf.mxu0
        %v2184 = vadd.f32 %v2164, %v2183
        %2185 = vdwg.mxu0
        %2186 = vmatpush.xpose.msra.mxu0 0.0
        %2187 = vmatpush.xpose.msra.mxu0 0.0
        %2188 = vmatpush.xpose.msra.mxu0 0.0
        %2189 = vmatpush.xpose.msra.mxu0 0.0
        %2190 = vmatpush.xpose.msra.mxu0 0.0
        %2191 = vmatpush.xpose.msra.mxu0 0.0
        %2192 = vmatpush.xpose.msra.mxu0 0.0
        %2193 = vmatpush.xpose.msra.mxu0 0.0
        %2194 = vmatpush.xpose.msra.mxu0 0.0
        %2195 = vmatpush.xpose.msra.mxu0 0.0
        %2196 = vmatpush.xpose.msra.mxu0 0.0
        %2197 = vmatpush.xpose.msra.mxu0 0.0
        %2198 = vmatpush.xpose.msra.mxu0 0.0
        %2199 = vmatpush.xpose.msra.mxu0 0.0
        %2200 = vmatpush.xpose.msra.mxu0 %v727
        %2201 = vmatpush.xpose.msra.mxu0 %v343
        %2202 = vmatmul.f32.gmra.mxu0 %v1210
        %v2203 = vpop.f32.mrf.mxu0
        %v2204 = vadd.f32 %v2184, %v2203
        %2205 = vdwg.mxu0
        %2206 = vmatpush.xpose.msra.mxu0 0.0
        %2207 = vmatpush.xpose.msra.mxu0 0.0
        %2208 = vmatpush.xpose.msra.mxu0 0.0
        %2209 = vmatpush.xpose.msra.mxu0 0.0
        %2210 = vmatpush.xpose.msra.mxu0 0.0
        %2211 = vmatpush.xpose.msra.mxu0 0.0
        %2212 = vmatpush.xpose.msra.mxu0 0.0
        %2213 = vmatpush.xpose.msra.mxu0 0.0
        %2214 = vmatpush.xpose.msra.mxu0 0.0
        %2215 = vmatpush.xpose.msra.mxu0 0.0
        %2216 = vmatpush.xpose.msra.mxu0 0.0
        %2217 = vmatpush.xpose.msra.mxu0 0.0
        %2218 = vmatpush.xpose.msra.mxu0 0.0
        %2219 = vmatpush.xpose.msra.mxu0 0.0
        %2220 = vmatpush.xpose.msra.mxu0 %v728
        %2221 = vmatpush.xpose.msra.mxu0 %v344
        %2222 = vmatmul.f32.gmra.mxu0 %v1211
        %v2223 = vpop.f32.mrf.mxu0
        %v2224 = vadd.f32 %v2204, %v2223
        %2225 = vdwg.mxu0
        %2226 = vmatpush.xpose.msra.mxu0 0.0
        %2227 = vmatpush.xpose.msra.mxu0 0.0
        %2228 = vmatpush.xpose.msra.mxu0 0.0
        %2229 = vmatpush.xpose.msra.mxu0 0.0
        %2230 = vmatpush.xpose.msra.mxu0 0.0
        %2231 = vmatpush.xpose.msra.mxu0 0.0
        %2232 = vmatpush.xpose.msra.mxu0 0.0
        %2233 = vmatpush.xpose.msra.mxu0 0.0
        %2234 = vmatpush.xpose.msra.mxu0 0.0
        %2235 = vmatpush.xpose.msra.mxu0 0.0
        %2236 = vmatpush.xpose.msra.mxu0 0.0
        %2237 = vmatpush.xpose.msra.mxu0 0.0
        %2238 = vmatpush.xpose.msra.mxu0 0.0
        %2239 = vmatpush.xpose.msra.mxu0 0.0
        %2240 = vmatpush.xpose.msra.mxu0 %v729
        %2241 = vmatpush.xpose.msra.mxu0 %v345
        %2242 = vmatmul.f32.gmra.mxu0 %v1214
        %v2243 = vpop.f32.mrf.mxu0
        %v2244 = vadd.f32 %v2224, %v2243
        %2245 = vdwg.mxu0
        %2246 = vmatpush.xpose.msra.mxu0 0.0
        %2247 = vmatpush.xpose.msra.mxu0 0.0
        %2248 = vmatpush.xpose.msra.mxu0 0.0
        %2249 = vmatpush.xpose.msra.mxu0 0.0
        %2250 = vmatpush.xpose.msra.mxu0 0.0
        %2251 = vmatpush.xpose.msra.mxu0 0.0
        %2252 = vmatpush.xpose.msra.mxu0 0.0
        %2253 = vmatpush.xpose.msra.mxu0 0.0
        %2254 = vmatpush.xpose.msra.mxu0 0.0
        %2255 = vmatpush.xpose.msra.mxu0 0.0
        %2256 = vmatpush.xpose.msra.mxu0 0.0
        %2257 = vmatpush.xpose.msra.mxu0 0.0
        %2258 = vmatpush.xpose.msra.mxu0 0.0
        %2259 = vmatpush.xpose.msra.mxu0 0.0
        %2260 = vmatpush.xpose.msra.mxu0 %v730
        %2261 = vmatpush.xpose.msra.mxu0 %v346
        %2262 = vmatmul.f32.gmra.mxu0 %v1215
        %v2263 = vpop.f32.mrf.mxu0
        %v2264 = vadd.f32 %v2244, %v2263
        %2265 = vdwg.mxu0
        %2266 = vmatpush.xpose.msra.mxu0 0.0
        %2267 = vmatpush.xpose.msra.mxu0 0.0
        %2268 = vmatpush.xpose.msra.mxu0 0.0
        %2269 = vmatpush.xpose.msra.mxu0 0.0
        %2270 = vmatpush.xpose.msra.mxu0 0.0
        %2271 = vmatpush.xpose.msra.mxu0 0.0
        %2272 = vmatpush.xpose.msra.mxu0 0.0
        %2273 = vmatpush.xpose.msra.mxu0 0.0
        %2274 = vmatpush.xpose.msra.mxu0 0.0
        %2275 = vmatpush.xpose.msra.mxu0 0.0
        %2276 = vmatpush.xpose.msra.mxu0 0.0
        %2277 = vmatpush.xpose.msra.mxu0 0.0
        %2278 = vmatpush.xpose.msra.mxu0 0.0
        %2279 = vmatpush.xpose.msra.mxu0 0.0
        %2280 = vmatpush.xpose.msra.mxu0 %v731
        %2281 = vmatpush.xpose.msra.mxu0 %v347
        %2282 = vmatmul.f32.gmra.mxu0 %v1216
        %v2283 = vpop.f32.mrf.mxu0
        %v2284 = vadd.f32 %v2264, %v2283
        %2285 = vdwg.mxu0
        %2286 = vmatpush.xpose.msra.mxu0 0.0
        %2287 = vmatpush.xpose.msra.mxu0 0.0
        %2288 = vmatpush.xpose.msra.mxu0 0.0
        %2289 = vmatpush.xpose.msra.mxu0 0.0
        %2290 = vmatpush.xpose.msra.mxu0 0.0
        %2291 = vmatpush.xpose.msra.mxu0 0.0
        %2292 = vmatpush.xpose.msra.mxu0 0.0
        %2293 = vmatpush.xpose.msra.mxu0 0.0
        %2294 = vmatpush.xpose.msra.mxu0 0.0
        %2295 = vmatpush.xpose.msra.mxu0 0.0
        %2296 = vmatpush.xpose.msra.mxu0 0.0
        %2297 = vmatpush.xpose.msra.mxu0 0.0
        %2298 = vmatpush.xpose.msra.mxu0 0.0
        %2299 = vmatpush.xpose.msra.mxu0 0.0
        %2300 = vmatpush.xpose.msra.mxu0 %v732
        %2301 = vmatpush.xpose.msra.mxu0 %v348
        %2302 = vmatmul.f32.gmra.mxu0 %v1217
        %v2303 = vpop.f32.mrf.mxu0
        %v2304 = vadd.f32 %v2284, %v2303
        %2305 = vdwg.mxu0
        %2306 = vmatpush.xpose.msra.mxu0 0.0
        %2307 = vmatpush.xpose.msra.mxu0 0.0
        %2308 = vmatpush.xpose.msra.mxu0 0.0
        %2309 = vmatpush.xpose.msra.mxu0 0.0
        %2310 = vmatpush.xpose.msra.mxu0 0.0
        %2311 = vmatpush.xpose.msra.mxu0 0.0
        %2312 = vmatpush.xpose.msra.mxu0 0.0
        %2313 = vmatpush.xpose.msra.mxu0 0.0
        %2314 = vmatpush.xpose.msra.mxu0 0.0
        %2315 = vmatpush.xpose.msra.mxu0 0.0
        %2316 = vmatpush.xpose.msra.mxu0 0.0
        %2317 = vmatpush.xpose.msra.mxu0 0.0
        %2318 = vmatpush.xpose.msra.mxu0 0.0
        %2319 = vmatpush.xpose.msra.mxu0 0.0
        %2320 = vmatpush.xpose.msra.mxu0 %v733
        %2321 = vmatpush.xpose.msra.mxu0 %v349
        %2322 = vmatmul.f32.gmra.mxu0 %v1218
        %v2323 = vpop.f32.mrf.mxu0
        %v2324 = vadd.f32 %v2304, %v2323
        %2325 = vdwg.mxu0
        %2326 = vmatpush.xpose.msra.mxu0 0.0
        %2327 = vmatpush.xpose.msra.mxu0 0.0
        %2328 = vmatpush.xpose.msra.mxu0 0.0
        %2329 = vmatpush.xpose.msra.mxu0 0.0
        %2330 = vmatpush.xpose.msra.mxu0 0.0
        %2331 = vmatpush.xpose.msra.mxu0 0.0
        %2332 = vmatpush.xpose.msra.mxu0 0.0
        %2333 = vmatpush.xpose.msra.mxu0 0.0
        %2334 = vmatpush.xpose.msra.mxu0 0.0
        %2335 = vmatpush.xpose.msra.mxu0 0.0
        %2336 = vmatpush.xpose.msra.mxu0 0.0
        %2337 = vmatpush.xpose.msra.mxu0 0.0
        %2338 = vmatpush.xpose.msra.mxu0 0.0
        %2339 = vmatpush.xpose.msra.mxu0 0.0
        %2340 = vmatpush.xpose.msra.mxu0 %v734
        %2341 = vmatpush.xpose.msra.mxu0 %v350
        %2342 = vmatmul.f32.gmra.mxu0 %v1219
        %v2343 = vpop.f32.mrf.mxu0
        %v2344 = vadd.f32 %v2324, %v2343
        %2345 = vdwg.mxu0
        %2346 = vmatpush.xpose.msra.mxu0 0.0
        %2347 = vmatpush.xpose.msra.mxu0 0.0
        %2348 = vmatpush.xpose.msra.mxu0 0.0
        %2349 = vmatpush.xpose.msra.mxu0 0.0
        %2350 = vmatpush.xpose.msra.mxu0 0.0
        %2351 = vmatpush.xpose.msra.mxu0 0.0
        %2352 = vmatpush.xpose.msra.mxu0 0.0
        %2353 = vmatpush.xpose.msra.mxu0 0.0
        %2354 = vmatpush.xpose.msra.mxu0 0.0
        %2355 = vmatpush.xpose.msra.mxu0 0.0
        %2356 = vmatpush.xpose.msra.mxu0 0.0
        %2357 = vmatpush.xpose.msra.mxu0 0.0
        %2358 = vmatpush.xpose.msra.mxu0 0.0
        %2359 = vmatpush.xpose.msra.mxu0 0.0
        %2360 = vmatpush.xpose.msra.mxu0 %v735
        %2361 = vmatpush.xpose.msra.mxu0 %v351
        %2362 = vmatmul.f32.gmra.mxu0 %v1220
        %v2363 = vpop.f32.mrf.mxu0
        %v2364 = vadd.f32 %v2344, %v2363
        %2365 = vdwg.mxu0
        %2366 = vmatpush.xpose.msra.mxu0 0.0
        %2367 = vmatpush.xpose.msra.mxu0 0.0
        %2368 = vmatpush.xpose.msra.mxu0 0.0
        %2369 = vmatpush.xpose.msra.mxu0 0.0
        %2370 = vmatpush.xpose.msra.mxu0 0.0
        %2371 = vmatpush.xpose.msra.mxu0 0.0
        %2372 = vmatpush.xpose.msra.mxu0 0.0
        %2373 = vmatpush.xpose.msra.mxu0 0.0
        %2374 = vmatpush.xpose.msra.mxu0 0.0
        %2375 = vmatpush.xpose.msra.mxu0 0.0
        %2376 = vmatpush.xpose.msra.mxu0 0.0
        %2377 = vmatpush.xpose.msra.mxu0 0.0
        %2378 = vmatpush.xpose.msra.mxu0 0.0
        %2379 = vmatpush.xpose.msra.mxu0 0.0
        %2380 = vmatpush.xpose.msra.mxu0 %v736
        %2381 = vmatpush.xpose.msra.mxu0 %v352
        %2382 = vmatmul.f32.gmra.mxu0 %v1221
        %v2383 = vpop.f32.mrf.mxu0
        %v2384 = vadd.f32 %v2364, %v2383
        %2385 = vdwg.mxu0
        %2386 = vmatpush.xpose.msra.mxu0 0.0
        %2387 = vmatpush.xpose.msra.mxu0 0.0
        %2388 = vmatpush.xpose.msra.mxu0 0.0
        %2389 = vmatpush.xpose.msra.mxu0 0.0
        %2390 = vmatpush.xpose.msra.mxu0 0.0
        %2391 = vmatpush.xpose.msra.mxu0 0.0
        %2392 = vmatpush.xpose.msra.mxu0 0.0
        %2393 = vmatpush.xpose.msra.mxu0 0.0
        %2394 = vmatpush.xpose.msra.mxu0 0.0
        %2395 = vmatpush.xpose.msra.mxu0 0.0
        %2396 = vmatpush.xpose.msra.mxu0 0.0
        %2397 = vmatpush.xpose.msra.mxu0 0.0
        %2398 = vmatpush.xpose.msra.mxu0 0.0
        %2399 = vmatpush.xpose.msra.mxu0 0.0
        %2400 = vmatpush.xpose.msra.mxu0 %v737
        %2401 = vmatpush.xpose.msra.mxu0 %v353
        %2402 = vmatmul.f32.gmra.mxu0 %v1224
        %v2403 = vpop.f32.mrf.mxu0
        %v2404 = vadd.f32 %v2384, %v2403
        %2405 = vdwg.mxu0
        %2406 = vmatpush.xpose.msra.mxu0 0.0
        %2407 = vmatpush.xpose.msra.mxu0 0.0
        %2408 = vmatpush.xpose.msra.mxu0 0.0
        %2409 = vmatpush.xpose.msra.mxu0 0.0
        %2410 = vmatpush.xpose.msra.mxu0 0.0
        %2411 = vmatpush.xpose.msra.mxu0 0.0
        %2412 = vmatpush.xpose.msra.mxu0 0.0
        %2413 = vmatpush.xpose.msra.mxu0 0.0
        %2414 = vmatpush.xpose.msra.mxu0 0.0
        %2415 = vmatpush.xpose.msra.mxu0 0.0
        %2416 = vmatpush.xpose.msra.mxu0 0.0
        %2417 = vmatpush.xpose.msra.mxu0 0.0
        %2418 = vmatpush.xpose.msra.mxu0 0.0
        %2419 = vmatpush.xpose.msra.mxu0 0.0
        %2420 = vmatpush.xpose.msra.mxu0 %v738
        %2421 = vmatpush.xpose.msra.mxu0 %v354
        %2422 = vmatmul.f32.gmra.mxu0 %v1225
        %v2423 = vpop.f32.mrf.mxu0
        %v2424 = vadd.f32 %v2404, %v2423
        %2425 = vdwg.mxu0
        %2426 = vmatpush.xpose.msra.mxu0 0.0
        %2427 = vmatpush.xpose.msra.mxu0 0.0
        %2428 = vmatpush.xpose.msra.mxu0 0.0
        %2429 = vmatpush.xpose.msra.mxu0 0.0
        %2430 = vmatpush.xpose.msra.mxu0 0.0
        %2431 = vmatpush.xpose.msra.mxu0 0.0
        %2432 = vmatpush.xpose.msra.mxu0 0.0
        %2433 = vmatpush.xpose.msra.mxu0 0.0
        %2434 = vmatpush.xpose.msra.mxu0 0.0
        %2435 = vmatpush.xpose.msra.mxu0 0.0
        %2436 = vmatpush.xpose.msra.mxu0 0.0
        %2437 = vmatpush.xpose.msra.mxu0 0.0
        %2438 = vmatpush.xpose.msra.mxu0 0.0
        %2439 = vmatpush.xpose.msra.mxu0 0.0
        %2440 = vmatpush.xpose.msra.mxu0 %v739
        %2441 = vmatpush.xpose.msra.mxu0 %v355
        %2442 = vmatmul.f32.gmra.mxu0 %v1226
        %v2443 = vpop.f32.mrf.mxu0
        %v2444 = vadd.f32 %v2424, %v2443
        %2445 = vdwg.mxu0
        %2446 = vmatpush.xpose.msra.mxu0 0.0
        %2447 = vmatpush.xpose.msra.mxu0 0.0
        %2448 = vmatpush.xpose.msra.mxu0 0.0
        %2449 = vmatpush.xpose.msra.mxu0 0.0
        %2450 = vmatpush.xpose.msra.mxu0 0.0
        %2451 = vmatpush.xpose.msra.mxu0 0.0
        %2452 = vmatpush.xpose.msra.mxu0 0.0
        %2453 = vmatpush.xpose.msra.mxu0 0.0
        %2454 = vmatpush.xpose.msra.mxu0 0.0
        %2455 = vmatpush.xpose.msra.mxu0 0.0
        %2456 = vmatpush.xpose.msra.mxu0 0.0
        %2457 = vmatpush.xpose.msra.mxu0 0.0
        %2458 = vmatpush.xpose.msra.mxu0 0.0
        %2459 = vmatpush.xpose.msra.mxu0 0.0
        %2460 = vmatpush.xpose.msra.mxu0 %v740
        %2461 = vmatpush.xpose.msra.mxu0 %v356
        %2462 = vmatmul.f32.gmra.mxu0 %v1227
        %v2463 = vpop.f32.mrf.mxu0
        %v2464 = vadd.f32 %v2444, %v2463
        %2465 = vdwg.mxu0
        %2466 = vmatpush.xpose.msra.mxu0 0.0
        %2467 = vmatpush.xpose.msra.mxu0 0.0
        %2468 = vmatpush.xpose.msra.mxu0 0.0
        %2469 = vmatpush.xpose.msra.mxu0 0.0
        %2470 = vmatpush.xpose.msra.mxu0 0.0
        %2471 = vmatpush.xpose.msra.mxu0 0.0
        %2472 = vmatpush.xpose.msra.mxu0 0.0
        %2473 = vmatpush.xpose.msra.mxu0 0.0
        %2474 = vmatpush.xpose.msra.mxu0 0.0
        %2475 = vmatpush.xpose.msra.mxu0 0.0
        %2476 = vmatpush.xpose.msra.mxu0 0.0
        %2477 = vmatpush.xpose.msra.mxu0 0.0
        %2478 = vmatpush.xpose.msra.mxu0 0.0
        %2479 = vmatpush.xpose.msra.mxu0 0.0
        %2480 = vmatpush.xpose.msra.mxu0 %v741
        %2481 = vmatpush.xpose.msra.mxu0 %v357
        %2482 = vmatmul.f32.gmra.mxu0 %v1228
        %v2483 = vpop.f32.mrf.mxu0
        %v2484 = vadd.f32 %v2464, %v2483
        %2485 = vdwg.mxu0
        %2486 = vmatpush.xpose.msra.mxu0 0.0
        %2487 = vmatpush.xpose.msra.mxu0 0.0
        %2488 = vmatpush.xpose.msra.mxu0 0.0
        %2489 = vmatpush.xpose.msra.mxu0 0.0
        %2490 = vmatpush.xpose.msra.mxu0 0.0
        %2491 = vmatpush.xpose.msra.mxu0 0.0
        %2492 = vmatpush.xpose.msra.mxu0 0.0
        %2493 = vmatpush.xpose.msra.mxu0 0.0
        %2494 = vmatpush.xpose.msra.mxu0 0.0
        %2495 = vmatpush.xpose.msra.mxu0 0.0
        %2496 = vmatpush.xpose.msra.mxu0 0.0
        %2497 = vmatpush.xpose.msra.mxu0 0.0
        %2498 = vmatpush.xpose.msra.mxu0 0.0
        %2499 = vmatpush.xpose.msra.mxu0 0.0
        %2500 = vmatpush.xpose.msra.mxu0 %v742
        %2501 = vmatpush.xpose.msra.mxu0 %v358
        %2502 = vmatmul.f32.gmra.mxu0 %v1229
        %v2503 = vpop.f32.mrf.mxu0
        %v2504 = vadd.f32 %v2484, %v2503
        %2505 = vdwg.mxu0
        %2506 = vmatpush.xpose.msra.mxu0 0.0
        %2507 = vmatpush.xpose.msra.mxu0 0.0
        %2508 = vmatpush.xpose.msra.mxu0 0.0
        %2509 = vmatpush.xpose.msra.mxu0 0.0
        %2510 = vmatpush.xpose.msra.mxu0 0.0
        %2511 = vmatpush.xpose.msra.mxu0 0.0
        %2512 = vmatpush.xpose.msra.mxu0 0.0
        %2513 = vmatpush.xpose.msra.mxu0 0.0
        %2514 = vmatpush.xpose.msra.mxu0 0.0
        %2515 = vmatpush.xpose.msra.mxu0 0.0
        %2516 = vmatpush.xpose.msra.mxu0 0.0
        %2517 = vmatpush.xpose.msra.mxu0 0.0
        %2518 = vmatpush.xpose.msra.mxu0 0.0
        %2519 = vmatpush.xpose.msra.mxu0 0.0
        %2520 = vmatpush.xpose.msra.mxu0 %v743
        %2521 = vmatpush.xpose.msra.mxu0 %v359
        %2522 = vmatmul.f32.gmra.mxu0 %v1230
        %v2523 = vpop.f32.mrf.mxu0
        %v2524 = vadd.f32 %v2504, %v2523
        %2525 = vdwg.mxu0
        %2526 = vmatpush.xpose.msra.mxu0 0.0
        %2527 = vmatpush.xpose.msra.mxu0 0.0
        %2528 = vmatpush.xpose.msra.mxu0 0.0
        %2529 = vmatpush.xpose.msra.mxu0 0.0
        %2530 = vmatpush.xpose.msra.mxu0 0.0
        %2531 = vmatpush.xpose.msra.mxu0 0.0
        %2532 = vmatpush.xpose.msra.mxu0 0.0
        %2533 = vmatpush.xpose.msra.mxu0 0.0
        %2534 = vmatpush.xpose.msra.mxu0 0.0
        %2535 = vmatpush.xpose.msra.mxu0 0.0
        %2536 = vmatpush.xpose.msra.mxu0 0.0
        %2537 = vmatpush.xpose.msra.mxu0 0.0
        %2538 = vmatpush.xpose.msra.mxu0 0.0
        %2539 = vmatpush.xpose.msra.mxu0 0.0
        %2540 = vmatpush.xpose.msra.mxu0 %v744
        %2541 = vmatpush.xpose.msra.mxu0 %v360
        %2542 = vmatmul.f32.gmra.mxu0 %v1231
        %v2543 = vpop.f32.mrf.mxu0
        %v2544 = vadd.f32 %v2524, %v2543
        %2545 = vdwg.mxu0
        %2546 = vmatpush.xpose.msra.mxu0 0.0
        %2547 = vmatpush.xpose.msra.mxu0 0.0
        %2548 = vmatpush.xpose.msra.mxu0 0.0
        %2549 = vmatpush.xpose.msra.mxu0 0.0
        %2550 = vmatpush.xpose.msra.mxu0 0.0
        %2551 = vmatpush.xpose.msra.mxu0 0.0
        %2552 = vmatpush.xpose.msra.mxu0 0.0
        %2553 = vmatpush.xpose.msra.mxu0 0.0
        %2554 = vmatpush.xpose.msra.mxu0 0.0
        %2555 = vmatpush.xpose.msra.mxu0 0.0
        %2556 = vmatpush.xpose.msra.mxu0 0.0
        %2557 = vmatpush.xpose.msra.mxu0 0.0
        %2558 = vmatpush.xpose.msra.mxu0 0.0
        %2559 = vmatpush.xpose.msra.mxu0 0.0
        %2560 = vmatpush.xpose.msra.mxu0 %v745
        %2561 = vmatpush.xpose.msra.mxu0 %v361
        %2562 = vmatmul.f32.gmra.mxu0 %v1234
        %v2563 = vpop.f32.mrf.mxu0
        %v2564 = vadd.f32 %v2544, %v2563
        %2565 = vdwg.mxu0
        %2566 = vmatpush.xpose.msra.mxu0 0.0
        %2567 = vmatpush.xpose.msra.mxu0 0.0
        %2568 = vmatpush.xpose.msra.mxu0 0.0
        %2569 = vmatpush.xpose.msra.mxu0 0.0
        %2570 = vmatpush.xpose.msra.mxu0 0.0
        %2571 = vmatpush.xpose.msra.mxu0 0.0
        %2572 = vmatpush.xpose.msra.mxu0 0.0
        %2573 = vmatpush.xpose.msra.mxu0 0.0
        %2574 = vmatpush.xpose.msra.mxu0 0.0
        %2575 = vmatpush.xpose.msra.mxu0 0.0
        %2576 = vmatpush.xpose.msra.mxu0 0.0
        %2577 = vmatpush.xpose.msra.mxu0 0.0
        %2578 = vmatpush.xpose.msra.mxu0 0.0
        %2579 = vmatpush.xpose.msra.mxu0 0.0
        %2580 = vmatpush.xpose.msra.mxu0 %v746
        %2581 = vmatpush.xpose.msra.mxu0 %v362
        %2582 = vmatmul.f32.gmra.mxu0 %v1235
        %v2583 = vpop.f32.mrf.mxu0
        %v2584 = vadd.f32 %v2564, %v2583
        %2585 = vdwg.mxu0
        %2586 = vmatpush.xpose.msra.mxu0 0.0
        %2587 = vmatpush.xpose.msra.mxu0 0.0
        %2588 = vmatpush.xpose.msra.mxu0 0.0
        %2589 = vmatpush.xpose.msra.mxu0 0.0
        %2590 = vmatpush.xpose.msra.mxu0 0.0
        %2591 = vmatpush.xpose.msra.mxu0 0.0
        %2592 = vmatpush.xpose.msra.mxu0 0.0
        %2593 = vmatpush.xpose.msra.mxu0 0.0
        %2594 = vmatpush.xpose.msra.mxu0 0.0
        %2595 = vmatpush.xpose.msra.mxu0 0.0
        %2596 = vmatpush.xpose.msra.mxu0 0.0
        %2597 = vmatpush.xpose.msra.mxu0 0.0
        %2598 = vmatpush.xpose.msra.mxu0 0.0
        %2599 = vmatpush.xpose.msra.mxu0 0.0
        %2600 = vmatpush.xpose.msra.mxu0 %v747
        %2601 = vmatpush.xpose.msra.mxu0 %v363
        %2602 = vmatmul.f32.gmra.mxu0 %v1236
        %v2603 = vpop.f32.mrf.mxu0
        %v2604 = vadd.f32 %v2584, %v2603
        %2605 = vdwg.mxu0
        %2606 = vmatpush.xpose.msra.mxu0 0.0
        %2607 = vmatpush.xpose.msra.mxu0 0.0
        %2608 = vmatpush.xpose.msra.mxu0 0.0
        %2609 = vmatpush.xpose.msra.mxu0 0.0
        %2610 = vmatpush.xpose.msra.mxu0 0.0
        %2611 = vmatpush.xpose.msra.mxu0 0.0
        %2612 = vmatpush.xpose.msra.mxu0 0.0
        %2613 = vmatpush.xpose.msra.mxu0 0.0
        %2614 = vmatpush.xpose.msra.mxu0 0.0
        %2615 = vmatpush.xpose.msra.mxu0 0.0
        %2616 = vmatpush.xpose.msra.mxu0 0.0
        %2617 = vmatpush.xpose.msra.mxu0 0.0
        %2618 = vmatpush.xpose.msra.mxu0 0.0
        %2619 = vmatpush.xpose.msra.mxu0 0.0
        %2620 = vmatpush.xpose.msra.mxu0 %v748
        %2621 = vmatpush.xpose.msra.mxu0 %v364
        %2622 = vmatmul.f32.gmra.mxu0 %v1237
        %v2623 = vpop.f32.mrf.mxu0
        %v2624 = vadd.f32 %v2604, %v2623
        %2625 = vdwg.mxu0
        %2626 = vmatpush.xpose.msra.mxu0 0.0
        %2627 = vmatpush.xpose.msra.mxu0 0.0
        %2628 = vmatpush.xpose.msra.mxu0 0.0
        %2629 = vmatpush.xpose.msra.mxu0 0.0
        %2630 = vmatpush.xpose.msra.mxu0 0.0
        %2631 = vmatpush.xpose.msra.mxu0 0.0
        %2632 = vmatpush.xpose.msra.mxu0 0.0
        %2633 = vmatpush.xpose.msra.mxu0 0.0
        %2634 = vmatpush.xpose.msra.mxu0 0.0
        %2635 = vmatpush.xpose.msra.mxu0 0.0
        %2636 = vmatpush.xpose.msra.mxu0 0.0
        %2637 = vmatpush.xpose.msra.mxu0 0.0
        %2638 = vmatpush.xpose.msra.mxu0 0.0
        %2639 = vmatpush.xpose.msra.mxu0 0.0
        %2640 = vmatpush.xpose.msra.mxu0 %v749
        %2641 = vmatpush.xpose.msra.mxu0 %v365
        %2642 = vmatmul.f32.gmra.mxu0 %v1238
        %v2643 = vpop.f32.mrf.mxu0
        %v2644 = vadd.f32 %v2624, %v2643
        %2645 = vdwg.mxu0
        %2646 = vmatpush.xpose.msra.mxu0 0.0
        %2647 = vmatpush.xpose.msra.mxu0 0.0
        %2648 = vmatpush.xpose.msra.mxu0 0.0
        %2649 = vmatpush.xpose.msra.mxu0 0.0
        %2650 = vmatpush.xpose.msra.mxu0 0.0
        %2651 = vmatpush.xpose.msra.mxu0 0.0
        %2652 = vmatpush.xpose.msra.mxu0 0.0
        %2653 = vmatpush.xpose.msra.mxu0 0.0
        %2654 = vmatpush.xpose.msra.mxu0 0.0
        %2655 = vmatpush.xpose.msra.mxu0 0.0
        %2656 = vmatpush.xpose.msra.mxu0 0.0
        %2657 = vmatpush.xpose.msra.mxu0 0.0
        %2658 = vmatpush.xpose.msra.mxu0 0.0
        %2659 = vmatpush.xpose.msra.mxu0 0.0
        %2660 = vmatpush.xpose.msra.mxu0 %v750
        %2661 = vmatpush.xpose.msra.mxu0 %v366
        %2662 = vmatmul.f32.gmra.mxu0 %v1239
        %v2663 = vpop.f32.mrf.mxu0
        %v2664 = vadd.f32 %v2644, %v2663
        %2665 = vdwg.mxu0
        %2666 = vmatpush.xpose.msra.mxu0 0.0
        %2667 = vmatpush.xpose.msra.mxu0 0.0
        %2668 = vmatpush.xpose.msra.mxu0 0.0
        %2669 = vmatpush.xpose.msra.mxu0 0.0
        %2670 = vmatpush.xpose.msra.mxu0 0.0
        %2671 = vmatpush.xpose.msra.mxu0 0.0
        %2672 = vmatpush.xpose.msra.mxu0 0.0
        %2673 = vmatpush.xpose.msra.mxu0 0.0
        %2674 = vmatpush.xpose.msra.mxu0 0.0
        %2675 = vmatpush.xpose.msra.mxu0 0.0
        %2676 = vmatpush.xpose.msra.mxu0 0.0
        %2677 = vmatpush.xpose.msra.mxu0 0.0
        %2678 = vmatpush.xpose.msra.mxu0 0.0
        %2679 = vmatpush.xpose.msra.mxu0 0.0
        %2680 = vmatpush.xpose.msra.mxu0 %v751
        %2681 = vmatpush.xpose.msra.mxu0 %v367
        %2682 = vmatmul.f32.gmra.mxu0 %v1240
        %v2683 = vpop.f32.mrf.mxu0
        %v2684 = vadd.f32 %v2664, %v2683
        %2685 = vdwg.mxu0
        %2686 = vmatpush.xpose.msra.mxu0 0.0
        %2687 = vmatpush.xpose.msra.mxu0 0.0
        %2688 = vmatpush.xpose.msra.mxu0 0.0
        %2689 = vmatpush.xpose.msra.mxu0 0.0
        %2690 = vmatpush.xpose.msra.mxu0 0.0
        %2691 = vmatpush.xpose.msra.mxu0 0.0
        %2692 = vmatpush.xpose.msra.mxu0 0.0
        %2693 = vmatpush.xpose.msra.mxu0 0.0
        %2694 = vmatpush.xpose.msra.mxu0 0.0
        %2695 = vmatpush.xpose.msra.mxu0 0.0
        %2696 = vmatpush.xpose.msra.mxu0 0.0
        %2697 = vmatpush.xpose.msra.mxu0 0.0
        %2698 = vmatpush.xpose.msra.mxu0 0.0
        %2699 = vmatpush.xpose.msra.mxu0 0.0
        %2700 = vmatpush.xpose.msra.mxu0 %v752
        %2701 = vmatpush.xpose.msra.mxu0 %v368
        %2702 = vmatmul.f32.gmra.mxu0 %v1241
        %v2703 = vpop.f32.mrf.mxu0
        %v2704 = vadd.f32 %v2684, %v2703
        %2705 = vdwg.mxu0
        %2706 = vmatpush.xpose.msra.mxu0 0.0
        %2707 = vmatpush.xpose.msra.mxu0 0.0
        %2708 = vmatpush.xpose.msra.mxu0 0.0
        %2709 = vmatpush.xpose.msra.mxu0 0.0
        %2710 = vmatpush.xpose.msra.mxu0 0.0
        %2711 = vmatpush.xpose.msra.mxu0 0.0
        %2712 = vmatpush.xpose.msra.mxu0 0.0
        %2713 = vmatpush.xpose.msra.mxu0 0.0
        %2714 = vmatpush.xpose.msra.mxu0 0.0
        %2715 = vmatpush.xpose.msra.mxu0 0.0
        %2716 = vmatpush.xpose.msra.mxu0 0.0
        %2717 = vmatpush.xpose.msra.mxu0 0.0
        %2718 = vmatpush.xpose.msra.mxu0 0.0
        %2719 = vmatpush.xpose.msra.mxu0 0.0
        %2720 = vmatpush.xpose.msra.mxu0 %v753
        %2721 = vmatpush.xpose.msra.mxu0 %v369
        %2722 = vmatmul.f32.gmra.mxu0 %v1244
        %v2723 = vpop.f32.mrf.mxu0
        %v2724 = vadd.f32 %v2704, %v2723
        %2725 = vdwg.mxu0
        %2726 = vmatpush.xpose.msra.mxu0 0.0
        %2727 = vmatpush.xpose.msra.mxu0 0.0
        %2728 = vmatpush.xpose.msra.mxu0 0.0
        %2729 = vmatpush.xpose.msra.mxu0 0.0
        %2730 = vmatpush.xpose.msra.mxu0 0.0
        %2731 = vmatpush.xpose.msra.mxu0 0.0
        %2732 = vmatpush.xpose.msra.mxu0 0.0
        %2733 = vmatpush.xpose.msra.mxu0 0.0
        %2734 = vmatpush.xpose.msra.mxu0 0.0
        %2735 = vmatpush.xpose.msra.mxu0 0.0
        %2736 = vmatpush.xpose.msra.mxu0 0.0
        %2737 = vmatpush.xpose.msra.mxu0 0.0
        %2738 = vmatpush.xpose.msra.mxu0 0.0
        %2739 = vmatpush.xpose.msra.mxu0 0.0
        %2740 = vmatpush.xpose.msra.mxu0 %v754
        %2741 = vmatpush.xpose.msra.mxu0 %v370
        %2742 = vmatmul.f32.gmra.mxu0 %v1245
        %v2743 = vpop.f32.mrf.mxu0
        %v2744 = vadd.f32 %v2724, %v2743
        %2745 = vdwg.mxu0
        %2746 = vmatpush.xpose.msra.mxu0 0.0
        %2747 = vmatpush.xpose.msra.mxu0 0.0
        %2748 = vmatpush.xpose.msra.mxu0 0.0
        %2749 = vmatpush.xpose.msra.mxu0 0.0
        %2750 = vmatpush.xpose.msra.mxu0 0.0
        %2751 = vmatpush.xpose.msra.mxu0 0.0
        %2752 = vmatpush.xpose.msra.mxu0 0.0
        %2753 = vmatpush.xpose.msra.mxu0 0.0
        %2754 = vmatpush.xpose.msra.mxu0 0.0
        %2755 = vmatpush.xpose.msra.mxu0 0.0
        %2756 = vmatpush.xpose.msra.mxu0 0.0
        %2757 = vmatpush.xpose.msra.mxu0 0.0
        %2758 = vmatpush.xpose.msra.mxu0 0.0
        %2759 = vmatpush.xpose.msra.mxu0 0.0
        %2760 = vmatpush.xpose.msra.mxu0 %v755
        %2761 = vmatpush.xpose.msra.mxu0 %v371
        %2762 = vmatmul.f32.gmra.mxu0 %v1246
        %v2763 = vpop.f32.mrf.mxu0
        %v2764 = vadd.f32 %v2744, %v2763
        %2765 = vdwg.mxu0
        %2766 = vmatpush.xpose.msra.mxu0 0.0
        %2767 = vmatpush.xpose.msra.mxu0 0.0
        %2768 = vmatpush.xpose.msra.mxu0 0.0
        %2769 = vmatpush.xpose.msra.mxu0 0.0
        %2770 = vmatpush.xpose.msra.mxu0 0.0
        %2771 = vmatpush.xpose.msra.mxu0 0.0
        %2772 = vmatpush.xpose.msra.mxu0 0.0
        %2773 = vmatpush.xpose.msra.mxu0 0.0
        %2774 = vmatpush.xpose.msra.mxu0 0.0
        %2775 = vmatpush.xpose.msra.mxu0 0.0
        %2776 = vmatpush.xpose.msra.mxu0 0.0
        %2777 = vmatpush.xpose.msra.mxu0 0.0
        %2778 = vmatpush.xpose.msra.mxu0 0.0
        %2779 = vmatpush.xpose.msra.mxu0 0.0
        %2780 = vmatpush.xpose.msra.mxu0 %v756
        %2781 = vmatpush.xpose.msra.mxu0 %v372
        %2782 = vmatmul.f32.gmra.mxu0 %v1247
        %v2783 = vpop.f32.mrf.mxu0
        %v2784 = vadd.f32 %v2764, %v2783
        %2785 = vdwg.mxu0
        %2786 = vmatpush.xpose.msra.mxu0 0.0
        %2787 = vmatpush.xpose.msra.mxu0 0.0
        %2788 = vmatpush.xpose.msra.mxu0 0.0
        %2789 = vmatpush.xpose.msra.mxu0 0.0
        %2790 = vmatpush.xpose.msra.mxu0 0.0
        %2791 = vmatpush.xpose.msra.mxu0 0.0
        %2792 = vmatpush.xpose.msra.mxu0 0.0
        %2793 = vmatpush.xpose.msra.mxu0 0.0
        %2794 = vmatpush.xpose.msra.mxu0 0.0
        %2795 = vmatpush.xpose.msra.mxu0 0.0
        %2796 = vmatpush.xpose.msra.mxu0 0.0
        %2797 = vmatpush.xpose.msra.mxu0 0.0
        %2798 = vmatpush.xpose.msra.mxu0 0.0
        %2799 = vmatpush.xpose.msra.mxu0 0.0
        %2800 = vmatpush.xpose.msra.mxu0 %v757
        %2801 = vmatpush.xpose.msra.mxu0 %v373
        %2802 = vmatmul.f32.gmra.mxu0 %v1248
        %v2803 = vpop.f32.mrf.mxu0
        %v2804 = vadd.f32 %v2784, %v2803
        %2805 = vdwg.mxu0
        %2806 = vmatpush.xpose.msra.mxu0 0.0
        %2807 = vmatpush.xpose.msra.mxu0 0.0
        %2808 = vmatpush.xpose.msra.mxu0 0.0
        %2809 = vmatpush.xpose.msra.mxu0 0.0
        %2810 = vmatpush.xpose.msra.mxu0 0.0
        %2811 = vmatpush.xpose.msra.mxu0 0.0
        %2812 = vmatpush.xpose.msra.mxu0 0.0
        %2813 = vmatpush.xpose.msra.mxu0 0.0
        %2814 = vmatpush.xpose.msra.mxu0 0.0
        %2815 = vmatpush.xpose.msra.mxu0 0.0
        %2816 = vmatpush.xpose.msra.mxu0 0.0
        %2817 = vmatpush.xpose.msra.mxu0 0.0
        %2818 = vmatpush.xpose.msra.mxu0 0.0
        %2819 = vmatpush.xpose.msra.mxu0 0.0
        %2820 = vmatpush.xpose.msra.mxu0 %v758
        %2821 = vmatpush.xpose.msra.mxu0 %v374
        %2822 = vmatmul.f32.gmra.mxu0 %v1249
        %v2823 = vpop.f32.mrf.mxu0
        %v2824 = vadd.f32 %v2804, %v2823
        %2825 = vdwg.mxu0
        %2826 = vmatpush.xpose.msra.mxu0 0.0
        %2827 = vmatpush.xpose.msra.mxu0 0.0
        %2828 = vmatpush.xpose.msra.mxu0 0.0
        %2829 = vmatpush.xpose.msra.mxu0 0.0
        %2830 = vmatpush.xpose.msra.mxu0 0.0
        %2831 = vmatpush.xpose.msra.mxu0 0.0
        %2832 = vmatpush.xpose.msra.mxu0 0.0
        %2833 = vmatpush.xpose.msra.mxu0 0.0
        %2834 = vmatpush.xpose.msra.mxu0 0.0
        %2835 = vmatpush.xpose.msra.mxu0 0.0
        %2836 = vmatpush.xpose.msra.mxu0 0.0
        %2837 = vmatpush.xpose.msra.mxu0 0.0
        %2838 = vmatpush.xpose.msra.mxu0 0.0
        %2839 = vmatpush.xpose.msra.mxu0 0.0
        %2840 = vmatpush.xpose.msra.mxu0 %v759
        %2841 = vmatpush.xpose.msra.mxu0 %v375
        %2842 = vmatmul.f32.gmra.mxu0 %v1250
        %v2843 = vpop.f32.mrf.mxu0
        %v2844 = vadd.f32 %v2824, %v2843
        %2845 = vdwg.mxu0
        %2846 = vmatpush.xpose.msra.mxu0 0.0
        %2847 = vmatpush.xpose.msra.mxu0 0.0
        %2848 = vmatpush.xpose.msra.mxu0 0.0
        %2849 = vmatpush.xpose.msra.mxu0 0.0
        %2850 = vmatpush.xpose.msra.mxu0 0.0
        %2851 = vmatpush.xpose.msra.mxu0 0.0
        %2852 = vmatpush.xpose.msra.mxu0 0.0
        %2853 = vmatpush.xpose.msra.mxu0 0.0
        %2854 = vmatpush.xpose.msra.mxu0 0.0
        %2855 = vmatpush.xpose.msra.mxu0 0.0
        %2856 = vmatpush.xpose.msra.mxu0 0.0
        %2857 = vmatpush.xpose.msra.mxu0 0.0
        %2858 = vmatpush.xpose.msra.mxu0 0.0
        %2859 = vmatpush.xpose.msra.mxu0 0.0
        %2860 = vmatpush.xpose.msra.mxu0 %v760
        %2861 = vmatpush.xpose.msra.mxu0 %v376
        %2862 = vmatmul.f32.gmra.mxu0 %v1251
        %v2863 = vpop.f32.mrf.mxu0
        %v2864 = vadd.f32 %v2844, %v2863
        %2865 = vdwg.mxu0
        %2866 = vmatpush.xpose.msra.mxu0 0.0
        %2867 = vmatpush.xpose.msra.mxu0 0.0
        %2868 = vmatpush.xpose.msra.mxu0 0.0
        %2869 = vmatpush.xpose.msra.mxu0 0.0
        %2870 = vmatpush.xpose.msra.mxu0 0.0
        %2871 = vmatpush.xpose.msra.mxu0 0.0
        %2872 = vmatpush.xpose.msra.mxu0 0.0
        %2873 = vmatpush.xpose.msra.mxu0 0.0
        %2874 = vmatpush.xpose.msra.mxu0 0.0
        %2875 = vmatpush.xpose.msra.mxu0 0.0
        %2876 = vmatpush.xpose.msra.mxu0 0.0
        %2877 = vmatpush.xpose.msra.mxu0 0.0
        %2878 = vmatpush.xpose.msra.mxu0 0.0
        %2879 = vmatpush.xpose.msra.mxu0 0.0
        %2880 = vmatpush.xpose.msra.mxu0 %v761
        %2881 = vmatpush.xpose.msra.mxu0 %v377
        %2882 = vmatmul.f32.gmra.mxu0 %v1254
        %v2883 = vpop.f32.mrf.mxu0
        %v2884 = vadd.f32 %v2864, %v2883
        %2885 = vdwg.mxu0
        %2886 = vmatpush.xpose.msra.mxu0 0.0
        %2887 = vmatpush.xpose.msra.mxu0 0.0
        %2888 = vmatpush.xpose.msra.mxu0 0.0
        %2889 = vmatpush.xpose.msra.mxu0 0.0
        %2890 = vmatpush.xpose.msra.mxu0 0.0
        %2891 = vmatpush.xpose.msra.mxu0 0.0
        %2892 = vmatpush.xpose.msra.mxu0 0.0
        %2893 = vmatpush.xpose.msra.mxu0 0.0
        %2894 = vmatpush.xpose.msra.mxu0 0.0
        %2895 = vmatpush.xpose.msra.mxu0 0.0
        %2896 = vmatpush.xpose.msra.mxu0 0.0
        %2897 = vmatpush.xpose.msra.mxu0 0.0
        %2898 = vmatpush.xpose.msra.mxu0 0.0
        %2899 = vmatpush.xpose.msra.mxu0 0.0
        %2900 = vmatpush.xpose.msra.mxu0 %v762
        %2901 = vmatpush.xpose.msra.mxu0 %v378
        %2902 = vmatmul.f32.gmra.mxu0 %v1255
        %v2903 = vpop.f32.mrf.mxu0
        %v2904 = vadd.f32 %v2884, %v2903
        %2905 = vdwg.mxu0
        %2906 = vmatpush.xpose.msra.mxu0 0.0
        %2907 = vmatpush.xpose.msra.mxu0 0.0
        %2908 = vmatpush.xpose.msra.mxu0 0.0
        %2909 = vmatpush.xpose.msra.mxu0 0.0
        %2910 = vmatpush.xpose.msra.mxu0 0.0
        %2911 = vmatpush.xpose.msra.mxu0 0.0
        %2912 = vmatpush.xpose.msra.mxu0 0.0
        %2913 = vmatpush.xpose.msra.mxu0 0.0
        %2914 = vmatpush.xpose.msra.mxu0 0.0
        %2915 = vmatpush.xpose.msra.mxu0 0.0
        %2916 = vmatpush.xpose.msra.mxu0 0.0
        %2917 = vmatpush.xpose.msra.mxu0 0.0
        %2918 = vmatpush.xpose.msra.mxu0 0.0
        %2919 = vmatpush.xpose.msra.mxu0 0.0
        %2920 = vmatpush.xpose.msra.mxu0 %v763
        %2921 = vmatpush.xpose.msra.mxu0 %v379
        %2922 = vmatmul.f32.gmra.mxu0 %v1256
        %v2923 = vpop.f32.mrf.mxu0
        %v2924 = vadd.f32 %v2904, %v2923
        %2925 = vdwg.mxu0
        %2926 = vmatpush.xpose.msra.mxu0 0.0
        %2927 = vmatpush.xpose.msra.mxu0 0.0
        %2928 = vmatpush.xpose.msra.mxu0 0.0
        %2929 = vmatpush.xpose.msra.mxu0 0.0
        %2930 = vmatpush.xpose.msra.mxu0 0.0
        %2931 = vmatpush.xpose.msra.mxu0 0.0
        %2932 = vmatpush.xpose.msra.mxu0 0.0
        %2933 = vmatpush.xpose.msra.mxu0 0.0
        %2934 = vmatpush.xpose.msra.mxu0 0.0
        %2935 = vmatpush.xpose.msra.mxu0 0.0
        %2936 = vmatpush.xpose.msra.mxu0 0.0
        %2937 = vmatpush.xpose.msra.mxu0 0.0
        %2938 = vmatpush.xpose.msra.mxu0 0.0
        %2939 = vmatpush.xpose.msra.mxu0 0.0
        %2940 = vmatpush.xpose.msra.mxu0 %v764
        %2941 = vmatpush.xpose.msra.mxu0 %v380
        %2942 = vmatmul.f32.gmra.mxu0 %v1257
        %v2943 = vpop.f32.mrf.mxu0
        %v2944 = vadd.f32 %v2924, %v2943
        %2945 = vdwg.mxu0
        %2946 = vmatpush.xpose.msra.mxu0 0.0
        %2947 = vmatpush.xpose.msra.mxu0 0.0
        %2948 = vmatpush.xpose.msra.mxu0 0.0
        %2949 = vmatpush.xpose.msra.mxu0 0.0
        %2950 = vmatpush.xpose.msra.mxu0 0.0
        %2951 = vmatpush.xpose.msra.mxu0 0.0
        %2952 = vmatpush.xpose.msra.mxu0 0.0
        %2953 = vmatpush.xpose.msra.mxu0 0.0
        %2954 = vmatpush.xpose.msra.mxu0 0.0
        %2955 = vmatpush.xpose.msra.mxu0 0.0
        %2956 = vmatpush.xpose.msra.mxu0 0.0
        %2957 = vmatpush.xpose.msra.mxu0 0.0
        %2958 = vmatpush.xpose.msra.mxu0 0.0
        %2959 = vmatpush.xpose.msra.mxu0 0.0
        %2960 = vmatpush.xpose.msra.mxu0 %v765
        %2961 = vmatpush.xpose.msra.mxu0 %v381
        %2962 = vmatmul.f32.gmra.mxu0 %v1258
        %v2963 = vpop.f32.mrf.mxu0
        %v2964 = vadd.f32 %v2944, %v2963
        %2965 = vdwg.mxu0
        %2966 = vmatpush.xpose.msra.mxu0 0.0
        %2967 = vmatpush.xpose.msra.mxu0 0.0
        %2968 = vmatpush.xpose.msra.mxu0 0.0
        %2969 = vmatpush.xpose.msra.mxu0 0.0
        %2970 = vmatpush.xpose.msra.mxu0 0.0
        %2971 = vmatpush.xpose.msra.mxu0 0.0
        %2972 = vmatpush.xpose.msra.mxu0 0.0
        %2973 = vmatpush.xpose.msra.mxu0 0.0
        %2974 = vmatpush.xpose.msra.mxu0 0.0
        %2975 = vmatpush.xpose.msra.mxu0 0.0
        %2976 = vmatpush.xpose.msra.mxu0 0.0
        %2977 = vmatpush.xpose.msra.mxu0 0.0
        %2978 = vmatpush.xpose.msra.mxu0 0.0
        %2979 = vmatpush.xpose.msra.mxu0 0.0
        %2980 = vmatpush.xpose.msra.mxu0 %v766
        %2981 = vmatpush.xpose.msra.mxu0 %v382
        %2982 = vmatmul.f32.gmra.mxu0 %v1259
        %v2983 = vpop.f32.mrf.mxu0
        %v2984 = vadd.f32 %v2964, %v2983
        %2985 = vdwg.mxu0
        %2986 = vmatpush.xpose.msra.mxu0 0.0
        %2987 = vmatpush.xpose.msra.mxu0 0.0
        %2988 = vmatpush.xpose.msra.mxu0 0.0
        %2989 = vmatpush.xpose.msra.mxu0 0.0
        %2990 = vmatpush.xpose.msra.mxu0 0.0
        %2991 = vmatpush.xpose.msra.mxu0 0.0
        %2992 = vmatpush.xpose.msra.mxu0 0.0
        %2993 = vmatpush.xpose.msra.mxu0 0.0
        %2994 = vmatpush.xpose.msra.mxu0 0.0
        %2995 = vmatpush.xpose.msra.mxu0 0.0
        %2996 = vmatpush.xpose.msra.mxu0 0.0
        %2997 = vmatpush.xpose.msra.mxu0 0.0
        %2998 = vmatpush.xpose.msra.mxu0 0.0
        %2999 = vmatpush.xpose.msra.mxu0 0.0
        %3000 = vmatpush.xpose.msra.mxu0 %v767
        %3001 = vmatpush.xpose.msra.mxu0 %v383
        %3002 = vmatmul.f32.gmra.mxu0 %v1260
        %v3003 = vpop.f32.mrf.mxu0
        %v3004 = vadd.f32 %v2984, %v3003
        %3005 = vdwg.mxu0
        %3006 = vmatpush.xpose.msra.mxu0 0.0
        %3007 = vmatpush.xpose.msra.mxu0 0.0
        %3008 = vmatpush.xpose.msra.mxu0 0.0
        %3009 = vmatpush.xpose.msra.mxu0 0.0
        %3010 = vmatpush.xpose.msra.mxu0 0.0
        %3011 = vmatpush.xpose.msra.mxu0 0.0
        %3012 = vmatpush.xpose.msra.mxu0 0.0
        %3013 = vmatpush.xpose.msra.mxu0 0.0
        %3014 = vmatpush.xpose.msra.mxu0 0.0
        %3015 = vmatpush.xpose.msra.mxu0 0.0
        %3016 = vmatpush.xpose.msra.mxu0 0.0
        %3017 = vmatpush.xpose.msra.mxu0 0.0
        %3018 = vmatpush.xpose.msra.mxu0 0.0
        %3019 = vmatpush.xpose.msra.mxu0 0.0
        %3020 = vmatpush.xpose.msra.mxu0 %v768
        %3021 = vmatpush.xpose.msra.mxu0 %v384
        %3022 = vmatmul.f32.gmra.mxu0 %v1261
        %v3023 = vpop.f32.mrf.mxu0
        %v3024 = vadd.f32 %v3004, %v3023
        %3025 = vdwg.mxu0
        %3026 = vmatpush.xpose.msra.mxu0 0.0
        %3027 = vmatpush.xpose.msra.mxu0 0.0
        %3028 = vmatpush.xpose.msra.mxu0 0.0
        %3029 = vmatpush.xpose.msra.mxu0 0.0
        %3030 = vmatpush.xpose.msra.mxu0 0.0
        %3031 = vmatpush.xpose.msra.mxu0 0.0
        %3032 = vmatpush.xpose.msra.mxu0 0.0
        %3033 = vmatpush.xpose.msra.mxu0 0.0
        %3034 = vmatpush.xpose.msra.mxu0 0.0
        %3035 = vmatpush.xpose.msra.mxu0 0.0
        %3036 = vmatpush.xpose.msra.mxu0 0.0
        %3037 = vmatpush.xpose.msra.mxu0 0.0
        %3038 = vmatpush.xpose.msra.mxu0 0.0
        %3039 = vmatpush.xpose.msra.mxu0 0.0
        %3040 = vmatpush.xpose.msra.mxu0 %v769
        %3041 = vmatpush.xpose.msra.mxu0 %v385
        %3042 = vmatmul.f32.gmra.mxu0 %v1264
        %v3043 = vpop.f32.mrf.mxu0
        %v3044 = vadd.f32 %v3024, %v3043
        %3045 = vdwg.mxu0
        %3046 = vmatpush.xpose.msra.mxu0 0.0
        %3047 = vmatpush.xpose.msra.mxu0 0.0
        %3048 = vmatpush.xpose.msra.mxu0 0.0
        %3049 = vmatpush.xpose.msra.mxu0 0.0
        %3050 = vmatpush.xpose.msra.mxu0 0.0
        %3051 = vmatpush.xpose.msra.mxu0 0.0
        %3052 = vmatpush.xpose.msra.mxu0 0.0
        %3053 = vmatpush.xpose.msra.mxu0 0.0
        %3054 = vmatpush.xpose.msra.mxu0 0.0
        %3055 = vmatpush.xpose.msra.mxu0 0.0
        %3056 = vmatpush.xpose.msra.mxu0 0.0
        %3057 = vmatpush.xpose.msra.mxu0 0.0
        %3058 = vmatpush.xpose.msra.mxu0 0.0
        %3059 = vmatpush.xpose.msra.mxu0 0.0
        %3060 = vmatpush.xpose.msra.mxu0 %v770
        %3061 = vmatpush.xpose.msra.mxu0 %v386
        %3062 = vmatmul.f32.gmra.mxu0 %v1265
        %v3063 = vpop.f32.mrf.mxu0
        %v3064 = vadd.f32 %v3044, %v3063
        %3065 = vdwg.mxu0
        %3066 = vmatpush.xpose.msra.mxu0 0.0
        %3067 = vmatpush.xpose.msra.mxu0 0.0
        %3068 = vmatpush.xpose.msra.mxu0 0.0
        %3069 = vmatpush.xpose.msra.mxu0 0.0
        %3070 = vmatpush.xpose.msra.mxu0 0.0
        %3071 = vmatpush.xpose.msra.mxu0 0.0
        %3072 = vmatpush.xpose.msra.mxu0 0.0
        %3073 = vmatpush.xpose.msra.mxu0 0.0
        %3074 = vmatpush.xpose.msra.mxu0 0.0
        %3075 = vmatpush.xpose.msra.mxu0 0.0
        %3076 = vmatpush.xpose.msra.mxu0 0.0
        %3077 = vmatpush.xpose.msra.mxu0 0.0
        %3078 = vmatpush.xpose.msra.mxu0 0.0
        %3079 = vmatpush.xpose.msra.mxu0 0.0
        %3080 = vmatpush.xpose.msra.mxu0 %v771
        %3081 = vmatpush.xpose.msra.mxu0 %v387
        %3082 = vmatmul.f32.gmra.mxu0 %v1266
        %v3083 = vpop.f32.mrf.mxu0
        %v3084 = vadd.f32 %v3064, %v3083
        %3085 = vdwg.mxu0
        %3086 = vmatpush.xpose.msra.mxu0 0.0
        %3087 = vmatpush.xpose.msra.mxu0 0.0
        %3088 = vmatpush.xpose.msra.mxu0 0.0
        %3089 = vmatpush.xpose.msra.mxu0 0.0
        %3090 = vmatpush.xpose.msra.mxu0 0.0
        %3091 = vmatpush.xpose.msra.mxu0 0.0
        %3092 = vmatpush.xpose.msra.mxu0 0.0
        %3093 = vmatpush.xpose.msra.mxu0 0.0
        %3094 = vmatpush.xpose.msra.mxu0 0.0
        %3095 = vmatpush.xpose.msra.mxu0 0.0
        %3096 = vmatpush.xpose.msra.mxu0 0.0
        %3097 = vmatpush.xpose.msra.mxu0 0.0
        %3098 = vmatpush.xpose.msra.mxu0 0.0
        %3099 = vmatpush.xpose.msra.mxu0 0.0
        %3100 = vmatpush.xpose.msra.mxu0 %v772
        %3101 = vmatpush.xpose.msra.mxu0 %v388
        %3102 = vmatmul.f32.gmra.mxu0 %v1267
        %v3103 = vpop.f32.mrf.mxu0
        %v3104 = vadd.f32 %v3084, %v3103
        %3105 = vdwg.mxu0
        %3106 = vmatpush.xpose.msra.mxu0 0.0
        %3107 = vmatpush.xpose.msra.mxu0 0.0
        %3108 = vmatpush.xpose.msra.mxu0 0.0
        %3109 = vmatpush.xpose.msra.mxu0 0.0
        %3110 = vmatpush.xpose.msra.mxu0 0.0
        %3111 = vmatpush.xpose.msra.mxu0 0.0
        %3112 = vmatpush.xpose.msra.mxu0 0.0
        %3113 = vmatpush.xpose.msra.mxu0 0.0
        %3114 = vmatpush.xpose.msra.mxu0 0.0
        %3115 = vmatpush.xpose.msra.mxu0 0.0
        %3116 = vmatpush.xpose.msra.mxu0 0.0
        %3117 = vmatpush.xpose.msra.mxu0 0.0
        %3118 = vmatpush.xpose.msra.mxu0 0.0
        %3119 = vmatpush.xpose.msra.mxu0 0.0
        %3120 = vmatpush.xpose.msra.mxu0 %v773
        %3121 = vmatpush.xpose.msra.mxu0 %v389
        %3122 = vmatmul.f32.gmra.mxu0 %v1268
        %v3123 = vpop.f32.mrf.mxu0
        %v3124 = vadd.f32 %v3104, %v3123
        %3125 = vdwg.mxu0
        %3126 = vmatpush.xpose.msra.mxu0 0.0
        %3127 = vmatpush.xpose.msra.mxu0 0.0
        %3128 = vmatpush.xpose.msra.mxu0 0.0
        %3129 = vmatpush.xpose.msra.mxu0 0.0
        %3130 = vmatpush.xpose.msra.mxu0 0.0
        %3131 = vmatpush.xpose.msra.mxu0 0.0
        %3132 = vmatpush.xpose.msra.mxu0 0.0
        %3133 = vmatpush.xpose.msra.mxu0 0.0
        %3134 = vmatpush.xpose.msra.mxu0 0.0
        %3135 = vmatpush.xpose.msra.mxu0 0.0
        %3136 = vmatpush.xpose.msra.mxu0 0.0
        %3137 = vmatpush.xpose.msra.mxu0 0.0
        %3138 = vmatpush.xpose.msra.mxu0 0.0
        %3139 = vmatpush.xpose.msra.mxu0 0.0
        %3140 = vmatpush.xpose.msra.mxu0 %v774
        %3141 = vmatpush.xpose.msra.mxu0 %v390
        %3142 = vmatmul.f32.gmra.mxu0 %v1269
        %v3143 = vpop.f32.mrf.mxu0
        %v3144 = vadd.f32 %v3124, %v3143
        %3145 = vdwg.mxu0
        %3146 = vmatpush.xpose.msra.mxu0 0.0
        %3147 = vmatpush.xpose.msra.mxu0 0.0
        %3148 = vmatpush.xpose.msra.mxu0 0.0
        %3149 = vmatpush.xpose.msra.mxu0 0.0
        %3150 = vmatpush.xpose.msra.mxu0 0.0
        %3151 = vmatpush.xpose.msra.mxu0 0.0
        %3152 = vmatpush.xpose.msra.mxu0 0.0
        %3153 = vmatpush.xpose.msra.mxu0 0.0
        %3154 = vmatpush.xpose.msra.mxu0 0.0
        %3155 = vmatpush.xpose.msra.mxu0 0.0
        %3156 = vmatpush.xpose.msra.mxu0 0.0
        %3157 = vmatpush.xpose.msra.mxu0 0.0
        %3158 = vmatpush.xpose.msra.mxu0 0.0
        %3159 = vmatpush.xpose.msra.mxu0 0.0
        %3160 = vmatpush.xpose.msra.mxu0 %v775
        %3161 = vmatpush.xpose.msra.mxu0 %v391
        %3162 = vmatmul.f32.gmra.mxu0 %v1270
        %v3163 = vpop.f32.mrf.mxu0
        %v3164 = vadd.f32 %v3144, %v3163
        %3165 = vdwg.mxu0
        %3166 = vmatpush.xpose.msra.mxu0 0.0
        %3167 = vmatpush.xpose.msra.mxu0 0.0
        %3168 = vmatpush.xpose.msra.mxu0 0.0
        %3169 = vmatpush.xpose.msra.mxu0 0.0
        %3170 = vmatpush.xpose.msra.mxu0 0.0
        %3171 = vmatpush.xpose.msra.mxu0 0.0
        %3172 = vmatpush.xpose.msra.mxu0 0.0
        %3173 = vmatpush.xpose.msra.mxu0 0.0
        %3174 = vmatpush.xpose.msra.mxu0 0.0
        %3175 = vmatpush.xpose.msra.mxu0 0.0
        %3176 = vmatpush.xpose.msra.mxu0 0.0
        %3177 = vmatpush.xpose.msra.mxu0 0.0
        %3178 = vmatpush.xpose.msra.mxu0 0.0
        %3179 = vmatpush.xpose.msra.mxu0 0.0
        %3180 = vmatpush.xpose.msra.mxu0 %v776
        %3181 = vmatpush.xpose.msra.mxu0 %v392
        %3182 = vmatmul.f32.gmra.mxu0 %v1271
        %v3183 = vpop.f32.mrf.mxu0
        %v3184 = vadd.f32 %v3164, %v3183
        %3185 = vdwg.mxu0
        %3186 = vmatpush.xpose.msra.mxu0 0.0
        %3187 = vmatpush.xpose.msra.mxu0 0.0
        %3188 = vmatpush.xpose.msra.mxu0 0.0
        %3189 = vmatpush.xpose.msra.mxu0 0.0
        %3190 = vmatpush.xpose.msra.mxu0 0.0
        %3191 = vmatpush.xpose.msra.mxu0 0.0
        %3192 = vmatpush.xpose.msra.mxu0 0.0
        %3193 = vmatpush.xpose.msra.mxu0 0.0
        %3194 = vmatpush.xpose.msra.mxu0 0.0
        %3195 = vmatpush.xpose.msra.mxu0 0.0
        %3196 = vmatpush.xpose.msra.mxu0 0.0
        %3197 = vmatpush.xpose.msra.mxu0 0.0
        %3198 = vmatpush.xpose.msra.mxu0 0.0
        %3199 = vmatpush.xpose.msra.mxu0 0.0
        %3200 = vmatpush.xpose.msra.mxu0 %v777
        %3201 = vmatpush.xpose.msra.mxu0 %v393
        %3202 = vmatmul.f32.gmra.mxu0 %v1274
        %v3203 = vpop.f32.mrf.mxu0
        %v3204 = vadd.f32 %v3184, %v3203
        %3205 = vdwg.mxu0
        %3206 = vmatpush.xpose.msra.mxu0 0.0
        %3207 = vmatpush.xpose.msra.mxu0 0.0
        %3208 = vmatpush.xpose.msra.mxu0 0.0
        %3209 = vmatpush.xpose.msra.mxu0 0.0
        %3210 = vmatpush.xpose.msra.mxu0 0.0
        %3211 = vmatpush.xpose.msra.mxu0 0.0
        %3212 = vmatpush.xpose.msra.mxu0 0.0
        %3213 = vmatpush.xpose.msra.mxu0 0.0
        %3214 = vmatpush.xpose.msra.mxu0 0.0
        %3215 = vmatpush.xpose.msra.mxu0 0.0
        %3216 = vmatpush.xpose.msra.mxu0 0.0
        %3217 = vmatpush.xpose.msra.mxu0 0.0
        %3218 = vmatpush.xpose.msra.mxu0 0.0
        %3219 = vmatpush.xpose.msra.mxu0 0.0
        %3220 = vmatpush.xpose.msra.mxu0 %v778
        %3221 = vmatpush.xpose.msra.mxu0 %v394
        %3222 = vmatmul.f32.gmra.mxu0 %v1275
        %v3223 = vpop.f32.mrf.mxu0
        %v3224 = vadd.f32 %v3204, %v3223
        %3225 = vdwg.mxu0
        %3226 = vmatpush.xpose.msra.mxu0 0.0
        %3227 = vmatpush.xpose.msra.mxu0 0.0
        %3228 = vmatpush.xpose.msra.mxu0 0.0
        %3229 = vmatpush.xpose.msra.mxu0 0.0
        %3230 = vmatpush.xpose.msra.mxu0 0.0
        %3231 = vmatpush.xpose.msra.mxu0 0.0
        %3232 = vmatpush.xpose.msra.mxu0 0.0
        %3233 = vmatpush.xpose.msra.mxu0 0.0
        %3234 = vmatpush.xpose.msra.mxu0 0.0
        %3235 = vmatpush.xpose.msra.mxu0 0.0
        %3236 = vmatpush.xpose.msra.mxu0 0.0
        %3237 = vmatpush.xpose.msra.mxu0 0.0
        %3238 = vmatpush.xpose.msra.mxu0 0.0
        %3239 = vmatpush.xpose.msra.mxu0 0.0
        %3240 = vmatpush.xpose.msra.mxu0 %v779
        %3241 = vmatpush.xpose.msra.mxu0 %v395
        %3242 = vmatmul.f32.gmra.mxu0 %v1276
        %v3243 = vpop.f32.mrf.mxu0
        %v3244 = vadd.f32 %v3224, %v3243
        %3245 = vdwg.mxu0
        %3246 = vmatpush.xpose.msra.mxu0 0.0
        %3247 = vmatpush.xpose.msra.mxu0 0.0
        %3248 = vmatpush.xpose.msra.mxu0 0.0
        %3249 = vmatpush.xpose.msra.mxu0 0.0
        %3250 = vmatpush.xpose.msra.mxu0 0.0
        %3251 = vmatpush.xpose.msra.mxu0 0.0
        %3252 = vmatpush.xpose.msra.mxu0 0.0
        %3253 = vmatpush.xpose.msra.mxu0 0.0
        %3254 = vmatpush.xpose.msra.mxu0 0.0
        %3255 = vmatpush.xpose.msra.mxu0 0.0
        %3256 = vmatpush.xpose.msra.mxu0 0.0
        %3257 = vmatpush.xpose.msra.mxu0 0.0
        %3258 = vmatpush.xpose.msra.mxu0 0.0
        %3259 = vmatpush.xpose.msra.mxu0 0.0
        %3260 = vmatpush.xpose.msra.mxu0 %v780
        %3261 = vmatpush.xpose.msra.mxu0 %v396
        %3262 = vmatmul.f32.gmra.mxu0 %v1277
        %v3263 = vpop.f32.mrf.mxu0
        %v3264 = vadd.f32 %v3244, %v3263
        %3265 = vdwg.mxu0
        %3266 = vmatpush.xpose.msra.mxu0 0.0
        %3267 = vmatpush.xpose.msra.mxu0 0.0
        %3268 = vmatpush.xpose.msra.mxu0 0.0
        %3269 = vmatpush.xpose.msra.mxu0 0.0
        %3270 = vmatpush.xpose.msra.mxu0 0.0
        %3271 = vmatpush.xpose.msra.mxu0 0.0
        %3272 = vmatpush.xpose.msra.mxu0 0.0
        %3273 = vmatpush.xpose.msra.mxu0 0.0
        %3274 = vmatpush.xpose.msra.mxu0 0.0
        %3275 = vmatpush.xpose.msra.mxu0 0.0
        %3276 = vmatpush.xpose.msra.mxu0 0.0
        %3277 = vmatpush.xpose.msra.mxu0 0.0
        %3278 = vmatpush.xpose.msra.mxu0 0.0
        %3279 = vmatpush.xpose.msra.mxu0 0.0
        %3280 = vmatpush.xpose.msra.mxu0 %v781
        %3281 = vmatpush.xpose.msra.mxu0 %v397
        %3282 = vmatmul.f32.gmra.mxu0 %v1278
        %v3283 = vpop.f32.mrf.mxu0
        %v3284 = vadd.f32 %v3264, %v3283
        %3285 = vdwg.mxu0
        %3286 = vmatpush.xpose.msra.mxu0 0.0
        %3287 = vmatpush.xpose.msra.mxu0 0.0
        %3288 = vmatpush.xpose.msra.mxu0 0.0
        %3289 = vmatpush.xpose.msra.mxu0 0.0
        %3290 = vmatpush.xpose.msra.mxu0 0.0
        %3291 = vmatpush.xpose.msra.mxu0 0.0
        %3292 = vmatpush.xpose.msra.mxu0 0.0
        %3293 = vmatpush.xpose.msra.mxu0 0.0
        %3294 = vmatpush.xpose.msra.mxu0 0.0
        %3295 = vmatpush.xpose.msra.mxu0 0.0
        %3296 = vmatpush.xpose.msra.mxu0 0.0
        %3297 = vmatpush.xpose.msra.mxu0 0.0
        %3298 = vmatpush.xpose.msra.mxu0 0.0
        %3299 = vmatpush.xpose.msra.mxu0 0.0
        %3300 = vmatpush.xpose.msra.mxu0 %v782
        %3301 = vmatpush.xpose.msra.mxu0 %v398
        %3302 = vmatmul.f32.gmra.mxu0 %v1279
        %v3303 = vpop.f32.mrf.mxu0
        %v3304 = vadd.f32 %v3284, %v3303
        %3305 = vdwg.mxu0
        %3306 = vmatpush.xpose.msra.mxu0 0.0
        %3307 = vmatpush.xpose.msra.mxu0 0.0
        %3308 = vmatpush.xpose.msra.mxu0 0.0
        %3309 = vmatpush.xpose.msra.mxu0 0.0
        %3310 = vmatpush.xpose.msra.mxu0 0.0
        %3311 = vmatpush.xpose.msra.mxu0 0.0
        %3312 = vmatpush.xpose.msra.mxu0 0.0
        %3313 = vmatpush.xpose.msra.mxu0 0.0
        %3314 = vmatpush.xpose.msra.mxu0 0.0
        %3315 = vmatpush.xpose.msra.mxu0 0.0
        %3316 = vmatpush.xpose.msra.mxu0 0.0
        %3317 = vmatpush.xpose.msra.mxu0 0.0
        %3318 = vmatpush.xpose.msra.mxu0 0.0
        %3319 = vmatpush.xpose.msra.mxu0 0.0
        %3320 = vmatpush.xpose.msra.mxu0 %v783
        %3321 = vmatpush.xpose.msra.mxu0 %v399
        %3322 = vmatmul.f32.gmra.mxu0 %v1280
        %v3323 = vpop.f32.mrf.mxu0
        %v3324 = vadd.f32 %v3304, %v3323
        %3325 = vdwg.mxu0
        %3326 = vmatpush.xpose.msra.mxu0 0.0
        %3327 = vmatpush.xpose.msra.mxu0 0.0
        %3328 = vmatpush.xpose.msra.mxu0 0.0
        %3329 = vmatpush.xpose.msra.mxu0 0.0
        %3330 = vmatpush.xpose.msra.mxu0 0.0
        %3331 = vmatpush.xpose.msra.mxu0 0.0
        %3332 = vmatpush.xpose.msra.mxu0 0.0
        %3333 = vmatpush.xpose.msra.mxu0 0.0
        %3334 = vmatpush.xpose.msra.mxu0 0.0
        %3335 = vmatpush.xpose.msra.mxu0 0.0
        %3336 = vmatpush.xpose.msra.mxu0 0.0
        %3337 = vmatpush.xpose.msra.mxu0 0.0
        %3338 = vmatpush.xpose.msra.mxu0 0.0
        %3339 = vmatpush.xpose.msra.mxu0 0.0
        %3340 = vmatpush.xpose.msra.mxu0 %v784
        %3341 = vmatpush.xpose.msra.mxu0 %v400
        %3342 = vmatmul.f32.gmra.mxu0 %v1281
        %v3343 = vpop.f32.mrf.mxu0
        %v3344 = vadd.f32 %v3324, %v3343
        %3345 = vdwg.mxu0
        %3346 = vmatpush.xpose.msra.mxu0 0.0
        %3347 = vmatpush.xpose.msra.mxu0 0.0
        %3348 = vmatpush.xpose.msra.mxu0 0.0
        %3349 = vmatpush.xpose.msra.mxu0 0.0
        %3350 = vmatpush.xpose.msra.mxu0 0.0
        %3351 = vmatpush.xpose.msra.mxu0 0.0
        %3352 = vmatpush.xpose.msra.mxu0 0.0
        %3353 = vmatpush.xpose.msra.mxu0 0.0
        %3354 = vmatpush.xpose.msra.mxu0 0.0
        %3355 = vmatpush.xpose.msra.mxu0 0.0
        %3356 = vmatpush.xpose.msra.mxu0 0.0
        %3357 = vmatpush.xpose.msra.mxu0 0.0
        %3358 = vmatpush.xpose.msra.mxu0 0.0
        %3359 = vmatpush.xpose.msra.mxu0 0.0
        %3360 = vmatpush.xpose.msra.mxu0 %v785
        %3361 = vmatpush.xpose.msra.mxu0 %v401
        %3362 = vmatmul.f32.gmra.mxu0 %v1284
        %v3363 = vpop.f32.mrf.mxu0
        %v3364 = vadd.f32 %v3344, %v3363
        %3365 = vdwg.mxu0
        %3366 = vmatpush.xpose.msra.mxu0 0.0
        %3367 = vmatpush.xpose.msra.mxu0 0.0
        %3368 = vmatpush.xpose.msra.mxu0 0.0
        %3369 = vmatpush.xpose.msra.mxu0 0.0
        %3370 = vmatpush.xpose.msra.mxu0 0.0
        %3371 = vmatpush.xpose.msra.mxu0 0.0
        %3372 = vmatpush.xpose.msra.mxu0 0.0
        %3373 = vmatpush.xpose.msra.mxu0 0.0
        %3374 = vmatpush.xpose.msra.mxu0 0.0
        %3375 = vmatpush.xpose.msra.mxu0 0.0
        %3376 = vmatpush.xpose.msra.mxu0 0.0
        %3377 = vmatpush.xpose.msra.mxu0 0.0
        %3378 = vmatpush.xpose.msra.mxu0 0.0
        %3379 = vmatpush.xpose.msra.mxu0 0.0
        %3380 = vmatpush.xpose.msra.mxu0 %v786
        %3381 = vmatpush.xpose.msra.mxu0 %v402
        %3382 = vmatmul.f32.gmra.mxu0 %v1285
        %v3383 = vpop.f32.mrf.mxu0
        %v3384 = vadd.f32 %v3364, %v3383
        %3385 = vdwg.mxu0
        %3386 = vmatpush.xpose.msra.mxu0 0.0
        %3387 = vmatpush.xpose.msra.mxu0 0.0
        %3388 = vmatpush.xpose.msra.mxu0 0.0
        %3389 = vmatpush.xpose.msra.mxu0 0.0
        %3390 = vmatpush.xpose.msra.mxu0 0.0
        %3391 = vmatpush.xpose.msra.mxu0 0.0
        %3392 = vmatpush.xpose.msra.mxu0 0.0
        %3393 = vmatpush.xpose.msra.mxu0 0.0
        %3394 = vmatpush.xpose.msra.mxu0 0.0
        %3395 = vmatpush.xpose.msra.mxu0 0.0
        %3396 = vmatpush.xpose.msra.mxu0 0.0
        %3397 = vmatpush.xpose.msra.mxu0 0.0
        %3398 = vmatpush.xpose.msra.mxu0 0.0
        %3399 = vmatpush.xpose.msra.mxu0 0.0
        %3400 = vmatpush.xpose.msra.mxu0 %v787
        %3401 = vmatpush.xpose.msra.mxu0 %v403
        %3402 = vmatmul.f32.gmra.mxu0 %v1286
        %v3403 = vpop.f32.mrf.mxu0
        %v3404 = vadd.f32 %v3384, %v3403
        %3405 = vdwg.mxu0
        %3406 = vmatpush.xpose.msra.mxu0 0.0
        %3407 = vmatpush.xpose.msra.mxu0 0.0
        %3408 = vmatpush.xpose.msra.mxu0 0.0
        %3409 = vmatpush.xpose.msra.mxu0 0.0
        %3410 = vmatpush.xpose.msra.mxu0 0.0
        %3411 = vmatpush.xpose.msra.mxu0 0.0
        %3412 = vmatpush.xpose.msra.mxu0 0.0
        %3413 = vmatpush.xpose.msra.mxu0 0.0
        %3414 = vmatpush.xpose.msra.mxu0 0.0
        %3415 = vmatpush.xpose.msra.mxu0 0.0
        %3416 = vmatpush.xpose.msra.mxu0 0.0
        %3417 = vmatpush.xpose.msra.mxu0 0.0
        %3418 = vmatpush.xpose.msra.mxu0 0.0
        %3419 = vmatpush.xpose.msra.mxu0 0.0
        %3420 = vmatpush.xpose.msra.mxu0 %v788
        %3421 = vmatpush.xpose.msra.mxu0 %v404
        %3422 = vmatmul.f32.gmra.mxu0 %v1287
        %v3423 = vpop.f32.mrf.mxu0
        %v3424 = vadd.f32 %v3404, %v3423
        %3425 = vdwg.mxu0
        %3426 = vmatpush.xpose.msra.mxu0 0.0
        %3427 = vmatpush.xpose.msra.mxu0 0.0
        %3428 = vmatpush.xpose.msra.mxu0 0.0
        %3429 = vmatpush.xpose.msra.mxu0 0.0
        %3430 = vmatpush.xpose.msra.mxu0 0.0
        %3431 = vmatpush.xpose.msra.mxu0 0.0
        %3432 = vmatpush.xpose.msra.mxu0 0.0
        %3433 = vmatpush.xpose.msra.mxu0 0.0
        %3434 = vmatpush.xpose.msra.mxu0 0.0
        %3435 = vmatpush.xpose.msra.mxu0 0.0
        %3436 = vmatpush.xpose.msra.mxu0 0.0
        %3437 = vmatpush.xpose.msra.mxu0 0.0
        %3438 = vmatpush.xpose.msra.mxu0 0.0
        %3439 = vmatpush.xpose.msra.mxu0 0.0
        %3440 = vmatpush.xpose.msra.mxu0 %v789
        %3441 = vmatpush.xpose.msra.mxu0 %v405
        %3442 = vmatmul.f32.gmra.mxu0 %v1288
        %v3443 = vpop.f32.mrf.mxu0
        %v3444 = vadd.f32 %v3424, %v3443
        %3445 = vdwg.mxu0
        %3446 = vmatpush.xpose.msra.mxu0 0.0
        %3447 = vmatpush.xpose.msra.mxu0 0.0
        %3448 = vmatpush.xpose.msra.mxu0 0.0
        %3449 = vmatpush.xpose.msra.mxu0 0.0
        %3450 = vmatpush.xpose.msra.mxu0 0.0
        %3451 = vmatpush.xpose.msra.mxu0 0.0
        %3452 = vmatpush.xpose.msra.mxu0 0.0
        %3453 = vmatpush.xpose.msra.mxu0 0.0
        %3454 = vmatpush.xpose.msra.mxu0 0.0
        %3455 = vmatpush.xpose.msra.mxu0 0.0
        %3456 = vmatpush.xpose.msra.mxu0 0.0
        %3457 = vmatpush.xpose.msra.mxu0 0.0
        %3458 = vmatpush.xpose.msra.mxu0 0.0
        %3459 = vmatpush.xpose.msra.mxu0 0.0
        %3460 = vmatpush.xpose.msra.mxu0 %v790
        %3461 = vmatpush.xpose.msra.mxu0 %v406
        %3462 = vmatmul.f32.gmra.mxu0 %v1289
        %v3463 = vpop.f32.mrf.mxu0
        %v3464 = vadd.f32 %v3444, %v3463
        %3465 = vdwg.mxu0
        %3466 = vmatpush.xpose.msra.mxu0 0.0
        %3467 = vmatpush.xpose.msra.mxu0 0.0
        %3468 = vmatpush.xpose.msra.mxu0 0.0
        %3469 = vmatpush.xpose.msra.mxu0 0.0
        %3470 = vmatpush.xpose.msra.mxu0 0.0
        %3471 = vmatpush.xpose.msra.mxu0 0.0
        %3472 = vmatpush.xpose.msra.mxu0 0.0
        %3473 = vmatpush.xpose.msra.mxu0 0.0
        %3474 = vmatpush.xpose.msra.mxu0 0.0
        %3475 = vmatpush.xpose.msra.mxu0 0.0
        %3476 = vmatpush.xpose.msra.mxu0 0.0
        %3477 = vmatpush.xpose.msra.mxu0 0.0
        %3478 = vmatpush.xpose.msra.mxu0 0.0
        %3479 = vmatpush.xpose.msra.mxu0 0.0
        %3480 = vmatpush.xpose.msra.mxu0 %v791
        %3481 = vmatpush.xpose.msra.mxu0 %v407
        %3482 = vmatmul.f32.gmra.mxu0 %v1290
        %v3483 = vpop.f32.mrf.mxu0
        %v3484 = vadd.f32 %v3464, %v3483
        %3485 = vdwg.mxu0
        %3486 = vmatpush.xpose.msra.mxu0 0.0
        %3487 = vmatpush.xpose.msra.mxu0 0.0
        %3488 = vmatpush.xpose.msra.mxu0 0.0
        %3489 = vmatpush.xpose.msra.mxu0 0.0
        %3490 = vmatpush.xpose.msra.mxu0 0.0
        %3491 = vmatpush.xpose.msra.mxu0 0.0
        %3492 = vmatpush.xpose.msra.mxu0 0.0
        %3493 = vmatpush.xpose.msra.mxu0 0.0
        %3494 = vmatpush.xpose.msra.mxu0 0.0
        %3495 = vmatpush.xpose.msra.mxu0 0.0
        %3496 = vmatpush.xpose.msra.mxu0 0.0
        %3497 = vmatpush.xpose.msra.mxu0 0.0
        %3498 = vmatpush.xpose.msra.mxu0 0.0
        %3499 = vmatpush.xpose.msra.mxu0 0.0
        %3500 = vmatpush.xpose.msra.mxu0 %v792
        %3501 = vmatpush.xpose.msra.mxu0 %v408
        %3502 = vmatmul.f32.gmra.mxu0 %v1291
        %v3503 = vpop.f32.mrf.mxu0
        %v3504 = vadd.f32 %v3484, %v3503
        %3505 = vdwg.mxu0
        %3506 = vmatpush.xpose.msra.mxu0 0.0
        %3507 = vmatpush.xpose.msra.mxu0 0.0
        %3508 = vmatpush.xpose.msra.mxu0 0.0
        %3509 = vmatpush.xpose.msra.mxu0 0.0
        %3510 = vmatpush.xpose.msra.mxu0 0.0
        %3511 = vmatpush.xpose.msra.mxu0 0.0
        %3512 = vmatpush.xpose.msra.mxu0 0.0
        %3513 = vmatpush.xpose.msra.mxu0 0.0
        %3514 = vmatpush.xpose.msra.mxu0 0.0
        %3515 = vmatpush.xpose.msra.mxu0 0.0
        %3516 = vmatpush.xpose.msra.mxu0 0.0
        %3517 = vmatpush.xpose.msra.mxu0 0.0
        %3518 = vmatpush.xpose.msra.mxu0 0.0
        %3519 = vmatpush.xpose.msra.mxu0 0.0
        %3520 = vmatpush.xpose.msra.mxu0 %v793
        %3521 = vmatpush.xpose.msra.mxu0 %v409
        %3522 = vmatmul.f32.gmra.mxu0 %v1294
        %v3523 = vpop.f32.mrf.mxu0
        %v3524 = vadd.f32 %v3504, %v3523
        %3525 = vdwg.mxu0
        %3526 = vmatpush.xpose.msra.mxu0 0.0
        %3527 = vmatpush.xpose.msra.mxu0 0.0
        %3528 = vmatpush.xpose.msra.mxu0 0.0
        %3529 = vmatpush.xpose.msra.mxu0 0.0
        %3530 = vmatpush.xpose.msra.mxu0 0.0
        %3531 = vmatpush.xpose.msra.mxu0 0.0
        %3532 = vmatpush.xpose.msra.mxu0 0.0
        %3533 = vmatpush.xpose.msra.mxu0 0.0
        %3534 = vmatpush.xpose.msra.mxu0 0.0
        %3535 = vmatpush.xpose.msra.mxu0 0.0
        %3536 = vmatpush.xpose.msra.mxu0 0.0
        %3537 = vmatpush.xpose.msra.mxu0 0.0
        %3538 = vmatpush.xpose.msra.mxu0 0.0
        %3539 = vmatpush.xpose.msra.mxu0 0.0
        %3540 = vmatpush.xpose.msra.mxu0 %v794
        %3541 = vmatpush.xpose.msra.mxu0 %v410
        %3542 = vmatmul.f32.gmra.mxu0 %v1295
        %v3543 = vpop.f32.mrf.mxu0
        %v3544 = vadd.f32 %v3524, %v3543
        %3545 = vdwg.mxu0
        %3546 = vmatpush.xpose.msra.mxu0 0.0
        %3547 = vmatpush.xpose.msra.mxu0 0.0
        %3548 = vmatpush.xpose.msra.mxu0 0.0
        %3549 = vmatpush.xpose.msra.mxu0 0.0
        %3550 = vmatpush.xpose.msra.mxu0 0.0
        %3551 = vmatpush.xpose.msra.mxu0 0.0
        %3552 = vmatpush.xpose.msra.mxu0 0.0
        %3553 = vmatpush.xpose.msra.mxu0 0.0
        %3554 = vmatpush.xpose.msra.mxu0 0.0
        %3555 = vmatpush.xpose.msra.mxu0 0.0
        %3556 = vmatpush.xpose.msra.mxu0 0.0
        %3557 = vmatpush.xpose.msra.mxu0 0.0
        %3558 = vmatpush.xpose.msra.mxu0 0.0
        %3559 = vmatpush.xpose.msra.mxu0 0.0
        %3560 = vmatpush.xpose.msra.mxu0 %v795
        %3561 = vmatpush.xpose.msra.mxu0 %v411
        %3562 = vmatmul.f32.gmra.mxu0 %v1296
        %v3563 = vpop.f32.mrf.mxu0
        %v3564 = vadd.f32 %v3544, %v3563
        %3565 = vdwg.mxu0
        %3566 = vmatpush.xpose.msra.mxu0 0.0
        %3567 = vmatpush.xpose.msra.mxu0 0.0
        %3568 = vmatpush.xpose.msra.mxu0 0.0
        %3569 = vmatpush.xpose.msra.mxu0 0.0
        %3570 = vmatpush.xpose.msra.mxu0 0.0
        %3571 = vmatpush.xpose.msra.mxu0 0.0
        %3572 = vmatpush.xpose.msra.mxu0 0.0
        %3573 = vmatpush.xpose.msra.mxu0 0.0
        %3574 = vmatpush.xpose.msra.mxu0 0.0
        %3575 = vmatpush.xpose.msra.mxu0 0.0
        %3576 = vmatpush.xpose.msra.mxu0 0.0
        %3577 = vmatpush.xpose.msra.mxu0 0.0
        %3578 = vmatpush.xpose.msra.mxu0 0.0
        %3579 = vmatpush.xpose.msra.mxu0 0.0
        %3580 = vmatpush.xpose.msra.mxu0 %v796
        %3581 = vmatpush.xpose.msra.mxu0 %v412
        %3582 = vmatmul.f32.gmra.mxu0 %v1297
        %v3583 = vpop.f32.mrf.mxu0
        %v3584 = vadd.f32 %v3564, %v3583
        %3585 = vdwg.mxu0
        %3586 = vmatpush.xpose.msra.mxu0 0.0
        %3587 = vmatpush.xpose.msra.mxu0 0.0
        %3588 = vmatpush.xpose.msra.mxu0 0.0
        %3589 = vmatpush.xpose.msra.mxu0 0.0
        %3590 = vmatpush.xpose.msra.mxu0 0.0
        %3591 = vmatpush.xpose.msra.mxu0 0.0
        %3592 = vmatpush.xpose.msra.mxu0 0.0
        %3593 = vmatpush.xpose.msra.mxu0 0.0
        %3594 = vmatpush.xpose.msra.mxu0 0.0
        %3595 = vmatpush.xpose.msra.mxu0 0.0
        %3596 = vmatpush.xpose.msra.mxu0 0.0
        %3597 = vmatpush.xpose.msra.mxu0 0.0
        %3598 = vmatpush.xpose.msra.mxu0 0.0
        %3599 = vmatpush.xpose.msra.mxu0 0.0
        %3600 = vmatpush.xpose.msra.mxu0 %v797
        %3601 = vmatpush.xpose.msra.mxu0 %v413
        %3602 = vmatmul.f32.gmra.mxu0 %v1298
        %v3603 = vpop.f32.mrf.mxu0
        %v3604 = vadd.f32 %v3584, %v3603
        %3605 = vdwg.mxu0
        %3606 = vmatpush.xpose.msra.mxu0 0.0
        %3607 = vmatpush.xpose.msra.mxu0 0.0
        %3608 = vmatpush.xpose.msra.mxu0 0.0
        %3609 = vmatpush.xpose.msra.mxu0 0.0
        %3610 = vmatpush.xpose.msra.mxu0 0.0
        %3611 = vmatpush.xpose.msra.mxu0 0.0
        %3612 = vmatpush.xpose.msra.mxu0 0.0
        %3613 = vmatpush.xpose.msra.mxu0 0.0
        %3614 = vmatpush.xpose.msra.mxu0 0.0
        %3615 = vmatpush.xpose.msra.mxu0 0.0
        %3616 = vmatpush.xpose.msra.mxu0 0.0
        %3617 = vmatpush.xpose.msra.mxu0 0.0
        %3618 = vmatpush.xpose.msra.mxu0 0.0
        %3619 = vmatpush.xpose.msra.mxu0 0.0
        %3620 = vmatpush.xpose.msra.mxu0 %v798
        %3621 = vmatpush.xpose.msra.mxu0 %v414
        %3622 = vmatmul.f32.gmra.mxu0 %v1299
        %v3623 = vpop.f32.mrf.mxu0
        %v3624 = vadd.f32 %v3604, %v3623
        %3625 = vdwg.mxu0
        %3626 = vmatpush.xpose.msra.mxu0 0.0
        %3627 = vmatpush.xpose.msra.mxu0 0.0
        %3628 = vmatpush.xpose.msra.mxu0 0.0
        %3629 = vmatpush.xpose.msra.mxu0 0.0
        %3630 = vmatpush.xpose.msra.mxu0 0.0
        %3631 = vmatpush.xpose.msra.mxu0 0.0
        %3632 = vmatpush.xpose.msra.mxu0 0.0
        %3633 = vmatpush.xpose.msra.mxu0 0.0
        %3634 = vmatpush.xpose.msra.mxu0 0.0
        %3635 = vmatpush.xpose.msra.mxu0 0.0
        %3636 = vmatpush.xpose.msra.mxu0 0.0
        %3637 = vmatpush.xpose.msra.mxu0 0.0
        %3638 = vmatpush.xpose.msra.mxu0 0.0
        %3639 = vmatpush.xpose.msra.mxu0 0.0
        %3640 = vmatpush.xpose.msra.mxu0 %v799
        %3641 = vmatpush.xpose.msra.mxu0 %v415
        %3642 = vmatmul.f32.gmra.mxu0 %v1300
        %v3643 = vpop.f32.mrf.mxu0
        %v3644 = vadd.f32 %v3624, %v3643
        %3645 = vdwg.mxu0
        %3646 = vmatpush.xpose.msra.mxu0 0.0
        %3647 = vmatpush.xpose.msra.mxu0 0.0
        %3648 = vmatpush.xpose.msra.mxu0 0.0
        %3649 = vmatpush.xpose.msra.mxu0 0.0
        %3650 = vmatpush.xpose.msra.mxu0 0.0
        %3651 = vmatpush.xpose.msra.mxu0 0.0
        %3652 = vmatpush.xpose.msra.mxu0 0.0
        %3653 = vmatpush.xpose.msra.mxu0 0.0
        %3654 = vmatpush.xpose.msra.mxu0 0.0
        %3655 = vmatpush.xpose.msra.mxu0 0.0
        %3656 = vmatpush.xpose.msra.mxu0 0.0
        %3657 = vmatpush.xpose.msra.mxu0 0.0
        %3658 = vmatpush.xpose.msra.mxu0 0.0
        %3659 = vmatpush.xpose.msra.mxu0 0.0
        %3660 = vmatpush.xpose.msra.mxu0 %v800
        %3661 = vmatpush.xpose.msra.mxu0 %v416
        %3662 = vmatmul.f32.gmra.mxu0 %v1301
        %v3663 = vpop.f32.mrf.mxu0
        %v3664 = vadd.f32 %v3644, %v3663
        %3665 = vdwg.mxu0
        %3666 = vmatpush.xpose.msra.mxu0 0.0
        %3667 = vmatpush.xpose.msra.mxu0 0.0
        %3668 = vmatpush.xpose.msra.mxu0 0.0
        %3669 = vmatpush.xpose.msra.mxu0 0.0
        %3670 = vmatpush.xpose.msra.mxu0 0.0
        %3671 = vmatpush.xpose.msra.mxu0 0.0
        %3672 = vmatpush.xpose.msra.mxu0 0.0
        %3673 = vmatpush.xpose.msra.mxu0 0.0
        %3674 = vmatpush.xpose.msra.mxu0 0.0
        %3675 = vmatpush.xpose.msra.mxu0 0.0
        %3676 = vmatpush.xpose.msra.mxu0 0.0
        %3677 = vmatpush.xpose.msra.mxu0 0.0
        %3678 = vmatpush.xpose.msra.mxu0 0.0
        %3679 = vmatpush.xpose.msra.mxu0 0.0
        %3680 = vmatpush.xpose.msra.mxu0 %v801
        %3681 = vmatpush.xpose.msra.mxu0 %v417
        %3682 = vmatmul.f32.gmra.mxu0 %v1304
        %v3683 = vpop.f32.mrf.mxu0
        %v3684 = vadd.f32 %v3664, %v3683
        %3685 = vdwg.mxu0
        %3686 = vmatpush.xpose.msra.mxu0 0.0
        %3687 = vmatpush.xpose.msra.mxu0 0.0
        %3688 = vmatpush.xpose.msra.mxu0 0.0
        %3689 = vmatpush.xpose.msra.mxu0 0.0
        %3690 = vmatpush.xpose.msra.mxu0 0.0
        %3691 = vmatpush.xpose.msra.mxu0 0.0
        %3692 = vmatpush.xpose.msra.mxu0 0.0
        %3693 = vmatpush.xpose.msra.mxu0 0.0
        %3694 = vmatpush.xpose.msra.mxu0 0.0
        %3695 = vmatpush.xpose.msra.mxu0 0.0
        %3696 = vmatpush.xpose.msra.mxu0 0.0
        %3697 = vmatpush.xpose.msra.mxu0 0.0
        %3698 = vmatpush.xpose.msra.mxu0 0.0
        %3699 = vmatpush.xpose.msra.mxu0 0.0
        %3700 = vmatpush.xpose.msra.mxu0 %v802
        %3701 = vmatpush.xpose.msra.mxu0 %v418
        %3702 = vmatmul.f32.gmra.mxu0 %v1305
        %v3703 = vpop.f32.mrf.mxu0
        %v3704 = vadd.f32 %v3684, %v3703
        %3705 = vdwg.mxu0
        %3706 = vmatpush.xpose.msra.mxu0 0.0
        %3707 = vmatpush.xpose.msra.mxu0 0.0
        %3708 = vmatpush.xpose.msra.mxu0 0.0
        %3709 = vmatpush.xpose.msra.mxu0 0.0
        %3710 = vmatpush.xpose.msra.mxu0 0.0
        %3711 = vmatpush.xpose.msra.mxu0 0.0
        %3712 = vmatpush.xpose.msra.mxu0 0.0
        %3713 = vmatpush.xpose.msra.mxu0 0.0
        %3714 = vmatpush.xpose.msra.mxu0 0.0
        %3715 = vmatpush.xpose.msra.mxu0 0.0
        %3716 = vmatpush.xpose.msra.mxu0 0.0
        %3717 = vmatpush.xpose.msra.mxu0 0.0
        %3718 = vmatpush.xpose.msra.mxu0 0.0
        %3719 = vmatpush.xpose.msra.mxu0 0.0
        %3720 = vmatpush.xpose.msra.mxu0 %v803
        %3721 = vmatpush.xpose.msra.mxu0 %v419
        %3722 = vmatmul.f32.gmra.mxu0 %v1306
        %v3723 = vpop.f32.mrf.mxu0
        %v3724 = vadd.f32 %v3704, %v3723
        %3725 = vdwg.mxu0
        %3726 = vmatpush.xpose.msra.mxu0 0.0
        %3727 = vmatpush.xpose.msra.mxu0 0.0
        %3728 = vmatpush.xpose.msra.mxu0 0.0
        %3729 = vmatpush.xpose.msra.mxu0 0.0
        %3730 = vmatpush.xpose.msra.mxu0 0.0
        %3731 = vmatpush.xpose.msra.mxu0 0.0
        %3732 = vmatpush.xpose.msra.mxu0 0.0
        %3733 = vmatpush.xpose.msra.mxu0 0.0
        %3734 = vmatpush.xpose.msra.mxu0 0.0
        %3735 = vmatpush.xpose.msra.mxu0 0.0
        %3736 = vmatpush.xpose.msra.mxu0 0.0
        %3737 = vmatpush.xpose.msra.mxu0 0.0
        %3738 = vmatpush.xpose.msra.mxu0 0.0
        %3739 = vmatpush.xpose.msra.mxu0 0.0
        %3740 = vmatpush.xpose.msra.mxu0 %v804
        %3741 = vmatpush.xpose.msra.mxu0 %v420
        %3742 = vmatmul.f32.gmra.mxu0 %v1307
        %v3743 = vpop.f32.mrf.mxu0
        %v3744 = vadd.f32 %v3724, %v3743
        %3745 = vdwg.mxu0
        %3746 = vmatpush.xpose.msra.mxu0 0.0
        %3747 = vmatpush.xpose.msra.mxu0 0.0
        %3748 = vmatpush.xpose.msra.mxu0 0.0
        %3749 = vmatpush.xpose.msra.mxu0 0.0
        %3750 = vmatpush.xpose.msra.mxu0 0.0
        %3751 = vmatpush.xpose.msra.mxu0 0.0
        %3752 = vmatpush.xpose.msra.mxu0 0.0
        %3753 = vmatpush.xpose.msra.mxu0 0.0
        %3754 = vmatpush.xpose.msra.mxu0 0.0
        %3755 = vmatpush.xpose.msra.mxu0 0.0
        %3756 = vmatpush.xpose.msra.mxu0 0.0
        %3757 = vmatpush.xpose.msra.mxu0 0.0
        %3758 = vmatpush.xpose.msra.mxu0 0.0
        %3759 = vmatpush.xpose.msra.mxu0 0.0
        %3760 = vmatpush.xpose.msra.mxu0 %v805
        %3761 = vmatpush.xpose.msra.mxu0 %v421
        %3762 = vmatmul.f32.gmra.mxu0 %v1308
        %v3763 = vpop.f32.mrf.mxu0
        %v3764 = vadd.f32 %v3744, %v3763
        %3765 = vdwg.mxu0
        %3766 = vmatpush.xpose.msra.mxu0 0.0
        %3767 = vmatpush.xpose.msra.mxu0 0.0
        %3768 = vmatpush.xpose.msra.mxu0 0.0
        %3769 = vmatpush.xpose.msra.mxu0 0.0
        %3770 = vmatpush.xpose.msra.mxu0 0.0
        %3771 = vmatpush.xpose.msra.mxu0 0.0
        %3772 = vmatpush.xpose.msra.mxu0 0.0
        %3773 = vmatpush.xpose.msra.mxu0 0.0
        %3774 = vmatpush.xpose.msra.mxu0 0.0
        %3775 = vmatpush.xpose.msra.mxu0 0.0
        %3776 = vmatpush.xpose.msra.mxu0 0.0
        %3777 = vmatpush.xpose.msra.mxu0 0.0
        %3778 = vmatpush.xpose.msra.mxu0 0.0
        %3779 = vmatpush.xpose.msra.mxu0 0.0
        %3780 = vmatpush.xpose.msra.mxu0 %v806
        %3781 = vmatpush.xpose.msra.mxu0 %v422
        %3782 = vmatmul.f32.gmra.mxu0 %v1309
        %v3783 = vpop.f32.mrf.mxu0
        %v3784 = vadd.f32 %v3764, %v3783
        %3785 = vdwg.mxu0
        %3786 = vmatpush.xpose.msra.mxu0 0.0
        %3787 = vmatpush.xpose.msra.mxu0 0.0
        %3788 = vmatpush.xpose.msra.mxu0 0.0
        %3789 = vmatpush.xpose.msra.mxu0 0.0
        %3790 = vmatpush.xpose.msra.mxu0 0.0
        %3791 = vmatpush.xpose.msra.mxu0 0.0
        %3792 = vmatpush.xpose.msra.mxu0 0.0
        %3793 = vmatpush.xpose.msra.mxu0 0.0
        %3794 = vmatpush.xpose.msra.mxu0 0.0
        %3795 = vmatpush.xpose.msra.mxu0 0.0
        %3796 = vmatpush.xpose.msra.mxu0 0.0
        %3797 = vmatpush.xpose.msra.mxu0 0.0
        %3798 = vmatpush.xpose.msra.mxu0 0.0
        %3799 = vmatpush.xpose.msra.mxu0 0.0
        %3800 = vmatpush.xpose.msra.mxu0 %v807
        %3801 = vmatpush.xpose.msra.mxu0 %v423
        %3802 = vmatmul.f32.gmra.mxu0 %v1310
        %v3803 = vpop.f32.mrf.mxu0
        %v3804 = vadd.f32 %v3784, %v3803
        %3805 = vdwg.mxu0
        %3806 = vmatpush.xpose.msra.mxu0 0.0
        %3807 = vmatpush.xpose.msra.mxu0 0.0
        %3808 = vmatpush.xpose.msra.mxu0 0.0
        %3809 = vmatpush.xpose.msra.mxu0 0.0
        %3810 = vmatpush.xpose.msra.mxu0 0.0
        %3811 = vmatpush.xpose.msra.mxu0 0.0
        %3812 = vmatpush.xpose.msra.mxu0 0.0
        %3813 = vmatpush.xpose.msra.mxu0 0.0
        %3814 = vmatpush.xpose.msra.mxu0 0.0
        %3815 = vmatpush.xpose.msra.mxu0 0.0
        %3816 = vmatpush.xpose.msra.mxu0 0.0
        %3817 = vmatpush.xpose.msra.mxu0 0.0
        %3818 = vmatpush.xpose.msra.mxu0 0.0
        %3819 = vmatpush.xpose.msra.mxu0 0.0
        %3820 = vmatpush.xpose.msra.mxu0 %v808
        %3821 = vmatpush.xpose.msra.mxu0 %v424
        %3822 = vmatmul.f32.gmra.mxu0 %v1311
        %v3823 = vpop.f32.mrf.mxu0
        %v3824 = vadd.f32 %v3804, %v3823
        %3825 = vdwg.mxu0
        %3826 = vmatpush.xpose.msra.mxu0 0.0
        %3827 = vmatpush.xpose.msra.mxu0 0.0
        %3828 = vmatpush.xpose.msra.mxu0 0.0
        %3829 = vmatpush.xpose.msra.mxu0 0.0
        %3830 = vmatpush.xpose.msra.mxu0 0.0
        %3831 = vmatpush.xpose.msra.mxu0 0.0
        %3832 = vmatpush.xpose.msra.mxu0 0.0
        %3833 = vmatpush.xpose.msra.mxu0 0.0
        %3834 = vmatpush.xpose.msra.mxu0 0.0
        %3835 = vmatpush.xpose.msra.mxu0 0.0
        %3836 = vmatpush.xpose.msra.mxu0 0.0
        %3837 = vmatpush.xpose.msra.mxu0 0.0
        %3838 = vmatpush.xpose.msra.mxu0 0.0
        %3839 = vmatpush.xpose.msra.mxu0 0.0
        %3840 = vmatpush.xpose.msra.mxu0 %v809
        %3841 = vmatpush.xpose.msra.mxu0 %v425
        %3842 = vmatmul.f32.gmra.mxu0 %v1314
        %v3843 = vpop.f32.mrf.mxu0
        %v3844 = vadd.f32 %v3824, %v3843
        %3845 = vdwg.mxu0
        %3846 = vmatpush.xpose.msra.mxu0 0.0
        %3847 = vmatpush.xpose.msra.mxu0 0.0
        %3848 = vmatpush.xpose.msra.mxu0 0.0
        %3849 = vmatpush.xpose.msra.mxu0 0.0
        %3850 = vmatpush.xpose.msra.mxu0 0.0
        %3851 = vmatpush.xpose.msra.mxu0 0.0
        %3852 = vmatpush.xpose.msra.mxu0 0.0
        %3853 = vmatpush.xpose.msra.mxu0 0.0
        %3854 = vmatpush.xpose.msra.mxu0 0.0
        %3855 = vmatpush.xpose.msra.mxu0 0.0
        %3856 = vmatpush.xpose.msra.mxu0 0.0
        %3857 = vmatpush.xpose.msra.mxu0 0.0
        %3858 = vmatpush.xpose.msra.mxu0 0.0
        %3859 = vmatpush.xpose.msra.mxu0 0.0
        %3860 = vmatpush.xpose.msra.mxu0 %v810
        %3861 = vmatpush.xpose.msra.mxu0 %v426
        %3862 = vmatmul.f32.gmra.mxu0 %v1315
        %v3863 = vpop.f32.mrf.mxu0
        %v3864 = vadd.f32 %v3844, %v3863
        %3865 = vdwg.mxu0
        %3866 = vmatpush.xpose.msra.mxu0 0.0
        %3867 = vmatpush.xpose.msra.mxu0 0.0
        %3868 = vmatpush.xpose.msra.mxu0 0.0
        %3869 = vmatpush.xpose.msra.mxu0 0.0
        %3870 = vmatpush.xpose.msra.mxu0 0.0
        %3871 = vmatpush.xpose.msra.mxu0 0.0
        %3872 = vmatpush.xpose.msra.mxu0 0.0
        %3873 = vmatpush.xpose.msra.mxu0 0.0
        %3874 = vmatpush.xpose.msra.mxu0 0.0
        %3875 = vmatpush.xpose.msra.mxu0 0.0
        %3876 = vmatpush.xpose.msra.mxu0 0.0
        %3877 = vmatpush.xpose.msra.mxu0 0.0
        %3878 = vmatpush.xpose.msra.mxu0 0.0
        %3879 = vmatpush.xpose.msra.mxu0 0.0
        %3880 = vmatpush.xpose.msra.mxu0 %v811
        %3881 = vmatpush.xpose.msra.mxu0 %v427
        %3882 = vmatmul.f32.gmra.mxu0 %v1316
        %v3883 = vpop.f32.mrf.mxu0
        %v3884 = vadd.f32 %v3864, %v3883
        %3885 = vdwg.mxu0
        %3886 = vmatpush.xpose.msra.mxu0 0.0
        %3887 = vmatpush.xpose.msra.mxu0 0.0
        %3888 = vmatpush.xpose.msra.mxu0 0.0
        %3889 = vmatpush.xpose.msra.mxu0 0.0
        %3890 = vmatpush.xpose.msra.mxu0 0.0
        %3891 = vmatpush.xpose.msra.mxu0 0.0
        %3892 = vmatpush.xpose.msra.mxu0 0.0
        %3893 = vmatpush.xpose.msra.mxu0 0.0
        %3894 = vmatpush.xpose.msra.mxu0 0.0
        %3895 = vmatpush.xpose.msra.mxu0 0.0
        %3896 = vmatpush.xpose.msra.mxu0 0.0
        %3897 = vmatpush.xpose.msra.mxu0 0.0
        %3898 = vmatpush.xpose.msra.mxu0 0.0
        %3899 = vmatpush.xpose.msra.mxu0 0.0
        %3900 = vmatpush.xpose.msra.mxu0 %v812
        %3901 = vmatpush.xpose.msra.mxu0 %v428
        %3902 = vmatmul.f32.gmra.mxu0 %v1317
        %v3903 = vpop.f32.mrf.mxu0
        %v3904 = vadd.f32 %v3884, %v3903
        %3905 = vdwg.mxu0
        %3906 = vmatpush.xpose.msra.mxu0 0.0
        %3907 = vmatpush.xpose.msra.mxu0 0.0
        %3908 = vmatpush.xpose.msra.mxu0 0.0
        %3909 = vmatpush.xpose.msra.mxu0 0.0
        %3910 = vmatpush.xpose.msra.mxu0 0.0
        %3911 = vmatpush.xpose.msra.mxu0 0.0
        %3912 = vmatpush.xpose.msra.mxu0 0.0
        %3913 = vmatpush.xpose.msra.mxu0 0.0
        %3914 = vmatpush.xpose.msra.mxu0 0.0
        %3915 = vmatpush.xpose.msra.mxu0 0.0
        %3916 = vmatpush.xpose.msra.mxu0 0.0
        %3917 = vmatpush.xpose.msra.mxu0 0.0
        %3918 = vmatpush.xpose.msra.mxu0 0.0
        %3919 = vmatpush.xpose.msra.mxu0 0.0
        %3920 = vmatpush.xpose.msra.mxu0 %v813
        %3921 = vmatpush.xpose.msra.mxu0 %v429
        %3922 = vmatmul.f32.gmra.mxu0 %v1318
        %v3923 = vpop.f32.mrf.mxu0
        %v3924 = vadd.f32 %v3904, %v3923
        %3925 = vdwg.mxu0
        %3926 = vmatpush.xpose.msra.mxu0 0.0
        %3927 = vmatpush.xpose.msra.mxu0 0.0
        %3928 = vmatpush.xpose.msra.mxu0 0.0
        %3929 = vmatpush.xpose.msra.mxu0 0.0
        %3930 = vmatpush.xpose.msra.mxu0 0.0
        %3931 = vmatpush.xpose.msra.mxu0 0.0
        %3932 = vmatpush.xpose.msra.mxu0 0.0
        %3933 = vmatpush.xpose.msra.mxu0 0.0
        %3934 = vmatpush.xpose.msra.mxu0 0.0
        %3935 = vmatpush.xpose.msra.mxu0 0.0
        %3936 = vmatpush.xpose.msra.mxu0 0.0
        %3937 = vmatpush.xpose.msra.mxu0 0.0
        %3938 = vmatpush.xpose.msra.mxu0 0.0
        %3939 = vmatpush.xpose.msra.mxu0 0.0
        %3940 = vmatpush.xpose.msra.mxu0 %v814
        %3941 = vmatpush.xpose.msra.mxu0 %v430
        %3942 = vmatmul.f32.gmra.mxu0 %v1319
        %v3943 = vpop.f32.mrf.mxu0
        %v3944 = vadd.f32 %v3924, %v3943
        %3945 = vdwg.mxu0
        %3946 = vmatpush.xpose.msra.mxu0 0.0
        %3947 = vmatpush.xpose.msra.mxu0 0.0
        %3948 = vmatpush.xpose.msra.mxu0 0.0
        %3949 = vmatpush.xpose.msra.mxu0 0.0
        %3950 = vmatpush.xpose.msra.mxu0 0.0
        %3951 = vmatpush.xpose.msra.mxu0 0.0
        %3952 = vmatpush.xpose.msra.mxu0 0.0
        %3953 = vmatpush.xpose.msra.mxu0 0.0
        %3954 = vmatpush.xpose.msra.mxu0 0.0
        %3955 = vmatpush.xpose.msra.mxu0 0.0
        %3956 = vmatpush.xpose.msra.mxu0 0.0
        %3957 = vmatpush.xpose.msra.mxu0 0.0
        %3958 = vmatpush.xpose.msra.mxu0 0.0
        %3959 = vmatpush.xpose.msra.mxu0 0.0
        %3960 = vmatpush.xpose.msra.mxu0 %v815
        %3961 = vmatpush.xpose.msra.mxu0 %v431
        %3962 = vmatmul.f32.gmra.mxu0 %v1320
        %v3963 = vpop.f32.mrf.mxu0
        %v3964 = vadd.f32 %v3944, %v3963
        %3965 = vdwg.mxu0
        %3966 = vmatpush.xpose.msra.mxu0 0.0
        %3967 = vmatpush.xpose.msra.mxu0 0.0
        %3968 = vmatpush.xpose.msra.mxu0 0.0
        %3969 = vmatpush.xpose.msra.mxu0 0.0
        %3970 = vmatpush.xpose.msra.mxu0 0.0
        %3971 = vmatpush.xpose.msra.mxu0 0.0
        %3972 = vmatpush.xpose.msra.mxu0 0.0
        %3973 = vmatpush.xpose.msra.mxu0 0.0
        %3974 = vmatpush.xpose.msra.mxu0 0.0
        %3975 = vmatpush.xpose.msra.mxu0 0.0
        %3976 = vmatpush.xpose.msra.mxu0 0.0
        %3977 = vmatpush.xpose.msra.mxu0 0.0
        %3978 = vmatpush.xpose.msra.mxu0 0.0
        %3979 = vmatpush.xpose.msra.mxu0 0.0
        %3980 = vmatpush.xpose.msra.mxu0 %v816
        %3981 = vmatpush.xpose.msra.mxu0 %v432
        %3982 = vmatmul.f32.gmra.mxu0 %v1321
        %v3983 = vpop.f32.mrf.mxu0
        %v3984 = vadd.f32 %v3964, %v3983
        %3985 = vdwg.mxu0
        %3986 = vmatpush.xpose.msra.mxu0 0.0
        %3987 = vmatpush.xpose.msra.mxu0 0.0
        %3988 = vmatpush.xpose.msra.mxu0 0.0
        %3989 = vmatpush.xpose.msra.mxu0 0.0
        %3990 = vmatpush.xpose.msra.mxu0 0.0
        %3991 = vmatpush.xpose.msra.mxu0 0.0
        %3992 = vmatpush.xpose.msra.mxu0 0.0
        %3993 = vmatpush.xpose.msra.mxu0 0.0
        %3994 = vmatpush.xpose.msra.mxu0 0.0
        %3995 = vmatpush.xpose.msra.mxu0 0.0
        %3996 = vmatpush.xpose.msra.mxu0 0.0
        %3997 = vmatpush.xpose.msra.mxu0 0.0
        %3998 = vmatpush.xpose.msra.mxu0 0.0
        %3999 = vmatpush.xpose.msra.mxu0 0.0
        %4000 = vmatpush.xpose.msra.mxu0 %v817
        %4001 = vmatpush.xpose.msra.mxu0 %v433
        %4002 = vmatmul.f32.gmra.mxu0 %v1324
        %v4003 = vpop.f32.mrf.mxu0
        %v4004 = vadd.f32 %v3984, %v4003
        %4005 = vdwg.mxu0
        %4006 = vmatpush.xpose.msra.mxu0 0.0
        %4007 = vmatpush.xpose.msra.mxu0 0.0
        %4008 = vmatpush.xpose.msra.mxu0 0.0
        %4009 = vmatpush.xpose.msra.mxu0 0.0
        %4010 = vmatpush.xpose.msra.mxu0 0.0
        %4011 = vmatpush.xpose.msra.mxu0 0.0
        %4012 = vmatpush.xpose.msra.mxu0 0.0
        %4013 = vmatpush.xpose.msra.mxu0 0.0
        %4014 = vmatpush.xpose.msra.mxu0 0.0
        %4015 = vmatpush.xpose.msra.mxu0 0.0
        %4016 = vmatpush.xpose.msra.mxu0 0.0
        %4017 = vmatpush.xpose.msra.mxu0 0.0
        %4018 = vmatpush.xpose.msra.mxu0 0.0
        %4019 = vmatpush.xpose.msra.mxu0 0.0
        %4020 = vmatpush.xpose.msra.mxu0 %v818
        %4021 = vmatpush.xpose.msra.mxu0 %v434
        %4022 = vmatmul.f32.gmra.mxu0 %v1325
        %v4023 = vpop.f32.mrf.mxu0
        %v4024 = vadd.f32 %v4004, %v4023
        %4025 = vdwg.mxu0
        %4026 = vmatpush.xpose.msra.mxu0 0.0
        %4027 = vmatpush.xpose.msra.mxu0 0.0
        %4028 = vmatpush.xpose.msra.mxu0 0.0
        %4029 = vmatpush.xpose.msra.mxu0 0.0
        %4030 = vmatpush.xpose.msra.mxu0 0.0
        %4031 = vmatpush.xpose.msra.mxu0 0.0
        %4032 = vmatpush.xpose.msra.mxu0 0.0
        %4033 = vmatpush.xpose.msra.mxu0 0.0
        %4034 = vmatpush.xpose.msra.mxu0 0.0
        %4035 = vmatpush.xpose.msra.mxu0 0.0
        %4036 = vmatpush.xpose.msra.mxu0 0.0
        %4037 = vmatpush.xpose.msra.mxu0 0.0
        %4038 = vmatpush.xpose.msra.mxu0 0.0
        %4039 = vmatpush.xpose.msra.mxu0 0.0
        %4040 = vmatpush.xpose.msra.mxu0 %v819
        %4041 = vmatpush.xpose.msra.mxu0 %v435
        %4042 = vmatmul.f32.gmra.mxu0 %v1326
        %v4043 = vpop.f32.mrf.mxu0
        %v4044 = vadd.f32 %v4024, %v4043
        %4045 = vdwg.mxu0
        %4046 = vmatpush.xpose.msra.mxu0 0.0
        %4047 = vmatpush.xpose.msra.mxu0 0.0
        %4048 = vmatpush.xpose.msra.mxu0 0.0
        %4049 = vmatpush.xpose.msra.mxu0 0.0
        %4050 = vmatpush.xpose.msra.mxu0 0.0
        %4051 = vmatpush.xpose.msra.mxu0 0.0
        %4052 = vmatpush.xpose.msra.mxu0 0.0
        %4053 = vmatpush.xpose.msra.mxu0 0.0
        %4054 = vmatpush.xpose.msra.mxu0 0.0
        %4055 = vmatpush.xpose.msra.mxu0 0.0
        %4056 = vmatpush.xpose.msra.mxu0 0.0
        %4057 = vmatpush.xpose.msra.mxu0 0.0
        %4058 = vmatpush.xpose.msra.mxu0 0.0
        %4059 = vmatpush.xpose.msra.mxu0 0.0
        %4060 = vmatpush.xpose.msra.mxu0 %v820
        %4061 = vmatpush.xpose.msra.mxu0 %v436
        %4062 = vmatmul.f32.gmra.mxu0 %v1327
        %v4063 = vpop.f32.mrf.mxu0
        %v4064 = vadd.f32 %v4044, %v4063
        %4065 = vdwg.mxu0
        %4066 = vmatpush.xpose.msra.mxu0 0.0
        %4067 = vmatpush.xpose.msra.mxu0 0.0
        %4068 = vmatpush.xpose.msra.mxu0 0.0
        %4069 = vmatpush.xpose.msra.mxu0 0.0
        %4070 = vmatpush.xpose.msra.mxu0 0.0
        %4071 = vmatpush.xpose.msra.mxu0 0.0
        %4072 = vmatpush.xpose.msra.mxu0 0.0
        %4073 = vmatpush.xpose.msra.mxu0 0.0
        %4074 = vmatpush.xpose.msra.mxu0 0.0
        %4075 = vmatpush.xpose.msra.mxu0 0.0
        %4076 = vmatpush.xpose.msra.mxu0 0.0
        %4077 = vmatpush.xpose.msra.mxu0 0.0
        %4078 = vmatpush.xpose.msra.mxu0 0.0
        %4079 = vmatpush.xpose.msra.mxu0 0.0
        %4080 = vmatpush.xpose.msra.mxu0 %v821
        %4081 = vmatpush.xpose.msra.mxu0 %v437
        %4082 = vmatmul.f32.gmra.mxu0 %v1328
        %v4083 = vpop.f32.mrf.mxu0
        %v4084 = vadd.f32 %v4064, %v4083
        %4085 = vdwg.mxu0
        %4086 = vmatpush.xpose.msra.mxu0 0.0
        %4087 = vmatpush.xpose.msra.mxu0 0.0
        %4088 = vmatpush.xpose.msra.mxu0 0.0
        %4089 = vmatpush.xpose.msra.mxu0 0.0
        %4090 = vmatpush.xpose.msra.mxu0 0.0
        %4091 = vmatpush.xpose.msra.mxu0 0.0
        %4092 = vmatpush.xpose.msra.mxu0 0.0
        %4093 = vmatpush.xpose.msra.mxu0 0.0
        %4094 = vmatpush.xpose.msra.mxu0 0.0
        %4095 = vmatpush.xpose.msra.mxu0 0.0
        %4096 = vmatpush.xpose.msra.mxu0 0.0
        %4097 = vmatpush.xpose.msra.mxu0 0.0
        %4098 = vmatpush.xpose.msra.mxu0 0.0
        %4099 = vmatpush.xpose.msra.mxu0 0.0
        %4100 = vmatpush.xpose.msra.mxu0 %v822
        %4101 = vmatpush.xpose.msra.mxu0 %v438
        %4102 = vmatmul.f32.gmra.mxu0 %v1329
        %v4103 = vpop.f32.mrf.mxu0
        %v4104 = vadd.f32 %v4084, %v4103
        %4105 = vdwg.mxu0
        %4106 = vmatpush.xpose.msra.mxu0 0.0
        %4107 = vmatpush.xpose.msra.mxu0 0.0
        %4108 = vmatpush.xpose.msra.mxu0 0.0
        %4109 = vmatpush.xpose.msra.mxu0 0.0
        %4110 = vmatpush.xpose.msra.mxu0 0.0
        %4111 = vmatpush.xpose.msra.mxu0 0.0
        %4112 = vmatpush.xpose.msra.mxu0 0.0
        %4113 = vmatpush.xpose.msra.mxu0 0.0
        %4114 = vmatpush.xpose.msra.mxu0 0.0
        %4115 = vmatpush.xpose.msra.mxu0 0.0
        %4116 = vmatpush.xpose.msra.mxu0 0.0
        %4117 = vmatpush.xpose.msra.mxu0 0.0
        %4118 = vmatpush.xpose.msra.mxu0 0.0
        %4119 = vmatpush.xpose.msra.mxu0 0.0
        %4120 = vmatpush.xpose.msra.mxu0 %v823
        %4121 = vmatpush.xpose.msra.mxu0 %v439
        %4122 = vmatmul.f32.gmra.mxu0 %v1330
        %v4123 = vpop.f32.mrf.mxu0
        %v4124 = vadd.f32 %v4104, %v4123
        %4125 = vdwg.mxu0
        %4126 = vmatpush.xpose.msra.mxu0 0.0
        %4127 = vmatpush.xpose.msra.mxu0 0.0
        %4128 = vmatpush.xpose.msra.mxu0 0.0
        %4129 = vmatpush.xpose.msra.mxu0 0.0
        %4130 = vmatpush.xpose.msra.mxu0 0.0
        %4131 = vmatpush.xpose.msra.mxu0 0.0
        %4132 = vmatpush.xpose.msra.mxu0 0.0
        %4133 = vmatpush.xpose.msra.mxu0 0.0
        %4134 = vmatpush.xpose.msra.mxu0 0.0
        %4135 = vmatpush.xpose.msra.mxu0 0.0
        %4136 = vmatpush.xpose.msra.mxu0 0.0
        %4137 = vmatpush.xpose.msra.mxu0 0.0
        %4138 = vmatpush.xpose.msra.mxu0 0.0
        %4139 = vmatpush.xpose.msra.mxu0 0.0
        %4140 = vmatpush.xpose.msra.mxu0 %v824
        %4141 = vmatpush.xpose.msra.mxu0 %v440
        %4142 = vmatmul.f32.gmra.mxu0 %v1331
        %v4143 = vpop.f32.mrf.mxu0
        %v4144 = vadd.f32 %v4124, %v4143
        %4145 = vdwg.mxu0
        %4146 = vmatpush.xpose.msra.mxu0 0.0
        %4147 = vmatpush.xpose.msra.mxu0 0.0
        %4148 = vmatpush.xpose.msra.mxu0 0.0
        %4149 = vmatpush.xpose.msra.mxu0 0.0
        %4150 = vmatpush.xpose.msra.mxu0 0.0
        %4151 = vmatpush.xpose.msra.mxu0 0.0
        %4152 = vmatpush.xpose.msra.mxu0 0.0
        %4153 = vmatpush.xpose.msra.mxu0 0.0
        %4154 = vmatpush.xpose.msra.mxu0 0.0
        %4155 = vmatpush.xpose.msra.mxu0 0.0
        %4156 = vmatpush.xpose.msra.mxu0 0.0
        %4157 = vmatpush.xpose.msra.mxu0 0.0
        %4158 = vmatpush.xpose.msra.mxu0 0.0
        %4159 = vmatpush.xpose.msra.mxu0 0.0
        %4160 = vmatpush.xpose.msra.mxu0 %v825
        %4161 = vmatpush.xpose.msra.mxu0 %v441
        %4162 = vmatmul.f32.gmra.mxu0 %v1334
        %v4163 = vpop.f32.mrf.mxu0
        %v4164 = vadd.f32 %v4144, %v4163
        %4165 = vdwg.mxu0
        %4166 = vmatpush.xpose.msra.mxu0 0.0
        %4167 = vmatpush.xpose.msra.mxu0 0.0
        %4168 = vmatpush.xpose.msra.mxu0 0.0
        %4169 = vmatpush.xpose.msra.mxu0 0.0
        %4170 = vmatpush.xpose.msra.mxu0 0.0
        %4171 = vmatpush.xpose.msra.mxu0 0.0
        %4172 = vmatpush.xpose.msra.mxu0 0.0
        %4173 = vmatpush.xpose.msra.mxu0 0.0
        %4174 = vmatpush.xpose.msra.mxu0 0.0
        %4175 = vmatpush.xpose.msra.mxu0 0.0
        %4176 = vmatpush.xpose.msra.mxu0 0.0
        %4177 = vmatpush.xpose.msra.mxu0 0.0
        %4178 = vmatpush.xpose.msra.mxu0 0.0
        %4179 = vmatpush.xpose.msra.mxu0 0.0
        %4180 = vmatpush.xpose.msra.mxu0 %v826
        %4181 = vmatpush.xpose.msra.mxu0 %v442
        %4182 = vmatmul.f32.gmra.mxu0 %v1335
        %v4183 = vpop.f32.mrf.mxu0
        %v4184 = vadd.f32 %v4164, %v4183
        %4185 = vdwg.mxu0
        %4186 = vmatpush.xpose.msra.mxu0 0.0
        %4187 = vmatpush.xpose.msra.mxu0 0.0
        %4188 = vmatpush.xpose.msra.mxu0 0.0
        %4189 = vmatpush.xpose.msra.mxu0 0.0
        %4190 = vmatpush.xpose.msra.mxu0 0.0
        %4191 = vmatpush.xpose.msra.mxu0 0.0
        %4192 = vmatpush.xpose.msra.mxu0 0.0
        %4193 = vmatpush.xpose.msra.mxu0 0.0
        %4194 = vmatpush.xpose.msra.mxu0 0.0
        %4195 = vmatpush.xpose.msra.mxu0 0.0
        %4196 = vmatpush.xpose.msra.mxu0 0.0
        %4197 = vmatpush.xpose.msra.mxu0 0.0
        %4198 = vmatpush.xpose.msra.mxu0 0.0
        %4199 = vmatpush.xpose.msra.mxu0 0.0
        %4200 = vmatpush.xpose.msra.mxu0 %v827
        %4201 = vmatpush.xpose.msra.mxu0 %v443
        %4202 = vmatmul.f32.gmra.mxu0 %v1336
        %v4203 = vpop.f32.mrf.mxu0
        %v4204 = vadd.f32 %v4184, %v4203
        %4205 = vdwg.mxu0
        %4206 = vmatpush.xpose.msra.mxu0 0.0
        %4207 = vmatpush.xpose.msra.mxu0 0.0
        %4208 = vmatpush.xpose.msra.mxu0 0.0
        %4209 = vmatpush.xpose.msra.mxu0 0.0
        %4210 = vmatpush.xpose.msra.mxu0 0.0
        %4211 = vmatpush.xpose.msra.mxu0 0.0
        %4212 = vmatpush.xpose.msra.mxu0 0.0
        %4213 = vmatpush.xpose.msra.mxu0 0.0
        %4214 = vmatpush.xpose.msra.mxu0 0.0
        %4215 = vmatpush.xpose.msra.mxu0 0.0
        %4216 = vmatpush.xpose.msra.mxu0 0.0
        %4217 = vmatpush.xpose.msra.mxu0 0.0
        %4218 = vmatpush.xpose.msra.mxu0 0.0
        %4219 = vmatpush.xpose.msra.mxu0 0.0
        %4220 = vmatpush.xpose.msra.mxu0 %v828
        %4221 = vmatpush.xpose.msra.mxu0 %v444
        %4222 = vmatmul.f32.gmra.mxu0 %v1337
        %v4223 = vpop.f32.mrf.mxu0
        %v4224 = vadd.f32 %v4204, %v4223
        %4225 = vdwg.mxu0
        %4226 = vmatpush.xpose.msra.mxu0 0.0
        %4227 = vmatpush.xpose.msra.mxu0 0.0
        %4228 = vmatpush.xpose.msra.mxu0 0.0
        %4229 = vmatpush.xpose.msra.mxu0 0.0
        %4230 = vmatpush.xpose.msra.mxu0 0.0
        %4231 = vmatpush.xpose.msra.mxu0 0.0
        %4232 = vmatpush.xpose.msra.mxu0 0.0
        %4233 = vmatpush.xpose.msra.mxu0 0.0
        %4234 = vmatpush.xpose.msra.mxu0 0.0
        %4235 = vmatpush.xpose.msra.mxu0 0.0
        %4236 = vmatpush.xpose.msra.mxu0 0.0
        %4237 = vmatpush.xpose.msra.mxu0 0.0
        %4238 = vmatpush.xpose.msra.mxu0 0.0
        %4239 = vmatpush.xpose.msra.mxu0 0.0
        %4240 = vmatpush.xpose.msra.mxu0 %v829
        %4241 = vmatpush.xpose.msra.mxu0 %v445
        %4242 = vmatmul.f32.gmra.mxu0 %v1338
        %v4243 = vpop.f32.mrf.mxu0
        %v4244 = vadd.f32 %v4224, %v4243
        %4245 = vdwg.mxu0
        %4246 = vmatpush.xpose.msra.mxu0 0.0
        %4247 = vmatpush.xpose.msra.mxu0 0.0
        %4248 = vmatpush.xpose.msra.mxu0 0.0
        %4249 = vmatpush.xpose.msra.mxu0 0.0
        %4250 = vmatpush.xpose.msra.mxu0 0.0
        %4251 = vmatpush.xpose.msra.mxu0 0.0
        %4252 = vmatpush.xpose.msra.mxu0 0.0
        %4253 = vmatpush.xpose.msra.mxu0 0.0
        %4254 = vmatpush.xpose.msra.mxu0 0.0
        %4255 = vmatpush.xpose.msra.mxu0 0.0
        %4256 = vmatpush.xpose.msra.mxu0 0.0
        %4257 = vmatpush.xpose.msra.mxu0 0.0
        %4258 = vmatpush.xpose.msra.mxu0 0.0
        %4259 = vmatpush.xpose.msra.mxu0 0.0
        %4260 = vmatpush.xpose.msra.mxu0 %v830
        %4261 = vmatpush.xpose.msra.mxu0 %v446
        %4262 = vmatmul.f32.gmra.mxu0 %v1339
        %v4263 = vpop.f32.mrf.mxu0
        %v4264 = vadd.f32 %v4244, %v4263
        %4265 = vdwg.mxu0
        %4266 = vmatpush.xpose.msra.mxu0 0.0
        %4267 = vmatpush.xpose.msra.mxu0 0.0
        %4268 = vmatpush.xpose.msra.mxu0 0.0
        %4269 = vmatpush.xpose.msra.mxu0 0.0
        %4270 = vmatpush.xpose.msra.mxu0 0.0
        %4271 = vmatpush.xpose.msra.mxu0 0.0
        %4272 = vmatpush.xpose.msra.mxu0 0.0
        %4273 = vmatpush.xpose.msra.mxu0 0.0
        %4274 = vmatpush.xpose.msra.mxu0 0.0
        %4275 = vmatpush.xpose.msra.mxu0 0.0
        %4276 = vmatpush.xpose.msra.mxu0 0.0
        %4277 = vmatpush.xpose.msra.mxu0 0.0
        %4278 = vmatpush.xpose.msra.mxu0 0.0
        %4279 = vmatpush.xpose.msra.mxu0 0.0
        %4280 = vmatpush.xpose.msra.mxu0 %v831
        %4281 = vmatpush.xpose.msra.mxu0 %v447
        %4282 = vmatmul.f32.gmra.mxu0 %v1340
        %v4283 = vpop.f32.mrf.mxu0
        %v4284 = vadd.f32 %v4264, %v4283
        %4285 = vdwg.mxu0
        %4286 = vmatpush.xpose.msra.mxu0 0.0
        %4287 = vmatpush.xpose.msra.mxu0 0.0
        %4288 = vmatpush.xpose.msra.mxu0 0.0
        %4289 = vmatpush.xpose.msra.mxu0 0.0
        %4290 = vmatpush.xpose.msra.mxu0 0.0
        %4291 = vmatpush.xpose.msra.mxu0 0.0
        %4292 = vmatpush.xpose.msra.mxu0 0.0
        %4293 = vmatpush.xpose.msra.mxu0 0.0
        %4294 = vmatpush.xpose.msra.mxu0 0.0
        %4295 = vmatpush.xpose.msra.mxu0 0.0
        %4296 = vmatpush.xpose.msra.mxu0 0.0
        %4297 = vmatpush.xpose.msra.mxu0 0.0
        %4298 = vmatpush.xpose.msra.mxu0 0.0
        %4299 = vmatpush.xpose.msra.mxu0 0.0
        %4300 = vmatpush.xpose.msra.mxu0 %v832
        %4301 = vmatpush.xpose.msra.mxu0 %v448
        %4302 = vmatmul.f32.gmra.mxu0 %v1341
        %v4303 = vpop.f32.mrf.mxu0
        %v4304 = vadd.f32 %v4284, %v4303
        %4305 = vdwg.mxu0
        %4306 = vmatpush.xpose.msra.mxu0 0.0
        %4307 = vmatpush.xpose.msra.mxu0 0.0
        %4308 = vmatpush.xpose.msra.mxu0 0.0
        %4309 = vmatpush.xpose.msra.mxu0 0.0
        %4310 = vmatpush.xpose.msra.mxu0 0.0
        %4311 = vmatpush.xpose.msra.mxu0 0.0
        %4312 = vmatpush.xpose.msra.mxu0 0.0
        %4313 = vmatpush.xpose.msra.mxu0 0.0
        %4314 = vmatpush.xpose.msra.mxu0 0.0
        %4315 = vmatpush.xpose.msra.mxu0 0.0
        %4316 = vmatpush.xpose.msra.mxu0 0.0
        %4317 = vmatpush.xpose.msra.mxu0 0.0
        %4318 = vmatpush.xpose.msra.mxu0 0.0
        %4319 = vmatpush.xpose.msra.mxu0 0.0
        %4320 = vmatpush.xpose.msra.mxu0 %v833
        %4321 = vmatpush.xpose.msra.mxu0 %v449
        %4322 = vmatmul.f32.gmra.mxu0 %v1344
        %v4323 = vpop.f32.mrf.mxu0
        %v4324 = vadd.f32 %v4304, %v4323
        %4325 = vdwg.mxu0
        %4326 = vmatpush.xpose.msra.mxu0 0.0
        %4327 = vmatpush.xpose.msra.mxu0 0.0
        %4328 = vmatpush.xpose.msra.mxu0 0.0
        %4329 = vmatpush.xpose.msra.mxu0 0.0
        %4330 = vmatpush.xpose.msra.mxu0 0.0
        %4331 = vmatpush.xpose.msra.mxu0 0.0
        %4332 = vmatpush.xpose.msra.mxu0 0.0
        %4333 = vmatpush.xpose.msra.mxu0 0.0
        %4334 = vmatpush.xpose.msra.mxu0 0.0
        %4335 = vmatpush.xpose.msra.mxu0 0.0
        %4336 = vmatpush.xpose.msra.mxu0 0.0
        %4337 = vmatpush.xpose.msra.mxu0 0.0
        %4338 = vmatpush.xpose.msra.mxu0 0.0
        %4339 = vmatpush.xpose.msra.mxu0 0.0
        %4340 = vmatpush.xpose.msra.mxu0 %v834
        %4341 = vmatpush.xpose.msra.mxu0 %v450
        %4342 = vmatmul.f32.gmra.mxu0 %v1345
        %v4343 = vpop.f32.mrf.mxu0
        %v4344 = vadd.f32 %v4324, %v4343
        %4345 = vdwg.mxu0
        %4346 = vmatpush.xpose.msra.mxu0 0.0
        %4347 = vmatpush.xpose.msra.mxu0 0.0
        %4348 = vmatpush.xpose.msra.mxu0 0.0
        %4349 = vmatpush.xpose.msra.mxu0 0.0
        %4350 = vmatpush.xpose.msra.mxu0 0.0
        %4351 = vmatpush.xpose.msra.mxu0 0.0
        %4352 = vmatpush.xpose.msra.mxu0 0.0
        %4353 = vmatpush.xpose.msra.mxu0 0.0
        %4354 = vmatpush.xpose.msra.mxu0 0.0
        %4355 = vmatpush.xpose.msra.mxu0 0.0
        %4356 = vmatpush.xpose.msra.mxu0 0.0
        %4357 = vmatpush.xpose.msra.mxu0 0.0
        %4358 = vmatpush.xpose.msra.mxu0 0.0
        %4359 = vmatpush.xpose.msra.mxu0 0.0
        %4360 = vmatpush.xpose.msra.mxu0 %v835
        %4361 = vmatpush.xpose.msra.mxu0 %v451
        %4362 = vmatmul.f32.gmra.mxu0 %v1346
        %v4363 = vpop.f32.mrf.mxu0
        %v4364 = vadd.f32 %v4344, %v4363
        %4365 = vdwg.mxu0
        %4366 = vmatpush.xpose.msra.mxu0 0.0
        %4367 = vmatpush.xpose.msra.mxu0 0.0
        %4368 = vmatpush.xpose.msra.mxu0 0.0
        %4369 = vmatpush.xpose.msra.mxu0 0.0
        %4370 = vmatpush.xpose.msra.mxu0 0.0
        %4371 = vmatpush.xpose.msra.mxu0 0.0
        %4372 = vmatpush.xpose.msra.mxu0 0.0
        %4373 = vmatpush.xpose.msra.mxu0 0.0
        %4374 = vmatpush.xpose.msra.mxu0 0.0
        %4375 = vmatpush.xpose.msra.mxu0 0.0
        %4376 = vmatpush.xpose.msra.mxu0 0.0
        %4377 = vmatpush.xpose.msra.mxu0 0.0
        %4378 = vmatpush.xpose.msra.mxu0 0.0
        %4379 = vmatpush.xpose.msra.mxu0 0.0
        %4380 = vmatpush.xpose.msra.mxu0 %v836
        %4381 = vmatpush.xpose.msra.mxu0 %v452
        %4382 = vmatmul.f32.gmra.mxu0 %v1347
        %v4383 = vpop.f32.mrf.mxu0
        %v4384 = vadd.f32 %v4364, %v4383
        %4385 = vdwg.mxu0
        %4386 = vmatpush.xpose.msra.mxu0 0.0
        %4387 = vmatpush.xpose.msra.mxu0 0.0
        %4388 = vmatpush.xpose.msra.mxu0 0.0
        %4389 = vmatpush.xpose.msra.mxu0 0.0
        %4390 = vmatpush.xpose.msra.mxu0 0.0
        %4391 = vmatpush.xpose.msra.mxu0 0.0
        %4392 = vmatpush.xpose.msra.mxu0 0.0
        %4393 = vmatpush.xpose.msra.mxu0 0.0
        %4394 = vmatpush.xpose.msra.mxu0 0.0
        %4395 = vmatpush.xpose.msra.mxu0 0.0
        %4396 = vmatpush.xpose.msra.mxu0 0.0
        %4397 = vmatpush.xpose.msra.mxu0 0.0
        %4398 = vmatpush.xpose.msra.mxu0 0.0
        %4399 = vmatpush.xpose.msra.mxu0 0.0
        %4400 = vmatpush.xpose.msra.mxu0 %v837
        %4401 = vmatpush.xpose.msra.mxu0 %v453
        %4402 = vmatmul.f32.gmra.mxu0 %v1348
        %v4403 = vpop.f32.mrf.mxu0
        %v4404 = vadd.f32 %v4384, %v4403
        %4405 = vdwg.mxu0
        %4406 = vmatpush.xpose.msra.mxu0 0.0
        %4407 = vmatpush.xpose.msra.mxu0 0.0
        %4408 = vmatpush.xpose.msra.mxu0 0.0
        %4409 = vmatpush.xpose.msra.mxu0 0.0
        %4410 = vmatpush.xpose.msra.mxu0 0.0
        %4411 = vmatpush.xpose.msra.mxu0 0.0
        %4412 = vmatpush.xpose.msra.mxu0 0.0
        %4413 = vmatpush.xpose.msra.mxu0 0.0
        %4414 = vmatpush.xpose.msra.mxu0 0.0
        %4415 = vmatpush.xpose.msra.mxu0 0.0
        %4416 = vmatpush.xpose.msra.mxu0 0.0
        %4417 = vmatpush.xpose.msra.mxu0 0.0
        %4418 = vmatpush.xpose.msra.mxu0 0.0
        %4419 = vmatpush.xpose.msra.mxu0 0.0
        %4420 = vmatpush.xpose.msra.mxu0 %v838
        %4421 = vmatpush.xpose.msra.mxu0 %v454
        %4422 = vmatmul.f32.gmra.mxu0 %v1349
        %v4423 = vpop.f32.mrf.mxu0
        %v4424 = vadd.f32 %v4404, %v4423
        %4425 = vdwg.mxu0
        %4426 = vmatpush.xpose.msra.mxu0 0.0
        %4427 = vmatpush.xpose.msra.mxu0 0.0
        %4428 = vmatpush.xpose.msra.mxu0 0.0
        %4429 = vmatpush.xpose.msra.mxu0 0.0
        %4430 = vmatpush.xpose.msra.mxu0 0.0
        %4431 = vmatpush.xpose.msra.mxu0 0.0
        %4432 = vmatpush.xpose.msra.mxu0 0.0
        %4433 = vmatpush.xpose.msra.mxu0 0.0
        %4434 = vmatpush.xpose.msra.mxu0 0.0
        %4435 = vmatpush.xpose.msra.mxu0 0.0
        %4436 = vmatpush.xpose.msra.mxu0 0.0
        %4437 = vmatpush.xpose.msra.mxu0 0.0
        %4438 = vmatpush.xpose.msra.mxu0 0.0
        %4439 = vmatpush.xpose.msra.mxu0 0.0
        %4440 = vmatpush.xpose.msra.mxu0 %v839
        %4441 = vmatpush.xpose.msra.mxu0 %v455
        %4442 = vmatmul.f32.gmra.mxu0 %v1350
        %v4443 = vpop.f32.mrf.mxu0
        %v4444 = vadd.f32 %v4424, %v4443
        %4445 = vdwg.mxu0
        %4446 = vmatpush.xpose.msra.mxu0 0.0
        %4447 = vmatpush.xpose.msra.mxu0 0.0
        %4448 = vmatpush.xpose.msra.mxu0 0.0
        %4449 = vmatpush.xpose.msra.mxu0 0.0
        %4450 = vmatpush.xpose.msra.mxu0 0.0
        %4451 = vmatpush.xpose.msra.mxu0 0.0
        %4452 = vmatpush.xpose.msra.mxu0 0.0
        %4453 = vmatpush.xpose.msra.mxu0 0.0
        %4454 = vmatpush.xpose.msra.mxu0 0.0
        %4455 = vmatpush.xpose.msra.mxu0 0.0
        %4456 = vmatpush.xpose.msra.mxu0 0.0
        %4457 = vmatpush.xpose.msra.mxu0 0.0
        %4458 = vmatpush.xpose.msra.mxu0 0.0
        %4459 = vmatpush.xpose.msra.mxu0 0.0
        %4460 = vmatpush.xpose.msra.mxu0 %v840
        %4461 = vmatpush.xpose.msra.mxu0 %v456
        %4462 = vmatmul.f32.gmra.mxu0 %v1351
        %v4463 = vpop.f32.mrf.mxu0
        %v4464 = vadd.f32 %v4444, %v4463
        %4465 = vdwg.mxu0
        %4466 = vmatpush.xpose.msra.mxu0 0.0
        %4467 = vmatpush.xpose.msra.mxu0 0.0
        %4468 = vmatpush.xpose.msra.mxu0 0.0
        %4469 = vmatpush.xpose.msra.mxu0 0.0
        %4470 = vmatpush.xpose.msra.mxu0 0.0
        %4471 = vmatpush.xpose.msra.mxu0 0.0
        %4472 = vmatpush.xpose.msra.mxu0 0.0
        %4473 = vmatpush.xpose.msra.mxu0 0.0
        %4474 = vmatpush.xpose.msra.mxu0 0.0
        %4475 = vmatpush.xpose.msra.mxu0 0.0
        %4476 = vmatpush.xpose.msra.mxu0 0.0
        %4477 = vmatpush.xpose.msra.mxu0 0.0
        %4478 = vmatpush.xpose.msra.mxu0 0.0
        %4479 = vmatpush.xpose.msra.mxu0 0.0
        %4480 = vmatpush.xpose.msra.mxu0 %v841
        %4481 = vmatpush.xpose.msra.mxu0 %v457
        %4482 = vmatmul.f32.gmra.mxu0 %v1354
        %v4483 = vpop.f32.mrf.mxu0
        %v4484 = vadd.f32 %v4464, %v4483
        %4485 = vdwg.mxu0
        %4486 = vmatpush.xpose.msra.mxu0 0.0
        %4487 = vmatpush.xpose.msra.mxu0 0.0
        %4488 = vmatpush.xpose.msra.mxu0 0.0
        %4489 = vmatpush.xpose.msra.mxu0 0.0
        %4490 = vmatpush.xpose.msra.mxu0 0.0
        %4491 = vmatpush.xpose.msra.mxu0 0.0
        %4492 = vmatpush.xpose.msra.mxu0 0.0
        %4493 = vmatpush.xpose.msra.mxu0 0.0
        %4494 = vmatpush.xpose.msra.mxu0 0.0
        %4495 = vmatpush.xpose.msra.mxu0 0.0
        %4496 = vmatpush.xpose.msra.mxu0 0.0
        %4497 = vmatpush.xpose.msra.mxu0 0.0
        %4498 = vmatpush.xpose.msra.mxu0 0.0
        %4499 = vmatpush.xpose.msra.mxu0 0.0
        %4500 = vmatpush.xpose.msra.mxu0 %v842
        %4501 = vmatpush.xpose.msra.mxu0 %v458
        %4502 = vmatmul.f32.gmra.mxu0 %v1355
        %v4503 = vpop.f32.mrf.mxu0
        %v4504 = vadd.f32 %v4484, %v4503
        %4505 = vdwg.mxu0
        %4506 = vmatpush.xpose.msra.mxu0 0.0
        %4507 = vmatpush.xpose.msra.mxu0 0.0
        %4508 = vmatpush.xpose.msra.mxu0 0.0
        %4509 = vmatpush.xpose.msra.mxu0 0.0
        %4510 = vmatpush.xpose.msra.mxu0 0.0
        %4511 = vmatpush.xpose.msra.mxu0 0.0
        %4512 = vmatpush.xpose.msra.mxu0 0.0
        %4513 = vmatpush.xpose.msra.mxu0 0.0
        %4514 = vmatpush.xpose.msra.mxu0 0.0
        %4515 = vmatpush.xpose.msra.mxu0 0.0
        %4516 = vmatpush.xpose.msra.mxu0 0.0
        %4517 = vmatpush.xpose.msra.mxu0 0.0
        %4518 = vmatpush.xpose.msra.mxu0 0.0
        %4519 = vmatpush.xpose.msra.mxu0 0.0
        %4520 = vmatpush.xpose.msra.mxu0 %v843
        %4521 = vmatpush.xpose.msra.mxu0 %v459
        %4522 = vmatmul.f32.gmra.mxu0 %v1356
        %v4523 = vpop.f32.mrf.mxu0
        %v4524 = vadd.f32 %v4504, %v4523
        %4525 = vdwg.mxu0
        %4526 = vmatpush.xpose.msra.mxu0 0.0
        %4527 = vmatpush.xpose.msra.mxu0 0.0
        %4528 = vmatpush.xpose.msra.mxu0 0.0
        %4529 = vmatpush.xpose.msra.mxu0 0.0
        %4530 = vmatpush.xpose.msra.mxu0 0.0
        %4531 = vmatpush.xpose.msra.mxu0 0.0
        %4532 = vmatpush.xpose.msra.mxu0 0.0
        %4533 = vmatpush.xpose.msra.mxu0 0.0
        %4534 = vmatpush.xpose.msra.mxu0 0.0
        %4535 = vmatpush.xpose.msra.mxu0 0.0
        %4536 = vmatpush.xpose.msra.mxu0 0.0
        %4537 = vmatpush.xpose.msra.mxu0 0.0
        %4538 = vmatpush.xpose.msra.mxu0 0.0
        %4539 = vmatpush.xpose.msra.mxu0 0.0
        %4540 = vmatpush.xpose.msra.mxu0 %v844
        %4541 = vmatpush.xpose.msra.mxu0 %v460
        %4542 = vmatmul.f32.gmra.mxu0 %v1357
        %v4543 = vpop.f32.mrf.mxu0
        %v4544 = vadd.f32 %v4524, %v4543
        %4545 = vdwg.mxu0
        %4546 = vmatpush.xpose.msra.mxu0 0.0
        %4547 = vmatpush.xpose.msra.mxu0 0.0
        %4548 = vmatpush.xpose.msra.mxu0 0.0
        %4549 = vmatpush.xpose.msra.mxu0 0.0
        %4550 = vmatpush.xpose.msra.mxu0 0.0
        %4551 = vmatpush.xpose.msra.mxu0 0.0
        %4552 = vmatpush.xpose.msra.mxu0 0.0
        %4553 = vmatpush.xpose.msra.mxu0 0.0
        %4554 = vmatpush.xpose.msra.mxu0 0.0
        %4555 = vmatpush.xpose.msra.mxu0 0.0
        %4556 = vmatpush.xpose.msra.mxu0 0.0
        %4557 = vmatpush.xpose.msra.mxu0 0.0
        %4558 = vmatpush.xpose.msra.mxu0 0.0
        %4559 = vmatpush.xpose.msra.mxu0 0.0
        %4560 = vmatpush.xpose.msra.mxu0 %v845
        %4561 = vmatpush.xpose.msra.mxu0 %v461
        %4562 = vmatmul.f32.gmra.mxu0 %v1358
        %v4563 = vpop.f32.mrf.mxu0
        %v4564 = vadd.f32 %v4544, %v4563
        %4565 = vdwg.mxu0
        %4566 = vmatpush.xpose.msra.mxu0 0.0
        %4567 = vmatpush.xpose.msra.mxu0 0.0
        %4568 = vmatpush.xpose.msra.mxu0 0.0
        %4569 = vmatpush.xpose.msra.mxu0 0.0
        %4570 = vmatpush.xpose.msra.mxu0 0.0
        %4571 = vmatpush.xpose.msra.mxu0 0.0
        %4572 = vmatpush.xpose.msra.mxu0 0.0
        %4573 = vmatpush.xpose.msra.mxu0 0.0
        %4574 = vmatpush.xpose.msra.mxu0 0.0
        %4575 = vmatpush.xpose.msra.mxu0 0.0
        %4576 = vmatpush.xpose.msra.mxu0 0.0
        %4577 = vmatpush.xpose.msra.mxu0 0.0
        %4578 = vmatpush.xpose.msra.mxu0 0.0
        %4579 = vmatpush.xpose.msra.mxu0 0.0
        %4580 = vmatpush.xpose.msra.mxu0 %v846
        %4581 = vmatpush.xpose.msra.mxu0 %v462
        %4582 = vmatmul.f32.gmra.mxu0 %v1359
        %v4583 = vpop.f32.mrf.mxu0
        %v4584 = vadd.f32 %v4564, %v4583
        %4585 = vdwg.mxu0
        %4586 = vmatpush.xpose.msra.mxu0 0.0
        %4587 = vmatpush.xpose.msra.mxu0 0.0
        %4588 = vmatpush.xpose.msra.mxu0 0.0
        %4589 = vmatpush.xpose.msra.mxu0 0.0
        %4590 = vmatpush.xpose.msra.mxu0 0.0
        %4591 = vmatpush.xpose.msra.mxu0 0.0
        %4592 = vmatpush.xpose.msra.mxu0 0.0
        %4593 = vmatpush.xpose.msra.mxu0 0.0
        %4594 = vmatpush.xpose.msra.mxu0 0.0
        %4595 = vmatpush.xpose.msra.mxu0 0.0
        %4596 = vmatpush.xpose.msra.mxu0 0.0
        %4597 = vmatpush.xpose.msra.mxu0 0.0
        %4598 = vmatpush.xpose.msra.mxu0 0.0
        %4599 = vmatpush.xpose.msra.mxu0 0.0
        %4600 = vmatpush.xpose.msra.mxu0 %v847
        %4601 = vmatpush.xpose.msra.mxu0 %v463
        %4602 = vmatmul.f32.gmra.mxu0 %v1360
        %v4603 = vpop.f32.mrf.mxu0
        %v4604 = vadd.f32 %v4584, %v4603
        %4605 = vdwg.mxu0
        %4606 = vmatpush.xpose.msra.mxu0 0.0
        %4607 = vmatpush.xpose.msra.mxu0 0.0
        %4608 = vmatpush.xpose.msra.mxu0 0.0
        %4609 = vmatpush.xpose.msra.mxu0 0.0
        %4610 = vmatpush.xpose.msra.mxu0 0.0
        %4611 = vmatpush.xpose.msra.mxu0 0.0
        %4612 = vmatpush.xpose.msra.mxu0 0.0
        %4613 = vmatpush.xpose.msra.mxu0 0.0
        %4614 = vmatpush.xpose.msra.mxu0 0.0
        %4615 = vmatpush.xpose.msra.mxu0 0.0
        %4616 = vmatpush.xpose.msra.mxu0 0.0
        %4617 = vmatpush.xpose.msra.mxu0 0.0
        %4618 = vmatpush.xpose.msra.mxu0 0.0
        %4619 = vmatpush.xpose.msra.mxu0 0.0
        %4620 = vmatpush.xpose.msra.mxu0 %v848
        %4621 = vmatpush.xpose.msra.mxu0 %v464
        %4622 = vmatmul.f32.gmra.mxu0 %v1361
        %v4623 = vpop.f32.mrf.mxu0
        %v4624 = vadd.f32 %v4604, %v4623
        %4625 = vdwg.mxu0
        %4626 = vmatpush.xpose.msra.mxu0 0.0
        %4627 = vmatpush.xpose.msra.mxu0 0.0
        %4628 = vmatpush.xpose.msra.mxu0 0.0
        %4629 = vmatpush.xpose.msra.mxu0 0.0
        %4630 = vmatpush.xpose.msra.mxu0 0.0
        %4631 = vmatpush.xpose.msra.mxu0 0.0
        %4632 = vmatpush.xpose.msra.mxu0 0.0
        %4633 = vmatpush.xpose.msra.mxu0 0.0
        %4634 = vmatpush.xpose.msra.mxu0 0.0
        %4635 = vmatpush.xpose.msra.mxu0 0.0
        %4636 = vmatpush.xpose.msra.mxu0 0.0
        %4637 = vmatpush.xpose.msra.mxu0 0.0
        %4638 = vmatpush.xpose.msra.mxu0 0.0
        %4639 = vmatpush.xpose.msra.mxu0 0.0
        %4640 = vmatpush.xpose.msra.mxu0 %v849
        %4641 = vmatpush.xpose.msra.mxu0 %v465
        %4642 = vmatmul.f32.gmra.mxu0 %v1364
        %v4643 = vpop.f32.mrf.mxu0
        %v4644 = vadd.f32 %v4624, %v4643
        %4645 = vdwg.mxu0
        %4646 = vmatpush.xpose.msra.mxu0 0.0
        %4647 = vmatpush.xpose.msra.mxu0 0.0
        %4648 = vmatpush.xpose.msra.mxu0 0.0
        %4649 = vmatpush.xpose.msra.mxu0 0.0
        %4650 = vmatpush.xpose.msra.mxu0 0.0
        %4651 = vmatpush.xpose.msra.mxu0 0.0
        %4652 = vmatpush.xpose.msra.mxu0 0.0
        %4653 = vmatpush.xpose.msra.mxu0 0.0
        %4654 = vmatpush.xpose.msra.mxu0 0.0
        %4655 = vmatpush.xpose.msra.mxu0 0.0
        %4656 = vmatpush.xpose.msra.mxu0 0.0
        %4657 = vmatpush.xpose.msra.mxu0 0.0
        %4658 = vmatpush.xpose.msra.mxu0 0.0
        %4659 = vmatpush.xpose.msra.mxu0 0.0
        %4660 = vmatpush.xpose.msra.mxu0 %v850
        %4661 = vmatpush.xpose.msra.mxu0 %v466
        %4662 = vmatmul.f32.gmra.mxu0 %v1365
        %v4663 = vpop.f32.mrf.mxu0
        %v4664 = vadd.f32 %v4644, %v4663
        %4665 = vdwg.mxu0
        %4666 = vmatpush.xpose.msra.mxu0 0.0
        %4667 = vmatpush.xpose.msra.mxu0 0.0
        %4668 = vmatpush.xpose.msra.mxu0 0.0
        %4669 = vmatpush.xpose.msra.mxu0 0.0
        %4670 = vmatpush.xpose.msra.mxu0 0.0
        %4671 = vmatpush.xpose.msra.mxu0 0.0
        %4672 = vmatpush.xpose.msra.mxu0 0.0
        %4673 = vmatpush.xpose.msra.mxu0 0.0
        %4674 = vmatpush.xpose.msra.mxu0 0.0
        %4675 = vmatpush.xpose.msra.mxu0 0.0
        %4676 = vmatpush.xpose.msra.mxu0 0.0
        %4677 = vmatpush.xpose.msra.mxu0 0.0
        %4678 = vmatpush.xpose.msra.mxu0 0.0
        %4679 = vmatpush.xpose.msra.mxu0 0.0
        %4680 = vmatpush.xpose.msra.mxu0 %v851
        %4681 = vmatpush.xpose.msra.mxu0 %v467
        %4682 = vmatmul.f32.gmra.mxu0 %v1366
        %v4683 = vpop.f32.mrf.mxu0
        %v4684 = vadd.f32 %v4664, %v4683
        %4685 = vdwg.mxu0
        %4686 = vmatpush.xpose.msra.mxu0 0.0
        %4687 = vmatpush.xpose.msra.mxu0 0.0
        %4688 = vmatpush.xpose.msra.mxu0 0.0
        %4689 = vmatpush.xpose.msra.mxu0 0.0
        %4690 = vmatpush.xpose.msra.mxu0 0.0
        %4691 = vmatpush.xpose.msra.mxu0 0.0
        %4692 = vmatpush.xpose.msra.mxu0 0.0
        %4693 = vmatpush.xpose.msra.mxu0 0.0
        %4694 = vmatpush.xpose.msra.mxu0 0.0
        %4695 = vmatpush.xpose.msra.mxu0 0.0
        %4696 = vmatpush.xpose.msra.mxu0 0.0
        %4697 = vmatpush.xpose.msra.mxu0 0.0
        %4698 = vmatpush.xpose.msra.mxu0 0.0
        %4699 = vmatpush.xpose.msra.mxu0 0.0
        %4700 = vmatpush.xpose.msra.mxu0 %v852
        %4701 = vmatpush.xpose.msra.mxu0 %v468
        %4702 = vmatmul.f32.gmra.mxu0 %v1367
        %v4703 = vpop.f32.mrf.mxu0
        %v4704 = vadd.f32 %v4684, %v4703
        %4705 = vdwg.mxu0
        %4706 = vmatpush.xpose.msra.mxu0 0.0
        %4707 = vmatpush.xpose.msra.mxu0 0.0
        %4708 = vmatpush.xpose.msra.mxu0 0.0
        %4709 = vmatpush.xpose.msra.mxu0 0.0
        %4710 = vmatpush.xpose.msra.mxu0 0.0
        %4711 = vmatpush.xpose.msra.mxu0 0.0
        %4712 = vmatpush.xpose.msra.mxu0 0.0
        %4713 = vmatpush.xpose.msra.mxu0 0.0
        %4714 = vmatpush.xpose.msra.mxu0 0.0
        %4715 = vmatpush.xpose.msra.mxu0 0.0
        %4716 = vmatpush.xpose.msra.mxu0 0.0
        %4717 = vmatpush.xpose.msra.mxu0 0.0
        %4718 = vmatpush.xpose.msra.mxu0 0.0
        %4719 = vmatpush.xpose.msra.mxu0 0.0
        %4720 = vmatpush.xpose.msra.mxu0 %v853
        %4721 = vmatpush.xpose.msra.mxu0 %v469
        %4722 = vmatmul.f32.gmra.mxu0 %v1368
        %v4723 = vpop.f32.mrf.mxu0
        %v4724 = vadd.f32 %v4704, %v4723
        %4725 = vdwg.mxu0
        %4726 = vmatpush.xpose.msra.mxu0 0.0
        %4727 = vmatpush.xpose.msra.mxu0 0.0
        %4728 = vmatpush.xpose.msra.mxu0 0.0
        %4729 = vmatpush.xpose.msra.mxu0 0.0
        %4730 = vmatpush.xpose.msra.mxu0 0.0
        %4731 = vmatpush.xpose.msra.mxu0 0.0
        %4732 = vmatpush.xpose.msra.mxu0 0.0
        %4733 = vmatpush.xpose.msra.mxu0 0.0
        %4734 = vmatpush.xpose.msra.mxu0 0.0
        %4735 = vmatpush.xpose.msra.mxu0 0.0
        %4736 = vmatpush.xpose.msra.mxu0 0.0
        %4737 = vmatpush.xpose.msra.mxu0 0.0
        %4738 = vmatpush.xpose.msra.mxu0 0.0
        %4739 = vmatpush.xpose.msra.mxu0 0.0
        %4740 = vmatpush.xpose.msra.mxu0 %v854
        %4741 = vmatpush.xpose.msra.mxu0 %v470
        %4742 = vmatmul.f32.gmra.mxu0 %v1369
        %v4743 = vpop.f32.mrf.mxu0
        %v4744 = vadd.f32 %v4724, %v4743
        %4745 = vdwg.mxu0
        %4746 = vmatpush.xpose.msra.mxu0 0.0
        %4747 = vmatpush.xpose.msra.mxu0 0.0
        %4748 = vmatpush.xpose.msra.mxu0 0.0
        %4749 = vmatpush.xpose.msra.mxu0 0.0
        %4750 = vmatpush.xpose.msra.mxu0 0.0
        %4751 = vmatpush.xpose.msra.mxu0 0.0
        %4752 = vmatpush.xpose.msra.mxu0 0.0
        %4753 = vmatpush.xpose.msra.mxu0 0.0
        %4754 = vmatpush.xpose.msra.mxu0 0.0
        %4755 = vmatpush.xpose.msra.mxu0 0.0
        %4756 = vmatpush.xpose.msra.mxu0 0.0
        %4757 = vmatpush.xpose.msra.mxu0 0.0
        %4758 = vmatpush.xpose.msra.mxu0 0.0
        %4759 = vmatpush.xpose.msra.mxu0 0.0
        %4760 = vmatpush.xpose.msra.mxu0 %v855
        %4761 = vmatpush.xpose.msra.mxu0 %v471
        %4762 = vmatmul.f32.gmra.mxu0 %v1370
        %v4763 = vpop.f32.mrf.mxu0
        %v4764 = vadd.f32 %v4744, %v4763
        %4765 = vdwg.mxu0
        %4766 = vmatpush.xpose.msra.mxu0 0.0
        %4767 = vmatpush.xpose.msra.mxu0 0.0
        %4768 = vmatpush.xpose.msra.mxu0 0.0
        %4769 = vmatpush.xpose.msra.mxu0 0.0
        %4770 = vmatpush.xpose.msra.mxu0 0.0
        %4771 = vmatpush.xpose.msra.mxu0 0.0
        %4772 = vmatpush.xpose.msra.mxu0 0.0
        %4773 = vmatpush.xpose.msra.mxu0 0.0
        %4774 = vmatpush.xpose.msra.mxu0 0.0
        %4775 = vmatpush.xpose.msra.mxu0 0.0
        %4776 = vmatpush.xpose.msra.mxu0 0.0
        %4777 = vmatpush.xpose.msra.mxu0 0.0
        %4778 = vmatpush.xpose.msra.mxu0 0.0
        %4779 = vmatpush.xpose.msra.mxu0 0.0
        %4780 = vmatpush.xpose.msra.mxu0 %v856
        %4781 = vmatpush.xpose.msra.mxu0 %v472
        %4782 = vmatmul.f32.gmra.mxu0 %v1371
        %v4783 = vpop.f32.mrf.mxu0
        %v4784 = vadd.f32 %v4764, %v4783
        %4785 = vdwg.mxu0
        %4786 = vmatpush.xpose.msra.mxu0 0.0
        %4787 = vmatpush.xpose.msra.mxu0 0.0
        %4788 = vmatpush.xpose.msra.mxu0 0.0
        %4789 = vmatpush.xpose.msra.mxu0 0.0
        %4790 = vmatpush.xpose.msra.mxu0 0.0
        %4791 = vmatpush.xpose.msra.mxu0 0.0
        %4792 = vmatpush.xpose.msra.mxu0 0.0
        %4793 = vmatpush.xpose.msra.mxu0 0.0
        %4794 = vmatpush.xpose.msra.mxu0 0.0
        %4795 = vmatpush.xpose.msra.mxu0 0.0
        %4796 = vmatpush.xpose.msra.mxu0 0.0
        %4797 = vmatpush.xpose.msra.mxu0 0.0
        %4798 = vmatpush.xpose.msra.mxu0 0.0
        %4799 = vmatpush.xpose.msra.mxu0 0.0
        %4800 = vmatpush.xpose.msra.mxu0 %v857
        %4801 = vmatpush.xpose.msra.mxu0 %v473
        %4802 = vmatmul.f32.gmra.mxu0 %v1374
        %v4803 = vpop.f32.mrf.mxu0
        %v4804 = vadd.f32 %v4784, %v4803
        %4805 = vdwg.mxu0
        %4806 = vmatpush.xpose.msra.mxu0 0.0
        %4807 = vmatpush.xpose.msra.mxu0 0.0
        %4808 = vmatpush.xpose.msra.mxu0 0.0
        %4809 = vmatpush.xpose.msra.mxu0 0.0
        %4810 = vmatpush.xpose.msra.mxu0 0.0
        %4811 = vmatpush.xpose.msra.mxu0 0.0
        %4812 = vmatpush.xpose.msra.mxu0 0.0
        %4813 = vmatpush.xpose.msra.mxu0 0.0
        %4814 = vmatpush.xpose.msra.mxu0 0.0
        %4815 = vmatpush.xpose.msra.mxu0 0.0
        %4816 = vmatpush.xpose.msra.mxu0 0.0
        %4817 = vmatpush.xpose.msra.mxu0 0.0
        %4818 = vmatpush.xpose.msra.mxu0 0.0
        %4819 = vmatpush.xpose.msra.mxu0 0.0
        %4820 = vmatpush.xpose.msra.mxu0 %v858
        %4821 = vmatpush.xpose.msra.mxu0 %v474
        %4822 = vmatmul.f32.gmra.mxu0 %v1375
        %v4823 = vpop.f32.mrf.mxu0
        %v4824 = vadd.f32 %v4804, %v4823
        %4825 = vdwg.mxu0
        %4826 = vmatpush.xpose.msra.mxu0 0.0
        %4827 = vmatpush.xpose.msra.mxu0 0.0
        %4828 = vmatpush.xpose.msra.mxu0 0.0
        %4829 = vmatpush.xpose.msra.mxu0 0.0
        %4830 = vmatpush.xpose.msra.mxu0 0.0
        %4831 = vmatpush.xpose.msra.mxu0 0.0
        %4832 = vmatpush.xpose.msra.mxu0 0.0
        %4833 = vmatpush.xpose.msra.mxu0 0.0
        %4834 = vmatpush.xpose.msra.mxu0 0.0
        %4835 = vmatpush.xpose.msra.mxu0 0.0
        %4836 = vmatpush.xpose.msra.mxu0 0.0
        %4837 = vmatpush.xpose.msra.mxu0 0.0
        %4838 = vmatpush.xpose.msra.mxu0 0.0
        %4839 = vmatpush.xpose.msra.mxu0 0.0
        %4840 = vmatpush.xpose.msra.mxu0 %v859
        %4841 = vmatpush.xpose.msra.mxu0 %v475
        %4842 = vmatmul.f32.gmra.mxu0 %v1376
        %v4843 = vpop.f32.mrf.mxu0
        %v4844 = vadd.f32 %v4824, %v4843
        %4845 = vdwg.mxu0
        %4846 = vmatpush.xpose.msra.mxu0 0.0
        %4847 = vmatpush.xpose.msra.mxu0 0.0
        %4848 = vmatpush.xpose.msra.mxu0 0.0
        %4849 = vmatpush.xpose.msra.mxu0 0.0
        %4850 = vmatpush.xpose.msra.mxu0 0.0
        %4851 = vmatpush.xpose.msra.mxu0 0.0
        %4852 = vmatpush.xpose.msra.mxu0 0.0
        %4853 = vmatpush.xpose.msra.mxu0 0.0
        %4854 = vmatpush.xpose.msra.mxu0 0.0
        %4855 = vmatpush.xpose.msra.mxu0 0.0
        %4856 = vmatpush.xpose.msra.mxu0 0.0
        %4857 = vmatpush.xpose.msra.mxu0 0.0
        %4858 = vmatpush.xpose.msra.mxu0 0.0
        %4859 = vmatpush.xpose.msra.mxu0 0.0
        %4860 = vmatpush.xpose.msra.mxu0 %v860
        %4861 = vmatpush.xpose.msra.mxu0 %v476
        %4862 = vmatmul.f32.gmra.mxu0 %v1377
        %v4863 = vpop.f32.mrf.mxu0
        %v4864 = vadd.f32 %v4844, %v4863
        %4865 = vdwg.mxu0
        %4866 = vmatpush.xpose.msra.mxu0 0.0
        %4867 = vmatpush.xpose.msra.mxu0 0.0
        %4868 = vmatpush.xpose.msra.mxu0 0.0
        %4869 = vmatpush.xpose.msra.mxu0 0.0
        %4870 = vmatpush.xpose.msra.mxu0 0.0
        %4871 = vmatpush.xpose.msra.mxu0 0.0
        %4872 = vmatpush.xpose.msra.mxu0 0.0
        %4873 = vmatpush.xpose.msra.mxu0 0.0
        %4874 = vmatpush.xpose.msra.mxu0 0.0
        %4875 = vmatpush.xpose.msra.mxu0 0.0
        %4876 = vmatpush.xpose.msra.mxu0 0.0
        %4877 = vmatpush.xpose.msra.mxu0 0.0
        %4878 = vmatpush.xpose.msra.mxu0 0.0
        %4879 = vmatpush.xpose.msra.mxu0 0.0
        %4880 = vmatpush.xpose.msra.mxu0 %v861
        %4881 = vmatpush.xpose.msra.mxu0 %v477
        %4882 = vmatmul.f32.gmra.mxu0 %v1378
        %v4883 = vpop.f32.mrf.mxu0
        %v4884 = vadd.f32 %v4864, %v4883
        %4885 = vdwg.mxu0
        %4886 = vmatpush.xpose.msra.mxu0 0.0
        %4887 = vmatpush.xpose.msra.mxu0 0.0
        %4888 = vmatpush.xpose.msra.mxu0 0.0
        %4889 = vmatpush.xpose.msra.mxu0 0.0
        %4890 = vmatpush.xpose.msra.mxu0 0.0
        %4891 = vmatpush.xpose.msra.mxu0 0.0
        %4892 = vmatpush.xpose.msra.mxu0 0.0
        %4893 = vmatpush.xpose.msra.mxu0 0.0
        %4894 = vmatpush.xpose.msra.mxu0 0.0
        %4895 = vmatpush.xpose.msra.mxu0 0.0
        %4896 = vmatpush.xpose.msra.mxu0 0.0
        %4897 = vmatpush.xpose.msra.mxu0 0.0
        %4898 = vmatpush.xpose.msra.mxu0 0.0
        %4899 = vmatpush.xpose.msra.mxu0 0.0
        %4900 = vmatpush.xpose.msra.mxu0 %v862
        %4901 = vmatpush.xpose.msra.mxu0 %v478
        %4902 = vmatmul.f32.gmra.mxu0 %v1379
        %v4903 = vpop.f32.mrf.mxu0
        %v4904 = vadd.f32 %v4884, %v4903
        %4905 = vdwg.mxu0
        %4906 = vmatpush.xpose.msra.mxu0 0.0
        %4907 = vmatpush.xpose.msra.mxu0 0.0
        %4908 = vmatpush.xpose.msra.mxu0 0.0
        %4909 = vmatpush.xpose.msra.mxu0 0.0
        %4910 = vmatpush.xpose.msra.mxu0 0.0
        %4911 = vmatpush.xpose.msra.mxu0 0.0
        %4912 = vmatpush.xpose.msra.mxu0 0.0
        %4913 = vmatpush.xpose.msra.mxu0 0.0
        %4914 = vmatpush.xpose.msra.mxu0 0.0
        %4915 = vmatpush.xpose.msra.mxu0 0.0
        %4916 = vmatpush.xpose.msra.mxu0 0.0
        %4917 = vmatpush.xpose.msra.mxu0 0.0
        %4918 = vmatpush.xpose.msra.mxu0 0.0
        %4919 = vmatpush.xpose.msra.mxu0 0.0
        %4920 = vmatpush.xpose.msra.mxu0 %v863
        %4921 = vmatpush.xpose.msra.mxu0 %v479
        %4922 = vmatmul.f32.gmra.mxu0 %v1380
        %v4923 = vpop.f32.mrf.mxu0
        %v4924 = vadd.f32 %v4904, %v4923
        %4925 = vdwg.mxu0
        %4926 = vmatpush.xpose.msra.mxu0 0.0
        %4927 = vmatpush.xpose.msra.mxu0 0.0
        %4928 = vmatpush.xpose.msra.mxu0 0.0
        %4929 = vmatpush.xpose.msra.mxu0 0.0
        %4930 = vmatpush.xpose.msra.mxu0 0.0
        %4931 = vmatpush.xpose.msra.mxu0 0.0
        %4932 = vmatpush.xpose.msra.mxu0 0.0
        %4933 = vmatpush.xpose.msra.mxu0 0.0
        %4934 = vmatpush.xpose.msra.mxu0 0.0
        %4935 = vmatpush.xpose.msra.mxu0 0.0
        %4936 = vmatpush.xpose.msra.mxu0 0.0
        %4937 = vmatpush.xpose.msra.mxu0 0.0
        %4938 = vmatpush.xpose.msra.mxu0 0.0
        %4939 = vmatpush.xpose.msra.mxu0 0.0
        %4940 = vmatpush.xpose.msra.mxu0 %v864
        %4941 = vmatpush.xpose.msra.mxu0 %v480
        %4942 = vmatmul.f32.gmra.mxu0 %v1381
        %v4943 = vpop.f32.mrf.mxu0
        %v4944 = vadd.f32 %v4924, %v4943
        %4945 = vdwg.mxu0
        %4946 = vmatpush.xpose.msra.mxu0 0.0
        %4947 = vmatpush.xpose.msra.mxu0 0.0
        %4948 = vmatpush.xpose.msra.mxu0 0.0
        %4949 = vmatpush.xpose.msra.mxu0 0.0
        %4950 = vmatpush.xpose.msra.mxu0 0.0
        %4951 = vmatpush.xpose.msra.mxu0 0.0
        %4952 = vmatpush.xpose.msra.mxu0 0.0
        %4953 = vmatpush.xpose.msra.mxu0 0.0
        %4954 = vmatpush.xpose.msra.mxu0 0.0
        %4955 = vmatpush.xpose.msra.mxu0 0.0
        %4956 = vmatpush.xpose.msra.mxu0 0.0
        %4957 = vmatpush.xpose.msra.mxu0 0.0
        %4958 = vmatpush.xpose.msra.mxu0 0.0
        %4959 = vmatpush.xpose.msra.mxu0 0.0
        %4960 = vmatpush.xpose.msra.mxu0 %v865
        %4961 = vmatpush.xpose.msra.mxu0 %v481
        %4962 = vmatmul.f32.gmra.mxu0 %v1384
        %v4963 = vpop.f32.mrf.mxu0
        %v4964 = vadd.f32 %v4944, %v4963
        %4965 = vdwg.mxu0
        %4966 = vmatpush.xpose.msra.mxu0 0.0
        %4967 = vmatpush.xpose.msra.mxu0 0.0
        %4968 = vmatpush.xpose.msra.mxu0 0.0
        %4969 = vmatpush.xpose.msra.mxu0 0.0
        %4970 = vmatpush.xpose.msra.mxu0 0.0
        %4971 = vmatpush.xpose.msra.mxu0 0.0
        %4972 = vmatpush.xpose.msra.mxu0 0.0
        %4973 = vmatpush.xpose.msra.mxu0 0.0
        %4974 = vmatpush.xpose.msra.mxu0 0.0
        %4975 = vmatpush.xpose.msra.mxu0 0.0
        %4976 = vmatpush.xpose.msra.mxu0 0.0
        %4977 = vmatpush.xpose.msra.mxu0 0.0
        %4978 = vmatpush.xpose.msra.mxu0 0.0
        %4979 = vmatpush.xpose.msra.mxu0 0.0
        %4980 = vmatpush.xpose.msra.mxu0 %v866
        %4981 = vmatpush.xpose.msra.mxu0 %v482
        %4982 = vmatmul.f32.gmra.mxu0 %v1385
        %v4983 = vpop.f32.mrf.mxu0
        %v4984 = vadd.f32 %v4964, %v4983
        %4985 = vdwg.mxu0
        %4986 = vmatpush.xpose.msra.mxu0 0.0
        %4987 = vmatpush.xpose.msra.mxu0 0.0
        %4988 = vmatpush.xpose.msra.mxu0 0.0
        %4989 = vmatpush.xpose.msra.mxu0 0.0
        %4990 = vmatpush.xpose.msra.mxu0 0.0
        %4991 = vmatpush.xpose.msra.mxu0 0.0
        %4992 = vmatpush.xpose.msra.mxu0 0.0
        %4993 = vmatpush.xpose.msra.mxu0 0.0
        %4994 = vmatpush.xpose.msra.mxu0 0.0
        %4995 = vmatpush.xpose.msra.mxu0 0.0
        %4996 = vmatpush.xpose.msra.mxu0 0.0
        %4997 = vmatpush.xpose.msra.mxu0 0.0
        %4998 = vmatpush.xpose.msra.mxu0 0.0
        %4999 = vmatpush.xpose.msra.mxu0 0.0
        %5000 = vmatpush.xpose.msra.mxu0 %v867
        %5001 = vmatpush.xpose.msra.mxu0 %v483
        %5002 = vmatmul.f32.gmra.mxu0 %v1386
        %v5003 = vpop.f32.mrf.mxu0
        %v5004 = vadd.f32 %v4984, %v5003
        %5005 = vdwg.mxu0
        %5006 = vmatpush.xpose.msra.mxu0 0.0
        %5007 = vmatpush.xpose.msra.mxu0 0.0
        %5008 = vmatpush.xpose.msra.mxu0 0.0
        %5009 = vmatpush.xpose.msra.mxu0 0.0
        %5010 = vmatpush.xpose.msra.mxu0 0.0
        %5011 = vmatpush.xpose.msra.mxu0 0.0
        %5012 = vmatpush.xpose.msra.mxu0 0.0
        %5013 = vmatpush.xpose.msra.mxu0 0.0
        %5014 = vmatpush.xpose.msra.mxu0 0.0
        %5015 = vmatpush.xpose.msra.mxu0 0.0
        %5016 = vmatpush.xpose.msra.mxu0 0.0
        %5017 = vmatpush.xpose.msra.mxu0 0.0
        %5018 = vmatpush.xpose.msra.mxu0 0.0
        %5019 = vmatpush.xpose.msra.mxu0 0.0
        %5020 = vmatpush.xpose.msra.mxu0 %v868
        %5021 = vmatpush.xpose.msra.mxu0 %v484
        %5022 = vmatmul.f32.gmra.mxu0 %v1387
        %v5023 = vpop.f32.mrf.mxu0
        %v5024 = vadd.f32 %v5004, %v5023
        %5025 = vdwg.mxu0
        %5026 = vmatpush.xpose.msra.mxu0 0.0
        %5027 = vmatpush.xpose.msra.mxu0 0.0
        %5028 = vmatpush.xpose.msra.mxu0 0.0
        %5029 = vmatpush.xpose.msra.mxu0 0.0
        %5030 = vmatpush.xpose.msra.mxu0 0.0
        %5031 = vmatpush.xpose.msra.mxu0 0.0
        %5032 = vmatpush.xpose.msra.mxu0 0.0
        %5033 = vmatpush.xpose.msra.mxu0 0.0
        %5034 = vmatpush.xpose.msra.mxu0 0.0
        %5035 = vmatpush.xpose.msra.mxu0 0.0
        %5036 = vmatpush.xpose.msra.mxu0 0.0
        %5037 = vmatpush.xpose.msra.mxu0 0.0
        %5038 = vmatpush.xpose.msra.mxu0 0.0
        %5039 = vmatpush.xpose.msra.mxu0 0.0
        %5040 = vmatpush.xpose.msra.mxu0 %v869
        %5041 = vmatpush.xpose.msra.mxu0 %v485
        %5042 = vmatmul.f32.gmra.mxu0 %v1388
        %v5043 = vpop.f32.mrf.mxu0
        %v5044 = vadd.f32 %v5024, %v5043
        %5045 = vdwg.mxu0
        %5046 = vmatpush.xpose.msra.mxu0 0.0
        %5047 = vmatpush.xpose.msra.mxu0 0.0
        %5048 = vmatpush.xpose.msra.mxu0 0.0
        %5049 = vmatpush.xpose.msra.mxu0 0.0
        %5050 = vmatpush.xpose.msra.mxu0 0.0
        %5051 = vmatpush.xpose.msra.mxu0 0.0
        %5052 = vmatpush.xpose.msra.mxu0 0.0
        %5053 = vmatpush.xpose.msra.mxu0 0.0
        %5054 = vmatpush.xpose.msra.mxu0 0.0
        %5055 = vmatpush.xpose.msra.mxu0 0.0
        %5056 = vmatpush.xpose.msra.mxu0 0.0
        %5057 = vmatpush.xpose.msra.mxu0 0.0
        %5058 = vmatpush.xpose.msra.mxu0 0.0
        %5059 = vmatpush.xpose.msra.mxu0 0.0
        %5060 = vmatpush.xpose.msra.mxu0 %v870
        %5061 = vmatpush.xpose.msra.mxu0 %v486
        %5062 = vmatmul.f32.gmra.mxu0 %v1389
        %v5063 = vpop.f32.mrf.mxu0
        %v5064 = vadd.f32 %v5044, %v5063
        %5065 = vdwg.mxu0
        %5066 = vmatpush.xpose.msra.mxu0 0.0
        %5067 = vmatpush.xpose.msra.mxu0 0.0
        %5068 = vmatpush.xpose.msra.mxu0 0.0
        %5069 = vmatpush.xpose.msra.mxu0 0.0
        %5070 = vmatpush.xpose.msra.mxu0 0.0
        %5071 = vmatpush.xpose.msra.mxu0 0.0
        %5072 = vmatpush.xpose.msra.mxu0 0.0
        %5073 = vmatpush.xpose.msra.mxu0 0.0
        %5074 = vmatpush.xpose.msra.mxu0 0.0
        %5075 = vmatpush.xpose.msra.mxu0 0.0
        %5076 = vmatpush.xpose.msra.mxu0 0.0
        %5077 = vmatpush.xpose.msra.mxu0 0.0
        %5078 = vmatpush.xpose.msra.mxu0 0.0
        %5079 = vmatpush.xpose.msra.mxu0 0.0
        %5080 = vmatpush.xpose.msra.mxu0 %v871
        %5081 = vmatpush.xpose.msra.mxu0 %v487
        %5082 = vmatmul.f32.gmra.mxu0 %v1390
        %v5083 = vpop.f32.mrf.mxu0
        %v5084 = vadd.f32 %v5064, %v5083
        %5085 = vdwg.mxu0
        %5086 = vmatpush.xpose.msra.mxu0 0.0
        %5087 = vmatpush.xpose.msra.mxu0 0.0
        %5088 = vmatpush.xpose.msra.mxu0 0.0
        %5089 = vmatpush.xpose.msra.mxu0 0.0
        %5090 = vmatpush.xpose.msra.mxu0 0.0
        %5091 = vmatpush.xpose.msra.mxu0 0.0
        %5092 = vmatpush.xpose.msra.mxu0 0.0
        %5093 = vmatpush.xpose.msra.mxu0 0.0
        %5094 = vmatpush.xpose.msra.mxu0 0.0
        %5095 = vmatpush.xpose.msra.mxu0 0.0
        %5096 = vmatpush.xpose.msra.mxu0 0.0
        %5097 = vmatpush.xpose.msra.mxu0 0.0
        %5098 = vmatpush.xpose.msra.mxu0 0.0
        %5099 = vmatpush.xpose.msra.mxu0 0.0
        %5100 = vmatpush.xpose.msra.mxu0 %v872
        %5101 = vmatpush.xpose.msra.mxu0 %v488
        %5102 = vmatmul.f32.gmra.mxu0 %v1391
        %v5103 = vpop.f32.mrf.mxu0
        %v5104 = vadd.f32 %v5084, %v5103
        %5105 = vdwg.mxu0
        %5106 = vmatpush.xpose.msra.mxu0 0.0
        %5107 = vmatpush.xpose.msra.mxu0 0.0
        %5108 = vmatpush.xpose.msra.mxu0 0.0
        %5109 = vmatpush.xpose.msra.mxu0 0.0
        %5110 = vmatpush.xpose.msra.mxu0 0.0
        %5111 = vmatpush.xpose.msra.mxu0 0.0
        %5112 = vmatpush.xpose.msra.mxu0 0.0
        %5113 = vmatpush.xpose.msra.mxu0 0.0
        %5114 = vmatpush.xpose.msra.mxu0 0.0
        %5115 = vmatpush.xpose.msra.mxu0 0.0
        %5116 = vmatpush.xpose.msra.mxu0 0.0
        %5117 = vmatpush.xpose.msra.mxu0 0.0
        %5118 = vmatpush.xpose.msra.mxu0 0.0
        %5119 = vmatpush.xpose.msra.mxu0 0.0
        %5120 = vmatpush.xpose.msra.mxu0 %v873
        %5121 = vmatpush.xpose.msra.mxu0 %v489
        %5122 = vmatmul.f32.gmra.mxu0 %v1394
        %v5123 = vpop.f32.mrf.mxu0
        %v5124 = vadd.f32 %v5104, %v5123
        %5125 = vdwg.mxu0
        %5126 = vmatpush.xpose.msra.mxu0 0.0
        %5127 = vmatpush.xpose.msra.mxu0 0.0
        %5128 = vmatpush.xpose.msra.mxu0 0.0
        %5129 = vmatpush.xpose.msra.mxu0 0.0
        %5130 = vmatpush.xpose.msra.mxu0 0.0
        %5131 = vmatpush.xpose.msra.mxu0 0.0
        %5132 = vmatpush.xpose.msra.mxu0 0.0
        %5133 = vmatpush.xpose.msra.mxu0 0.0
        %5134 = vmatpush.xpose.msra.mxu0 0.0
        %5135 = vmatpush.xpose.msra.mxu0 0.0
        %5136 = vmatpush.xpose.msra.mxu0 0.0
        %5137 = vmatpush.xpose.msra.mxu0 0.0
        %5138 = vmatpush.xpose.msra.mxu0 0.0
        %5139 = vmatpush.xpose.msra.mxu0 0.0
        %5140 = vmatpush.xpose.msra.mxu0 %v874
        %5141 = vmatpush.xpose.msra.mxu0 %v490
        %5142 = vmatmul.f32.gmra.mxu0 %v1395
        %v5143 = vpop.f32.mrf.mxu0
        %v5144 = vadd.f32 %v5124, %v5143
        %5145 = vdwg.mxu0
        %5146 = vmatpush.xpose.msra.mxu0 0.0
        %5147 = vmatpush.xpose.msra.mxu0 0.0
        %5148 = vmatpush.xpose.msra.mxu0 0.0
        %5149 = vmatpush.xpose.msra.mxu0 0.0
        %5150 = vmatpush.xpose.msra.mxu0 0.0
        %5151 = vmatpush.xpose.msra.mxu0 0.0
        %5152 = vmatpush.xpose.msra.mxu0 0.0
        %5153 = vmatpush.xpose.msra.mxu0 0.0
        %5154 = vmatpush.xpose.msra.mxu0 0.0
        %5155 = vmatpush.xpose.msra.mxu0 0.0
        %5156 = vmatpush.xpose.msra.mxu0 0.0
        %5157 = vmatpush.xpose.msra.mxu0 0.0
        %5158 = vmatpush.xpose.msra.mxu0 0.0
        %5159 = vmatpush.xpose.msra.mxu0 0.0
        %5160 = vmatpush.xpose.msra.mxu0 %v875
        %5161 = vmatpush.xpose.msra.mxu0 %v491
        %5162 = vmatmul.f32.gmra.mxu0 %v1396
        %v5163 = vpop.f32.mrf.mxu0
        %v5164 = vadd.f32 %v5144, %v5163
        %5165 = vdwg.mxu0
        %5166 = vmatpush.xpose.msra.mxu0 0.0
        %5167 = vmatpush.xpose.msra.mxu0 0.0
        %5168 = vmatpush.xpose.msra.mxu0 0.0
        %5169 = vmatpush.xpose.msra.mxu0 0.0
        %5170 = vmatpush.xpose.msra.mxu0 0.0
        %5171 = vmatpush.xpose.msra.mxu0 0.0
        %5172 = vmatpush.xpose.msra.mxu0 0.0
        %5173 = vmatpush.xpose.msra.mxu0 0.0
        %5174 = vmatpush.xpose.msra.mxu0 0.0
        %5175 = vmatpush.xpose.msra.mxu0 0.0
        %5176 = vmatpush.xpose.msra.mxu0 0.0
        %5177 = vmatpush.xpose.msra.mxu0 0.0
        %5178 = vmatpush.xpose.msra.mxu0 0.0
        %5179 = vmatpush.xpose.msra.mxu0 0.0
        %5180 = vmatpush.xpose.msra.mxu0 %v876
        %5181 = vmatpush.xpose.msra.mxu0 %v492
        %5182 = vmatmul.f32.gmra.mxu0 %v1397
        %v5183 = vpop.f32.mrf.mxu0
        %v5184 = vadd.f32 %v5164, %v5183
        %5185 = vdwg.mxu0
        %5186 = vmatpush.xpose.msra.mxu0 0.0
        %5187 = vmatpush.xpose.msra.mxu0 0.0
        %5188 = vmatpush.xpose.msra.mxu0 0.0
        %5189 = vmatpush.xpose.msra.mxu0 0.0
        %5190 = vmatpush.xpose.msra.mxu0 0.0
        %5191 = vmatpush.xpose.msra.mxu0 0.0
        %5192 = vmatpush.xpose.msra.mxu0 0.0
        %5193 = vmatpush.xpose.msra.mxu0 0.0
        %5194 = vmatpush.xpose.msra.mxu0 0.0
        %5195 = vmatpush.xpose.msra.mxu0 0.0
        %5196 = vmatpush.xpose.msra.mxu0 0.0
        %5197 = vmatpush.xpose.msra.mxu0 0.0
        %5198 = vmatpush.xpose.msra.mxu0 0.0
        %5199 = vmatpush.xpose.msra.mxu0 0.0
        %5200 = vmatpush.xpose.msra.mxu0 %v877
        %5201 = vmatpush.xpose.msra.mxu0 %v493
        %5202 = vmatmul.f32.gmra.mxu0 %v1398
        %v5203 = vpop.f32.mrf.mxu0
        %v5204 = vadd.f32 %v5184, %v5203
        %5205 = vdwg.mxu0
        %5206 = vmatpush.xpose.msra.mxu0 0.0
        %5207 = vmatpush.xpose.msra.mxu0 0.0
        %5208 = vmatpush.xpose.msra.mxu0 0.0
        %5209 = vmatpush.xpose.msra.mxu0 0.0
        %5210 = vmatpush.xpose.msra.mxu0 0.0
        %5211 = vmatpush.xpose.msra.mxu0 0.0
        %5212 = vmatpush.xpose.msra.mxu0 0.0
        %5213 = vmatpush.xpose.msra.mxu0 0.0
        %5214 = vmatpush.xpose.msra.mxu0 0.0
        %5215 = vmatpush.xpose.msra.mxu0 0.0
        %5216 = vmatpush.xpose.msra.mxu0 0.0
        %5217 = vmatpush.xpose.msra.mxu0 0.0
        %5218 = vmatpush.xpose.msra.mxu0 0.0
        %5219 = vmatpush.xpose.msra.mxu0 0.0
        %5220 = vmatpush.xpose.msra.mxu0 %v878
        %5221 = vmatpush.xpose.msra.mxu0 %v494
        %5222 = vmatmul.f32.gmra.mxu0 %v1399
        %v5223 = vpop.f32.mrf.mxu0
        %v5224 = vadd.f32 %v5204, %v5223
        %5225 = vdwg.mxu0
        %5226 = vmatpush.xpose.msra.mxu0 0.0
        %5227 = vmatpush.xpose.msra.mxu0 0.0
        %5228 = vmatpush.xpose.msra.mxu0 0.0
        %5229 = vmatpush.xpose.msra.mxu0 0.0
        %5230 = vmatpush.xpose.msra.mxu0 0.0
        %5231 = vmatpush.xpose.msra.mxu0 0.0
        %5232 = vmatpush.xpose.msra.mxu0 0.0
        %5233 = vmatpush.xpose.msra.mxu0 0.0
        %5234 = vmatpush.xpose.msra.mxu0 0.0
        %5235 = vmatpush.xpose.msra.mxu0 0.0
        %5236 = vmatpush.xpose.msra.mxu0 0.0
        %5237 = vmatpush.xpose.msra.mxu0 0.0
        %5238 = vmatpush.xpose.msra.mxu0 0.0
        %5239 = vmatpush.xpose.msra.mxu0 0.0
        %5240 = vmatpush.xpose.msra.mxu0 %v879
        %5241 = vmatpush.xpose.msra.mxu0 %v495
        %5242 = vmatmul.f32.gmra.mxu0 %v1400
        %v5243 = vpop.f32.mrf.mxu0
        %v5244 = vadd.f32 %v5224, %v5243
        %5245 = vdwg.mxu0
        %5246 = vmatpush.xpose.msra.mxu0 0.0
        %5247 = vmatpush.xpose.msra.mxu0 0.0
        %5248 = vmatpush.xpose.msra.mxu0 0.0
        %5249 = vmatpush.xpose.msra.mxu0 0.0
        %5250 = vmatpush.xpose.msra.mxu0 0.0
        %5251 = vmatpush.xpose.msra.mxu0 0.0
        %5252 = vmatpush.xpose.msra.mxu0 0.0
        %5253 = vmatpush.xpose.msra.mxu0 0.0
        %5254 = vmatpush.xpose.msra.mxu0 0.0
        %5255 = vmatpush.xpose.msra.mxu0 0.0
        %5256 = vmatpush.xpose.msra.mxu0 0.0
        %5257 = vmatpush.xpose.msra.mxu0 0.0
        %5258 = vmatpush.xpose.msra.mxu0 0.0
        %5259 = vmatpush.xpose.msra.mxu0 0.0
        %5260 = vmatpush.xpose.msra.mxu0 %v880
        %5261 = vmatpush.xpose.msra.mxu0 %v496
        %5262 = vmatmul.f32.gmra.mxu0 %v1401
        %v5263 = vpop.f32.mrf.mxu0
        %v5264 = vadd.f32 %v5244, %v5263
        %5265 = vdwg.mxu0
        %5266 = vmatpush.xpose.msra.mxu0 0.0
        %5267 = vmatpush.xpose.msra.mxu0 0.0
        %5268 = vmatpush.xpose.msra.mxu0 0.0
        %5269 = vmatpush.xpose.msra.mxu0 0.0
        %5270 = vmatpush.xpose.msra.mxu0 0.0
        %5271 = vmatpush.xpose.msra.mxu0 0.0
        %5272 = vmatpush.xpose.msra.mxu0 0.0
        %5273 = vmatpush.xpose.msra.mxu0 0.0
        %5274 = vmatpush.xpose.msra.mxu0 0.0
        %5275 = vmatpush.xpose.msra.mxu0 0.0
        %5276 = vmatpush.xpose.msra.mxu0 0.0
        %5277 = vmatpush.xpose.msra.mxu0 0.0
        %5278 = vmatpush.xpose.msra.mxu0 0.0
        %5279 = vmatpush.xpose.msra.mxu0 0.0
        %5280 = vmatpush.xpose.msra.mxu0 %v881
        %5281 = vmatpush.xpose.msra.mxu0 %v497
        %5282 = vmatmul.f32.gmra.mxu0 %v1404
        %v5283 = vpop.f32.mrf.mxu0
        %v5284 = vadd.f32 %v5264, %v5283
        %5285 = vdwg.mxu0
        %5286 = vmatpush.xpose.msra.mxu0 0.0
        %5287 = vmatpush.xpose.msra.mxu0 0.0
        %5288 = vmatpush.xpose.msra.mxu0 0.0
        %5289 = vmatpush.xpose.msra.mxu0 0.0
        %5290 = vmatpush.xpose.msra.mxu0 0.0
        %5291 = vmatpush.xpose.msra.mxu0 0.0
        %5292 = vmatpush.xpose.msra.mxu0 0.0
        %5293 = vmatpush.xpose.msra.mxu0 0.0
        %5294 = vmatpush.xpose.msra.mxu0 0.0
        %5295 = vmatpush.xpose.msra.mxu0 0.0
        %5296 = vmatpush.xpose.msra.mxu0 0.0
        %5297 = vmatpush.xpose.msra.mxu0 0.0
        %5298 = vmatpush.xpose.msra.mxu0 0.0
        %5299 = vmatpush.xpose.msra.mxu0 0.0
        %5300 = vmatpush.xpose.msra.mxu0 %v882
        %5301 = vmatpush.xpose.msra.mxu0 %v498
        %5302 = vmatmul.f32.gmra.mxu0 %v1405
        %v5303 = vpop.f32.mrf.mxu0
        %v5304 = vadd.f32 %v5284, %v5303
        %5305 = vdwg.mxu0
        %5306 = vmatpush.xpose.msra.mxu0 0.0
        %5307 = vmatpush.xpose.msra.mxu0 0.0
        %5308 = vmatpush.xpose.msra.mxu0 0.0
        %5309 = vmatpush.xpose.msra.mxu0 0.0
        %5310 = vmatpush.xpose.msra.mxu0 0.0
        %5311 = vmatpush.xpose.msra.mxu0 0.0
        %5312 = vmatpush.xpose.msra.mxu0 0.0
        %5313 = vmatpush.xpose.msra.mxu0 0.0
        %5314 = vmatpush.xpose.msra.mxu0 0.0
        %5315 = vmatpush.xpose.msra.mxu0 0.0
        %5316 = vmatpush.xpose.msra.mxu0 0.0
        %5317 = vmatpush.xpose.msra.mxu0 0.0
        %5318 = vmatpush.xpose.msra.mxu0 0.0
        %5319 = vmatpush.xpose.msra.mxu0 0.0
        %5320 = vmatpush.xpose.msra.mxu0 %v883
        %5321 = vmatpush.xpose.msra.mxu0 %v499
        %5322 = vmatmul.f32.gmra.mxu0 %v1406
        %v5323 = vpop.f32.mrf.mxu0
        %v5324 = vadd.f32 %v5304, %v5323
        %5325 = vdwg.mxu0
        %5326 = vmatpush.xpose.msra.mxu0 0.0
        %5327 = vmatpush.xpose.msra.mxu0 0.0
        %5328 = vmatpush.xpose.msra.mxu0 0.0
        %5329 = vmatpush.xpose.msra.mxu0 0.0
        %5330 = vmatpush.xpose.msra.mxu0 0.0
        %5331 = vmatpush.xpose.msra.mxu0 0.0
        %5332 = vmatpush.xpose.msra.mxu0 0.0
        %5333 = vmatpush.xpose.msra.mxu0 0.0
        %5334 = vmatpush.xpose.msra.mxu0 0.0
        %5335 = vmatpush.xpose.msra.mxu0 0.0
        %5336 = vmatpush.xpose.msra.mxu0 0.0
        %5337 = vmatpush.xpose.msra.mxu0 0.0
        %5338 = vmatpush.xpose.msra.mxu0 0.0
        %5339 = vmatpush.xpose.msra.mxu0 0.0
        %5340 = vmatpush.xpose.msra.mxu0 %v884
        %5341 = vmatpush.xpose.msra.mxu0 %v500
        %5342 = vmatmul.f32.gmra.mxu0 %v1407
        %v5343 = vpop.f32.mrf.mxu0
        %v5344 = vadd.f32 %v5324, %v5343
        %5345 = vdwg.mxu0
        %5346 = vmatpush.xpose.msra.mxu0 0.0
        %5347 = vmatpush.xpose.msra.mxu0 0.0
        %5348 = vmatpush.xpose.msra.mxu0 0.0
        %5349 = vmatpush.xpose.msra.mxu0 0.0
        %5350 = vmatpush.xpose.msra.mxu0 0.0
        %5351 = vmatpush.xpose.msra.mxu0 0.0
        %5352 = vmatpush.xpose.msra.mxu0 0.0
        %5353 = vmatpush.xpose.msra.mxu0 0.0
        %5354 = vmatpush.xpose.msra.mxu0 0.0
        %5355 = vmatpush.xpose.msra.mxu0 0.0
        %5356 = vmatpush.xpose.msra.mxu0 0.0
        %5357 = vmatpush.xpose.msra.mxu0 0.0
        %5358 = vmatpush.xpose.msra.mxu0 0.0
        %5359 = vmatpush.xpose.msra.mxu0 0.0
        %5360 = vmatpush.xpose.msra.mxu0 %v885
        %5361 = vmatpush.xpose.msra.mxu0 %v501
        %5362 = vmatmul.f32.gmra.mxu0 %v1408
        %v5363 = vpop.f32.mrf.mxu0
        %v5364 = vadd.f32 %v5344, %v5363
        %5365 = vdwg.mxu0
        %5366 = vmatpush.xpose.msra.mxu0 0.0
        %5367 = vmatpush.xpose.msra.mxu0 0.0
        %5368 = vmatpush.xpose.msra.mxu0 0.0
        %5369 = vmatpush.xpose.msra.mxu0 0.0
        %5370 = vmatpush.xpose.msra.mxu0 0.0
        %5371 = vmatpush.xpose.msra.mxu0 0.0
        %5372 = vmatpush.xpose.msra.mxu0 0.0
        %5373 = vmatpush.xpose.msra.mxu0 0.0
        %5374 = vmatpush.xpose.msra.mxu0 0.0
        %5375 = vmatpush.xpose.msra.mxu0 0.0
        %5376 = vmatpush.xpose.msra.mxu0 0.0
        %5377 = vmatpush.xpose.msra.mxu0 0.0
        %5378 = vmatpush.xpose.msra.mxu0 0.0
        %5379 = vmatpush.xpose.msra.mxu0 0.0
        %5380 = vmatpush.xpose.msra.mxu0 %v886
        %5381 = vmatpush.xpose.msra.mxu0 %v502
        %5382 = vmatmul.f32.gmra.mxu0 %v1409
        %v5383 = vpop.f32.mrf.mxu0
        %v5384 = vadd.f32 %v5364, %v5383
        %5385 = vdwg.mxu0
        %5386 = vmatpush.xpose.msra.mxu0 0.0
        %5387 = vmatpush.xpose.msra.mxu0 0.0
        %5388 = vmatpush.xpose.msra.mxu0 0.0
        %5389 = vmatpush.xpose.msra.mxu0 0.0
        %5390 = vmatpush.xpose.msra.mxu0 0.0
        %5391 = vmatpush.xpose.msra.mxu0 0.0
        %5392 = vmatpush.xpose.msra.mxu0 0.0
        %5393 = vmatpush.xpose.msra.mxu0 0.0
        %5394 = vmatpush.xpose.msra.mxu0 0.0
        %5395 = vmatpush.xpose.msra.mxu0 0.0
        %5396 = vmatpush.xpose.msra.mxu0 0.0
        %5397 = vmatpush.xpose.msra.mxu0 0.0
        %5398 = vmatpush.xpose.msra.mxu0 0.0
        %5399 = vmatpush.xpose.msra.mxu0 0.0
        %5400 = vmatpush.xpose.msra.mxu0 %v887
        %5401 = vmatpush.xpose.msra.mxu0 %v503
        %5402 = vmatmul.f32.gmra.mxu0 %v1410
        %v5403 = vpop.f32.mrf.mxu0
        %v5404 = vadd.f32 %v5384, %v5403
        %5405 = vdwg.mxu0
        %5406 = vmatpush.xpose.msra.mxu0 0.0
        %5407 = vmatpush.xpose.msra.mxu0 0.0
        %5408 = vmatpush.xpose.msra.mxu0 0.0
        %5409 = vmatpush.xpose.msra.mxu0 0.0
        %5410 = vmatpush.xpose.msra.mxu0 0.0
        %5411 = vmatpush.xpose.msra.mxu0 0.0
        %5412 = vmatpush.xpose.msra.mxu0 0.0
        %5413 = vmatpush.xpose.msra.mxu0 0.0
        %5414 = vmatpush.xpose.msra.mxu0 0.0
        %5415 = vmatpush.xpose.msra.mxu0 0.0
        %5416 = vmatpush.xpose.msra.mxu0 0.0
        %5417 = vmatpush.xpose.msra.mxu0 0.0
        %5418 = vmatpush.xpose.msra.mxu0 0.0
        %5419 = vmatpush.xpose.msra.mxu0 0.0
        %5420 = vmatpush.xpose.msra.mxu0 %v888
        %5421 = vmatpush.xpose.msra.mxu0 %v504
        %5422 = vmatmul.f32.gmra.mxu0 %v1411
        %v5423 = vpop.f32.mrf.mxu0
        %v5424 = vadd.f32 %v5404, %v5423
        %5425 = vdwg.mxu0
        %5426 = vmatpush.xpose.msra.mxu0 0.0
        %5427 = vmatpush.xpose.msra.mxu0 0.0
        %5428 = vmatpush.xpose.msra.mxu0 0.0
        %5429 = vmatpush.xpose.msra.mxu0 0.0
        %5430 = vmatpush.xpose.msra.mxu0 0.0
        %5431 = vmatpush.xpose.msra.mxu0 0.0
        %5432 = vmatpush.xpose.msra.mxu0 0.0
        %5433 = vmatpush.xpose.msra.mxu0 0.0
        %5434 = vmatpush.xpose.msra.mxu0 0.0
        %5435 = vmatpush.xpose.msra.mxu0 0.0
        %5436 = vmatpush.xpose.msra.mxu0 0.0
        %5437 = vmatpush.xpose.msra.mxu0 0.0
        %5438 = vmatpush.xpose.msra.mxu0 0.0
        %5439 = vmatpush.xpose.msra.mxu0 0.0
        %5440 = vmatpush.xpose.msra.mxu0 %v889
        %5441 = vmatpush.xpose.msra.mxu0 %v505
        %5442 = vmatmul.f32.gmra.mxu0 %v1414
        %v5443 = vpop.f32.mrf.mxu0
        %v5444 = vadd.f32 %v5424, %v5443
        %5445 = vdwg.mxu0
        %5446 = vmatpush.xpose.msra.mxu0 0.0
        %5447 = vmatpush.xpose.msra.mxu0 0.0
        %5448 = vmatpush.xpose.msra.mxu0 0.0
        %5449 = vmatpush.xpose.msra.mxu0 0.0
        %5450 = vmatpush.xpose.msra.mxu0 0.0
        %5451 = vmatpush.xpose.msra.mxu0 0.0
        %5452 = vmatpush.xpose.msra.mxu0 0.0
        %5453 = vmatpush.xpose.msra.mxu0 0.0
        %5454 = vmatpush.xpose.msra.mxu0 0.0
        %5455 = vmatpush.xpose.msra.mxu0 0.0
        %5456 = vmatpush.xpose.msra.mxu0 0.0
        %5457 = vmatpush.xpose.msra.mxu0 0.0
        %5458 = vmatpush.xpose.msra.mxu0 0.0
        %5459 = vmatpush.xpose.msra.mxu0 0.0
        %5460 = vmatpush.xpose.msra.mxu0 %v890
        %5461 = vmatpush.xpose.msra.mxu0 %v506
        %5462 = vmatmul.f32.gmra.mxu0 %v1415
        %v5463 = vpop.f32.mrf.mxu0
        %v5464 = vadd.f32 %v5444, %v5463
        %5465 = vdwg.mxu0
        %5466 = vmatpush.xpose.msra.mxu0 0.0
        %5467 = vmatpush.xpose.msra.mxu0 0.0
        %5468 = vmatpush.xpose.msra.mxu0 0.0
        %5469 = vmatpush.xpose.msra.mxu0 0.0
        %5470 = vmatpush.xpose.msra.mxu0 0.0
        %5471 = vmatpush.xpose.msra.mxu0 0.0
        %5472 = vmatpush.xpose.msra.mxu0 0.0
        %5473 = vmatpush.xpose.msra.mxu0 0.0
        %5474 = vmatpush.xpose.msra.mxu0 0.0
        %5475 = vmatpush.xpose.msra.mxu0 0.0
        %5476 = vmatpush.xpose.msra.mxu0 0.0
        %5477 = vmatpush.xpose.msra.mxu0 0.0
        %5478 = vmatpush.xpose.msra.mxu0 0.0
        %5479 = vmatpush.xpose.msra.mxu0 0.0
        %5480 = vmatpush.xpose.msra.mxu0 %v891
        %5481 = vmatpush.xpose.msra.mxu0 %v507
        %5482 = vmatmul.f32.gmra.mxu0 %v1416
        %v5483 = vpop.f32.mrf.mxu0
        %v5484 = vadd.f32 %v5464, %v5483
        %5485 = vdwg.mxu0
        %5486 = vmatpush.xpose.msra.mxu0 0.0
        %5487 = vmatpush.xpose.msra.mxu0 0.0
        %5488 = vmatpush.xpose.msra.mxu0 0.0
        %5489 = vmatpush.xpose.msra.mxu0 0.0
        %5490 = vmatpush.xpose.msra.mxu0 0.0
        %5491 = vmatpush.xpose.msra.mxu0 0.0
        %5492 = vmatpush.xpose.msra.mxu0 0.0
        %5493 = vmatpush.xpose.msra.mxu0 0.0
        %5494 = vmatpush.xpose.msra.mxu0 0.0
        %5495 = vmatpush.xpose.msra.mxu0 0.0
        %5496 = vmatpush.xpose.msra.mxu0 0.0
        %5497 = vmatpush.xpose.msra.mxu0 0.0
        %5498 = vmatpush.xpose.msra.mxu0 0.0
        %5499 = vmatpush.xpose.msra.mxu0 0.0
        %5500 = vmatpush.xpose.msra.mxu0 %v892
        %5501 = vmatpush.xpose.msra.mxu0 %v508
        %5502 = vmatmul.f32.gmra.mxu0 %v1417
        %v5503 = vpop.f32.mrf.mxu0
        %v5504 = vadd.f32 %v5484, %v5503
        %5505 = vdwg.mxu0
        %5506 = vmatpush.xpose.msra.mxu0 0.0
        %5507 = vmatpush.xpose.msra.mxu0 0.0
        %5508 = vmatpush.xpose.msra.mxu0 0.0
        %5509 = vmatpush.xpose.msra.mxu0 0.0
        %5510 = vmatpush.xpose.msra.mxu0 0.0
        %5511 = vmatpush.xpose.msra.mxu0 0.0
        %5512 = vmatpush.xpose.msra.mxu0 0.0
        %5513 = vmatpush.xpose.msra.mxu0 0.0
        %5514 = vmatpush.xpose.msra.mxu0 0.0
        %5515 = vmatpush.xpose.msra.mxu0 0.0
        %5516 = vmatpush.xpose.msra.mxu0 0.0
        %5517 = vmatpush.xpose.msra.mxu0 0.0
        %5518 = vmatpush.xpose.msra.mxu0 0.0
        %5519 = vmatpush.xpose.msra.mxu0 0.0
        %5520 = vmatpush.xpose.msra.mxu0 %v893
        %5521 = vmatpush.xpose.msra.mxu0 %v509
        %5522 = vmatmul.f32.gmra.mxu0 %v1418
        %v5523 = vpop.f32.mrf.mxu0
        %v5524 = vadd.f32 %v5504, %v5523
        %5525 = vdwg.mxu0
        %5526 = vmatpush.xpose.msra.mxu0 0.0
        %5527 = vmatpush.xpose.msra.mxu0 0.0
        %5528 = vmatpush.xpose.msra.mxu0 0.0
        %5529 = vmatpush.xpose.msra.mxu0 0.0
        %5530 = vmatpush.xpose.msra.mxu0 0.0
        %5531 = vmatpush.xpose.msra.mxu0 0.0
        %5532 = vmatpush.xpose.msra.mxu0 0.0
        %5533 = vmatpush.xpose.msra.mxu0 0.0
        %5534 = vmatpush.xpose.msra.mxu0 0.0
        %5535 = vmatpush.xpose.msra.mxu0 0.0
        %5536 = vmatpush.xpose.msra.mxu0 0.0
        %5537 = vmatpush.xpose.msra.mxu0 0.0
        %5538 = vmatpush.xpose.msra.mxu0 0.0
        %5539 = vmatpush.xpose.msra.mxu0 0.0
        %5540 = vmatpush.xpose.msra.mxu0 %v894
        %5541 = vmatpush.xpose.msra.mxu0 %v510
        %5542 = vmatmul.f32.gmra.mxu0 %v1419
        %v5543 = vpop.f32.mrf.mxu0
        %v5544 = vadd.f32 %v5524, %v5543
        %5545 = vdwg.mxu0
        %5546 = vmatpush.xpose.msra.mxu0 0.0
        %5547 = vmatpush.xpose.msra.mxu0 0.0
        %5548 = vmatpush.xpose.msra.mxu0 0.0
        %5549 = vmatpush.xpose.msra.mxu0 0.0
        %5550 = vmatpush.xpose.msra.mxu0 0.0
        %5551 = vmatpush.xpose.msra.mxu0 0.0
        %5552 = vmatpush.xpose.msra.mxu0 0.0
        %5553 = vmatpush.xpose.msra.mxu0 0.0
        %5554 = vmatpush.xpose.msra.mxu0 0.0
        %5555 = vmatpush.xpose.msra.mxu0 0.0
        %5556 = vmatpush.xpose.msra.mxu0 0.0
        %5557 = vmatpush.xpose.msra.mxu0 0.0
        %5558 = vmatpush.xpose.msra.mxu0 0.0
        %5559 = vmatpush.xpose.msra.mxu0 0.0
        %5560 = vmatpush.xpose.msra.mxu0 %v895
        %5561 = vmatpush.xpose.msra.mxu0 %v511
        %5562 = vmatmul.f32.gmra.mxu0 %v1420
        %v5563 = vpop.f32.mrf.mxu0
        %v5564 = vadd.f32 %v5544, %v5563
        %5565 = vdwg.mxu0
        %5566 = vmatpush.xpose.msra.mxu0 0.0
        %5567 = vmatpush.xpose.msra.mxu0 0.0
        %5568 = vmatpush.xpose.msra.mxu0 0.0
        %5569 = vmatpush.xpose.msra.mxu0 0.0
        %5570 = vmatpush.xpose.msra.mxu0 0.0
        %5571 = vmatpush.xpose.msra.mxu0 0.0
        %5572 = vmatpush.xpose.msra.mxu0 0.0
        %5573 = vmatpush.xpose.msra.mxu0 0.0
        %5574 = vmatpush.xpose.msra.mxu0 0.0
        %5575 = vmatpush.xpose.msra.mxu0 0.0
        %5576 = vmatpush.xpose.msra.mxu0 0.0
        %5577 = vmatpush.xpose.msra.mxu0 0.0
        %5578 = vmatpush.xpose.msra.mxu0 0.0
        %5579 = vmatpush.xpose.msra.mxu0 0.0
        %5580 = vmatpush.xpose.msra.mxu0 %v896
        %5581 = vmatpush.xpose.msra.mxu0 %v512
        %5582 = vmatmul.f32.gmra.mxu0 %v1421
        %v5583 = vpop.f32.mrf.mxu0
        %v5584 = vadd.f32 %v5564, %v5583
        %5585 = vdwg.mxu0
        %5586 = vmatpush.xpose.msra.mxu0 0.0
        %5587 = vmatpush.xpose.msra.mxu0 0.0
        %5588 = vmatpush.xpose.msra.mxu0 0.0
        %5589 = vmatpush.xpose.msra.mxu0 0.0
        %5590 = vmatpush.xpose.msra.mxu0 0.0
        %5591 = vmatpush.xpose.msra.mxu0 0.0
        %5592 = vmatpush.xpose.msra.mxu0 0.0
        %5593 = vmatpush.xpose.msra.mxu0 0.0
        %5594 = vmatpush.xpose.msra.mxu0 0.0
        %5595 = vmatpush.xpose.msra.mxu0 0.0
        %5596 = vmatpush.xpose.msra.mxu0 0.0
        %5597 = vmatpush.xpose.msra.mxu0 0.0
        %5598 = vmatpush.xpose.msra.mxu0 0.0
        %5599 = vmatpush.xpose.msra.mxu0 0.0
        %5600 = vmatpush.xpose.msra.mxu0 %v897
        %5601 = vmatpush.xpose.msra.mxu0 %v513
        %5602 = vmatmul.f32.gmra.mxu0 %v1424
        %v5603 = vpop.f32.mrf.mxu0
        %v5604 = vadd.f32 %v5584, %v5603
        %5605 = vdwg.mxu0
        %5606 = vmatpush.xpose.msra.mxu0 0.0
        %5607 = vmatpush.xpose.msra.mxu0 0.0
        %5608 = vmatpush.xpose.msra.mxu0 0.0
        %5609 = vmatpush.xpose.msra.mxu0 0.0
        %5610 = vmatpush.xpose.msra.mxu0 0.0
        %5611 = vmatpush.xpose.msra.mxu0 0.0
        %5612 = vmatpush.xpose.msra.mxu0 0.0
        %5613 = vmatpush.xpose.msra.mxu0 0.0
        %5614 = vmatpush.xpose.msra.mxu0 0.0
        %5615 = vmatpush.xpose.msra.mxu0 0.0
        %5616 = vmatpush.xpose.msra.mxu0 0.0
        %5617 = vmatpush.xpose.msra.mxu0 0.0
        %5618 = vmatpush.xpose.msra.mxu0 0.0
        %5619 = vmatpush.xpose.msra.mxu0 0.0
        %5620 = vmatpush.xpose.msra.mxu0 %v898
        %5621 = vmatpush.xpose.msra.mxu0 %v514
        %5622 = vmatmul.f32.gmra.mxu0 %v1425
        %v5623 = vpop.f32.mrf.mxu0
        %v5624 = vadd.f32 %v5604, %v5623
        %5625 = vdwg.mxu0
        %5626 = vmatpush.xpose.msra.mxu0 0.0
        %5627 = vmatpush.xpose.msra.mxu0 0.0
        %5628 = vmatpush.xpose.msra.mxu0 0.0
        %5629 = vmatpush.xpose.msra.mxu0 0.0
        %5630 = vmatpush.xpose.msra.mxu0 0.0
        %5631 = vmatpush.xpose.msra.mxu0 0.0
        %5632 = vmatpush.xpose.msra.mxu0 0.0
        %5633 = vmatpush.xpose.msra.mxu0 0.0
        %5634 = vmatpush.xpose.msra.mxu0 0.0
        %5635 = vmatpush.xpose.msra.mxu0 0.0
        %5636 = vmatpush.xpose.msra.mxu0 0.0
        %5637 = vmatpush.xpose.msra.mxu0 0.0
        %5638 = vmatpush.xpose.msra.mxu0 0.0
        %5639 = vmatpush.xpose.msra.mxu0 0.0
        %5640 = vmatpush.xpose.msra.mxu0 %v899
        %5641 = vmatpush.xpose.msra.mxu0 %v515
        %5642 = vmatmul.f32.gmra.mxu0 %v1426
        %v5643 = vpop.f32.mrf.mxu0
        %v5644 = vadd.f32 %v5624, %v5643
        %5645 = vdwg.mxu0
        %5646 = vmatpush.xpose.msra.mxu0 0.0
        %5647 = vmatpush.xpose.msra.mxu0 0.0
        %5648 = vmatpush.xpose.msra.mxu0 0.0
        %5649 = vmatpush.xpose.msra.mxu0 0.0
        %5650 = vmatpush.xpose.msra.mxu0 0.0
        %5651 = vmatpush.xpose.msra.mxu0 0.0
        %5652 = vmatpush.xpose.msra.mxu0 0.0
        %5653 = vmatpush.xpose.msra.mxu0 0.0
        %5654 = vmatpush.xpose.msra.mxu0 0.0
        %5655 = vmatpush.xpose.msra.mxu0 0.0
        %5656 = vmatpush.xpose.msra.mxu0 0.0
        %5657 = vmatpush.xpose.msra.mxu0 0.0
        %5658 = vmatpush.xpose.msra.mxu0 0.0
        %5659 = vmatpush.xpose.msra.mxu0 0.0
        %5660 = vmatpush.xpose.msra.mxu0 %v900
        %5661 = vmatpush.xpose.msra.mxu0 %v516
        %5662 = vmatmul.f32.gmra.mxu0 %v1427
        %v5663 = vpop.f32.mrf.mxu0
        %v5664 = vadd.f32 %v5644, %v5663
        %5665 = vdwg.mxu0
        %5666 = vmatpush.xpose.msra.mxu0 0.0
        %5667 = vmatpush.xpose.msra.mxu0 0.0
        %5668 = vmatpush.xpose.msra.mxu0 0.0
        %5669 = vmatpush.xpose.msra.mxu0 0.0
        %5670 = vmatpush.xpose.msra.mxu0 0.0
        %5671 = vmatpush.xpose.msra.mxu0 0.0
        %5672 = vmatpush.xpose.msra.mxu0 0.0
        %5673 = vmatpush.xpose.msra.mxu0 0.0
        %5674 = vmatpush.xpose.msra.mxu0 0.0
        %5675 = vmatpush.xpose.msra.mxu0 0.0
        %5676 = vmatpush.xpose.msra.mxu0 0.0
        %5677 = vmatpush.xpose.msra.mxu0 0.0
        %5678 = vmatpush.xpose.msra.mxu0 0.0
        %5679 = vmatpush.xpose.msra.mxu0 0.0
        %5680 = vmatpush.xpose.msra.mxu0 %v901
        %5681 = vmatpush.xpose.msra.mxu0 %v517
        %5682 = vmatmul.f32.gmra.mxu0 %v1428
        %v5683 = vpop.f32.mrf.mxu0
        %v5684 = vadd.f32 %v5664, %v5683
        %5685 = vdwg.mxu0
        %5686 = vmatpush.xpose.msra.mxu0 0.0
        %5687 = vmatpush.xpose.msra.mxu0 0.0
        %5688 = vmatpush.xpose.msra.mxu0 0.0
        %5689 = vmatpush.xpose.msra.mxu0 0.0
        %5690 = vmatpush.xpose.msra.mxu0 0.0
        %5691 = vmatpush.xpose.msra.mxu0 0.0
        %5692 = vmatpush.xpose.msra.mxu0 0.0
        %5693 = vmatpush.xpose.msra.mxu0 0.0
        %5694 = vmatpush.xpose.msra.mxu0 0.0
        %5695 = vmatpush.xpose.msra.mxu0 0.0
        %5696 = vmatpush.xpose.msra.mxu0 0.0
        %5697 = vmatpush.xpose.msra.mxu0 0.0
        %5698 = vmatpush.xpose.msra.mxu0 0.0
        %5699 = vmatpush.xpose.msra.mxu0 0.0
        %5700 = vmatpush.xpose.msra.mxu0 %v902
        %5701 = vmatpush.xpose.msra.mxu0 %v518
        %5702 = vmatmul.f32.gmra.mxu0 %v1429
        %v5703 = vpop.f32.mrf.mxu0
        %v5704 = vadd.f32 %v5684, %v5703
        %5705 = vdwg.mxu0
        %5706 = vmatpush.xpose.msra.mxu0 0.0
        %5707 = vmatpush.xpose.msra.mxu0 0.0
        %5708 = vmatpush.xpose.msra.mxu0 0.0
        %5709 = vmatpush.xpose.msra.mxu0 0.0
        %5710 = vmatpush.xpose.msra.mxu0 0.0
        %5711 = vmatpush.xpose.msra.mxu0 0.0
        %5712 = vmatpush.xpose.msra.mxu0 0.0
        %5713 = vmatpush.xpose.msra.mxu0 0.0
        %5714 = vmatpush.xpose.msra.mxu0 0.0
        %5715 = vmatpush.xpose.msra.mxu0 0.0
        %5716 = vmatpush.xpose.msra.mxu0 0.0
        %5717 = vmatpush.xpose.msra.mxu0 0.0
        %5718 = vmatpush.xpose.msra.mxu0 0.0
        %5719 = vmatpush.xpose.msra.mxu0 0.0
        %5720 = vmatpush.xpose.msra.mxu0 %v903
        %5721 = vmatpush.xpose.msra.mxu0 %v519
        %5722 = vmatmul.f32.gmra.mxu0 %v1430
        %v5723 = vpop.f32.mrf.mxu0
        %v5724 = vadd.f32 %v5704, %v5723
        %5725 = vdwg.mxu0
        %5726 = vmatpush.xpose.msra.mxu0 0.0
        %5727 = vmatpush.xpose.msra.mxu0 0.0
        %5728 = vmatpush.xpose.msra.mxu0 0.0
        %5729 = vmatpush.xpose.msra.mxu0 0.0
        %5730 = vmatpush.xpose.msra.mxu0 0.0
        %5731 = vmatpush.xpose.msra.mxu0 0.0
        %5732 = vmatpush.xpose.msra.mxu0 0.0
        %5733 = vmatpush.xpose.msra.mxu0 0.0
        %5734 = vmatpush.xpose.msra.mxu0 0.0
        %5735 = vmatpush.xpose.msra.mxu0 0.0
        %5736 = vmatpush.xpose.msra.mxu0 0.0
        %5737 = vmatpush.xpose.msra.mxu0 0.0
        %5738 = vmatpush.xpose.msra.mxu0 0.0
        %5739 = vmatpush.xpose.msra.mxu0 0.0
        %5740 = vmatpush.xpose.msra.mxu0 %v904
        %5741 = vmatpush.xpose.msra.mxu0 %v520
        %5742 = vmatmul.f32.gmra.mxu0 %v1431
        %v5743 = vpop.f32.mrf.mxu0
        %v5744 = vadd.f32 %v5724, %v5743
        %5745 = vdwg.mxu0
        %5746 = vmatpush.xpose.msra.mxu0 0.0
        %5747 = vmatpush.xpose.msra.mxu0 0.0
        %5748 = vmatpush.xpose.msra.mxu0 0.0
        %5749 = vmatpush.xpose.msra.mxu0 0.0
        %5750 = vmatpush.xpose.msra.mxu0 0.0
        %5751 = vmatpush.xpose.msra.mxu0 0.0
        %5752 = vmatpush.xpose.msra.mxu0 0.0
        %5753 = vmatpush.xpose.msra.mxu0 0.0
        %5754 = vmatpush.xpose.msra.mxu0 0.0
        %5755 = vmatpush.xpose.msra.mxu0 0.0
        %5756 = vmatpush.xpose.msra.mxu0 0.0
        %5757 = vmatpush.xpose.msra.mxu0 0.0
        %5758 = vmatpush.xpose.msra.mxu0 0.0
        %5759 = vmatpush.xpose.msra.mxu0 0.0
        %5760 = vmatpush.xpose.msra.mxu0 %v905
        %5761 = vmatpush.xpose.msra.mxu0 %v521
        %5762 = vmatmul.f32.gmra.mxu0 %v1434
        %v5763 = vpop.f32.mrf.mxu0
        %v5764 = vadd.f32 %v5744, %v5763
        %5765 = vdwg.mxu0
        %5766 = vmatpush.xpose.msra.mxu0 0.0
        %5767 = vmatpush.xpose.msra.mxu0 0.0
        %5768 = vmatpush.xpose.msra.mxu0 0.0
        %5769 = vmatpush.xpose.msra.mxu0 0.0
        %5770 = vmatpush.xpose.msra.mxu0 0.0
        %5771 = vmatpush.xpose.msra.mxu0 0.0
        %5772 = vmatpush.xpose.msra.mxu0 0.0
        %5773 = vmatpush.xpose.msra.mxu0 0.0
        %5774 = vmatpush.xpose.msra.mxu0 0.0
        %5775 = vmatpush.xpose.msra.mxu0 0.0
        %5776 = vmatpush.xpose.msra.mxu0 0.0
        %5777 = vmatpush.xpose.msra.mxu0 0.0
        %5778 = vmatpush.xpose.msra.mxu0 0.0
        %5779 = vmatpush.xpose.msra.mxu0 0.0
        %5780 = vmatpush.xpose.msra.mxu0 %v906
        %5781 = vmatpush.xpose.msra.mxu0 %v522
        %5782 = vmatmul.f32.gmra.mxu0 %v1435
        %v5783 = vpop.f32.mrf.mxu0
        %v5784 = vadd.f32 %v5764, %v5783
        %5785 = vdwg.mxu0
        %5786 = vmatpush.xpose.msra.mxu0 0.0
        %5787 = vmatpush.xpose.msra.mxu0 0.0
        %5788 = vmatpush.xpose.msra.mxu0 0.0
        %5789 = vmatpush.xpose.msra.mxu0 0.0
        %5790 = vmatpush.xpose.msra.mxu0 0.0
        %5791 = vmatpush.xpose.msra.mxu0 0.0
        %5792 = vmatpush.xpose.msra.mxu0 0.0
        %5793 = vmatpush.xpose.msra.mxu0 0.0
        %5794 = vmatpush.xpose.msra.mxu0 0.0
        %5795 = vmatpush.xpose.msra.mxu0 0.0
        %5796 = vmatpush.xpose.msra.mxu0 0.0
        %5797 = vmatpush.xpose.msra.mxu0 0.0
        %5798 = vmatpush.xpose.msra.mxu0 0.0
        %5799 = vmatpush.xpose.msra.mxu0 0.0
        %5800 = vmatpush.xpose.msra.mxu0 %v907
        %5801 = vmatpush.xpose.msra.mxu0 %v523
        %5802 = vmatmul.f32.gmra.mxu0 %v1436
        %v5803 = vpop.f32.mrf.mxu0
        %v5804 = vadd.f32 %v5784, %v5803
        %5805 = vdwg.mxu0
        %5806 = vmatpush.xpose.msra.mxu0 0.0
        %5807 = vmatpush.xpose.msra.mxu0 0.0
        %5808 = vmatpush.xpose.msra.mxu0 0.0
        %5809 = vmatpush.xpose.msra.mxu0 0.0
        %5810 = vmatpush.xpose.msra.mxu0 0.0
        %5811 = vmatpush.xpose.msra.mxu0 0.0
        %5812 = vmatpush.xpose.msra.mxu0 0.0
        %5813 = vmatpush.xpose.msra.mxu0 0.0
        %5814 = vmatpush.xpose.msra.mxu0 0.0
        %5815 = vmatpush.xpose.msra.mxu0 0.0
        %5816 = vmatpush.xpose.msra.mxu0 0.0
        %5817 = vmatpush.xpose.msra.mxu0 0.0
        %5818 = vmatpush.xpose.msra.mxu0 0.0
        %5819 = vmatpush.xpose.msra.mxu0 0.0
        %5820 = vmatpush.xpose.msra.mxu0 %v908
        %5821 = vmatpush.xpose.msra.mxu0 %v524
        %5822 = vmatmul.f32.gmra.mxu0 %v1437
        %v5823 = vpop.f32.mrf.mxu0
        %v5824 = vadd.f32 %v5804, %v5823
        %5825 = vdwg.mxu0
        %5826 = vmatpush.xpose.msra.mxu0 0.0
        %5827 = vmatpush.xpose.msra.mxu0 0.0
        %5828 = vmatpush.xpose.msra.mxu0 0.0
        %5829 = vmatpush.xpose.msra.mxu0 0.0
        %5830 = vmatpush.xpose.msra.mxu0 0.0
        %5831 = vmatpush.xpose.msra.mxu0 0.0
        %5832 = vmatpush.xpose.msra.mxu0 0.0
        %5833 = vmatpush.xpose.msra.mxu0 0.0
        %5834 = vmatpush.xpose.msra.mxu0 0.0
        %5835 = vmatpush.xpose.msra.mxu0 0.0
        %5836 = vmatpush.xpose.msra.mxu0 0.0
        %5837 = vmatpush.xpose.msra.mxu0 0.0
        %5838 = vmatpush.xpose.msra.mxu0 0.0
        %5839 = vmatpush.xpose.msra.mxu0 0.0
        %5840 = vmatpush.xpose.msra.mxu0 %v909
        %5841 = vmatpush.xpose.msra.mxu0 %v525
        %5842 = vmatmul.f32.gmra.mxu0 %v1438
        %v5843 = vpop.f32.mrf.mxu0
        %v5844 = vadd.f32 %v5824, %v5843
        %5845 = vdwg.mxu0
        %5846 = vmatpush.xpose.msra.mxu0 0.0
        %5847 = vmatpush.xpose.msra.mxu0 0.0
        %5848 = vmatpush.xpose.msra.mxu0 0.0
        %5849 = vmatpush.xpose.msra.mxu0 0.0
        %5850 = vmatpush.xpose.msra.mxu0 0.0
        %5851 = vmatpush.xpose.msra.mxu0 0.0
        %5852 = vmatpush.xpose.msra.mxu0 0.0
        %5853 = vmatpush.xpose.msra.mxu0 0.0
        %5854 = vmatpush.xpose.msra.mxu0 0.0
        %5855 = vmatpush.xpose.msra.mxu0 0.0
        %5856 = vmatpush.xpose.msra.mxu0 0.0
        %5857 = vmatpush.xpose.msra.mxu0 0.0
        %5858 = vmatpush.xpose.msra.mxu0 0.0
        %5859 = vmatpush.xpose.msra.mxu0 0.0
        %5860 = vmatpush.xpose.msra.mxu0 %v910
        %5861 = vmatpush.xpose.msra.mxu0 %v526
        %5862 = vmatmul.f32.gmra.mxu0 %v1439
        %v5863 = vpop.f32.mrf.mxu0
        %v5864 = vadd.f32 %v5844, %v5863
        %5865 = vdwg.mxu0
        %5866 = vmatpush.xpose.msra.mxu0 0.0
        %5867 = vmatpush.xpose.msra.mxu0 0.0
        %5868 = vmatpush.xpose.msra.mxu0 0.0
        %5869 = vmatpush.xpose.msra.mxu0 0.0
        %5870 = vmatpush.xpose.msra.mxu0 0.0
        %5871 = vmatpush.xpose.msra.mxu0 0.0
        %5872 = vmatpush.xpose.msra.mxu0 0.0
        %5873 = vmatpush.xpose.msra.mxu0 0.0
        %5874 = vmatpush.xpose.msra.mxu0 0.0
        %5875 = vmatpush.xpose.msra.mxu0 0.0
        %5876 = vmatpush.xpose.msra.mxu0 0.0
        %5877 = vmatpush.xpose.msra.mxu0 0.0
        %5878 = vmatpush.xpose.msra.mxu0 0.0
        %5879 = vmatpush.xpose.msra.mxu0 0.0
        %5880 = vmatpush.xpose.msra.mxu0 %v911
        %5881 = vmatpush.xpose.msra.mxu0 %v527
        %5882 = vmatmul.f32.gmra.mxu0 %v1440
        %v5883 = vpop.f32.mrf.mxu0
        %v5884 = vadd.f32 %v5864, %v5883
        %5885 = vdwg.mxu0
        %5886 = vmatpush.xpose.msra.mxu0 0.0
        %5887 = vmatpush.xpose.msra.mxu0 0.0
        %5888 = vmatpush.xpose.msra.mxu0 0.0
        %5889 = vmatpush.xpose.msra.mxu0 0.0
        %5890 = vmatpush.xpose.msra.mxu0 0.0
        %5891 = vmatpush.xpose.msra.mxu0 0.0
        %5892 = vmatpush.xpose.msra.mxu0 0.0
        %5893 = vmatpush.xpose.msra.mxu0 0.0
        %5894 = vmatpush.xpose.msra.mxu0 0.0
        %5895 = vmatpush.xpose.msra.mxu0 0.0
        %5896 = vmatpush.xpose.msra.mxu0 0.0
        %5897 = vmatpush.xpose.msra.mxu0 0.0
        %5898 = vmatpush.xpose.msra.mxu0 0.0
        %5899 = vmatpush.xpose.msra.mxu0 0.0
        %5900 = vmatpush.xpose.msra.mxu0 %v912
        %5901 = vmatpush.xpose.msra.mxu0 %v528
        %5902 = vmatmul.f32.gmra.mxu0 %v1441
        %v5903 = vpop.f32.mrf.mxu0
        %v5904 = vadd.f32 %v5884, %v5903
        %5905 = vdwg.mxu0
        %5906 = vmatpush.xpose.msra.mxu0 0.0
        %5907 = vmatpush.xpose.msra.mxu0 0.0
        %5908 = vmatpush.xpose.msra.mxu0 0.0
        %5909 = vmatpush.xpose.msra.mxu0 0.0
        %5910 = vmatpush.xpose.msra.mxu0 0.0
        %5911 = vmatpush.xpose.msra.mxu0 0.0
        %5912 = vmatpush.xpose.msra.mxu0 0.0
        %5913 = vmatpush.xpose.msra.mxu0 0.0
        %5914 = vmatpush.xpose.msra.mxu0 0.0
        %5915 = vmatpush.xpose.msra.mxu0 0.0
        %5916 = vmatpush.xpose.msra.mxu0 0.0
        %5917 = vmatpush.xpose.msra.mxu0 0.0
        %5918 = vmatpush.xpose.msra.mxu0 0.0
        %5919 = vmatpush.xpose.msra.mxu0 0.0
        %5920 = vmatpush.xpose.msra.mxu0 %v913
        %5921 = vmatpush.xpose.msra.mxu0 %v529
        %5922 = vmatmul.f32.gmra.mxu0 %v1444
        %v5923 = vpop.f32.mrf.mxu0
        %v5924 = vadd.f32 %v5904, %v5923
        %5925 = vdwg.mxu0
        %5926 = vmatpush.xpose.msra.mxu0 0.0
        %5927 = vmatpush.xpose.msra.mxu0 0.0
        %5928 = vmatpush.xpose.msra.mxu0 0.0
        %5929 = vmatpush.xpose.msra.mxu0 0.0
        %5930 = vmatpush.xpose.msra.mxu0 0.0
        %5931 = vmatpush.xpose.msra.mxu0 0.0
        %5932 = vmatpush.xpose.msra.mxu0 0.0
        %5933 = vmatpush.xpose.msra.mxu0 0.0
        %5934 = vmatpush.xpose.msra.mxu0 0.0
        %5935 = vmatpush.xpose.msra.mxu0 0.0
        %5936 = vmatpush.xpose.msra.mxu0 0.0
        %5937 = vmatpush.xpose.msra.mxu0 0.0
        %5938 = vmatpush.xpose.msra.mxu0 0.0
        %5939 = vmatpush.xpose.msra.mxu0 0.0
        %5940 = vmatpush.xpose.msra.mxu0 %v914
        %5941 = vmatpush.xpose.msra.mxu0 %v530
        %5942 = vmatmul.f32.gmra.mxu0 %v1445
        %v5943 = vpop.f32.mrf.mxu0
        %v5944 = vadd.f32 %v5924, %v5943
        %5945 = vdwg.mxu0
        %5946 = vmatpush.xpose.msra.mxu0 0.0
        %5947 = vmatpush.xpose.msra.mxu0 0.0
        %5948 = vmatpush.xpose.msra.mxu0 0.0
        %5949 = vmatpush.xpose.msra.mxu0 0.0
        %5950 = vmatpush.xpose.msra.mxu0 0.0
        %5951 = vmatpush.xpose.msra.mxu0 0.0
        %5952 = vmatpush.xpose.msra.mxu0 0.0
        %5953 = vmatpush.xpose.msra.mxu0 0.0
        %5954 = vmatpush.xpose.msra.mxu0 0.0
        %5955 = vmatpush.xpose.msra.mxu0 0.0
        %5956 = vmatpush.xpose.msra.mxu0 0.0
        %5957 = vmatpush.xpose.msra.mxu0 0.0
        %5958 = vmatpush.xpose.msra.mxu0 0.0
        %5959 = vmatpush.xpose.msra.mxu0 0.0
        %5960 = vmatpush.xpose.msra.mxu0 %v915
        %5961 = vmatpush.xpose.msra.mxu0 %v531
        %5962 = vmatmul.f32.gmra.mxu0 %v1446
        %v5963 = vpop.f32.mrf.mxu0
        %v5964 = vadd.f32 %v5944, %v5963
        %5965 = vdwg.mxu0
        %5966 = vmatpush.xpose.msra.mxu0 0.0
        %5967 = vmatpush.xpose.msra.mxu0 0.0
        %5968 = vmatpush.xpose.msra.mxu0 0.0
        %5969 = vmatpush.xpose.msra.mxu0 0.0
        %5970 = vmatpush.xpose.msra.mxu0 0.0
        %5971 = vmatpush.xpose.msra.mxu0 0.0
        %5972 = vmatpush.xpose.msra.mxu0 0.0
        %5973 = vmatpush.xpose.msra.mxu0 0.0
        %5974 = vmatpush.xpose.msra.mxu0 0.0
        %5975 = vmatpush.xpose.msra.mxu0 0.0
        %5976 = vmatpush.xpose.msra.mxu0 0.0
        %5977 = vmatpush.xpose.msra.mxu0 0.0
        %5978 = vmatpush.xpose.msra.mxu0 0.0
        %5979 = vmatpush.xpose.msra.mxu0 0.0
        %5980 = vmatpush.xpose.msra.mxu0 %v916
        %5981 = vmatpush.xpose.msra.mxu0 %v532
        %5982 = vmatmul.f32.gmra.mxu0 %v1447
        %v5983 = vpop.f32.mrf.mxu0
        %v5984 = vadd.f32 %v5964, %v5983
        %5985 = vdwg.mxu0
        %5986 = vmatpush.xpose.msra.mxu0 0.0
        %5987 = vmatpush.xpose.msra.mxu0 0.0
        %5988 = vmatpush.xpose.msra.mxu0 0.0
        %5989 = vmatpush.xpose.msra.mxu0 0.0
        %5990 = vmatpush.xpose.msra.mxu0 0.0
        %5991 = vmatpush.xpose.msra.mxu0 0.0
        %5992 = vmatpush.xpose.msra.mxu0 0.0
        %5993 = vmatpush.xpose.msra.mxu0 0.0
        %5994 = vmatpush.xpose.msra.mxu0 0.0
        %5995 = vmatpush.xpose.msra.mxu0 0.0
        %5996 = vmatpush.xpose.msra.mxu0 0.0
        %5997 = vmatpush.xpose.msra.mxu0 0.0
        %5998 = vmatpush.xpose.msra.mxu0 0.0
        %5999 = vmatpush.xpose.msra.mxu0 0.0
        %6000 = vmatpush.xpose.msra.mxu0 %v917
        %6001 = vmatpush.xpose.msra.mxu0 %v533
        %6002 = vmatmul.f32.gmra.mxu0 %v1448
        %v6003 = vpop.f32.mrf.mxu0
        %v6004 = vadd.f32 %v5984, %v6003
        %6005 = vdwg.mxu0
        %6006 = vmatpush.xpose.msra.mxu0 0.0
        %6007 = vmatpush.xpose.msra.mxu0 0.0
        %6008 = vmatpush.xpose.msra.mxu0 0.0
        %6009 = vmatpush.xpose.msra.mxu0 0.0
        %6010 = vmatpush.xpose.msra.mxu0 0.0
        %6011 = vmatpush.xpose.msra.mxu0 0.0
        %6012 = vmatpush.xpose.msra.mxu0 0.0
        %6013 = vmatpush.xpose.msra.mxu0 0.0
        %6014 = vmatpush.xpose.msra.mxu0 0.0
        %6015 = vmatpush.xpose.msra.mxu0 0.0
        %6016 = vmatpush.xpose.msra.mxu0 0.0
        %6017 = vmatpush.xpose.msra.mxu0 0.0
        %6018 = vmatpush.xpose.msra.mxu0 0.0
        %6019 = vmatpush.xpose.msra.mxu0 0.0
        %6020 = vmatpush.xpose.msra.mxu0 %v918
        %6021 = vmatpush.xpose.msra.mxu0 %v534
        %6022 = vmatmul.f32.gmra.mxu0 %v1449
        %v6023 = vpop.f32.mrf.mxu0
        %v6024 = vadd.f32 %v6004, %v6023
        %6025 = vdwg.mxu0
        %6026 = vmatpush.xpose.msra.mxu0 0.0
        %6027 = vmatpush.xpose.msra.mxu0 0.0
        %6028 = vmatpush.xpose.msra.mxu0 0.0
        %6029 = vmatpush.xpose.msra.mxu0 0.0
        %6030 = vmatpush.xpose.msra.mxu0 0.0
        %6031 = vmatpush.xpose.msra.mxu0 0.0
        %6032 = vmatpush.xpose.msra.mxu0 0.0
        %6033 = vmatpush.xpose.msra.mxu0 0.0
        %6034 = vmatpush.xpose.msra.mxu0 0.0
        %6035 = vmatpush.xpose.msra.mxu0 0.0
        %6036 = vmatpush.xpose.msra.mxu0 0.0
        %6037 = vmatpush.xpose.msra.mxu0 0.0
        %6038 = vmatpush.xpose.msra.mxu0 0.0
        %6039 = vmatpush.xpose.msra.mxu0 0.0
        %6040 = vmatpush.xpose.msra.mxu0 %v919
        %6041 = vmatpush.xpose.msra.mxu0 %v535
        %6042 = vmatmul.f32.gmra.mxu0 %v1450
        %v6043 = vpop.f32.mrf.mxu0
        %v6044 = vadd.f32 %v6024, %v6043
        %6045 = vdwg.mxu0
        %6046 = vmatpush.xpose.msra.mxu0 0.0
        %6047 = vmatpush.xpose.msra.mxu0 0.0
        %6048 = vmatpush.xpose.msra.mxu0 0.0
        %6049 = vmatpush.xpose.msra.mxu0 0.0
        %6050 = vmatpush.xpose.msra.mxu0 0.0
        %6051 = vmatpush.xpose.msra.mxu0 0.0
        %6052 = vmatpush.xpose.msra.mxu0 0.0
        %6053 = vmatpush.xpose.msra.mxu0 0.0
        %6054 = vmatpush.xpose.msra.mxu0 0.0
        %6055 = vmatpush.xpose.msra.mxu0 0.0
        %6056 = vmatpush.xpose.msra.mxu0 0.0
        %6057 = vmatpush.xpose.msra.mxu0 0.0
        %6058 = vmatpush.xpose.msra.mxu0 0.0
        %6059 = vmatpush.xpose.msra.mxu0 0.0
        %6060 = vmatpush.xpose.msra.mxu0 %v920
        %6061 = vmatpush.xpose.msra.mxu0 %v536
        %6062 = vmatmul.f32.gmra.mxu0 %v1451
        %v6063 = vpop.f32.mrf.mxu0
        %v6064 = vadd.f32 %v6044, %v6063
        %6065 = vdwg.mxu0
        %6066 = vmatpush.xpose.msra.mxu0 0.0
        %6067 = vmatpush.xpose.msra.mxu0 0.0
        %6068 = vmatpush.xpose.msra.mxu0 0.0
        %6069 = vmatpush.xpose.msra.mxu0 0.0
        %6070 = vmatpush.xpose.msra.mxu0 0.0
        %6071 = vmatpush.xpose.msra.mxu0 0.0
        %6072 = vmatpush.xpose.msra.mxu0 0.0
        %6073 = vmatpush.xpose.msra.mxu0 0.0
        %6074 = vmatpush.xpose.msra.mxu0 0.0
        %6075 = vmatpush.xpose.msra.mxu0 0.0
        %6076 = vmatpush.xpose.msra.mxu0 0.0
        %6077 = vmatpush.xpose.msra.mxu0 0.0
        %6078 = vmatpush.xpose.msra.mxu0 0.0
        %6079 = vmatpush.xpose.msra.mxu0 0.0
        %6080 = vmatpush.xpose.msra.mxu0 %v921
        %6081 = vmatpush.xpose.msra.mxu0 %v537
        %6082 = vmatmul.f32.gmra.mxu0 %v1454
        %v6083 = vpop.f32.mrf.mxu0
        %v6084 = vadd.f32 %v6064, %v6083
        %6085 = vdwg.mxu0
        %6086 = vmatpush.xpose.msra.mxu0 0.0
        %6087 = vmatpush.xpose.msra.mxu0 0.0
        %6088 = vmatpush.xpose.msra.mxu0 0.0
        %6089 = vmatpush.xpose.msra.mxu0 0.0
        %6090 = vmatpush.xpose.msra.mxu0 0.0
        %6091 = vmatpush.xpose.msra.mxu0 0.0
        %6092 = vmatpush.xpose.msra.mxu0 0.0
        %6093 = vmatpush.xpose.msra.mxu0 0.0
        %6094 = vmatpush.xpose.msra.mxu0 0.0
        %6095 = vmatpush.xpose.msra.mxu0 0.0
        %6096 = vmatpush.xpose.msra.mxu0 0.0
        %6097 = vmatpush.xpose.msra.mxu0 0.0
        %6098 = vmatpush.xpose.msra.mxu0 0.0
        %6099 = vmatpush.xpose.msra.mxu0 0.0
        %6100 = vmatpush.xpose.msra.mxu0 %v922
        %6101 = vmatpush.xpose.msra.mxu0 %v538
        %6102 = vmatmul.f32.gmra.mxu0 %v1455
        %v6103 = vpop.f32.mrf.mxu0
        %v6104 = vadd.f32 %v6084, %v6103
        %6105 = vdwg.mxu0
        %6106 = vmatpush.xpose.msra.mxu0 0.0
        %6107 = vmatpush.xpose.msra.mxu0 0.0
        %6108 = vmatpush.xpose.msra.mxu0 0.0
        %6109 = vmatpush.xpose.msra.mxu0 0.0
        %6110 = vmatpush.xpose.msra.mxu0 0.0
        %6111 = vmatpush.xpose.msra.mxu0 0.0
        %6112 = vmatpush.xpose.msra.mxu0 0.0
        %6113 = vmatpush.xpose.msra.mxu0 0.0
        %6114 = vmatpush.xpose.msra.mxu0 0.0
        %6115 = vmatpush.xpose.msra.mxu0 0.0
        %6116 = vmatpush.xpose.msra.mxu0 0.0
        %6117 = vmatpush.xpose.msra.mxu0 0.0
        %6118 = vmatpush.xpose.msra.mxu0 0.0
        %6119 = vmatpush.xpose.msra.mxu0 0.0
        %6120 = vmatpush.xpose.msra.mxu0 %v923
        %6121 = vmatpush.xpose.msra.mxu0 %v539
        %6122 = vmatmul.f32.gmra.mxu0 %v1456
        %v6123 = vpop.f32.mrf.mxu0
        %v6124 = vadd.f32 %v6104, %v6123
        %6125 = vdwg.mxu0
        %6126 = vmatpush.xpose.msra.mxu0 0.0
        %6127 = vmatpush.xpose.msra.mxu0 0.0
        %6128 = vmatpush.xpose.msra.mxu0 0.0
        %6129 = vmatpush.xpose.msra.mxu0 0.0
        %6130 = vmatpush.xpose.msra.mxu0 0.0
        %6131 = vmatpush.xpose.msra.mxu0 0.0
        %6132 = vmatpush.xpose.msra.mxu0 0.0
        %6133 = vmatpush.xpose.msra.mxu0 0.0
        %6134 = vmatpush.xpose.msra.mxu0 0.0
        %6135 = vmatpush.xpose.msra.mxu0 0.0
        %6136 = vmatpush.xpose.msra.mxu0 0.0
        %6137 = vmatpush.xpose.msra.mxu0 0.0
        %6138 = vmatpush.xpose.msra.mxu0 0.0
        %6139 = vmatpush.xpose.msra.mxu0 0.0
        %6140 = vmatpush.xpose.msra.mxu0 %v924
        %6141 = vmatpush.xpose.msra.mxu0 %v540
        %6142 = vmatmul.f32.gmra.mxu0 %v1457
        %v6143 = vpop.f32.mrf.mxu0
        %v6144 = vadd.f32 %v6124, %v6143
        %6145 = vdwg.mxu0
        %6146 = vmatpush.xpose.msra.mxu0 0.0
        %6147 = vmatpush.xpose.msra.mxu0 0.0
        %6148 = vmatpush.xpose.msra.mxu0 0.0
        %6149 = vmatpush.xpose.msra.mxu0 0.0
        %6150 = vmatpush.xpose.msra.mxu0 0.0
        %6151 = vmatpush.xpose.msra.mxu0 0.0
        %6152 = vmatpush.xpose.msra.mxu0 0.0
        %6153 = vmatpush.xpose.msra.mxu0 0.0
        %6154 = vmatpush.xpose.msra.mxu0 0.0
        %6155 = vmatpush.xpose.msra.mxu0 0.0
        %6156 = vmatpush.xpose.msra.mxu0 0.0
        %6157 = vmatpush.xpose.msra.mxu0 0.0
        %6158 = vmatpush.xpose.msra.mxu0 0.0
        %6159 = vmatpush.xpose.msra.mxu0 0.0
        %6160 = vmatpush.xpose.msra.mxu0 %v925
        %6161 = vmatpush.xpose.msra.mxu0 %v541
        %6162 = vmatmul.f32.gmra.mxu0 %v1458
        %v6163 = vpop.f32.mrf.mxu0
        %v6164 = vadd.f32 %v6144, %v6163
        %6165 = vdwg.mxu0
        %6166 = vmatpush.xpose.msra.mxu0 0.0
        %6167 = vmatpush.xpose.msra.mxu0 0.0
        %6168 = vmatpush.xpose.msra.mxu0 0.0
        %6169 = vmatpush.xpose.msra.mxu0 0.0
        %6170 = vmatpush.xpose.msra.mxu0 0.0
        %6171 = vmatpush.xpose.msra.mxu0 0.0
        %6172 = vmatpush.xpose.msra.mxu0 0.0
        %6173 = vmatpush.xpose.msra.mxu0 0.0
        %6174 = vmatpush.xpose.msra.mxu0 0.0
        %6175 = vmatpush.xpose.msra.mxu0 0.0
        %6176 = vmatpush.xpose.msra.mxu0 0.0
        %6177 = vmatpush.xpose.msra.mxu0 0.0
        %6178 = vmatpush.xpose.msra.mxu0 0.0
        %6179 = vmatpush.xpose.msra.mxu0 0.0
        %6180 = vmatpush.xpose.msra.mxu0 %v926
        %6181 = vmatpush.xpose.msra.mxu0 %v542
        %6182 = vmatmul.f32.gmra.mxu0 %v1459
        %v6183 = vpop.f32.mrf.mxu0
        %v6184 = vadd.f32 %v6164, %v6183
        %6185 = vdwg.mxu0
        %6186 = vmatpush.xpose.msra.mxu0 0.0
        %6187 = vmatpush.xpose.msra.mxu0 0.0
        %6188 = vmatpush.xpose.msra.mxu0 0.0
        %6189 = vmatpush.xpose.msra.mxu0 0.0
        %6190 = vmatpush.xpose.msra.mxu0 0.0
        %6191 = vmatpush.xpose.msra.mxu0 0.0
        %6192 = vmatpush.xpose.msra.mxu0 0.0
        %6193 = vmatpush.xpose.msra.mxu0 0.0
        %6194 = vmatpush.xpose.msra.mxu0 0.0
        %6195 = vmatpush.xpose.msra.mxu0 0.0
        %6196 = vmatpush.xpose.msra.mxu0 0.0
        %6197 = vmatpush.xpose.msra.mxu0 0.0
        %6198 = vmatpush.xpose.msra.mxu0 0.0
        %6199 = vmatpush.xpose.msra.mxu0 0.0
        %6200 = vmatpush.xpose.msra.mxu0 %v927
        %6201 = vmatpush.xpose.msra.mxu0 %v543
        %6202 = vmatmul.f32.gmra.mxu0 %v1460
        %v6203 = vpop.f32.mrf.mxu0
        %v6204 = vadd.f32 %v6184, %v6203
        %6205 = vdwg.mxu0
        %6206 = vmatpush.xpose.msra.mxu0 0.0
        %6207 = vmatpush.xpose.msra.mxu0 0.0
        %6208 = vmatpush.xpose.msra.mxu0 0.0
        %6209 = vmatpush.xpose.msra.mxu0 0.0
        %6210 = vmatpush.xpose.msra.mxu0 0.0
        %6211 = vmatpush.xpose.msra.mxu0 0.0
        %6212 = vmatpush.xpose.msra.mxu0 0.0
        %6213 = vmatpush.xpose.msra.mxu0 0.0
        %6214 = vmatpush.xpose.msra.mxu0 0.0
        %6215 = vmatpush.xpose.msra.mxu0 0.0
        %6216 = vmatpush.xpose.msra.mxu0 0.0
        %6217 = vmatpush.xpose.msra.mxu0 0.0
        %6218 = vmatpush.xpose.msra.mxu0 0.0
        %6219 = vmatpush.xpose.msra.mxu0 0.0
        %6220 = vmatpush.xpose.msra.mxu0 %v928
        %6221 = vmatpush.xpose.msra.mxu0 %v544
        %6222 = vmatmul.f32.gmra.mxu0 %v1461
        %v6223 = vpop.f32.mrf.mxu0
        %v6224 = vadd.f32 %v6204, %v6223
        %6225 = vdwg.mxu0
        %6226 = vmatpush.xpose.msra.mxu0 0.0
        %6227 = vmatpush.xpose.msra.mxu0 0.0
        %6228 = vmatpush.xpose.msra.mxu0 0.0
        %6229 = vmatpush.xpose.msra.mxu0 0.0
        %6230 = vmatpush.xpose.msra.mxu0 0.0
        %6231 = vmatpush.xpose.msra.mxu0 0.0
        %6232 = vmatpush.xpose.msra.mxu0 0.0
        %6233 = vmatpush.xpose.msra.mxu0 0.0
        %6234 = vmatpush.xpose.msra.mxu0 0.0
        %6235 = vmatpush.xpose.msra.mxu0 0.0
        %6236 = vmatpush.xpose.msra.mxu0 0.0
        %6237 = vmatpush.xpose.msra.mxu0 0.0
        %6238 = vmatpush.xpose.msra.mxu0 0.0
        %6239 = vmatpush.xpose.msra.mxu0 0.0
        %6240 = vmatpush.xpose.msra.mxu0 %v929
        %6241 = vmatpush.xpose.msra.mxu0 %v545
        %6242 = vmatmul.f32.gmra.mxu0 %v1464
        %v6243 = vpop.f32.mrf.mxu0
        %v6244 = vadd.f32 %v6224, %v6243
        %6245 = vdwg.mxu0
        %6246 = vmatpush.xpose.msra.mxu0 0.0
        %6247 = vmatpush.xpose.msra.mxu0 0.0
        %6248 = vmatpush.xpose.msra.mxu0 0.0
        %6249 = vmatpush.xpose.msra.mxu0 0.0
        %6250 = vmatpush.xpose.msra.mxu0 0.0
        %6251 = vmatpush.xpose.msra.mxu0 0.0
        %6252 = vmatpush.xpose.msra.mxu0 0.0
        %6253 = vmatpush.xpose.msra.mxu0 0.0
        %6254 = vmatpush.xpose.msra.mxu0 0.0
        %6255 = vmatpush.xpose.msra.mxu0 0.0
        %6256 = vmatpush.xpose.msra.mxu0 0.0
        %6257 = vmatpush.xpose.msra.mxu0 0.0
        %6258 = vmatpush.xpose.msra.mxu0 0.0
        %6259 = vmatpush.xpose.msra.mxu0 0.0
        %6260 = vmatpush.xpose.msra.mxu0 %v930
        %6261 = vmatpush.xpose.msra.mxu0 %v546
        %6262 = vmatmul.f32.gmra.mxu0 %v1465
        %v6263 = vpop.f32.mrf.mxu0
        %v6264 = vadd.f32 %v6244, %v6263
        %6265 = vdwg.mxu0
        %6266 = vmatpush.xpose.msra.mxu0 0.0
        %6267 = vmatpush.xpose.msra.mxu0 0.0
        %6268 = vmatpush.xpose.msra.mxu0 0.0
        %6269 = vmatpush.xpose.msra.mxu0 0.0
        %6270 = vmatpush.xpose.msra.mxu0 0.0
        %6271 = vmatpush.xpose.msra.mxu0 0.0
        %6272 = vmatpush.xpose.msra.mxu0 0.0
        %6273 = vmatpush.xpose.msra.mxu0 0.0
        %6274 = vmatpush.xpose.msra.mxu0 0.0
        %6275 = vmatpush.xpose.msra.mxu0 0.0
        %6276 = vmatpush.xpose.msra.mxu0 0.0
        %6277 = vmatpush.xpose.msra.mxu0 0.0
        %6278 = vmatpush.xpose.msra.mxu0 0.0
        %6279 = vmatpush.xpose.msra.mxu0 0.0
        %6280 = vmatpush.xpose.msra.mxu0 %v931
        %6281 = vmatpush.xpose.msra.mxu0 %v547
        %6282 = vmatmul.f32.gmra.mxu0 %v1466
        %v6283 = vpop.f32.mrf.mxu0
        %v6284 = vadd.f32 %v6264, %v6283
        %6285 = vdwg.mxu0
        %6286 = vmatpush.xpose.msra.mxu0 0.0
        %6287 = vmatpush.xpose.msra.mxu0 0.0
        %6288 = vmatpush.xpose.msra.mxu0 0.0
        %6289 = vmatpush.xpose.msra.mxu0 0.0
        %6290 = vmatpush.xpose.msra.mxu0 0.0
        %6291 = vmatpush.xpose.msra.mxu0 0.0
        %6292 = vmatpush.xpose.msra.mxu0 0.0
        %6293 = vmatpush.xpose.msra.mxu0 0.0
        %6294 = vmatpush.xpose.msra.mxu0 0.0
        %6295 = vmatpush.xpose.msra.mxu0 0.0
        %6296 = vmatpush.xpose.msra.mxu0 0.0
        %6297 = vmatpush.xpose.msra.mxu0 0.0
        %6298 = vmatpush.xpose.msra.mxu0 0.0
        %6299 = vmatpush.xpose.msra.mxu0 0.0
        %6300 = vmatpush.xpose.msra.mxu0 %v932
        %6301 = vmatpush.xpose.msra.mxu0 %v548
        %6302 = vmatmul.f32.gmra.mxu0 %v1467
        %v6303 = vpop.f32.mrf.mxu0
        %v6304 = vadd.f32 %v6284, %v6303
        %6305 = vdwg.mxu0
        %6306 = vmatpush.xpose.msra.mxu0 0.0
        %6307 = vmatpush.xpose.msra.mxu0 0.0
        %6308 = vmatpush.xpose.msra.mxu0 0.0
        %6309 = vmatpush.xpose.msra.mxu0 0.0
        %6310 = vmatpush.xpose.msra.mxu0 0.0
        %6311 = vmatpush.xpose.msra.mxu0 0.0
        %6312 = vmatpush.xpose.msra.mxu0 0.0
        %6313 = vmatpush.xpose.msra.mxu0 0.0
        %6314 = vmatpush.xpose.msra.mxu0 0.0
        %6315 = vmatpush.xpose.msra.mxu0 0.0
        %6316 = vmatpush.xpose.msra.mxu0 0.0
        %6317 = vmatpush.xpose.msra.mxu0 0.0
        %6318 = vmatpush.xpose.msra.mxu0 0.0
        %6319 = vmatpush.xpose.msra.mxu0 0.0
        %6320 = vmatpush.xpose.msra.mxu0 %v933
        %6321 = vmatpush.xpose.msra.mxu0 %v549
        %6322 = vmatmul.f32.gmra.mxu0 %v1468
        %v6323 = vpop.f32.mrf.mxu0
        %v6324 = vadd.f32 %v6304, %v6323
        %6325 = vdwg.mxu0
        %6326 = vmatpush.xpose.msra.mxu0 0.0
        %6327 = vmatpush.xpose.msra.mxu0 0.0
        %6328 = vmatpush.xpose.msra.mxu0 0.0
        %6329 = vmatpush.xpose.msra.mxu0 0.0
        %6330 = vmatpush.xpose.msra.mxu0 0.0
        %6331 = vmatpush.xpose.msra.mxu0 0.0
        %6332 = vmatpush.xpose.msra.mxu0 0.0
        %6333 = vmatpush.xpose.msra.mxu0 0.0
        %6334 = vmatpush.xpose.msra.mxu0 0.0
        %6335 = vmatpush.xpose.msra.mxu0 0.0
        %6336 = vmatpush.xpose.msra.mxu0 0.0
        %6337 = vmatpush.xpose.msra.mxu0 0.0
        %6338 = vmatpush.xpose.msra.mxu0 0.0
        %6339 = vmatpush.xpose.msra.mxu0 0.0
        %6340 = vmatpush.xpose.msra.mxu0 %v934
        %6341 = vmatpush.xpose.msra.mxu0 %v550
        %6342 = vmatmul.f32.gmra.mxu0 %v1469
        %v6343 = vpop.f32.mrf.mxu0
        %v6344 = vadd.f32 %v6324, %v6343
        %6345 = vdwg.mxu0
        %6346 = vmatpush.xpose.msra.mxu0 0.0
        %6347 = vmatpush.xpose.msra.mxu0 0.0
        %6348 = vmatpush.xpose.msra.mxu0 0.0
        %6349 = vmatpush.xpose.msra.mxu0 0.0
        %6350 = vmatpush.xpose.msra.mxu0 0.0
        %6351 = vmatpush.xpose.msra.mxu0 0.0
        %6352 = vmatpush.xpose.msra.mxu0 0.0
        %6353 = vmatpush.xpose.msra.mxu0 0.0
        %6354 = vmatpush.xpose.msra.mxu0 0.0
        %6355 = vmatpush.xpose.msra.mxu0 0.0
        %6356 = vmatpush.xpose.msra.mxu0 0.0
        %6357 = vmatpush.xpose.msra.mxu0 0.0
        %6358 = vmatpush.xpose.msra.mxu0 0.0
        %6359 = vmatpush.xpose.msra.mxu0 0.0
        %6360 = vmatpush.xpose.msra.mxu0 %v935
        %6361 = vmatpush.xpose.msra.mxu0 %v551
        %6362 = vmatmul.f32.gmra.mxu0 %v1470
        %v6363 = vpop.f32.mrf.mxu0
        %v6364 = vadd.f32 %v6344, %v6363
        %6365 = vdwg.mxu0
        %6366 = vmatpush.xpose.msra.mxu0 0.0
        %6367 = vmatpush.xpose.msra.mxu0 0.0
        %6368 = vmatpush.xpose.msra.mxu0 0.0
        %6369 = vmatpush.xpose.msra.mxu0 0.0
        %6370 = vmatpush.xpose.msra.mxu0 0.0
        %6371 = vmatpush.xpose.msra.mxu0 0.0
        %6372 = vmatpush.xpose.msra.mxu0 0.0
        %6373 = vmatpush.xpose.msra.mxu0 0.0
        %6374 = vmatpush.xpose.msra.mxu0 0.0
        %6375 = vmatpush.xpose.msra.mxu0 0.0
        %6376 = vmatpush.xpose.msra.mxu0 0.0
        %6377 = vmatpush.xpose.msra.mxu0 0.0
        %6378 = vmatpush.xpose.msra.mxu0 0.0
        %6379 = vmatpush.xpose.msra.mxu0 0.0
        %6380 = vmatpush.xpose.msra.mxu0 %v936
        %6381 = vmatpush.xpose.msra.mxu0 %v552
        %6382 = vmatmul.f32.gmra.mxu0 %v1471
        %v6383 = vpop.f32.mrf.mxu0
        %v6384 = vadd.f32 %v6364, %v6383
        %6385 = vdwg.mxu0
        %6386 = vmatpush.xpose.msra.mxu0 0.0
        %6387 = vmatpush.xpose.msra.mxu0 0.0
        %6388 = vmatpush.xpose.msra.mxu0 0.0
        %6389 = vmatpush.xpose.msra.mxu0 0.0
        %6390 = vmatpush.xpose.msra.mxu0 0.0
        %6391 = vmatpush.xpose.msra.mxu0 0.0
        %6392 = vmatpush.xpose.msra.mxu0 0.0
        %6393 = vmatpush.xpose.msra.mxu0 0.0
        %6394 = vmatpush.xpose.msra.mxu0 0.0
        %6395 = vmatpush.xpose.msra.mxu0 0.0
        %6396 = vmatpush.xpose.msra.mxu0 0.0
        %6397 = vmatpush.xpose.msra.mxu0 0.0
        %6398 = vmatpush.xpose.msra.mxu0 0.0
        %6399 = vmatpush.xpose.msra.mxu0 0.0
        %6400 = vmatpush.xpose.msra.mxu0 %v937
        %6401 = vmatpush.xpose.msra.mxu0 %v553
        %6402 = vmatmul.f32.gmra.mxu0 %v1474
        %v6403 = vpop.f32.mrf.mxu0
        %v6404 = vadd.f32 %v6384, %v6403
        %6405 = vdwg.mxu0
        %6406 = vmatpush.xpose.msra.mxu0 0.0
        %6407 = vmatpush.xpose.msra.mxu0 0.0
        %6408 = vmatpush.xpose.msra.mxu0 0.0
        %6409 = vmatpush.xpose.msra.mxu0 0.0
        %6410 = vmatpush.xpose.msra.mxu0 0.0
        %6411 = vmatpush.xpose.msra.mxu0 0.0
        %6412 = vmatpush.xpose.msra.mxu0 0.0
        %6413 = vmatpush.xpose.msra.mxu0 0.0
        %6414 = vmatpush.xpose.msra.mxu0 0.0
        %6415 = vmatpush.xpose.msra.mxu0 0.0
        %6416 = vmatpush.xpose.msra.mxu0 0.0
        %6417 = vmatpush.xpose.msra.mxu0 0.0
        %6418 = vmatpush.xpose.msra.mxu0 0.0
        %6419 = vmatpush.xpose.msra.mxu0 0.0
        %6420 = vmatpush.xpose.msra.mxu0 %v938
        %6421 = vmatpush.xpose.msra.mxu0 %v554
        %6422 = vmatmul.f32.gmra.mxu0 %v1475
        %v6423 = vpop.f32.mrf.mxu0
        %v6424 = vadd.f32 %v6404, %v6423
        %6425 = vdwg.mxu0
        %6426 = vmatpush.xpose.msra.mxu0 0.0
        %6427 = vmatpush.xpose.msra.mxu0 0.0
        %6428 = vmatpush.xpose.msra.mxu0 0.0
        %6429 = vmatpush.xpose.msra.mxu0 0.0
        %6430 = vmatpush.xpose.msra.mxu0 0.0
        %6431 = vmatpush.xpose.msra.mxu0 0.0
        %6432 = vmatpush.xpose.msra.mxu0 0.0
        %6433 = vmatpush.xpose.msra.mxu0 0.0
        %6434 = vmatpush.xpose.msra.mxu0 0.0
        %6435 = vmatpush.xpose.msra.mxu0 0.0
        %6436 = vmatpush.xpose.msra.mxu0 0.0
        %6437 = vmatpush.xpose.msra.mxu0 0.0
        %6438 = vmatpush.xpose.msra.mxu0 0.0
        %6439 = vmatpush.xpose.msra.mxu0 0.0
        %6440 = vmatpush.xpose.msra.mxu0 %v939
        %6441 = vmatpush.xpose.msra.mxu0 %v555
        %6442 = vmatmul.f32.gmra.mxu0 %v1476
        %v6443 = vpop.f32.mrf.mxu0
        %v6444 = vadd.f32 %v6424, %v6443
        %6445 = vdwg.mxu0
        %6446 = vmatpush.xpose.msra.mxu0 0.0
        %6447 = vmatpush.xpose.msra.mxu0 0.0
        %6448 = vmatpush.xpose.msra.mxu0 0.0
        %6449 = vmatpush.xpose.msra.mxu0 0.0
        %6450 = vmatpush.xpose.msra.mxu0 0.0
        %6451 = vmatpush.xpose.msra.mxu0 0.0
        %6452 = vmatpush.xpose.msra.mxu0 0.0
        %6453 = vmatpush.xpose.msra.mxu0 0.0
        %6454 = vmatpush.xpose.msra.mxu0 0.0
        %6455 = vmatpush.xpose.msra.mxu0 0.0
        %6456 = vmatpush.xpose.msra.mxu0 0.0
        %6457 = vmatpush.xpose.msra.mxu0 0.0
        %6458 = vmatpush.xpose.msra.mxu0 0.0
        %6459 = vmatpush.xpose.msra.mxu0 0.0
        %6460 = vmatpush.xpose.msra.mxu0 %v940
        %6461 = vmatpush.xpose.msra.mxu0 %v556
        %6462 = vmatmul.f32.gmra.mxu0 %v1477
        %v6463 = vpop.f32.mrf.mxu0
        %v6464 = vadd.f32 %v6444, %v6463
        %6465 = vdwg.mxu0
        %6466 = vmatpush.xpose.msra.mxu0 0.0
        %6467 = vmatpush.xpose.msra.mxu0 0.0
        %6468 = vmatpush.xpose.msra.mxu0 0.0
        %6469 = vmatpush.xpose.msra.mxu0 0.0
        %6470 = vmatpush.xpose.msra.mxu0 0.0
        %6471 = vmatpush.xpose.msra.mxu0 0.0
        %6472 = vmatpush.xpose.msra.mxu0 0.0
        %6473 = vmatpush.xpose.msra.mxu0 0.0
        %6474 = vmatpush.xpose.msra.mxu0 0.0
        %6475 = vmatpush.xpose.msra.mxu0 0.0
        %6476 = vmatpush.xpose.msra.mxu0 0.0
        %6477 = vmatpush.xpose.msra.mxu0 0.0
        %6478 = vmatpush.xpose.msra.mxu0 0.0
        %6479 = vmatpush.xpose.msra.mxu0 0.0
        %6480 = vmatpush.xpose.msra.mxu0 %v941
        %6481 = vmatpush.xpose.msra.mxu0 %v557
        %6482 = vmatmul.f32.gmra.mxu0 %v1478
        %v6483 = vpop.f32.mrf.mxu0
        %v6484 = vadd.f32 %v6464, %v6483
        %6485 = vdwg.mxu0
        %6486 = vmatpush.xpose.msra.mxu0 0.0
        %6487 = vmatpush.xpose.msra.mxu0 0.0
        %6488 = vmatpush.xpose.msra.mxu0 0.0
        %6489 = vmatpush.xpose.msra.mxu0 0.0
        %6490 = vmatpush.xpose.msra.mxu0 0.0
        %6491 = vmatpush.xpose.msra.mxu0 0.0
        %6492 = vmatpush.xpose.msra.mxu0 0.0
        %6493 = vmatpush.xpose.msra.mxu0 0.0
        %6494 = vmatpush.xpose.msra.mxu0 0.0
        %6495 = vmatpush.xpose.msra.mxu0 0.0
        %6496 = vmatpush.xpose.msra.mxu0 0.0
        %6497 = vmatpush.xpose.msra.mxu0 0.0
        %6498 = vmatpush.xpose.msra.mxu0 0.0
        %6499 = vmatpush.xpose.msra.mxu0 0.0
        %6500 = vmatpush.xpose.msra.mxu0 %v942
        %6501 = vmatpush.xpose.msra.mxu0 %v558
        %6502 = vmatmul.f32.gmra.mxu0 %v1479
        %v6503 = vpop.f32.mrf.mxu0
        %v6504 = vadd.f32 %v6484, %v6503
        %6505 = vdwg.mxu0
        %6506 = vmatpush.xpose.msra.mxu0 0.0
        %6507 = vmatpush.xpose.msra.mxu0 0.0
        %6508 = vmatpush.xpose.msra.mxu0 0.0
        %6509 = vmatpush.xpose.msra.mxu0 0.0
        %6510 = vmatpush.xpose.msra.mxu0 0.0
        %6511 = vmatpush.xpose.msra.mxu0 0.0
        %6512 = vmatpush.xpose.msra.mxu0 0.0
        %6513 = vmatpush.xpose.msra.mxu0 0.0
        %6514 = vmatpush.xpose.msra.mxu0 0.0
        %6515 = vmatpush.xpose.msra.mxu0 0.0
        %6516 = vmatpush.xpose.msra.mxu0 0.0
        %6517 = vmatpush.xpose.msra.mxu0 0.0
        %6518 = vmatpush.xpose.msra.mxu0 0.0
        %6519 = vmatpush.xpose.msra.mxu0 0.0
        %6520 = vmatpush.xpose.msra.mxu0 %v943
        %6521 = vmatpush.xpose.msra.mxu0 %v559
        %6522 = vmatmul.f32.gmra.mxu0 %v1480
        %v6523 = vpop.f32.mrf.mxu0
        %v6524 = vadd.f32 %v6504, %v6523
        %6525 = vdwg.mxu0
        %6526 = vmatpush.xpose.msra.mxu0 0.0
        %6527 = vmatpush.xpose.msra.mxu0 0.0
        %6528 = vmatpush.xpose.msra.mxu0 0.0
        %6529 = vmatpush.xpose.msra.mxu0 0.0
        %6530 = vmatpush.xpose.msra.mxu0 0.0
        %6531 = vmatpush.xpose.msra.mxu0 0.0
        %6532 = vmatpush.xpose.msra.mxu0 0.0
        %6533 = vmatpush.xpose.msra.mxu0 0.0
        %6534 = vmatpush.xpose.msra.mxu0 0.0
        %6535 = vmatpush.xpose.msra.mxu0 0.0
        %6536 = vmatpush.xpose.msra.mxu0 0.0
        %6537 = vmatpush.xpose.msra.mxu0 0.0
        %6538 = vmatpush.xpose.msra.mxu0 0.0
        %6539 = vmatpush.xpose.msra.mxu0 0.0
        %6540 = vmatpush.xpose.msra.mxu0 %v944
        %6541 = vmatpush.xpose.msra.mxu0 %v560
        %6542 = vmatmul.f32.gmra.mxu0 %v1481
        %v6543 = vpop.f32.mrf.mxu0
        %v6544 = vadd.f32 %v6524, %v6543
        %6545 = vdwg.mxu0
        %6546 = vmatpush.xpose.msra.mxu0 0.0
        %6547 = vmatpush.xpose.msra.mxu0 0.0
        %6548 = vmatpush.xpose.msra.mxu0 0.0
        %6549 = vmatpush.xpose.msra.mxu0 0.0
        %6550 = vmatpush.xpose.msra.mxu0 0.0
        %6551 = vmatpush.xpose.msra.mxu0 0.0
        %6552 = vmatpush.xpose.msra.mxu0 0.0
        %6553 = vmatpush.xpose.msra.mxu0 0.0
        %6554 = vmatpush.xpose.msra.mxu0 0.0
        %6555 = vmatpush.xpose.msra.mxu0 0.0
        %6556 = vmatpush.xpose.msra.mxu0 0.0
        %6557 = vmatpush.xpose.msra.mxu0 0.0
        %6558 = vmatpush.xpose.msra.mxu0 0.0
        %6559 = vmatpush.xpose.msra.mxu0 0.0
        %6560 = vmatpush.xpose.msra.mxu0 %v945
        %6561 = vmatpush.xpose.msra.mxu0 %v561
        %6562 = vmatmul.f32.gmra.mxu0 %v1484
        %v6563 = vpop.f32.mrf.mxu0
        %v6564 = vadd.f32 %v6544, %v6563
        %6565 = vdwg.mxu0
        %6566 = vmatpush.xpose.msra.mxu0 0.0
        %6567 = vmatpush.xpose.msra.mxu0 0.0
        %6568 = vmatpush.xpose.msra.mxu0 0.0
        %6569 = vmatpush.xpose.msra.mxu0 0.0
        %6570 = vmatpush.xpose.msra.mxu0 0.0
        %6571 = vmatpush.xpose.msra.mxu0 0.0
        %6572 = vmatpush.xpose.msra.mxu0 0.0
        %6573 = vmatpush.xpose.msra.mxu0 0.0
        %6574 = vmatpush.xpose.msra.mxu0 0.0
        %6575 = vmatpush.xpose.msra.mxu0 0.0
        %6576 = vmatpush.xpose.msra.mxu0 0.0
        %6577 = vmatpush.xpose.msra.mxu0 0.0
        %6578 = vmatpush.xpose.msra.mxu0 0.0
        %6579 = vmatpush.xpose.msra.mxu0 0.0
        %6580 = vmatpush.xpose.msra.mxu0 %v946
        %6581 = vmatpush.xpose.msra.mxu0 %v562
        %6582 = vmatmul.f32.gmra.mxu0 %v1485
        %v6583 = vpop.f32.mrf.mxu0
        %v6584 = vadd.f32 %v6564, %v6583
        %6585 = vdwg.mxu0
        %6586 = vmatpush.xpose.msra.mxu0 0.0
        %6587 = vmatpush.xpose.msra.mxu0 0.0
        %6588 = vmatpush.xpose.msra.mxu0 0.0
        %6589 = vmatpush.xpose.msra.mxu0 0.0
        %6590 = vmatpush.xpose.msra.mxu0 0.0
        %6591 = vmatpush.xpose.msra.mxu0 0.0
        %6592 = vmatpush.xpose.msra.mxu0 0.0
        %6593 = vmatpush.xpose.msra.mxu0 0.0
        %6594 = vmatpush.xpose.msra.mxu0 0.0
        %6595 = vmatpush.xpose.msra.mxu0 0.0
        %6596 = vmatpush.xpose.msra.mxu0 0.0
        %6597 = vmatpush.xpose.msra.mxu0 0.0
        %6598 = vmatpush.xpose.msra.mxu0 0.0
        %6599 = vmatpush.xpose.msra.mxu0 0.0
        %6600 = vmatpush.xpose.msra.mxu0 %v947
        %6601 = vmatpush.xpose.msra.mxu0 %v563
        %6602 = vmatmul.f32.gmra.mxu0 %v1486
        %v6603 = vpop.f32.mrf.mxu0
        %v6604 = vadd.f32 %v6584, %v6603
        %6605 = vdwg.mxu0
        %6606 = vmatpush.xpose.msra.mxu0 0.0
        %6607 = vmatpush.xpose.msra.mxu0 0.0
        %6608 = vmatpush.xpose.msra.mxu0 0.0
        %6609 = vmatpush.xpose.msra.mxu0 0.0
        %6610 = vmatpush.xpose.msra.mxu0 0.0
        %6611 = vmatpush.xpose.msra.mxu0 0.0
        %6612 = vmatpush.xpose.msra.mxu0 0.0
        %6613 = vmatpush.xpose.msra.mxu0 0.0
        %6614 = vmatpush.xpose.msra.mxu0 0.0
        %6615 = vmatpush.xpose.msra.mxu0 0.0
        %6616 = vmatpush.xpose.msra.mxu0 0.0
        %6617 = vmatpush.xpose.msra.mxu0 0.0
        %6618 = vmatpush.xpose.msra.mxu0 0.0
        %6619 = vmatpush.xpose.msra.mxu0 0.0
        %6620 = vmatpush.xpose.msra.mxu0 %v948
        %6621 = vmatpush.xpose.msra.mxu0 %v564
        %6622 = vmatmul.f32.gmra.mxu0 %v1487
        %v6623 = vpop.f32.mrf.mxu0
        %v6624 = vadd.f32 %v6604, %v6623
        %6625 = vdwg.mxu0
        %6626 = vmatpush.xpose.msra.mxu0 0.0
        %6627 = vmatpush.xpose.msra.mxu0 0.0
        %6628 = vmatpush.xpose.msra.mxu0 0.0
        %6629 = vmatpush.xpose.msra.mxu0 0.0
        %6630 = vmatpush.xpose.msra.mxu0 0.0
        %6631 = vmatpush.xpose.msra.mxu0 0.0
        %6632 = vmatpush.xpose.msra.mxu0 0.0
        %6633 = vmatpush.xpose.msra.mxu0 0.0
        %6634 = vmatpush.xpose.msra.mxu0 0.0
        %6635 = vmatpush.xpose.msra.mxu0 0.0
        %6636 = vmatpush.xpose.msra.mxu0 0.0
        %6637 = vmatpush.xpose.msra.mxu0 0.0
        %6638 = vmatpush.xpose.msra.mxu0 0.0
        %6639 = vmatpush.xpose.msra.mxu0 0.0
        %6640 = vmatpush.xpose.msra.mxu0 %v949
        %6641 = vmatpush.xpose.msra.mxu0 %v565
        %6642 = vmatmul.f32.gmra.mxu0 %v1488
        %v6643 = vpop.f32.mrf.mxu0
        %v6644 = vadd.f32 %v6624, %v6643
        %6645 = vdwg.mxu0
        %6646 = vmatpush.xpose.msra.mxu0 0.0
        %6647 = vmatpush.xpose.msra.mxu0 0.0
        %6648 = vmatpush.xpose.msra.mxu0 0.0
        %6649 = vmatpush.xpose.msra.mxu0 0.0
        %6650 = vmatpush.xpose.msra.mxu0 0.0
        %6651 = vmatpush.xpose.msra.mxu0 0.0
        %6652 = vmatpush.xpose.msra.mxu0 0.0
        %6653 = vmatpush.xpose.msra.mxu0 0.0
        %6654 = vmatpush.xpose.msra.mxu0 0.0
        %6655 = vmatpush.xpose.msra.mxu0 0.0
        %6656 = vmatpush.xpose.msra.mxu0 0.0
        %6657 = vmatpush.xpose.msra.mxu0 0.0
        %6658 = vmatpush.xpose.msra.mxu0 0.0
        %6659 = vmatpush.xpose.msra.mxu0 0.0
        %6660 = vmatpush.xpose.msra.mxu0 %v950
        %6661 = vmatpush.xpose.msra.mxu0 %v566
        %6662 = vmatmul.f32.gmra.mxu0 %v1489
        %v6663 = vpop.f32.mrf.mxu0
        %v6664 = vadd.f32 %v6644, %v6663
        %6665 = vdwg.mxu0
        %6666 = vmatpush.xpose.msra.mxu0 0.0
        %6667 = vmatpush.xpose.msra.mxu0 0.0
        %6668 = vmatpush.xpose.msra.mxu0 0.0
        %6669 = vmatpush.xpose.msra.mxu0 0.0
        %6670 = vmatpush.xpose.msra.mxu0 0.0
        %6671 = vmatpush.xpose.msra.mxu0 0.0
        %6672 = vmatpush.xpose.msra.mxu0 0.0
        %6673 = vmatpush.xpose.msra.mxu0 0.0
        %6674 = vmatpush.xpose.msra.mxu0 0.0
        %6675 = vmatpush.xpose.msra.mxu0 0.0
        %6676 = vmatpush.xpose.msra.mxu0 0.0
        %6677 = vmatpush.xpose.msra.mxu0 0.0
        %6678 = vmatpush.xpose.msra.mxu0 0.0
        %6679 = vmatpush.xpose.msra.mxu0 0.0
        %6680 = vmatpush.xpose.msra.mxu0 %v951
        %6681 = vmatpush.xpose.msra.mxu0 %v567
        %6682 = vmatmul.f32.gmra.mxu0 %v1490
        %v6683 = vpop.f32.mrf.mxu0
        %v6684 = vadd.f32 %v6664, %v6683
        %6685 = vdwg.mxu0
        %6686 = vmatpush.xpose.msra.mxu0 0.0
        %6687 = vmatpush.xpose.msra.mxu0 0.0
        %6688 = vmatpush.xpose.msra.mxu0 0.0
        %6689 = vmatpush.xpose.msra.mxu0 0.0
        %6690 = vmatpush.xpose.msra.mxu0 0.0
        %6691 = vmatpush.xpose.msra.mxu0 0.0
        %6692 = vmatpush.xpose.msra.mxu0 0.0
        %6693 = vmatpush.xpose.msra.mxu0 0.0
        %6694 = vmatpush.xpose.msra.mxu0 0.0
        %6695 = vmatpush.xpose.msra.mxu0 0.0
        %6696 = vmatpush.xpose.msra.mxu0 0.0
        %6697 = vmatpush.xpose.msra.mxu0 0.0
        %6698 = vmatpush.xpose.msra.mxu0 0.0
        %6699 = vmatpush.xpose.msra.mxu0 0.0
        %6700 = vmatpush.xpose.msra.mxu0 %v952
        %6701 = vmatpush.xpose.msra.mxu0 %v568
        %6702 = vmatmul.f32.gmra.mxu0 %v1491
        %v6703 = vpop.f32.mrf.mxu0
        %v6704 = vadd.f32 %v6684, %v6703
        %6705 = vdwg.mxu0
        %6706 = vmatpush.xpose.msra.mxu0 0.0
        %6707 = vmatpush.xpose.msra.mxu0 0.0
        %6708 = vmatpush.xpose.msra.mxu0 0.0
        %6709 = vmatpush.xpose.msra.mxu0 0.0
        %6710 = vmatpush.xpose.msra.mxu0 0.0
        %6711 = vmatpush.xpose.msra.mxu0 0.0
        %6712 = vmatpush.xpose.msra.mxu0 0.0
        %6713 = vmatpush.xpose.msra.mxu0 0.0
        %6714 = vmatpush.xpose.msra.mxu0 0.0
        %6715 = vmatpush.xpose.msra.mxu0 0.0
        %6716 = vmatpush.xpose.msra.mxu0 0.0
        %6717 = vmatpush.xpose.msra.mxu0 0.0
        %6718 = vmatpush.xpose.msra.mxu0 0.0
        %6719 = vmatpush.xpose.msra.mxu0 0.0
        %6720 = vmatpush.xpose.msra.mxu0 %v953
        %6721 = vmatpush.xpose.msra.mxu0 %v569
        %6722 = vmatmul.f32.gmra.mxu0 %v1494
        %v6723 = vpop.f32.mrf.mxu0
        %v6724 = vadd.f32 %v6704, %v6723
        %6725 = vdwg.mxu0
        %6726 = vmatpush.xpose.msra.mxu0 0.0
        %6727 = vmatpush.xpose.msra.mxu0 0.0
        %6728 = vmatpush.xpose.msra.mxu0 0.0
        %6729 = vmatpush.xpose.msra.mxu0 0.0
        %6730 = vmatpush.xpose.msra.mxu0 0.0
        %6731 = vmatpush.xpose.msra.mxu0 0.0
        %6732 = vmatpush.xpose.msra.mxu0 0.0
        %6733 = vmatpush.xpose.msra.mxu0 0.0
        %6734 = vmatpush.xpose.msra.mxu0 0.0
        %6735 = vmatpush.xpose.msra.mxu0 0.0
        %6736 = vmatpush.xpose.msra.mxu0 0.0
        %6737 = vmatpush.xpose.msra.mxu0 0.0
        %6738 = vmatpush.xpose.msra.mxu0 0.0
        %6739 = vmatpush.xpose.msra.mxu0 0.0
        %6740 = vmatpush.xpose.msra.mxu0 %v954
        %6741 = vmatpush.xpose.msra.mxu0 %v570
        %6742 = vmatmul.f32.gmra.mxu0 %v1495
        %v6743 = vpop.f32.mrf.mxu0
        %v6744 = vadd.f32 %v6724, %v6743
        %6745 = vdwg.mxu0
        %6746 = vmatpush.xpose.msra.mxu0 0.0
        %6747 = vmatpush.xpose.msra.mxu0 0.0
        %6748 = vmatpush.xpose.msra.mxu0 0.0
        %6749 = vmatpush.xpose.msra.mxu0 0.0
        %6750 = vmatpush.xpose.msra.mxu0 0.0
        %6751 = vmatpush.xpose.msra.mxu0 0.0
        %6752 = vmatpush.xpose.msra.mxu0 0.0
        %6753 = vmatpush.xpose.msra.mxu0 0.0
        %6754 = vmatpush.xpose.msra.mxu0 0.0
        %6755 = vmatpush.xpose.msra.mxu0 0.0
        %6756 = vmatpush.xpose.msra.mxu0 0.0
        %6757 = vmatpush.xpose.msra.mxu0 0.0
        %6758 = vmatpush.xpose.msra.mxu0 0.0
        %6759 = vmatpush.xpose.msra.mxu0 0.0
        %6760 = vmatpush.xpose.msra.mxu0 %v955
        %6761 = vmatpush.xpose.msra.mxu0 %v571
        %6762 = vmatmul.f32.gmra.mxu0 %v1496
        %v6763 = vpop.f32.mrf.mxu0
        %v6764 = vadd.f32 %v6744, %v6763
        %6765 = vdwg.mxu0
        %6766 = vmatpush.xpose.msra.mxu0 0.0
        %6767 = vmatpush.xpose.msra.mxu0 0.0
        %6768 = vmatpush.xpose.msra.mxu0 0.0
        %6769 = vmatpush.xpose.msra.mxu0 0.0
        %6770 = vmatpush.xpose.msra.mxu0 0.0
        %6771 = vmatpush.xpose.msra.mxu0 0.0
        %6772 = vmatpush.xpose.msra.mxu0 0.0
        %6773 = vmatpush.xpose.msra.mxu0 0.0
        %6774 = vmatpush.xpose.msra.mxu0 0.0
        %6775 = vmatpush.xpose.msra.mxu0 0.0
        %6776 = vmatpush.xpose.msra.mxu0 0.0
        %6777 = vmatpush.xpose.msra.mxu0 0.0
        %6778 = vmatpush.xpose.msra.mxu0 0.0
        %6779 = vmatpush.xpose.msra.mxu0 0.0
        %6780 = vmatpush.xpose.msra.mxu0 %v956
        %6781 = vmatpush.xpose.msra.mxu0 %v572
        %6782 = vmatmul.f32.gmra.mxu0 %v1497
        %v6783 = vpop.f32.mrf.mxu0
        %v6784 = vadd.f32 %v6764, %v6783
        %6785 = vdwg.mxu0
        %6786 = vmatpush.xpose.msra.mxu0 0.0
        %6787 = vmatpush.xpose.msra.mxu0 0.0
        %6788 = vmatpush.xpose.msra.mxu0 0.0
        %6789 = vmatpush.xpose.msra.mxu0 0.0
        %6790 = vmatpush.xpose.msra.mxu0 0.0
        %6791 = vmatpush.xpose.msra.mxu0 0.0
        %6792 = vmatpush.xpose.msra.mxu0 0.0
        %6793 = vmatpush.xpose.msra.mxu0 0.0
        %6794 = vmatpush.xpose.msra.mxu0 0.0
        %6795 = vmatpush.xpose.msra.mxu0 0.0
        %6796 = vmatpush.xpose.msra.mxu0 0.0
        %6797 = vmatpush.xpose.msra.mxu0 0.0
        %6798 = vmatpush.xpose.msra.mxu0 0.0
        %6799 = vmatpush.xpose.msra.mxu0 0.0
        %6800 = vmatpush.xpose.msra.mxu0 %v957
        %6801 = vmatpush.xpose.msra.mxu0 %v573
        %6802 = vmatmul.f32.gmra.mxu0 %v1498
        %v6803 = vpop.f32.mrf.mxu0
        %v6804 = vadd.f32 %v6784, %v6803
        %6805 = vdwg.mxu0
        %6806 = vmatpush.xpose.msra.mxu0 0.0
        %6807 = vmatpush.xpose.msra.mxu0 0.0
        %6808 = vmatpush.xpose.msra.mxu0 0.0
        %6809 = vmatpush.xpose.msra.mxu0 0.0
        %6810 = vmatpush.xpose.msra.mxu0 0.0
        %6811 = vmatpush.xpose.msra.mxu0 0.0
        %6812 = vmatpush.xpose.msra.mxu0 0.0
        %6813 = vmatpush.xpose.msra.mxu0 0.0
        %6814 = vmatpush.xpose.msra.mxu0 0.0
        %6815 = vmatpush.xpose.msra.mxu0 0.0
        %6816 = vmatpush.xpose.msra.mxu0 0.0
        %6817 = vmatpush.xpose.msra.mxu0 0.0
        %6818 = vmatpush.xpose.msra.mxu0 0.0
        %6819 = vmatpush.xpose.msra.mxu0 0.0
        %6820 = vmatpush.xpose.msra.mxu0 %v958
        %6821 = vmatpush.xpose.msra.mxu0 %v574
        %6822 = vmatmul.f32.gmra.mxu0 %v1499
        %v6823 = vpop.f32.mrf.mxu0
        %v6824 = vadd.f32 %v6804, %v6823
        %6825 = vdwg.mxu0
        %6826 = vmatpush.xpose.msra.mxu0 0.0
        %6827 = vmatpush.xpose.msra.mxu0 0.0
        %6828 = vmatpush.xpose.msra.mxu0 0.0
        %6829 = vmatpush.xpose.msra.mxu0 0.0
        %6830 = vmatpush.xpose.msra.mxu0 0.0
        %6831 = vmatpush.xpose.msra.mxu0 0.0
        %6832 = vmatpush.xpose.msra.mxu0 0.0
        %6833 = vmatpush.xpose.msra.mxu0 0.0
        %6834 = vmatpush.xpose.msra.mxu0 0.0
        %6835 = vmatpush.xpose.msra.mxu0 0.0
        %6836 = vmatpush.xpose.msra.mxu0 0.0
        %6837 = vmatpush.xpose.msra.mxu0 0.0
        %6838 = vmatpush.xpose.msra.mxu0 0.0
        %6839 = vmatpush.xpose.msra.mxu0 0.0
        %6840 = vmatpush.xpose.msra.mxu0 %v959
        %6841 = vmatpush.xpose.msra.mxu0 %v575
        %6842 = vmatmul.f32.gmra.mxu0 %v1500
        %v6843 = vpop.f32.mrf.mxu0
        %v6844 = vadd.f32 %v6824, %v6843
        %6845 = vdwg.mxu0
        %6846 = vmatpush.xpose.msra.mxu0 0.0
        %6847 = vmatpush.xpose.msra.mxu0 0.0
        %6848 = vmatpush.xpose.msra.mxu0 0.0
        %6849 = vmatpush.xpose.msra.mxu0 0.0
        %6850 = vmatpush.xpose.msra.mxu0 0.0
        %6851 = vmatpush.xpose.msra.mxu0 0.0
        %6852 = vmatpush.xpose.msra.mxu0 0.0
        %6853 = vmatpush.xpose.msra.mxu0 0.0
        %6854 = vmatpush.xpose.msra.mxu0 0.0
        %6855 = vmatpush.xpose.msra.mxu0 0.0
        %6856 = vmatpush.xpose.msra.mxu0 0.0
        %6857 = vmatpush.xpose.msra.mxu0 0.0
        %6858 = vmatpush.xpose.msra.mxu0 0.0
        %6859 = vmatpush.xpose.msra.mxu0 0.0
        %6860 = vmatpush.xpose.msra.mxu0 %v960
        %6861 = vmatpush.xpose.msra.mxu0 %v576
        %6862 = vmatmul.f32.gmra.mxu0 %v1501
        %v6863 = vpop.f32.mrf.mxu0
        %v6864 = vadd.f32 %v6844, %v6863
        %6865 = vdwg.mxu0
        %6866 = vmatpush.xpose.msra.mxu0 0.0
        %6867 = vmatpush.xpose.msra.mxu0 0.0
        %6868 = vmatpush.xpose.msra.mxu0 0.0
        %6869 = vmatpush.xpose.msra.mxu0 0.0
        %6870 = vmatpush.xpose.msra.mxu0 0.0
        %6871 = vmatpush.xpose.msra.mxu0 0.0
        %6872 = vmatpush.xpose.msra.mxu0 0.0
        %6873 = vmatpush.xpose.msra.mxu0 0.0
        %6874 = vmatpush.xpose.msra.mxu0 0.0
        %6875 = vmatpush.xpose.msra.mxu0 0.0
        %6876 = vmatpush.xpose.msra.mxu0 0.0
        %6877 = vmatpush.xpose.msra.mxu0 0.0
        %6878 = vmatpush.xpose.msra.mxu0 0.0
        %6879 = vmatpush.xpose.msra.mxu0 0.0
        %6880 = vmatpush.xpose.msra.mxu0 %v961
        %6881 = vmatpush.xpose.msra.mxu0 %v577
        %6882 = vmatmul.f32.gmra.mxu0 %v1504
        %v6883 = vpop.f32.mrf.mxu0
        %v6884 = vadd.f32 %v6864, %v6883
        %6885 = vdwg.mxu0
        %6886 = vmatpush.xpose.msra.mxu0 0.0
        %6887 = vmatpush.xpose.msra.mxu0 0.0
        %6888 = vmatpush.xpose.msra.mxu0 0.0
        %6889 = vmatpush.xpose.msra.mxu0 0.0
        %6890 = vmatpush.xpose.msra.mxu0 0.0
        %6891 = vmatpush.xpose.msra.mxu0 0.0
        %6892 = vmatpush.xpose.msra.mxu0 0.0
        %6893 = vmatpush.xpose.msra.mxu0 0.0
        %6894 = vmatpush.xpose.msra.mxu0 0.0
        %6895 = vmatpush.xpose.msra.mxu0 0.0
        %6896 = vmatpush.xpose.msra.mxu0 0.0
        %6897 = vmatpush.xpose.msra.mxu0 0.0
        %6898 = vmatpush.xpose.msra.mxu0 0.0
        %6899 = vmatpush.xpose.msra.mxu0 0.0
        %6900 = vmatpush.xpose.msra.mxu0 %v962
        %6901 = vmatpush.xpose.msra.mxu0 %v578
        %6902 = vmatmul.f32.gmra.mxu0 %v1505
        %v6903 = vpop.f32.mrf.mxu0
        %v6904 = vadd.f32 %v6884, %v6903
        %6905 = vdwg.mxu0
        %6906 = vmatpush.xpose.msra.mxu0 0.0
        %6907 = vmatpush.xpose.msra.mxu0 0.0
        %6908 = vmatpush.xpose.msra.mxu0 0.0
        %6909 = vmatpush.xpose.msra.mxu0 0.0
        %6910 = vmatpush.xpose.msra.mxu0 0.0
        %6911 = vmatpush.xpose.msra.mxu0 0.0
        %6912 = vmatpush.xpose.msra.mxu0 0.0
        %6913 = vmatpush.xpose.msra.mxu0 0.0
        %6914 = vmatpush.xpose.msra.mxu0 0.0
        %6915 = vmatpush.xpose.msra.mxu0 0.0
        %6916 = vmatpush.xpose.msra.mxu0 0.0
        %6917 = vmatpush.xpose.msra.mxu0 0.0
        %6918 = vmatpush.xpose.msra.mxu0 0.0
        %6919 = vmatpush.xpose.msra.mxu0 0.0
        %6920 = vmatpush.xpose.msra.mxu0 %v963
        %6921 = vmatpush.xpose.msra.mxu0 %v579
        %6922 = vmatmul.f32.gmra.mxu0 %v1506
        %v6923 = vpop.f32.mrf.mxu0
        %v6924 = vadd.f32 %v6904, %v6923
        %6925 = vdwg.mxu0
        %6926 = vmatpush.xpose.msra.mxu0 0.0
        %6927 = vmatpush.xpose.msra.mxu0 0.0
        %6928 = vmatpush.xpose.msra.mxu0 0.0
        %6929 = vmatpush.xpose.msra.mxu0 0.0
        %6930 = vmatpush.xpose.msra.mxu0 0.0
        %6931 = vmatpush.xpose.msra.mxu0 0.0
        %6932 = vmatpush.xpose.msra.mxu0 0.0
        %6933 = vmatpush.xpose.msra.mxu0 0.0
        %6934 = vmatpush.xpose.msra.mxu0 0.0
        %6935 = vmatpush.xpose.msra.mxu0 0.0
        %6936 = vmatpush.xpose.msra.mxu0 0.0
        %6937 = vmatpush.xpose.msra.mxu0 0.0
        %6938 = vmatpush.xpose.msra.mxu0 0.0
        %6939 = vmatpush.xpose.msra.mxu0 0.0
        %6940 = vmatpush.xpose.msra.mxu0 %v964
        %6941 = vmatpush.xpose.msra.mxu0 %v580
        %6942 = vmatmul.f32.gmra.mxu0 %v1507
        %v6943 = vpop.f32.mrf.mxu0
        %v6944 = vadd.f32 %v6924, %v6943
        %6945 = vdwg.mxu0
        %6946 = vmatpush.xpose.msra.mxu0 0.0
        %6947 = vmatpush.xpose.msra.mxu0 0.0
        %6948 = vmatpush.xpose.msra.mxu0 0.0
        %6949 = vmatpush.xpose.msra.mxu0 0.0
        %6950 = vmatpush.xpose.msra.mxu0 0.0
        %6951 = vmatpush.xpose.msra.mxu0 0.0
        %6952 = vmatpush.xpose.msra.mxu0 0.0
        %6953 = vmatpush.xpose.msra.mxu0 0.0
        %6954 = vmatpush.xpose.msra.mxu0 0.0
        %6955 = vmatpush.xpose.msra.mxu0 0.0
        %6956 = vmatpush.xpose.msra.mxu0 0.0
        %6957 = vmatpush.xpose.msra.mxu0 0.0
        %6958 = vmatpush.xpose.msra.mxu0 0.0
        %6959 = vmatpush.xpose.msra.mxu0 0.0
        %6960 = vmatpush.xpose.msra.mxu0 %v965
        %6961 = vmatpush.xpose.msra.mxu0 %v581
        %6962 = vmatmul.f32.gmra.mxu0 %v1508
        %v6963 = vpop.f32.mrf.mxu0
        %v6964 = vadd.f32 %v6944, %v6963
        %6965 = vdwg.mxu0
        %6966 = vmatpush.xpose.msra.mxu0 0.0
        %6967 = vmatpush.xpose.msra.mxu0 0.0
        %6968 = vmatpush.xpose.msra.mxu0 0.0
        %6969 = vmatpush.xpose.msra.mxu0 0.0
        %6970 = vmatpush.xpose.msra.mxu0 0.0
        %6971 = vmatpush.xpose.msra.mxu0 0.0
        %6972 = vmatpush.xpose.msra.mxu0 0.0
        %6973 = vmatpush.xpose.msra.mxu0 0.0
        %6974 = vmatpush.xpose.msra.mxu0 0.0
        %6975 = vmatpush.xpose.msra.mxu0 0.0
        %6976 = vmatpush.xpose.msra.mxu0 0.0
        %6977 = vmatpush.xpose.msra.mxu0 0.0
        %6978 = vmatpush.xpose.msra.mxu0 0.0
        %6979 = vmatpush.xpose.msra.mxu0 0.0
        %6980 = vmatpush.xpose.msra.mxu0 %v966
        %6981 = vmatpush.xpose.msra.mxu0 %v582
        %6982 = vmatmul.f32.gmra.mxu0 %v1509
        %v6983 = vpop.f32.mrf.mxu0
        %v6984 = vadd.f32 %v6964, %v6983
        %6985 = vdwg.mxu0
        %6986 = vmatpush.xpose.msra.mxu0 0.0
        %6987 = vmatpush.xpose.msra.mxu0 0.0
        %6988 = vmatpush.xpose.msra.mxu0 0.0
        %6989 = vmatpush.xpose.msra.mxu0 0.0
        %6990 = vmatpush.xpose.msra.mxu0 0.0
        %6991 = vmatpush.xpose.msra.mxu0 0.0
        %6992 = vmatpush.xpose.msra.mxu0 0.0
        %6993 = vmatpush.xpose.msra.mxu0 0.0
        %6994 = vmatpush.xpose.msra.mxu0 0.0
        %6995 = vmatpush.xpose.msra.mxu0 0.0
        %6996 = vmatpush.xpose.msra.mxu0 0.0
        %6997 = vmatpush.xpose.msra.mxu0 0.0
        %6998 = vmatpush.xpose.msra.mxu0 0.0
        %6999 = vmatpush.xpose.msra.mxu0 0.0
        %7000 = vmatpush.xpose.msra.mxu0 %v967
        %7001 = vmatpush.xpose.msra.mxu0 %v583
        %7002 = vmatmul.f32.gmra.mxu0 %v1510
        %v7003 = vpop.f32.mrf.mxu0
        %v7004 = vadd.f32 %v6984, %v7003
        %7005 = vdwg.mxu0
        %7006 = vmatpush.xpose.msra.mxu0 0.0
        %7007 = vmatpush.xpose.msra.mxu0 0.0
        %7008 = vmatpush.xpose.msra.mxu0 0.0
        %7009 = vmatpush.xpose.msra.mxu0 0.0
        %7010 = vmatpush.xpose.msra.mxu0 0.0
        %7011 = vmatpush.xpose.msra.mxu0 0.0
        %7012 = vmatpush.xpose.msra.mxu0 0.0
        %7013 = vmatpush.xpose.msra.mxu0 0.0
        %7014 = vmatpush.xpose.msra.mxu0 0.0
        %7015 = vmatpush.xpose.msra.mxu0 0.0
        %7016 = vmatpush.xpose.msra.mxu0 0.0
        %7017 = vmatpush.xpose.msra.mxu0 0.0
        %7018 = vmatpush.xpose.msra.mxu0 0.0
        %7019 = vmatpush.xpose.msra.mxu0 0.0
        %7020 = vmatpush.xpose.msra.mxu0 %v968
        %7021 = vmatpush.xpose.msra.mxu0 %v584
        %7022 = vmatmul.f32.gmra.mxu0 %v1511
        %v7023 = vpop.f32.mrf.mxu0
        %v7024 = vadd.f32 %v7004, %v7023
        %7025 = vdwg.mxu0
        %7026 = vmatpush.xpose.msra.mxu0 0.0
        %7027 = vmatpush.xpose.msra.mxu0 0.0
        %7028 = vmatpush.xpose.msra.mxu0 0.0
        %7029 = vmatpush.xpose.msra.mxu0 0.0
        %7030 = vmatpush.xpose.msra.mxu0 0.0
        %7031 = vmatpush.xpose.msra.mxu0 0.0
        %7032 = vmatpush.xpose.msra.mxu0 0.0
        %7033 = vmatpush.xpose.msra.mxu0 0.0
        %7034 = vmatpush.xpose.msra.mxu0 0.0
        %7035 = vmatpush.xpose.msra.mxu0 0.0
        %7036 = vmatpush.xpose.msra.mxu0 0.0
        %7037 = vmatpush.xpose.msra.mxu0 0.0
        %7038 = vmatpush.xpose.msra.mxu0 0.0
        %7039 = vmatpush.xpose.msra.mxu0 0.0
        %7040 = vmatpush.xpose.msra.mxu0 %v969
        %7041 = vmatpush.xpose.msra.mxu0 %v585
        %7042 = vmatmul.f32.gmra.mxu0 %v1514
        %v7043 = vpop.f32.mrf.mxu0
        %v7044 = vadd.f32 %v7024, %v7043
        %7045 = vdwg.mxu0
        %7046 = vmatpush.xpose.msra.mxu0 0.0
        %7047 = vmatpush.xpose.msra.mxu0 0.0
        %7048 = vmatpush.xpose.msra.mxu0 0.0
        %7049 = vmatpush.xpose.msra.mxu0 0.0
        %7050 = vmatpush.xpose.msra.mxu0 0.0
        %7051 = vmatpush.xpose.msra.mxu0 0.0
        %7052 = vmatpush.xpose.msra.mxu0 0.0
        %7053 = vmatpush.xpose.msra.mxu0 0.0
        %7054 = vmatpush.xpose.msra.mxu0 0.0
        %7055 = vmatpush.xpose.msra.mxu0 0.0
        %7056 = vmatpush.xpose.msra.mxu0 0.0
        %7057 = vmatpush.xpose.msra.mxu0 0.0
        %7058 = vmatpush.xpose.msra.mxu0 0.0
        %7059 = vmatpush.xpose.msra.mxu0 0.0
        %7060 = vmatpush.xpose.msra.mxu0 %v970
        %7061 = vmatpush.xpose.msra.mxu0 %v586
        %7062 = vmatmul.f32.gmra.mxu0 %v1515
        %v7063 = vpop.f32.mrf.mxu0
        %v7064 = vadd.f32 %v7044, %v7063
        %7065 = vdwg.mxu0
        %7066 = vmatpush.xpose.msra.mxu0 0.0
        %7067 = vmatpush.xpose.msra.mxu0 0.0
        %7068 = vmatpush.xpose.msra.mxu0 0.0
        %7069 = vmatpush.xpose.msra.mxu0 0.0
        %7070 = vmatpush.xpose.msra.mxu0 0.0
        %7071 = vmatpush.xpose.msra.mxu0 0.0
        %7072 = vmatpush.xpose.msra.mxu0 0.0
        %7073 = vmatpush.xpose.msra.mxu0 0.0
        %7074 = vmatpush.xpose.msra.mxu0 0.0
        %7075 = vmatpush.xpose.msra.mxu0 0.0
        %7076 = vmatpush.xpose.msra.mxu0 0.0
        %7077 = vmatpush.xpose.msra.mxu0 0.0
        %7078 = vmatpush.xpose.msra.mxu0 0.0
        %7079 = vmatpush.xpose.msra.mxu0 0.0
        %7080 = vmatpush.xpose.msra.mxu0 %v971
        %7081 = vmatpush.xpose.msra.mxu0 %v587
        %7082 = vmatmul.f32.gmra.mxu0 %v1516
        %v7083 = vpop.f32.mrf.mxu0
        %v7084 = vadd.f32 %v7064, %v7083
        %7085 = vdwg.mxu0
        %7086 = vmatpush.xpose.msra.mxu0 0.0
        %7087 = vmatpush.xpose.msra.mxu0 0.0
        %7088 = vmatpush.xpose.msra.mxu0 0.0
        %7089 = vmatpush.xpose.msra.mxu0 0.0
        %7090 = vmatpush.xpose.msra.mxu0 0.0
        %7091 = vmatpush.xpose.msra.mxu0 0.0
        %7092 = vmatpush.xpose.msra.mxu0 0.0
        %7093 = vmatpush.xpose.msra.mxu0 0.0
        %7094 = vmatpush.xpose.msra.mxu0 0.0
        %7095 = vmatpush.xpose.msra.mxu0 0.0
        %7096 = vmatpush.xpose.msra.mxu0 0.0
        %7097 = vmatpush.xpose.msra.mxu0 0.0
        %7098 = vmatpush.xpose.msra.mxu0 0.0
        %7099 = vmatpush.xpose.msra.mxu0 0.0
        %7100 = vmatpush.xpose.msra.mxu0 %v972
        %7101 = vmatpush.xpose.msra.mxu0 %v588
        %7102 = vmatmul.f32.gmra.mxu0 %v1517
        %v7103 = vpop.f32.mrf.mxu0
        %v7104 = vadd.f32 %v7084, %v7103
        %7105 = vdwg.mxu0
        %7106 = vmatpush.xpose.msra.mxu0 0.0
        %7107 = vmatpush.xpose.msra.mxu0 0.0
        %7108 = vmatpush.xpose.msra.mxu0 0.0
        %7109 = vmatpush.xpose.msra.mxu0 0.0
        %7110 = vmatpush.xpose.msra.mxu0 0.0
        %7111 = vmatpush.xpose.msra.mxu0 0.0
        %7112 = vmatpush.xpose.msra.mxu0 0.0
        %7113 = vmatpush.xpose.msra.mxu0 0.0
        %7114 = vmatpush.xpose.msra.mxu0 0.0
        %7115 = vmatpush.xpose.msra.mxu0 0.0
        %7116 = vmatpush.xpose.msra.mxu0 0.0
        %7117 = vmatpush.xpose.msra.mxu0 0.0
        %7118 = vmatpush.xpose.msra.mxu0 0.0
        %7119 = vmatpush.xpose.msra.mxu0 0.0
        %7120 = vmatpush.xpose.msra.mxu0 %v973
        %7121 = vmatpush.xpose.msra.mxu0 %v589
        %7122 = vmatmul.f32.gmra.mxu0 %v1518
        %v7123 = vpop.f32.mrf.mxu0
        %v7124 = vadd.f32 %v7104, %v7123
        %7125 = vdwg.mxu0
        %7126 = vmatpush.xpose.msra.mxu0 0.0
        %7127 = vmatpush.xpose.msra.mxu0 0.0
        %7128 = vmatpush.xpose.msra.mxu0 0.0
        %7129 = vmatpush.xpose.msra.mxu0 0.0
        %7130 = vmatpush.xpose.msra.mxu0 0.0
        %7131 = vmatpush.xpose.msra.mxu0 0.0
        %7132 = vmatpush.xpose.msra.mxu0 0.0
        %7133 = vmatpush.xpose.msra.mxu0 0.0
        %7134 = vmatpush.xpose.msra.mxu0 0.0
        %7135 = vmatpush.xpose.msra.mxu0 0.0
        %7136 = vmatpush.xpose.msra.mxu0 0.0
        %7137 = vmatpush.xpose.msra.mxu0 0.0
        %7138 = vmatpush.xpose.msra.mxu0 0.0
        %7139 = vmatpush.xpose.msra.mxu0 0.0
        %7140 = vmatpush.xpose.msra.mxu0 %v974
        %7141 = vmatpush.xpose.msra.mxu0 %v590
        %7142 = vmatmul.f32.gmra.mxu0 %v1519
        %v7143 = vpop.f32.mrf.mxu0
        %v7144 = vadd.f32 %v7124, %v7143
        %7145 = vdwg.mxu0
        %7146 = vmatpush.xpose.msra.mxu0 0.0
        %7147 = vmatpush.xpose.msra.mxu0 0.0
        %7148 = vmatpush.xpose.msra.mxu0 0.0
        %7149 = vmatpush.xpose.msra.mxu0 0.0
        %7150 = vmatpush.xpose.msra.mxu0 0.0
        %7151 = vmatpush.xpose.msra.mxu0 0.0
        %7152 = vmatpush.xpose.msra.mxu0 0.0
        %7153 = vmatpush.xpose.msra.mxu0 0.0
        %7154 = vmatpush.xpose.msra.mxu0 0.0
        %7155 = vmatpush.xpose.msra.mxu0 0.0
        %7156 = vmatpush.xpose.msra.mxu0 0.0
        %7157 = vmatpush.xpose.msra.mxu0 0.0
        %7158 = vmatpush.xpose.msra.mxu0 0.0
        %7159 = vmatpush.xpose.msra.mxu0 0.0
        %7160 = vmatpush.xpose.msra.mxu0 %v975
        %7161 = vmatpush.xpose.msra.mxu0 %v591
        %7162 = vmatmul.f32.gmra.mxu0 %v1520
        %v7163 = vpop.f32.mrf.mxu0
        %v7164 = vadd.f32 %v7144, %v7163
        %7165 = vdwg.mxu0
        %7166 = vmatpush.xpose.msra.mxu0 0.0
        %7167 = vmatpush.xpose.msra.mxu0 0.0
        %7168 = vmatpush.xpose.msra.mxu0 0.0
        %7169 = vmatpush.xpose.msra.mxu0 0.0
        %7170 = vmatpush.xpose.msra.mxu0 0.0
        %7171 = vmatpush.xpose.msra.mxu0 0.0
        %7172 = vmatpush.xpose.msra.mxu0 0.0
        %7173 = vmatpush.xpose.msra.mxu0 0.0
        %7174 = vmatpush.xpose.msra.mxu0 0.0
        %7175 = vmatpush.xpose.msra.mxu0 0.0
        %7176 = vmatpush.xpose.msra.mxu0 0.0
        %7177 = vmatpush.xpose.msra.mxu0 0.0
        %7178 = vmatpush.xpose.msra.mxu0 0.0
        %7179 = vmatpush.xpose.msra.mxu0 0.0
        %7180 = vmatpush.xpose.msra.mxu0 %v976
        %7181 = vmatpush.xpose.msra.mxu0 %v592
        %7182 = vmatmul.f32.gmra.mxu0 %v1521
        %v7183 = vpop.f32.mrf.mxu0
        %v7184 = vadd.f32 %v7164, %v7183
        %7185 = vdwg.mxu0
        %7186 = vmatpush.xpose.msra.mxu0 0.0
        %7187 = vmatpush.xpose.msra.mxu0 0.0
        %7188 = vmatpush.xpose.msra.mxu0 0.0
        %7189 = vmatpush.xpose.msra.mxu0 0.0
        %7190 = vmatpush.xpose.msra.mxu0 0.0
        %7191 = vmatpush.xpose.msra.mxu0 0.0
        %7192 = vmatpush.xpose.msra.mxu0 0.0
        %7193 = vmatpush.xpose.msra.mxu0 0.0
        %7194 = vmatpush.xpose.msra.mxu0 0.0
        %7195 = vmatpush.xpose.msra.mxu0 0.0
        %7196 = vmatpush.xpose.msra.mxu0 0.0
        %7197 = vmatpush.xpose.msra.mxu0 0.0
        %7198 = vmatpush.xpose.msra.mxu0 0.0
        %7199 = vmatpush.xpose.msra.mxu0 0.0
        %7200 = vmatpush.xpose.msra.mxu0 %v977
        %7201 = vmatpush.xpose.msra.mxu0 %v593
        %7202 = vmatmul.f32.gmra.mxu0 %v1524
        %v7203 = vpop.f32.mrf.mxu0
        %v7204 = vadd.f32 %v7184, %v7203
        %7205 = vdwg.mxu0
        %7206 = vmatpush.xpose.msra.mxu0 0.0
        %7207 = vmatpush.xpose.msra.mxu0 0.0
        %7208 = vmatpush.xpose.msra.mxu0 0.0
        %7209 = vmatpush.xpose.msra.mxu0 0.0
        %7210 = vmatpush.xpose.msra.mxu0 0.0
        %7211 = vmatpush.xpose.msra.mxu0 0.0
        %7212 = vmatpush.xpose.msra.mxu0 0.0
        %7213 = vmatpush.xpose.msra.mxu0 0.0
        %7214 = vmatpush.xpose.msra.mxu0 0.0
        %7215 = vmatpush.xpose.msra.mxu0 0.0
        %7216 = vmatpush.xpose.msra.mxu0 0.0
        %7217 = vmatpush.xpose.msra.mxu0 0.0
        %7218 = vmatpush.xpose.msra.mxu0 0.0
        %7219 = vmatpush.xpose.msra.mxu0 0.0
        %7220 = vmatpush.xpose.msra.mxu0 %v978
        %7221 = vmatpush.xpose.msra.mxu0 %v594
        %7222 = vmatmul.f32.gmra.mxu0 %v1525
        %v7223 = vpop.f32.mrf.mxu0
        %v7224 = vadd.f32 %v7204, %v7223
        %7225 = vdwg.mxu0
        %7226 = vmatpush.xpose.msra.mxu0 0.0
        %7227 = vmatpush.xpose.msra.mxu0 0.0
        %7228 = vmatpush.xpose.msra.mxu0 0.0
        %7229 = vmatpush.xpose.msra.mxu0 0.0
        %7230 = vmatpush.xpose.msra.mxu0 0.0
        %7231 = vmatpush.xpose.msra.mxu0 0.0
        %7232 = vmatpush.xpose.msra.mxu0 0.0
        %7233 = vmatpush.xpose.msra.mxu0 0.0
        %7234 = vmatpush.xpose.msra.mxu0 0.0
        %7235 = vmatpush.xpose.msra.mxu0 0.0
        %7236 = vmatpush.xpose.msra.mxu0 0.0
        %7237 = vmatpush.xpose.msra.mxu0 0.0
        %7238 = vmatpush.xpose.msra.mxu0 0.0
        %7239 = vmatpush.xpose.msra.mxu0 0.0
        %7240 = vmatpush.xpose.msra.mxu0 %v979
        %7241 = vmatpush.xpose.msra.mxu0 %v595
        %7242 = vmatmul.f32.gmra.mxu0 %v1526
        %v7243 = vpop.f32.mrf.mxu0
        %v7244 = vadd.f32 %v7224, %v7243
        %7245 = vdwg.mxu0
        %7246 = vmatpush.xpose.msra.mxu0 0.0
        %7247 = vmatpush.xpose.msra.mxu0 0.0
        %7248 = vmatpush.xpose.msra.mxu0 0.0
        %7249 = vmatpush.xpose.msra.mxu0 0.0
        %7250 = vmatpush.xpose.msra.mxu0 0.0
        %7251 = vmatpush.xpose.msra.mxu0 0.0
        %7252 = vmatpush.xpose.msra.mxu0 0.0
        %7253 = vmatpush.xpose.msra.mxu0 0.0
        %7254 = vmatpush.xpose.msra.mxu0 0.0
        %7255 = vmatpush.xpose.msra.mxu0 0.0
        %7256 = vmatpush.xpose.msra.mxu0 0.0
        %7257 = vmatpush.xpose.msra.mxu0 0.0
        %7258 = vmatpush.xpose.msra.mxu0 0.0
        %7259 = vmatpush.xpose.msra.mxu0 0.0
        %7260 = vmatpush.xpose.msra.mxu0 %v980
        %7261 = vmatpush.xpose.msra.mxu0 %v596
        %7262 = vmatmul.f32.gmra.mxu0 %v1527
        %v7263 = vpop.f32.mrf.mxu0
        %v7264 = vadd.f32 %v7244, %v7263
        %7265 = vdwg.mxu0
        %7266 = vmatpush.xpose.msra.mxu0 0.0
        %7267 = vmatpush.xpose.msra.mxu0 0.0
        %7268 = vmatpush.xpose.msra.mxu0 0.0
        %7269 = vmatpush.xpose.msra.mxu0 0.0
        %7270 = vmatpush.xpose.msra.mxu0 0.0
        %7271 = vmatpush.xpose.msra.mxu0 0.0
        %7272 = vmatpush.xpose.msra.mxu0 0.0
        %7273 = vmatpush.xpose.msra.mxu0 0.0
        %7274 = vmatpush.xpose.msra.mxu0 0.0
        %7275 = vmatpush.xpose.msra.mxu0 0.0
        %7276 = vmatpush.xpose.msra.mxu0 0.0
        %7277 = vmatpush.xpose.msra.mxu0 0.0
        %7278 = vmatpush.xpose.msra.mxu0 0.0
        %7279 = vmatpush.xpose.msra.mxu0 0.0
        %7280 = vmatpush.xpose.msra.mxu0 %v981
        %7281 = vmatpush.xpose.msra.mxu0 %v597
        %7282 = vmatmul.f32.gmra.mxu0 %v1528
        %v7283 = vpop.f32.mrf.mxu0
        %v7284 = vadd.f32 %v7264, %v7283
        %7285 = vdwg.mxu0
        %7286 = vmatpush.xpose.msra.mxu0 0.0
        %7287 = vmatpush.xpose.msra.mxu0 0.0
        %7288 = vmatpush.xpose.msra.mxu0 0.0
        %7289 = vmatpush.xpose.msra.mxu0 0.0
        %7290 = vmatpush.xpose.msra.mxu0 0.0
        %7291 = vmatpush.xpose.msra.mxu0 0.0
        %7292 = vmatpush.xpose.msra.mxu0 0.0
        %7293 = vmatpush.xpose.msra.mxu0 0.0
        %7294 = vmatpush.xpose.msra.mxu0 0.0
        %7295 = vmatpush.xpose.msra.mxu0 0.0
        %7296 = vmatpush.xpose.msra.mxu0 0.0
        %7297 = vmatpush.xpose.msra.mxu0 0.0
        %7298 = vmatpush.xpose.msra.mxu0 0.0
        %7299 = vmatpush.xpose.msra.mxu0 0.0
        %7300 = vmatpush.xpose.msra.mxu0 %v982
        %7301 = vmatpush.xpose.msra.mxu0 %v598
        %7302 = vmatmul.f32.gmra.mxu0 %v1529
        %v7303 = vpop.f32.mrf.mxu0
        %v7304 = vadd.f32 %v7284, %v7303
        %7305 = vdwg.mxu0
        %7306 = vmatpush.xpose.msra.mxu0 0.0
        %7307 = vmatpush.xpose.msra.mxu0 0.0
        %7308 = vmatpush.xpose.msra.mxu0 0.0
        %7309 = vmatpush.xpose.msra.mxu0 0.0
        %7310 = vmatpush.xpose.msra.mxu0 0.0
        %7311 = vmatpush.xpose.msra.mxu0 0.0
        %7312 = vmatpush.xpose.msra.mxu0 0.0
        %7313 = vmatpush.xpose.msra.mxu0 0.0
        %7314 = vmatpush.xpose.msra.mxu0 0.0
        %7315 = vmatpush.xpose.msra.mxu0 0.0
        %7316 = vmatpush.xpose.msra.mxu0 0.0
        %7317 = vmatpush.xpose.msra.mxu0 0.0
        %7318 = vmatpush.xpose.msra.mxu0 0.0
        %7319 = vmatpush.xpose.msra.mxu0 0.0
        %7320 = vmatpush.xpose.msra.mxu0 %v983
        %7321 = vmatpush.xpose.msra.mxu0 %v599
        %7322 = vmatmul.f32.gmra.mxu0 %v1530
        %v7323 = vpop.f32.mrf.mxu0
        %v7324 = vadd.f32 %v7304, %v7323
        %7325 = vdwg.mxu0
        %7326 = vmatpush.xpose.msra.mxu0 0.0
        %7327 = vmatpush.xpose.msra.mxu0 0.0
        %7328 = vmatpush.xpose.msra.mxu0 0.0
        %7329 = vmatpush.xpose.msra.mxu0 0.0
        %7330 = vmatpush.xpose.msra.mxu0 0.0
        %7331 = vmatpush.xpose.msra.mxu0 0.0
        %7332 = vmatpush.xpose.msra.mxu0 0.0
        %7333 = vmatpush.xpose.msra.mxu0 0.0
        %7334 = vmatpush.xpose.msra.mxu0 0.0
        %7335 = vmatpush.xpose.msra.mxu0 0.0
        %7336 = vmatpush.xpose.msra.mxu0 0.0
        %7337 = vmatpush.xpose.msra.mxu0 0.0
        %7338 = vmatpush.xpose.msra.mxu0 0.0
        %7339 = vmatpush.xpose.msra.mxu0 0.0
        %7340 = vmatpush.xpose.msra.mxu0 %v984
        %7341 = vmatpush.xpose.msra.mxu0 %v600
        %7342 = vmatmul.f32.gmra.mxu0 %v1531
        %v7343 = vpop.f32.mrf.mxu0
        %v7344 = vadd.f32 %v7324, %v7343
        %7345 = vdwg.mxu0
        %7346 = vmatpush.xpose.msra.mxu0 0.0
        %7347 = vmatpush.xpose.msra.mxu0 0.0
        %7348 = vmatpush.xpose.msra.mxu0 0.0
        %7349 = vmatpush.xpose.msra.mxu0 0.0
        %7350 = vmatpush.xpose.msra.mxu0 0.0
        %7351 = vmatpush.xpose.msra.mxu0 0.0
        %7352 = vmatpush.xpose.msra.mxu0 0.0
        %7353 = vmatpush.xpose.msra.mxu0 0.0
        %7354 = vmatpush.xpose.msra.mxu0 0.0
        %7355 = vmatpush.xpose.msra.mxu0 0.0
        %7356 = vmatpush.xpose.msra.mxu0 0.0
        %7357 = vmatpush.xpose.msra.mxu0 0.0
        %7358 = vmatpush.xpose.msra.mxu0 0.0
        %7359 = vmatpush.xpose.msra.mxu0 0.0
        %7360 = vmatpush.xpose.msra.mxu0 %v985
        %7361 = vmatpush.xpose.msra.mxu0 %v601
        %7362 = vmatmul.f32.gmra.mxu0 %v1534
        %v7363 = vpop.f32.mrf.mxu0
        %v7364 = vadd.f32 %v7344, %v7363
        %7365 = vdwg.mxu0
        %7366 = vmatpush.xpose.msra.mxu0 0.0
        %7367 = vmatpush.xpose.msra.mxu0 0.0
        %7368 = vmatpush.xpose.msra.mxu0 0.0
        %7369 = vmatpush.xpose.msra.mxu0 0.0
        %7370 = vmatpush.xpose.msra.mxu0 0.0
        %7371 = vmatpush.xpose.msra.mxu0 0.0
        %7372 = vmatpush.xpose.msra.mxu0 0.0
        %7373 = vmatpush.xpose.msra.mxu0 0.0
        %7374 = vmatpush.xpose.msra.mxu0 0.0
        %7375 = vmatpush.xpose.msra.mxu0 0.0
        %7376 = vmatpush.xpose.msra.mxu0 0.0
        %7377 = vmatpush.xpose.msra.mxu0 0.0
        %7378 = vmatpush.xpose.msra.mxu0 0.0
        %7379 = vmatpush.xpose.msra.mxu0 0.0
        %7380 = vmatpush.xpose.msra.mxu0 %v986
        %7381 = vmatpush.xpose.msra.mxu0 %v602
        %7382 = vmatmul.f32.gmra.mxu0 %v1535
        %v7383 = vpop.f32.mrf.mxu0
        %v7384 = vadd.f32 %v7364, %v7383
        %7385 = vdwg.mxu0
        %7386 = vmatpush.xpose.msra.mxu0 0.0
        %7387 = vmatpush.xpose.msra.mxu0 0.0
        %7388 = vmatpush.xpose.msra.mxu0 0.0
        %7389 = vmatpush.xpose.msra.mxu0 0.0
        %7390 = vmatpush.xpose.msra.mxu0 0.0
        %7391 = vmatpush.xpose.msra.mxu0 0.0
        %7392 = vmatpush.xpose.msra.mxu0 0.0
        %7393 = vmatpush.xpose.msra.mxu0 0.0
        %7394 = vmatpush.xpose.msra.mxu0 0.0
        %7395 = vmatpush.xpose.msra.mxu0 0.0
        %7396 = vmatpush.xpose.msra.mxu0 0.0
        %7397 = vmatpush.xpose.msra.mxu0 0.0
        %7398 = vmatpush.xpose.msra.mxu0 0.0
        %7399 = vmatpush.xpose.msra.mxu0 0.0
        %7400 = vmatpush.xpose.msra.mxu0 %v987
        %7401 = vmatpush.xpose.msra.mxu0 %v603
        %7402 = vmatmul.f32.gmra.mxu0 %v1536
        %v7403 = vpop.f32.mrf.mxu0
        %v7404 = vadd.f32 %v7384, %v7403
        %7405 = vdwg.mxu0
        %7406 = vmatpush.xpose.msra.mxu0 0.0
        %7407 = vmatpush.xpose.msra.mxu0 0.0
        %7408 = vmatpush.xpose.msra.mxu0 0.0
        %7409 = vmatpush.xpose.msra.mxu0 0.0
        %7410 = vmatpush.xpose.msra.mxu0 0.0
        %7411 = vmatpush.xpose.msra.mxu0 0.0
        %7412 = vmatpush.xpose.msra.mxu0 0.0
        %7413 = vmatpush.xpose.msra.mxu0 0.0
        %7414 = vmatpush.xpose.msra.mxu0 0.0
        %7415 = vmatpush.xpose.msra.mxu0 0.0
        %7416 = vmatpush.xpose.msra.mxu0 0.0
        %7417 = vmatpush.xpose.msra.mxu0 0.0
        %7418 = vmatpush.xpose.msra.mxu0 0.0
        %7419 = vmatpush.xpose.msra.mxu0 0.0
        %7420 = vmatpush.xpose.msra.mxu0 %v988
        %7421 = vmatpush.xpose.msra.mxu0 %v604
        %7422 = vmatmul.f32.gmra.mxu0 %v1537
        %v7423 = vpop.f32.mrf.mxu0
        %v7424 = vadd.f32 %v7404, %v7423
        %7425 = vdwg.mxu0
        %7426 = vmatpush.xpose.msra.mxu0 0.0
        %7427 = vmatpush.xpose.msra.mxu0 0.0
        %7428 = vmatpush.xpose.msra.mxu0 0.0
        %7429 = vmatpush.xpose.msra.mxu0 0.0
        %7430 = vmatpush.xpose.msra.mxu0 0.0
        %7431 = vmatpush.xpose.msra.mxu0 0.0
        %7432 = vmatpush.xpose.msra.mxu0 0.0
        %7433 = vmatpush.xpose.msra.mxu0 0.0
        %7434 = vmatpush.xpose.msra.mxu0 0.0
        %7435 = vmatpush.xpose.msra.mxu0 0.0
        %7436 = vmatpush.xpose.msra.mxu0 0.0
        %7437 = vmatpush.xpose.msra.mxu0 0.0
        %7438 = vmatpush.xpose.msra.mxu0 0.0
        %7439 = vmatpush.xpose.msra.mxu0 0.0
        %7440 = vmatpush.xpose.msra.mxu0 %v989
        %7441 = vmatpush.xpose.msra.mxu0 %v605
        %7442 = vmatmul.f32.gmra.mxu0 %v1538
        %v7443 = vpop.f32.mrf.mxu0
        %v7444 = vadd.f32 %v7424, %v7443
        %7445 = vdwg.mxu0
        %7446 = vmatpush.xpose.msra.mxu0 0.0
        %7447 = vmatpush.xpose.msra.mxu0 0.0
        %7448 = vmatpush.xpose.msra.mxu0 0.0
        %7449 = vmatpush.xpose.msra.mxu0 0.0
        %7450 = vmatpush.xpose.msra.mxu0 0.0
        %7451 = vmatpush.xpose.msra.mxu0 0.0
        %7452 = vmatpush.xpose.msra.mxu0 0.0
        %7453 = vmatpush.xpose.msra.mxu0 0.0
        %7454 = vmatpush.xpose.msra.mxu0 0.0
        %7455 = vmatpush.xpose.msra.mxu0 0.0
        %7456 = vmatpush.xpose.msra.mxu0 0.0
        %7457 = vmatpush.xpose.msra.mxu0 0.0
        %7458 = vmatpush.xpose.msra.mxu0 0.0
        %7459 = vmatpush.xpose.msra.mxu0 0.0
        %7460 = vmatpush.xpose.msra.mxu0 %v990
        %7461 = vmatpush.xpose.msra.mxu0 %v606
        %7462 = vmatmul.f32.gmra.mxu0 %v1539
        %v7463 = vpop.f32.mrf.mxu0
        %v7464 = vadd.f32 %v7444, %v7463
        %7465 = vdwg.mxu0
        %7466 = vmatpush.xpose.msra.mxu0 0.0
        %7467 = vmatpush.xpose.msra.mxu0 0.0
        %7468 = vmatpush.xpose.msra.mxu0 0.0
        %7469 = vmatpush.xpose.msra.mxu0 0.0
        %7470 = vmatpush.xpose.msra.mxu0 0.0
        %7471 = vmatpush.xpose.msra.mxu0 0.0
        %7472 = vmatpush.xpose.msra.mxu0 0.0
        %7473 = vmatpush.xpose.msra.mxu0 0.0
        %7474 = vmatpush.xpose.msra.mxu0 0.0
        %7475 = vmatpush.xpose.msra.mxu0 0.0
        %7476 = vmatpush.xpose.msra.mxu0 0.0
        %7477 = vmatpush.xpose.msra.mxu0 0.0
        %7478 = vmatpush.xpose.msra.mxu0 0.0
        %7479 = vmatpush.xpose.msra.mxu0 0.0
        %7480 = vmatpush.xpose.msra.mxu0 %v991
        %7481 = vmatpush.xpose.msra.mxu0 %v607
        %7482 = vmatmul.f32.gmra.mxu0 %v1540
        %v7483 = vpop.f32.mrf.mxu0
        %v7484 = vadd.f32 %v7464, %v7483
        %7485 = vdwg.mxu0
        %7486 = vmatpush.xpose.msra.mxu0 0.0
        %7487 = vmatpush.xpose.msra.mxu0 0.0
        %7488 = vmatpush.xpose.msra.mxu0 0.0
        %7489 = vmatpush.xpose.msra.mxu0 0.0
        %7490 = vmatpush.xpose.msra.mxu0 0.0
        %7491 = vmatpush.xpose.msra.mxu0 0.0
        %7492 = vmatpush.xpose.msra.mxu0 0.0
        %7493 = vmatpush.xpose.msra.mxu0 0.0
        %7494 = vmatpush.xpose.msra.mxu0 0.0
        %7495 = vmatpush.xpose.msra.mxu0 0.0
        %7496 = vmatpush.xpose.msra.mxu0 0.0
        %7497 = vmatpush.xpose.msra.mxu0 0.0
        %7498 = vmatpush.xpose.msra.mxu0 0.0
        %7499 = vmatpush.xpose.msra.mxu0 0.0
        %7500 = vmatpush.xpose.msra.mxu0 %v992
        %7501 = vmatpush.xpose.msra.mxu0 %v608
        %7502 = vmatmul.f32.gmra.mxu0 %v1541
        %v7503 = vpop.f32.mrf.mxu0
        %v7504 = vadd.f32 %v7484, %v7503
        %7505 = vdwg.mxu0
        %7506 = vmatpush.xpose.msra.mxu0 0.0
        %7507 = vmatpush.xpose.msra.mxu0 0.0
        %7508 = vmatpush.xpose.msra.mxu0 0.0
        %7509 = vmatpush.xpose.msra.mxu0 0.0
        %7510 = vmatpush.xpose.msra.mxu0 0.0
        %7511 = vmatpush.xpose.msra.mxu0 0.0
        %7512 = vmatpush.xpose.msra.mxu0 0.0
        %7513 = vmatpush.xpose.msra.mxu0 0.0
        %7514 = vmatpush.xpose.msra.mxu0 0.0
        %7515 = vmatpush.xpose.msra.mxu0 0.0
        %7516 = vmatpush.xpose.msra.mxu0 0.0
        %7517 = vmatpush.xpose.msra.mxu0 0.0
        %7518 = vmatpush.xpose.msra.mxu0 0.0
        %7519 = vmatpush.xpose.msra.mxu0 0.0
        %7520 = vmatpush.xpose.msra.mxu0 %v993
        %7521 = vmatpush.xpose.msra.mxu0 %v609
        %7522 = vmatmul.f32.gmra.mxu0 %v1544
        %v7523 = vpop.f32.mrf.mxu0
        %v7524 = vadd.f32 %v7504, %v7523
        %7525 = vdwg.mxu0
        %7526 = vmatpush.xpose.msra.mxu0 0.0
        %7527 = vmatpush.xpose.msra.mxu0 0.0
        %7528 = vmatpush.xpose.msra.mxu0 0.0
        %7529 = vmatpush.xpose.msra.mxu0 0.0
        %7530 = vmatpush.xpose.msra.mxu0 0.0
        %7531 = vmatpush.xpose.msra.mxu0 0.0
        %7532 = vmatpush.xpose.msra.mxu0 0.0
        %7533 = vmatpush.xpose.msra.mxu0 0.0
        %7534 = vmatpush.xpose.msra.mxu0 0.0
        %7535 = vmatpush.xpose.msra.mxu0 0.0
        %7536 = vmatpush.xpose.msra.mxu0 0.0
        %7537 = vmatpush.xpose.msra.mxu0 0.0
        %7538 = vmatpush.xpose.msra.mxu0 0.0
        %7539 = vmatpush.xpose.msra.mxu0 0.0
        %7540 = vmatpush.xpose.msra.mxu0 %v994
        %7541 = vmatpush.xpose.msra.mxu0 %v610
        %7542 = vmatmul.f32.gmra.mxu0 %v1545
        %v7543 = vpop.f32.mrf.mxu0
        %v7544 = vadd.f32 %v7524, %v7543
        %7545 = vdwg.mxu0
        %7546 = vmatpush.xpose.msra.mxu0 0.0
        %7547 = vmatpush.xpose.msra.mxu0 0.0
        %7548 = vmatpush.xpose.msra.mxu0 0.0
        %7549 = vmatpush.xpose.msra.mxu0 0.0
        %7550 = vmatpush.xpose.msra.mxu0 0.0
        %7551 = vmatpush.xpose.msra.mxu0 0.0
        %7552 = vmatpush.xpose.msra.mxu0 0.0
        %7553 = vmatpush.xpose.msra.mxu0 0.0
        %7554 = vmatpush.xpose.msra.mxu0 0.0
        %7555 = vmatpush.xpose.msra.mxu0 0.0
        %7556 = vmatpush.xpose.msra.mxu0 0.0
        %7557 = vmatpush.xpose.msra.mxu0 0.0
        %7558 = vmatpush.xpose.msra.mxu0 0.0
        %7559 = vmatpush.xpose.msra.mxu0 0.0
        %7560 = vmatpush.xpose.msra.mxu0 %v995
        %7561 = vmatpush.xpose.msra.mxu0 %v611
        %7562 = vmatmul.f32.gmra.mxu0 %v1546
        %v7563 = vpop.f32.mrf.mxu0
        %v7564 = vadd.f32 %v7544, %v7563
        %7565 = vdwg.mxu0
        %7566 = vmatpush.xpose.msra.mxu0 0.0
        %7567 = vmatpush.xpose.msra.mxu0 0.0
        %7568 = vmatpush.xpose.msra.mxu0 0.0
        %7569 = vmatpush.xpose.msra.mxu0 0.0
        %7570 = vmatpush.xpose.msra.mxu0 0.0
        %7571 = vmatpush.xpose.msra.mxu0 0.0
        %7572 = vmatpush.xpose.msra.mxu0 0.0
        %7573 = vmatpush.xpose.msra.mxu0 0.0
        %7574 = vmatpush.xpose.msra.mxu0 0.0
        %7575 = vmatpush.xpose.msra.mxu0 0.0
        %7576 = vmatpush.xpose.msra.mxu0 0.0
        %7577 = vmatpush.xpose.msra.mxu0 0.0
        %7578 = vmatpush.xpose.msra.mxu0 0.0
        %7579 = vmatpush.xpose.msra.mxu0 0.0
        %7580 = vmatpush.xpose.msra.mxu0 %v996
        %7581 = vmatpush.xpose.msra.mxu0 %v612
        %7582 = vmatmul.f32.gmra.mxu0 %v1547
        %v7583 = vpop.f32.mrf.mxu0
        %v7584 = vadd.f32 %v7564, %v7583
        %7585 = vdwg.mxu0
        %7586 = vmatpush.xpose.msra.mxu0 0.0
        %7587 = vmatpush.xpose.msra.mxu0 0.0
        %7588 = vmatpush.xpose.msra.mxu0 0.0
        %7589 = vmatpush.xpose.msra.mxu0 0.0
        %7590 = vmatpush.xpose.msra.mxu0 0.0
        %7591 = vmatpush.xpose.msra.mxu0 0.0
        %7592 = vmatpush.xpose.msra.mxu0 0.0
        %7593 = vmatpush.xpose.msra.mxu0 0.0
        %7594 = vmatpush.xpose.msra.mxu0 0.0
        %7595 = vmatpush.xpose.msra.mxu0 0.0
        %7596 = vmatpush.xpose.msra.mxu0 0.0
        %7597 = vmatpush.xpose.msra.mxu0 0.0
        %7598 = vmatpush.xpose.msra.mxu0 0.0
        %7599 = vmatpush.xpose.msra.mxu0 0.0
        %7600 = vmatpush.xpose.msra.mxu0 %v997
        %7601 = vmatpush.xpose.msra.mxu0 %v613
        %7602 = vmatmul.f32.gmra.mxu0 %v1548
        %v7603 = vpop.f32.mrf.mxu0
        %v7604 = vadd.f32 %v7584, %v7603
        %7605 = vdwg.mxu0
        %7606 = vmatpush.xpose.msra.mxu0 0.0
        %7607 = vmatpush.xpose.msra.mxu0 0.0
        %7608 = vmatpush.xpose.msra.mxu0 0.0
        %7609 = vmatpush.xpose.msra.mxu0 0.0
        %7610 = vmatpush.xpose.msra.mxu0 0.0
        %7611 = vmatpush.xpose.msra.mxu0 0.0
        %7612 = vmatpush.xpose.msra.mxu0 0.0
        %7613 = vmatpush.xpose.msra.mxu0 0.0
        %7614 = vmatpush.xpose.msra.mxu0 0.0
        %7615 = vmatpush.xpose.msra.mxu0 0.0
        %7616 = vmatpush.xpose.msra.mxu0 0.0
        %7617 = vmatpush.xpose.msra.mxu0 0.0
        %7618 = vmatpush.xpose.msra.mxu0 0.0
        %7619 = vmatpush.xpose.msra.mxu0 0.0
        %7620 = vmatpush.xpose.msra.mxu0 %v998
        %7621 = vmatpush.xpose.msra.mxu0 %v614
        %7622 = vmatmul.f32.gmra.mxu0 %v1549
        %v7623 = vpop.f32.mrf.mxu0
        %v7624 = vadd.f32 %v7604, %v7623
        %7625 = vdwg.mxu0
        %7626 = vmatpush.xpose.msra.mxu0 0.0
        %7627 = vmatpush.xpose.msra.mxu0 0.0
        %7628 = vmatpush.xpose.msra.mxu0 0.0
        %7629 = vmatpush.xpose.msra.mxu0 0.0
        %7630 = vmatpush.xpose.msra.mxu0 0.0
        %7631 = vmatpush.xpose.msra.mxu0 0.0
        %7632 = vmatpush.xpose.msra.mxu0 0.0
        %7633 = vmatpush.xpose.msra.mxu0 0.0
        %7634 = vmatpush.xpose.msra.mxu0 0.0
        %7635 = vmatpush.xpose.msra.mxu0 0.0
        %7636 = vmatpush.xpose.msra.mxu0 0.0
        %7637 = vmatpush.xpose.msra.mxu0 0.0
        %7638 = vmatpush.xpose.msra.mxu0 0.0
        %7639 = vmatpush.xpose.msra.mxu0 0.0
        %7640 = vmatpush.xpose.msra.mxu0 %v999
        %7641 = vmatpush.xpose.msra.mxu0 %v615
        %7642 = vmatmul.f32.gmra.mxu0 %v1550
        %v7643 = vpop.f32.mrf.mxu0
        %v7644 = vadd.f32 %v7624, %v7643
        %7645 = vdwg.mxu0
        %7646 = vmatpush.xpose.msra.mxu0 0.0
        %7647 = vmatpush.xpose.msra.mxu0 0.0
        %7648 = vmatpush.xpose.msra.mxu0 0.0
        %7649 = vmatpush.xpose.msra.mxu0 0.0
        %7650 = vmatpush.xpose.msra.mxu0 0.0
        %7651 = vmatpush.xpose.msra.mxu0 0.0
        %7652 = vmatpush.xpose.msra.mxu0 0.0
        %7653 = vmatpush.xpose.msra.mxu0 0.0
        %7654 = vmatpush.xpose.msra.mxu0 0.0
        %7655 = vmatpush.xpose.msra.mxu0 0.0
        %7656 = vmatpush.xpose.msra.mxu0 0.0
        %7657 = vmatpush.xpose.msra.mxu0 0.0
        %7658 = vmatpush.xpose.msra.mxu0 0.0
        %7659 = vmatpush.xpose.msra.mxu0 0.0
        %7660 = vmatpush.xpose.msra.mxu0 %v1000
        %7661 = vmatpush.xpose.msra.mxu0 %v616
        %7662 = vmatmul.f32.gmra.mxu0 %v1551
        %v7663 = vpop.f32.mrf.mxu0
        %v7664 = vadd.f32 %v7644, %v7663
        %7665 = vdwg.mxu0
        %7666 = vmatpush.xpose.msra.mxu0 0.0
        %7667 = vmatpush.xpose.msra.mxu0 0.0
        %7668 = vmatpush.xpose.msra.mxu0 0.0
        %7669 = vmatpush.xpose.msra.mxu0 0.0
        %7670 = vmatpush.xpose.msra.mxu0 0.0
        %7671 = vmatpush.xpose.msra.mxu0 0.0
        %7672 = vmatpush.xpose.msra.mxu0 0.0
        %7673 = vmatpush.xpose.msra.mxu0 0.0
        %7674 = vmatpush.xpose.msra.mxu0 0.0
        %7675 = vmatpush.xpose.msra.mxu0 0.0
        %7676 = vmatpush.xpose.msra.mxu0 0.0
        %7677 = vmatpush.xpose.msra.mxu0 0.0
        %7678 = vmatpush.xpose.msra.mxu0 0.0
        %7679 = vmatpush.xpose.msra.mxu0 0.0
        %7680 = vmatpush.xpose.msra.mxu0 %v1001
        %7681 = vmatpush.xpose.msra.mxu0 %v617
        %7682 = vmatmul.f32.gmra.mxu0 %v1554
        %v7683 = vpop.f32.mrf.mxu0
        %v7684 = vadd.f32 %v7664, %v7683
        %7685 = vdwg.mxu0
        %7686 = vmatpush.xpose.msra.mxu0 0.0
        %7687 = vmatpush.xpose.msra.mxu0 0.0
        %7688 = vmatpush.xpose.msra.mxu0 0.0
        %7689 = vmatpush.xpose.msra.mxu0 0.0
        %7690 = vmatpush.xpose.msra.mxu0 0.0
        %7691 = vmatpush.xpose.msra.mxu0 0.0
        %7692 = vmatpush.xpose.msra.mxu0 0.0
        %7693 = vmatpush.xpose.msra.mxu0 0.0
        %7694 = vmatpush.xpose.msra.mxu0 0.0
        %7695 = vmatpush.xpose.msra.mxu0 0.0
        %7696 = vmatpush.xpose.msra.mxu0 0.0
        %7697 = vmatpush.xpose.msra.mxu0 0.0
        %7698 = vmatpush.xpose.msra.mxu0 0.0
        %7699 = vmatpush.xpose.msra.mxu0 0.0
        %7700 = vmatpush.xpose.msra.mxu0 %v1002
        %7701 = vmatpush.xpose.msra.mxu0 %v618
        %7702 = vmatmul.f32.gmra.mxu0 %v1555
        %v7703 = vpop.f32.mrf.mxu0
        %v7704 = vadd.f32 %v7684, %v7703
        %7705 = vdwg.mxu0
        %7706 = vmatpush.xpose.msra.mxu0 0.0
        %7707 = vmatpush.xpose.msra.mxu0 0.0
        %7708 = vmatpush.xpose.msra.mxu0 0.0
        %7709 = vmatpush.xpose.msra.mxu0 0.0
        %7710 = vmatpush.xpose.msra.mxu0 0.0
        %7711 = vmatpush.xpose.msra.mxu0 0.0
        %7712 = vmatpush.xpose.msra.mxu0 0.0
        %7713 = vmatpush.xpose.msra.mxu0 0.0
        %7714 = vmatpush.xpose.msra.mxu0 0.0
        %7715 = vmatpush.xpose.msra.mxu0 0.0
        %7716 = vmatpush.xpose.msra.mxu0 0.0
        %7717 = vmatpush.xpose.msra.mxu0 0.0
        %7718 = vmatpush.xpose.msra.mxu0 0.0
        %7719 = vmatpush.xpose.msra.mxu0 0.0
        %7720 = vmatpush.xpose.msra.mxu0 %v1003
        %7721 = vmatpush.xpose.msra.mxu0 %v619
        %7722 = vmatmul.f32.gmra.mxu0 %v1556
        %v7723 = vpop.f32.mrf.mxu0
        %v7724 = vadd.f32 %v7704, %v7723
        %7725 = vdwg.mxu0
        %7726 = vmatpush.xpose.msra.mxu0 0.0
        %7727 = vmatpush.xpose.msra.mxu0 0.0
        %7728 = vmatpush.xpose.msra.mxu0 0.0
        %7729 = vmatpush.xpose.msra.mxu0 0.0
        %7730 = vmatpush.xpose.msra.mxu0 0.0
        %7731 = vmatpush.xpose.msra.mxu0 0.0
        %7732 = vmatpush.xpose.msra.mxu0 0.0
        %7733 = vmatpush.xpose.msra.mxu0 0.0
        %7734 = vmatpush.xpose.msra.mxu0 0.0
        %7735 = vmatpush.xpose.msra.mxu0 0.0
        %7736 = vmatpush.xpose.msra.mxu0 0.0
        %7737 = vmatpush.xpose.msra.mxu0 0.0
        %7738 = vmatpush.xpose.msra.mxu0 0.0
        %7739 = vmatpush.xpose.msra.mxu0 0.0
        %7740 = vmatpush.xpose.msra.mxu0 %v1004
        %7741 = vmatpush.xpose.msra.mxu0 %v620
        %7742 = vmatmul.f32.gmra.mxu0 %v1557
        %v7743 = vpop.f32.mrf.mxu0
        %v7744 = vadd.f32 %v7724, %v7743
        %7745 = vdwg.mxu0
        %7746 = vmatpush.xpose.msra.mxu0 0.0
        %7747 = vmatpush.xpose.msra.mxu0 0.0
        %7748 = vmatpush.xpose.msra.mxu0 0.0
        %7749 = vmatpush.xpose.msra.mxu0 0.0
        %7750 = vmatpush.xpose.msra.mxu0 0.0
        %7751 = vmatpush.xpose.msra.mxu0 0.0
        %7752 = vmatpush.xpose.msra.mxu0 0.0
        %7753 = vmatpush.xpose.msra.mxu0 0.0
        %7754 = vmatpush.xpose.msra.mxu0 0.0
        %7755 = vmatpush.xpose.msra.mxu0 0.0
        %7756 = vmatpush.xpose.msra.mxu0 0.0
        %7757 = vmatpush.xpose.msra.mxu0 0.0
        %7758 = vmatpush.xpose.msra.mxu0 0.0
        %7759 = vmatpush.xpose.msra.mxu0 0.0
        %7760 = vmatpush.xpose.msra.mxu0 %v1005
        %7761 = vmatpush.xpose.msra.mxu0 %v621
        %7762 = vmatmul.f32.gmra.mxu0 %v1558
        %v7763 = vpop.f32.mrf.mxu0
        %v7764 = vadd.f32 %v7744, %v7763
        %7765 = vdwg.mxu0
        %7766 = vmatpush.xpose.msra.mxu0 0.0
        %7767 = vmatpush.xpose.msra.mxu0 0.0
        %7768 = vmatpush.xpose.msra.mxu0 0.0
        %7769 = vmatpush.xpose.msra.mxu0 0.0
        %7770 = vmatpush.xpose.msra.mxu0 0.0
        %7771 = vmatpush.xpose.msra.mxu0 0.0
        %7772 = vmatpush.xpose.msra.mxu0 0.0
        %7773 = vmatpush.xpose.msra.mxu0 0.0
        %7774 = vmatpush.xpose.msra.mxu0 0.0
        %7775 = vmatpush.xpose.msra.mxu0 0.0
        %7776 = vmatpush.xpose.msra.mxu0 0.0
        %7777 = vmatpush.xpose.msra.mxu0 0.0
        %7778 = vmatpush.xpose.msra.mxu0 0.0
        %7779 = vmatpush.xpose.msra.mxu0 0.0
        %7780 = vmatpush.xpose.msra.mxu0 %v1006
        %7781 = vmatpush.xpose.msra.mxu0 %v622
        %7782 = vmatmul.f32.gmra.mxu0 %v1559
        %v7783 = vpop.f32.mrf.mxu0
        %v7784 = vadd.f32 %v7764, %v7783
        %7785 = vdwg.mxu0
        %7786 = vmatpush.xpose.msra.mxu0 0.0
        %7787 = vmatpush.xpose.msra.mxu0 0.0
        %7788 = vmatpush.xpose.msra.mxu0 0.0
        %7789 = vmatpush.xpose.msra.mxu0 0.0
        %7790 = vmatpush.xpose.msra.mxu0 0.0
        %7791 = vmatpush.xpose.msra.mxu0 0.0
        %7792 = vmatpush.xpose.msra.mxu0 0.0
        %7793 = vmatpush.xpose.msra.mxu0 0.0
        %7794 = vmatpush.xpose.msra.mxu0 0.0
        %7795 = vmatpush.xpose.msra.mxu0 0.0
        %7796 = vmatpush.xpose.msra.mxu0 0.0
        %7797 = vmatpush.xpose.msra.mxu0 0.0
        %7798 = vmatpush.xpose.msra.mxu0 0.0
        %7799 = vmatpush.xpose.msra.mxu0 0.0
        %7800 = vmatpush.xpose.msra.mxu0 %v1007
        %7801 = vmatpush.xpose.msra.mxu0 %v623
        %7802 = vmatmul.f32.gmra.mxu0 %v1560
        %v7803 = vpop.f32.mrf.mxu0
        %v7804 = vadd.f32 %v7784, %v7803
        %7805 = vdwg.mxu0
        %7806 = vmatpush.xpose.msra.mxu0 0.0
        %7807 = vmatpush.xpose.msra.mxu0 0.0
        %7808 = vmatpush.xpose.msra.mxu0 0.0
        %7809 = vmatpush.xpose.msra.mxu0 0.0
        %7810 = vmatpush.xpose.msra.mxu0 0.0
        %7811 = vmatpush.xpose.msra.mxu0 0.0
        %7812 = vmatpush.xpose.msra.mxu0 0.0
        %7813 = vmatpush.xpose.msra.mxu0 0.0
        %7814 = vmatpush.xpose.msra.mxu0 0.0
        %7815 = vmatpush.xpose.msra.mxu0 0.0
        %7816 = vmatpush.xpose.msra.mxu0 0.0
        %7817 = vmatpush.xpose.msra.mxu0 0.0
        %7818 = vmatpush.xpose.msra.mxu0 0.0
        %7819 = vmatpush.xpose.msra.mxu0 0.0
        %7820 = vmatpush.xpose.msra.mxu0 %v1008
        %7821 = vmatpush.xpose.msra.mxu0 %v624
        %7822 = vmatmul.f32.gmra.mxu0 %v1561
        %v7823 = vpop.f32.mrf.mxu0
        %v7824 = vadd.f32 %v7804, %v7823
        %7825 = vdwg.mxu0
        %7826 = vmatpush.xpose.msra.mxu0 0.0
        %7827 = vmatpush.xpose.msra.mxu0 0.0
        %7828 = vmatpush.xpose.msra.mxu0 0.0
        %7829 = vmatpush.xpose.msra.mxu0 0.0
        %7830 = vmatpush.xpose.msra.mxu0 0.0
        %7831 = vmatpush.xpose.msra.mxu0 0.0
        %7832 = vmatpush.xpose.msra.mxu0 0.0
        %7833 = vmatpush.xpose.msra.mxu0 0.0
        %7834 = vmatpush.xpose.msra.mxu0 0.0
        %7835 = vmatpush.xpose.msra.mxu0 0.0
        %7836 = vmatpush.xpose.msra.mxu0 0.0
        %7837 = vmatpush.xpose.msra.mxu0 0.0
        %7838 = vmatpush.xpose.msra.mxu0 0.0
        %7839 = vmatpush.xpose.msra.mxu0 0.0
        %7840 = vmatpush.xpose.msra.mxu0 %v1009
        %7841 = vmatpush.xpose.msra.mxu0 %v625
        %7842 = vmatmul.f32.gmra.mxu0 %v1564
        %v7843 = vpop.f32.mrf.mxu0
        %v7844 = vadd.f32 %v7824, %v7843
        %7845 = vdwg.mxu0
        %7846 = vmatpush.xpose.msra.mxu0 0.0
        %7847 = vmatpush.xpose.msra.mxu0 0.0
        %7848 = vmatpush.xpose.msra.mxu0 0.0
        %7849 = vmatpush.xpose.msra.mxu0 0.0
        %7850 = vmatpush.xpose.msra.mxu0 0.0
        %7851 = vmatpush.xpose.msra.mxu0 0.0
        %7852 = vmatpush.xpose.msra.mxu0 0.0
        %7853 = vmatpush.xpose.msra.mxu0 0.0
        %7854 = vmatpush.xpose.msra.mxu0 0.0
        %7855 = vmatpush.xpose.msra.mxu0 0.0
        %7856 = vmatpush.xpose.msra.mxu0 0.0
        %7857 = vmatpush.xpose.msra.mxu0 0.0
        %7858 = vmatpush.xpose.msra.mxu0 0.0
        %7859 = vmatpush.xpose.msra.mxu0 0.0
        %7860 = vmatpush.xpose.msra.mxu0 %v1010
        %7861 = vmatpush.xpose.msra.mxu0 %v626
        %7862 = vmatmul.f32.gmra.mxu0 %v1565
        %v7863 = vpop.f32.mrf.mxu0
        %v7864 = vadd.f32 %v7844, %v7863
        %7865 = vdwg.mxu0
        %7866 = vmatpush.xpose.msra.mxu0 0.0
        %7867 = vmatpush.xpose.msra.mxu0 0.0
        %7868 = vmatpush.xpose.msra.mxu0 0.0
        %7869 = vmatpush.xpose.msra.mxu0 0.0
        %7870 = vmatpush.xpose.msra.mxu0 0.0
        %7871 = vmatpush.xpose.msra.mxu0 0.0
        %7872 = vmatpush.xpose.msra.mxu0 0.0
        %7873 = vmatpush.xpose.msra.mxu0 0.0
        %7874 = vmatpush.xpose.msra.mxu0 0.0
        %7875 = vmatpush.xpose.msra.mxu0 0.0
        %7876 = vmatpush.xpose.msra.mxu0 0.0
        %7877 = vmatpush.xpose.msra.mxu0 0.0
        %7878 = vmatpush.xpose.msra.mxu0 0.0
        %7879 = vmatpush.xpose.msra.mxu0 0.0
        %7880 = vmatpush.xpose.msra.mxu0 %v1011
        %7881 = vmatpush.xpose.msra.mxu0 %v627
        %7882 = vmatmul.f32.gmra.mxu0 %v1566
        %v7883 = vpop.f32.mrf.mxu0
        %v7884 = vadd.f32 %v7864, %v7883
        %7885 = vdwg.mxu0
        %7886 = vmatpush.xpose.msra.mxu0 0.0
        %7887 = vmatpush.xpose.msra.mxu0 0.0
        %7888 = vmatpush.xpose.msra.mxu0 0.0
        %7889 = vmatpush.xpose.msra.mxu0 0.0
        %7890 = vmatpush.xpose.msra.mxu0 0.0
        %7891 = vmatpush.xpose.msra.mxu0 0.0
        %7892 = vmatpush.xpose.msra.mxu0 0.0
        %7893 = vmatpush.xpose.msra.mxu0 0.0
        %7894 = vmatpush.xpose.msra.mxu0 0.0
        %7895 = vmatpush.xpose.msra.mxu0 0.0
        %7896 = vmatpush.xpose.msra.mxu0 0.0
        %7897 = vmatpush.xpose.msra.mxu0 0.0
        %7898 = vmatpush.xpose.msra.mxu0 0.0
        %7899 = vmatpush.xpose.msra.mxu0 0.0
        %7900 = vmatpush.xpose.msra.mxu0 %v1012
        %7901 = vmatpush.xpose.msra.mxu0 %v628
        %7902 = vmatmul.f32.gmra.mxu0 %v1567
        %v7903 = vpop.f32.mrf.mxu0
        %v7904 = vadd.f32 %v7884, %v7903
        %7905 = vdwg.mxu0
        %7906 = vmatpush.xpose.msra.mxu0 0.0
        %7907 = vmatpush.xpose.msra.mxu0 0.0
        %7908 = vmatpush.xpose.msra.mxu0 0.0
        %7909 = vmatpush.xpose.msra.mxu0 0.0
        %7910 = vmatpush.xpose.msra.mxu0 0.0
        %7911 = vmatpush.xpose.msra.mxu0 0.0
        %7912 = vmatpush.xpose.msra.mxu0 0.0
        %7913 = vmatpush.xpose.msra.mxu0 0.0
        %7914 = vmatpush.xpose.msra.mxu0 0.0
        %7915 = vmatpush.xpose.msra.mxu0 0.0
        %7916 = vmatpush.xpose.msra.mxu0 0.0
        %7917 = vmatpush.xpose.msra.mxu0 0.0
        %7918 = vmatpush.xpose.msra.mxu0 0.0
        %7919 = vmatpush.xpose.msra.mxu0 0.0
        %7920 = vmatpush.xpose.msra.mxu0 %v1013
        %7921 = vmatpush.xpose.msra.mxu0 %v629
        %7922 = vmatmul.f32.gmra.mxu0 %v1568
        %v7923 = vpop.f32.mrf.mxu0
        %v7924 = vadd.f32 %v7904, %v7923
        %7925 = vdwg.mxu0
        %7926 = vmatpush.xpose.msra.mxu0 0.0
        %7927 = vmatpush.xpose.msra.mxu0 0.0
        %7928 = vmatpush.xpose.msra.mxu0 0.0
        %7929 = vmatpush.xpose.msra.mxu0 0.0
        %7930 = vmatpush.xpose.msra.mxu0 0.0
        %7931 = vmatpush.xpose.msra.mxu0 0.0
        %7932 = vmatpush.xpose.msra.mxu0 0.0
        %7933 = vmatpush.xpose.msra.mxu0 0.0
        %7934 = vmatpush.xpose.msra.mxu0 0.0
        %7935 = vmatpush.xpose.msra.mxu0 0.0
        %7936 = vmatpush.xpose.msra.mxu0 0.0
        %7937 = vmatpush.xpose.msra.mxu0 0.0
        %7938 = vmatpush.xpose.msra.mxu0 0.0
        %7939 = vmatpush.xpose.msra.mxu0 0.0
        %7940 = vmatpush.xpose.msra.mxu0 %v1014
        %7941 = vmatpush.xpose.msra.mxu0 %v630
        %7942 = vmatmul.f32.gmra.mxu0 %v1569
        %v7943 = vpop.f32.mrf.mxu0
        %v7944 = vadd.f32 %v7924, %v7943
        %7945 = vdwg.mxu0
        %7946 = vmatpush.xpose.msra.mxu0 0.0
        %7947 = vmatpush.xpose.msra.mxu0 0.0
        %7948 = vmatpush.xpose.msra.mxu0 0.0
        %7949 = vmatpush.xpose.msra.mxu0 0.0
        %7950 = vmatpush.xpose.msra.mxu0 0.0
        %7951 = vmatpush.xpose.msra.mxu0 0.0
        %7952 = vmatpush.xpose.msra.mxu0 0.0
        %7953 = vmatpush.xpose.msra.mxu0 0.0
        %7954 = vmatpush.xpose.msra.mxu0 0.0
        %7955 = vmatpush.xpose.msra.mxu0 0.0
        %7956 = vmatpush.xpose.msra.mxu0 0.0
        %7957 = vmatpush.xpose.msra.mxu0 0.0
        %7958 = vmatpush.xpose.msra.mxu0 0.0
        %7959 = vmatpush.xpose.msra.mxu0 0.0
        %7960 = vmatpush.xpose.msra.mxu0 %v1015
        %7961 = vmatpush.xpose.msra.mxu0 %v631
        %7962 = vmatmul.f32.gmra.mxu0 %v1570
        %v7963 = vpop.f32.mrf.mxu0
        %v7964 = vadd.f32 %v7944, %v7963
        %7965 = vdwg.mxu0
        %7966 = vmatpush.xpose.msra.mxu0 0.0
        %7967 = vmatpush.xpose.msra.mxu0 0.0
        %7968 = vmatpush.xpose.msra.mxu0 0.0
        %7969 = vmatpush.xpose.msra.mxu0 0.0
        %7970 = vmatpush.xpose.msra.mxu0 0.0
        %7971 = vmatpush.xpose.msra.mxu0 0.0
        %7972 = vmatpush.xpose.msra.mxu0 0.0
        %7973 = vmatpush.xpose.msra.mxu0 0.0
        %7974 = vmatpush.xpose.msra.mxu0 0.0
        %7975 = vmatpush.xpose.msra.mxu0 0.0
        %7976 = vmatpush.xpose.msra.mxu0 0.0
        %7977 = vmatpush.xpose.msra.mxu0 0.0
        %7978 = vmatpush.xpose.msra.mxu0 0.0
        %7979 = vmatpush.xpose.msra.mxu0 0.0
        %7980 = vmatpush.xpose.msra.mxu0 %v1016
        %7981 = vmatpush.xpose.msra.mxu0 %v632
        %7982 = vmatmul.f32.gmra.mxu0 %v1571
        %v7983 = vpop.f32.mrf.mxu0
        %v7984 = vadd.f32 %v7964, %v7983
        %7985 = vdwg.mxu0
        %7986 = vmatpush.xpose.msra.mxu0 0.0
        %7987 = vmatpush.xpose.msra.mxu0 0.0
        %7988 = vmatpush.xpose.msra.mxu0 0.0
        %7989 = vmatpush.xpose.msra.mxu0 0.0
        %7990 = vmatpush.xpose.msra.mxu0 0.0
        %7991 = vmatpush.xpose.msra.mxu0 0.0
        %7992 = vmatpush.xpose.msra.mxu0 0.0
        %7993 = vmatpush.xpose.msra.mxu0 0.0
        %7994 = vmatpush.xpose.msra.mxu0 0.0
        %7995 = vmatpush.xpose.msra.mxu0 0.0
        %7996 = vmatpush.xpose.msra.mxu0 0.0
        %7997 = vmatpush.xpose.msra.mxu0 0.0
        %7998 = vmatpush.xpose.msra.mxu0 0.0
        %7999 = vmatpush.xpose.msra.mxu0 0.0
        %8000 = vmatpush.xpose.msra.mxu0 %v1017
        %8001 = vmatpush.xpose.msra.mxu0 %v633
        %8002 = vmatmul.f32.gmra.mxu0 %v1574
        %v8003 = vpop.f32.mrf.mxu0
        %v8004 = vadd.f32 %v7984, %v8003
        %8005 = vdwg.mxu0
        %8006 = vmatpush.xpose.msra.mxu0 0.0
        %8007 = vmatpush.xpose.msra.mxu0 0.0
        %8008 = vmatpush.xpose.msra.mxu0 0.0
        %8009 = vmatpush.xpose.msra.mxu0 0.0
        %8010 = vmatpush.xpose.msra.mxu0 0.0
        %8011 = vmatpush.xpose.msra.mxu0 0.0
        %8012 = vmatpush.xpose.msra.mxu0 0.0
        %8013 = vmatpush.xpose.msra.mxu0 0.0
        %8014 = vmatpush.xpose.msra.mxu0 0.0
        %8015 = vmatpush.xpose.msra.mxu0 0.0
        %8016 = vmatpush.xpose.msra.mxu0 0.0
        %8017 = vmatpush.xpose.msra.mxu0 0.0
        %8018 = vmatpush.xpose.msra.mxu0 0.0
        %8019 = vmatpush.xpose.msra.mxu0 0.0
        %8020 = vmatpush.xpose.msra.mxu0 %v1018
        %8021 = vmatpush.xpose.msra.mxu0 %v634
        %8022 = vmatmul.f32.gmra.mxu0 %v1575
        %v8023 = vpop.f32.mrf.mxu0
        %v8024 = vadd.f32 %v8004, %v8023
        %8025 = vdwg.mxu0
        %8026 = vmatpush.xpose.msra.mxu0 0.0
        %8027 = vmatpush.xpose.msra.mxu0 0.0
        %8028 = vmatpush.xpose.msra.mxu0 0.0
        %8029 = vmatpush.xpose.msra.mxu0 0.0
        %8030 = vmatpush.xpose.msra.mxu0 0.0
        %8031 = vmatpush.xpose.msra.mxu0 0.0
        %8032 = vmatpush.xpose.msra.mxu0 0.0
        %8033 = vmatpush.xpose.msra.mxu0 0.0
        %8034 = vmatpush.xpose.msra.mxu0 0.0
        %8035 = vmatpush.xpose.msra.mxu0 0.0
        %8036 = vmatpush.xpose.msra.mxu0 0.0
        %8037 = vmatpush.xpose.msra.mxu0 0.0
        %8038 = vmatpush.xpose.msra.mxu0 0.0
        %8039 = vmatpush.xpose.msra.mxu0 0.0
        %8040 = vmatpush.xpose.msra.mxu0 %v1019
        %8041 = vmatpush.xpose.msra.mxu0 %v635
        %8042 = vmatmul.f32.gmra.mxu0 %v1576
        %v8043 = vpop.f32.mrf.mxu0
        %v8044 = vadd.f32 %v8024, %v8043
        %8045 = vdwg.mxu0
        %8046 = vmatpush.xpose.msra.mxu0 0.0
        %8047 = vmatpush.xpose.msra.mxu0 0.0
        %8048 = vmatpush.xpose.msra.mxu0 0.0
        %8049 = vmatpush.xpose.msra.mxu0 0.0
        %8050 = vmatpush.xpose.msra.mxu0 0.0
        %8051 = vmatpush.xpose.msra.mxu0 0.0
        %8052 = vmatpush.xpose.msra.mxu0 0.0
        %8053 = vmatpush.xpose.msra.mxu0 0.0
        %8054 = vmatpush.xpose.msra.mxu0 0.0
        %8055 = vmatpush.xpose.msra.mxu0 0.0
        %8056 = vmatpush.xpose.msra.mxu0 0.0
        %8057 = vmatpush.xpose.msra.mxu0 0.0
        %8058 = vmatpush.xpose.msra.mxu0 0.0
        %8059 = vmatpush.xpose.msra.mxu0 0.0
        %8060 = vmatpush.xpose.msra.mxu0 %v1020
        %8061 = vmatpush.xpose.msra.mxu0 %v636
        %8062 = vmatmul.f32.gmra.mxu0 %v1577
        %v8063 = vpop.f32.mrf.mxu0
        %v8064 = vadd.f32 %v8044, %v8063
        %8065 = vdwg.mxu0
        %8066 = vmatpush.xpose.msra.mxu0 0.0
        %8067 = vmatpush.xpose.msra.mxu0 0.0
        %8068 = vmatpush.xpose.msra.mxu0 0.0
        %8069 = vmatpush.xpose.msra.mxu0 0.0
        %8070 = vmatpush.xpose.msra.mxu0 0.0
        %8071 = vmatpush.xpose.msra.mxu0 0.0
        %8072 = vmatpush.xpose.msra.mxu0 0.0
        %8073 = vmatpush.xpose.msra.mxu0 0.0
        %8074 = vmatpush.xpose.msra.mxu0 0.0
        %8075 = vmatpush.xpose.msra.mxu0 0.0
        %8076 = vmatpush.xpose.msra.mxu0 0.0
        %8077 = vmatpush.xpose.msra.mxu0 0.0
        %8078 = vmatpush.xpose.msra.mxu0 0.0
        %8079 = vmatpush.xpose.msra.mxu0 0.0
        %8080 = vmatpush.xpose.msra.mxu0 %v1021
        %8081 = vmatpush.xpose.msra.mxu0 %v637
        %8082 = vmatmul.f32.gmra.mxu0 %v1578
        %v8083 = vpop.f32.mrf.mxu0
        %v8084 = vadd.f32 %v8064, %v8083
        %8085 = vdwg.mxu0
        %8086 = vmatpush.xpose.msra.mxu0 0.0
        %8087 = vmatpush.xpose.msra.mxu0 0.0
        %8088 = vmatpush.xpose.msra.mxu0 0.0
        %8089 = vmatpush.xpose.msra.mxu0 0.0
        %8090 = vmatpush.xpose.msra.mxu0 0.0
        %8091 = vmatpush.xpose.msra.mxu0 0.0
        %8092 = vmatpush.xpose.msra.mxu0 0.0
        %8093 = vmatpush.xpose.msra.mxu0 0.0
        %8094 = vmatpush.xpose.msra.mxu0 0.0
        %8095 = vmatpush.xpose.msra.mxu0 0.0
        %8096 = vmatpush.xpose.msra.mxu0 0.0
        %8097 = vmatpush.xpose.msra.mxu0 0.0
        %8098 = vmatpush.xpose.msra.mxu0 0.0
        %8099 = vmatpush.xpose.msra.mxu0 0.0
        %8100 = vmatpush.xpose.msra.mxu0 %v1022
        %8101 = vmatpush.xpose.msra.mxu0 %v638
        %8102 = vmatmul.f32.gmra.mxu0 %v1579
        %v8103 = vpop.f32.mrf.mxu0
        %v8104 = vadd.f32 %v8084, %v8103
        %8105 = vdwg.mxu0
        %8106 = vmatpush.xpose.msra.mxu0 0.0
        %8107 = vmatpush.xpose.msra.mxu0 0.0
        %8108 = vmatpush.xpose.msra.mxu0 0.0
        %8109 = vmatpush.xpose.msra.mxu0 0.0
        %8110 = vmatpush.xpose.msra.mxu0 0.0
        %8111 = vmatpush.xpose.msra.mxu0 0.0
        %8112 = vmatpush.xpose.msra.mxu0 0.0
        %8113 = vmatpush.xpose.msra.mxu0 0.0
        %8114 = vmatpush.xpose.msra.mxu0 0.0
        %8115 = vmatpush.xpose.msra.mxu0 0.0
        %8116 = vmatpush.xpose.msra.mxu0 0.0
        %8117 = vmatpush.xpose.msra.mxu0 0.0
        %8118 = vmatpush.xpose.msra.mxu0 0.0
        %8119 = vmatpush.xpose.msra.mxu0 0.0
        %8120 = vmatpush.xpose.msra.mxu0 %v1023
        %8121 = vmatpush.xpose.msra.mxu0 %v639
        %8122 = vmatmul.f32.gmra.mxu0 %v1580
        %v8123 = vpop.f32.mrf.mxu0
        %v8124 = vadd.f32 %v8104, %v8123
        %8125 = vdwg.mxu0
        %8126 = vmatpush.xpose.msra.mxu0 0.0
        %8127 = vmatpush.xpose.msra.mxu0 0.0
        %8128 = vmatpush.xpose.msra.mxu0 0.0
        %8129 = vmatpush.xpose.msra.mxu0 0.0
        %8130 = vmatpush.xpose.msra.mxu0 0.0
        %8131 = vmatpush.xpose.msra.mxu0 0.0
        %8132 = vmatpush.xpose.msra.mxu0 0.0
        %8133 = vmatpush.xpose.msra.mxu0 0.0
        %8134 = vmatpush.xpose.msra.mxu0 0.0
        %8135 = vmatpush.xpose.msra.mxu0 0.0
        %8136 = vmatpush.xpose.msra.mxu0 0.0
        %8137 = vmatpush.xpose.msra.mxu0 0.0
        %8138 = vmatpush.xpose.msra.mxu0 0.0
        %8139 = vmatpush.xpose.msra.mxu0 0.0
        %8140 = vmatpush.xpose.msra.mxu0 %v1024
        %8141 = vmatpush.xpose.msra.mxu0 %v640
        %8142 = vmatmul.f32.gmra.mxu0 %v1581
        %v8143 = vpop.f32.mrf.mxu0
        %v8144 = vadd.f32 %v8124, %v8143
        %8145 = vdwg.mxu0
        %8146 = vmatpush.xpose.msra.mxu0 0.0
        %8147 = vmatpush.xpose.msra.mxu0 0.0
        %8148 = vmatpush.xpose.msra.mxu0 0.0
        %8149 = vmatpush.xpose.msra.mxu0 0.0
        %8150 = vmatpush.xpose.msra.mxu0 0.0
        %8151 = vmatpush.xpose.msra.mxu0 0.0
        %8152 = vmatpush.xpose.msra.mxu0 0.0
        %8153 = vmatpush.xpose.msra.mxu0 0.0
        %8154 = vmatpush.xpose.msra.mxu0 0.0
        %8155 = vmatpush.xpose.msra.mxu0 0.0
        %8156 = vmatpush.xpose.msra.mxu0 0.0
        %8157 = vmatpush.xpose.msra.mxu0 0.0
        %8158 = vmatpush.xpose.msra.mxu0 0.0
        %8159 = vmatpush.xpose.msra.mxu0 0.0
        %8160 = vmatpush.xpose.msra.mxu0 %v1025
        %8161 = vmatpush.xpose.msra.mxu0 %v641
        %8162 = vmatmul.f32.gmra.mxu0 %v1584
        %v8163 = vpop.f32.mrf.mxu0
        %v8164 = vadd.f32 %v8144, %v8163
        %8165 = vdwg.mxu0
        %8166 = vmatpush.xpose.msra.mxu0 0.0
        %8167 = vmatpush.xpose.msra.mxu0 0.0
        %8168 = vmatpush.xpose.msra.mxu0 0.0
        %8169 = vmatpush.xpose.msra.mxu0 0.0
        %8170 = vmatpush.xpose.msra.mxu0 0.0
        %8171 = vmatpush.xpose.msra.mxu0 0.0
        %8172 = vmatpush.xpose.msra.mxu0 0.0
        %8173 = vmatpush.xpose.msra.mxu0 0.0
        %8174 = vmatpush.xpose.msra.mxu0 0.0
        %8175 = vmatpush.xpose.msra.mxu0 0.0
        %8176 = vmatpush.xpose.msra.mxu0 0.0
        %8177 = vmatpush.xpose.msra.mxu0 0.0
        %8178 = vmatpush.xpose.msra.mxu0 0.0
        %8179 = vmatpush.xpose.msra.mxu0 0.0
        %8180 = vmatpush.xpose.msra.mxu0 %v1026
        %8181 = vmatpush.xpose.msra.mxu0 %v642
        %8182 = vmatmul.f32.gmra.mxu0 %v1585
        %v8183 = vpop.f32.mrf.mxu0
        %v8184 = vadd.f32 %v8164, %v8183
        %8185 = vdwg.mxu0
        %8186 = vmatpush.xpose.msra.mxu0 0.0
        %8187 = vmatpush.xpose.msra.mxu0 0.0
        %8188 = vmatpush.xpose.msra.mxu0 0.0
        %8189 = vmatpush.xpose.msra.mxu0 0.0
        %8190 = vmatpush.xpose.msra.mxu0 0.0
        %8191 = vmatpush.xpose.msra.mxu0 0.0
        %8192 = vmatpush.xpose.msra.mxu0 0.0
        %8193 = vmatpush.xpose.msra.mxu0 0.0
        %8194 = vmatpush.xpose.msra.mxu0 0.0
        %8195 = vmatpush.xpose.msra.mxu0 0.0
        %8196 = vmatpush.xpose.msra.mxu0 0.0
        %8197 = vmatpush.xpose.msra.mxu0 0.0
        %8198 = vmatpush.xpose.msra.mxu0 0.0
        %8199 = vmatpush.xpose.msra.mxu0 0.0
        %8200 = vmatpush.xpose.msra.mxu0 %v1027
        %8201 = vmatpush.xpose.msra.mxu0 %v643
        %8202 = vmatmul.f32.gmra.mxu0 %v1586
        %v8203 = vpop.f32.mrf.mxu0
        %v8204 = vadd.f32 %v8184, %v8203
        %8205 = vdwg.mxu0
        %8206 = vmatpush.xpose.msra.mxu0 0.0
        %8207 = vmatpush.xpose.msra.mxu0 0.0
        %8208 = vmatpush.xpose.msra.mxu0 0.0
        %8209 = vmatpush.xpose.msra.mxu0 0.0
        %8210 = vmatpush.xpose.msra.mxu0 0.0
        %8211 = vmatpush.xpose.msra.mxu0 0.0
        %8212 = vmatpush.xpose.msra.mxu0 0.0
        %8213 = vmatpush.xpose.msra.mxu0 0.0
        %8214 = vmatpush.xpose.msra.mxu0 0.0
        %8215 = vmatpush.xpose.msra.mxu0 0.0
        %8216 = vmatpush.xpose.msra.mxu0 0.0
        %8217 = vmatpush.xpose.msra.mxu0 0.0
        %8218 = vmatpush.xpose.msra.mxu0 0.0
        %8219 = vmatpush.xpose.msra.mxu0 0.0
        %8220 = vmatpush.xpose.msra.mxu0 %v1028
        %8221 = vmatpush.xpose.msra.mxu0 %v644
        %8222 = vmatmul.f32.gmra.mxu0 %v1587
        %v8223 = vpop.f32.mrf.mxu0
        %v8224 = vadd.f32 %v8204, %v8223
        %8225 = vdwg.mxu0
        %8226 = vmatpush.xpose.msra.mxu0 0.0
        %8227 = vmatpush.xpose.msra.mxu0 0.0
        %8228 = vmatpush.xpose.msra.mxu0 0.0
        %8229 = vmatpush.xpose.msra.mxu0 0.0
        %8230 = vmatpush.xpose.msra.mxu0 0.0
        %8231 = vmatpush.xpose.msra.mxu0 0.0
        %8232 = vmatpush.xpose.msra.mxu0 0.0
        %8233 = vmatpush.xpose.msra.mxu0 0.0
        %8234 = vmatpush.xpose.msra.mxu0 0.0
        %8235 = vmatpush.xpose.msra.mxu0 0.0
        %8236 = vmatpush.xpose.msra.mxu0 0.0
        %8237 = vmatpush.xpose.msra.mxu0 0.0
        %8238 = vmatpush.xpose.msra.mxu0 0.0
        %8239 = vmatpush.xpose.msra.mxu0 0.0
        %8240 = vmatpush.xpose.msra.mxu0 %v1029
        %8241 = vmatpush.xpose.msra.mxu0 %v645
        %8242 = vmatmul.f32.gmra.mxu0 %v1588
        %v8243 = vpop.f32.mrf.mxu0
        %v8244 = vadd.f32 %v8224, %v8243
        %8245 = vdwg.mxu0
        %8246 = vmatpush.xpose.msra.mxu0 0.0
        %8247 = vmatpush.xpose.msra.mxu0 0.0
        %8248 = vmatpush.xpose.msra.mxu0 0.0
        %8249 = vmatpush.xpose.msra.mxu0 0.0
        %8250 = vmatpush.xpose.msra.mxu0 0.0
        %8251 = vmatpush.xpose.msra.mxu0 0.0
        %8252 = vmatpush.xpose.msra.mxu0 0.0
        %8253 = vmatpush.xpose.msra.mxu0 0.0
        %8254 = vmatpush.xpose.msra.mxu0 0.0
        %8255 = vmatpush.xpose.msra.mxu0 0.0
        %8256 = vmatpush.xpose.msra.mxu0 0.0
        %8257 = vmatpush.xpose.msra.mxu0 0.0
        %8258 = vmatpush.xpose.msra.mxu0 0.0
        %8259 = vmatpush.xpose.msra.mxu0 0.0
        %8260 = vmatpush.xpose.msra.mxu0 %v1030
        %8261 = vmatpush.xpose.msra.mxu0 %v646
        %8262 = vmatmul.f32.gmra.mxu0 %v1589
        %v8263 = vpop.f32.mrf.mxu0
        %v8264 = vadd.f32 %v8244, %v8263
        %8265 = vdwg.mxu0
        %8266 = vmatpush.xpose.msra.mxu0 0.0
        %8267 = vmatpush.xpose.msra.mxu0 0.0
        %8268 = vmatpush.xpose.msra.mxu0 0.0
        %8269 = vmatpush.xpose.msra.mxu0 0.0
        %8270 = vmatpush.xpose.msra.mxu0 0.0
        %8271 = vmatpush.xpose.msra.mxu0 0.0
        %8272 = vmatpush.xpose.msra.mxu0 0.0
        %8273 = vmatpush.xpose.msra.mxu0 0.0
        %8274 = vmatpush.xpose.msra.mxu0 0.0
        %8275 = vmatpush.xpose.msra.mxu0 0.0
        %8276 = vmatpush.xpose.msra.mxu0 0.0
        %8277 = vmatpush.xpose.msra.mxu0 0.0
        %8278 = vmatpush.xpose.msra.mxu0 0.0
        %8279 = vmatpush.xpose.msra.mxu0 0.0
        %8280 = vmatpush.xpose.msra.mxu0 %v1031
        %8281 = vmatpush.xpose.msra.mxu0 %v647
        %8282 = vmatmul.f32.gmra.mxu0 %v1590
        %v8283 = vpop.f32.mrf.mxu0
        %v8284 = vadd.f32 %v8264, %v8283
        %8285 = vdwg.mxu0
        %8286 = vmatpush.xpose.msra.mxu0 0.0
        %8287 = vmatpush.xpose.msra.mxu0 0.0
        %8288 = vmatpush.xpose.msra.mxu0 0.0
        %8289 = vmatpush.xpose.msra.mxu0 0.0
        %8290 = vmatpush.xpose.msra.mxu0 0.0
        %8291 = vmatpush.xpose.msra.mxu0 0.0
        %8292 = vmatpush.xpose.msra.mxu0 0.0
        %8293 = vmatpush.xpose.msra.mxu0 0.0
        %8294 = vmatpush.xpose.msra.mxu0 0.0
        %8295 = vmatpush.xpose.msra.mxu0 0.0
        %8296 = vmatpush.xpose.msra.mxu0 0.0
        %8297 = vmatpush.xpose.msra.mxu0 0.0
        %8298 = vmatpush.xpose.msra.mxu0 0.0
        %8299 = vmatpush.xpose.msra.mxu0 0.0
        %8300 = vmatpush.xpose.msra.mxu0 %v1032
        %8301 = vmatpush.xpose.msra.mxu0 %v648
        %8302 = vmatmul.f32.gmra.mxu0 %v1591
        %v8303 = vpop.f32.mrf.mxu0
        %v8304 = vadd.f32 %v8284, %v8303
        %8305 = vdwg.mxu0
        %8306 = vmatpush.xpose.msra.mxu0 0.0
        %8307 = vmatpush.xpose.msra.mxu0 0.0
        %8308 = vmatpush.xpose.msra.mxu0 0.0
        %8309 = vmatpush.xpose.msra.mxu0 0.0
        %8310 = vmatpush.xpose.msra.mxu0 0.0
        %8311 = vmatpush.xpose.msra.mxu0 0.0
        %8312 = vmatpush.xpose.msra.mxu0 0.0
        %8313 = vmatpush.xpose.msra.mxu0 0.0
        %8314 = vmatpush.xpose.msra.mxu0 0.0
        %8315 = vmatpush.xpose.msra.mxu0 0.0
        %8316 = vmatpush.xpose.msra.mxu0 0.0
        %8317 = vmatpush.xpose.msra.mxu0 0.0
        %8318 = vmatpush.xpose.msra.mxu0 0.0
        %8319 = vmatpush.xpose.msra.mxu0 0.0
        %8320 = vmatpush.xpose.msra.mxu0 %v1033
        %8321 = vmatpush.xpose.msra.mxu0 %v649
        %8322 = vmatmul.f32.gmra.mxu0 %v1594
        %v8323 = vpop.f32.mrf.mxu0
        %v8324 = vadd.f32 %v8304, %v8323
        %8325 = vdwg.mxu0
        %8326 = vmatpush.xpose.msra.mxu0 0.0
        %8327 = vmatpush.xpose.msra.mxu0 0.0
        %8328 = vmatpush.xpose.msra.mxu0 0.0
        %8329 = vmatpush.xpose.msra.mxu0 0.0
        %8330 = vmatpush.xpose.msra.mxu0 0.0
        %8331 = vmatpush.xpose.msra.mxu0 0.0
        %8332 = vmatpush.xpose.msra.mxu0 0.0
        %8333 = vmatpush.xpose.msra.mxu0 0.0
        %8334 = vmatpush.xpose.msra.mxu0 0.0
        %8335 = vmatpush.xpose.msra.mxu0 0.0
        %8336 = vmatpush.xpose.msra.mxu0 0.0
        %8337 = vmatpush.xpose.msra.mxu0 0.0
        %8338 = vmatpush.xpose.msra.mxu0 0.0
        %8339 = vmatpush.xpose.msra.mxu0 0.0
        %8340 = vmatpush.xpose.msra.mxu0 %v1034
        %8341 = vmatpush.xpose.msra.mxu0 %v650
        %8342 = vmatmul.f32.gmra.mxu0 %v1595
        %v8343 = vpop.f32.mrf.mxu0
        %v8344 = vadd.f32 %v8324, %v8343
        %8345 = vdwg.mxu0
        %8346 = vmatpush.xpose.msra.mxu0 0.0
        %8347 = vmatpush.xpose.msra.mxu0 0.0
        %8348 = vmatpush.xpose.msra.mxu0 0.0
        %8349 = vmatpush.xpose.msra.mxu0 0.0
        %8350 = vmatpush.xpose.msra.mxu0 0.0
        %8351 = vmatpush.xpose.msra.mxu0 0.0
        %8352 = vmatpush.xpose.msra.mxu0 0.0
        %8353 = vmatpush.xpose.msra.mxu0 0.0
        %8354 = vmatpush.xpose.msra.mxu0 0.0
        %8355 = vmatpush.xpose.msra.mxu0 0.0
        %8356 = vmatpush.xpose.msra.mxu0 0.0
        %8357 = vmatpush.xpose.msra.mxu0 0.0
        %8358 = vmatpush.xpose.msra.mxu0 0.0
        %8359 = vmatpush.xpose.msra.mxu0 0.0
        %8360 = vmatpush.xpose.msra.mxu0 %v1035
        %8361 = vmatpush.xpose.msra.mxu0 %v651
        %8362 = vmatmul.f32.gmra.mxu0 %v1596
        %v8363 = vpop.f32.mrf.mxu0
        %v8364 = vadd.f32 %v8344, %v8363
        %8365 = vdwg.mxu0
        %8366 = vmatpush.xpose.msra.mxu0 0.0
        %8367 = vmatpush.xpose.msra.mxu0 0.0
        %8368 = vmatpush.xpose.msra.mxu0 0.0
        %8369 = vmatpush.xpose.msra.mxu0 0.0
        %8370 = vmatpush.xpose.msra.mxu0 0.0
        %8371 = vmatpush.xpose.msra.mxu0 0.0
        %8372 = vmatpush.xpose.msra.mxu0 0.0
        %8373 = vmatpush.xpose.msra.mxu0 0.0
        %8374 = vmatpush.xpose.msra.mxu0 0.0
        %8375 = vmatpush.xpose.msra.mxu0 0.0
        %8376 = vmatpush.xpose.msra.mxu0 0.0
        %8377 = vmatpush.xpose.msra.mxu0 0.0
        %8378 = vmatpush.xpose.msra.mxu0 0.0
        %8379 = vmatpush.xpose.msra.mxu0 0.0
        %8380 = vmatpush.xpose.msra.mxu0 %v1036
        %8381 = vmatpush.xpose.msra.mxu0 %v652
        %8382 = vmatmul.f32.gmra.mxu0 %v1597
        %v8383 = vpop.f32.mrf.mxu0
        %v8384 = vadd.f32 %v8364, %v8383
        %8385 = vdwg.mxu0
        %8386 = vmatpush.xpose.msra.mxu0 0.0
        %8387 = vmatpush.xpose.msra.mxu0 0.0
        %8388 = vmatpush.xpose.msra.mxu0 0.0
        %8389 = vmatpush.xpose.msra.mxu0 0.0
        %8390 = vmatpush.xpose.msra.mxu0 0.0
        %8391 = vmatpush.xpose.msra.mxu0 0.0
        %8392 = vmatpush.xpose.msra.mxu0 0.0
        %8393 = vmatpush.xpose.msra.mxu0 0.0
        %8394 = vmatpush.xpose.msra.mxu0 0.0
        %8395 = vmatpush.xpose.msra.mxu0 0.0
        %8396 = vmatpush.xpose.msra.mxu0 0.0
        %8397 = vmatpush.xpose.msra.mxu0 0.0
        %8398 = vmatpush.xpose.msra.mxu0 0.0
        %8399 = vmatpush.xpose.msra.mxu0 0.0
        %8400 = vmatpush.xpose.msra.mxu0 %v1037
        %8401 = vmatpush.xpose.msra.mxu0 %v653
        %8402 = vmatmul.f32.gmra.mxu0 %v1598
        %v8403 = vpop.f32.mrf.mxu0
        %v8404 = vadd.f32 %v8384, %v8403
        %8405 = vdwg.mxu0
        %8406 = vmatpush.xpose.msra.mxu0 0.0
        %8407 = vmatpush.xpose.msra.mxu0 0.0
        %8408 = vmatpush.xpose.msra.mxu0 0.0
        %8409 = vmatpush.xpose.msra.mxu0 0.0
        %8410 = vmatpush.xpose.msra.mxu0 0.0
        %8411 = vmatpush.xpose.msra.mxu0 0.0
        %8412 = vmatpush.xpose.msra.mxu0 0.0
        %8413 = vmatpush.xpose.msra.mxu0 0.0
        %8414 = vmatpush.xpose.msra.mxu0 0.0
        %8415 = vmatpush.xpose.msra.mxu0 0.0
        %8416 = vmatpush.xpose.msra.mxu0 0.0
        %8417 = vmatpush.xpose.msra.mxu0 0.0
        %8418 = vmatpush.xpose.msra.mxu0 0.0
        %8419 = vmatpush.xpose.msra.mxu0 0.0
        %8420 = vmatpush.xpose.msra.mxu0 %v1038
        %8421 = vmatpush.xpose.msra.mxu0 %v654
        %8422 = vmatmul.f32.gmra.mxu0 %v1599
        %v8423 = vpop.f32.mrf.mxu0
        %v8424 = vadd.f32 %v8404, %v8423
        %8425 = vdwg.mxu0
        %8426 = vmatpush.xpose.msra.mxu0 0.0
        %8427 = vmatpush.xpose.msra.mxu0 0.0
        %8428 = vmatpush.xpose.msra.mxu0 0.0
        %8429 = vmatpush.xpose.msra.mxu0 0.0
        %8430 = vmatpush.xpose.msra.mxu0 0.0
        %8431 = vmatpush.xpose.msra.mxu0 0.0
        %8432 = vmatpush.xpose.msra.mxu0 0.0
        %8433 = vmatpush.xpose.msra.mxu0 0.0
        %8434 = vmatpush.xpose.msra.mxu0 0.0
        %8435 = vmatpush.xpose.msra.mxu0 0.0
        %8436 = vmatpush.xpose.msra.mxu0 0.0
        %8437 = vmatpush.xpose.msra.mxu0 0.0
        %8438 = vmatpush.xpose.msra.mxu0 0.0
        %8439 = vmatpush.xpose.msra.mxu0 0.0
        %8440 = vmatpush.xpose.msra.mxu0 %v1039
        %8441 = vmatpush.xpose.msra.mxu0 %v655
        %8442 = vmatmul.f32.gmra.mxu0 %v1600
        %v8443 = vpop.f32.mrf.mxu0
        %v8444 = vadd.f32 %v8424, %v8443
        %8445 = vdwg.mxu0
        %8446 = vmatpush.xpose.msra.mxu0 0.0
        %8447 = vmatpush.xpose.msra.mxu0 0.0
        %8448 = vmatpush.xpose.msra.mxu0 0.0
        %8449 = vmatpush.xpose.msra.mxu0 0.0
        %8450 = vmatpush.xpose.msra.mxu0 0.0
        %8451 = vmatpush.xpose.msra.mxu0 0.0
        %8452 = vmatpush.xpose.msra.mxu0 0.0
        %8453 = vmatpush.xpose.msra.mxu0 0.0
        %8454 = vmatpush.xpose.msra.mxu0 0.0
        %8455 = vmatpush.xpose.msra.mxu0 0.0
        %8456 = vmatpush.xpose.msra.mxu0 0.0
        %8457 = vmatpush.xpose.msra.mxu0 0.0
        %8458 = vmatpush.xpose.msra.mxu0 0.0
        %8459 = vmatpush.xpose.msra.mxu0 0.0
        %8460 = vmatpush.xpose.msra.mxu0 %v1040
        %8461 = vmatpush.xpose.msra.mxu0 %v656
        %8462 = vmatmul.f32.gmra.mxu0 %v1601
        %v8463 = vpop.f32.mrf.mxu0
        %v8464 = vadd.f32 %v8444, %v8463
        %8465 = vdwg.mxu0
        %8466 = vmatpush.xpose.msra.mxu0 0.0
        %8467 = vmatpush.xpose.msra.mxu0 0.0
        %8468 = vmatpush.xpose.msra.mxu0 0.0
        %8469 = vmatpush.xpose.msra.mxu0 0.0
        %8470 = vmatpush.xpose.msra.mxu0 0.0
        %8471 = vmatpush.xpose.msra.mxu0 0.0
        %8472 = vmatpush.xpose.msra.mxu0 0.0
        %8473 = vmatpush.xpose.msra.mxu0 0.0
        %8474 = vmatpush.xpose.msra.mxu0 0.0
        %8475 = vmatpush.xpose.msra.mxu0 0.0
        %8476 = vmatpush.xpose.msra.mxu0 0.0
        %8477 = vmatpush.xpose.msra.mxu0 0.0
        %8478 = vmatpush.xpose.msra.mxu0 0.0
        %8479 = vmatpush.xpose.msra.mxu0 0.0
        %8480 = vmatpush.xpose.msra.mxu0 %v1041
        %8481 = vmatpush.xpose.msra.mxu0 %v657
        %8482 = vmatmul.f32.gmra.mxu0 %v1604
        %v8483 = vpop.f32.mrf.mxu0
        %v8484 = vadd.f32 %v8464, %v8483
        %8485 = vdwg.mxu0
        %8486 = vmatpush.xpose.msra.mxu0 0.0
        %8487 = vmatpush.xpose.msra.mxu0 0.0
        %8488 = vmatpush.xpose.msra.mxu0 0.0
        %8489 = vmatpush.xpose.msra.mxu0 0.0
        %8490 = vmatpush.xpose.msra.mxu0 0.0
        %8491 = vmatpush.xpose.msra.mxu0 0.0
        %8492 = vmatpush.xpose.msra.mxu0 0.0
        %8493 = vmatpush.xpose.msra.mxu0 0.0
        %8494 = vmatpush.xpose.msra.mxu0 0.0
        %8495 = vmatpush.xpose.msra.mxu0 0.0
        %8496 = vmatpush.xpose.msra.mxu0 0.0
        %8497 = vmatpush.xpose.msra.mxu0 0.0
        %8498 = vmatpush.xpose.msra.mxu0 0.0
        %8499 = vmatpush.xpose.msra.mxu0 0.0
        %8500 = vmatpush.xpose.msra.mxu0 %v1042
        %8501 = vmatpush.xpose.msra.mxu0 %v658
        %8502 = vmatmul.f32.gmra.mxu0 %v1605
        %v8503 = vpop.f32.mrf.mxu0
        %v8504 = vadd.f32 %v8484, %v8503
        %8505 = vdwg.mxu0
        %8506 = vmatpush.xpose.msra.mxu0 0.0
        %8507 = vmatpush.xpose.msra.mxu0 0.0
        %8508 = vmatpush.xpose.msra.mxu0 0.0
        %8509 = vmatpush.xpose.msra.mxu0 0.0
        %8510 = vmatpush.xpose.msra.mxu0 0.0
        %8511 = vmatpush.xpose.msra.mxu0 0.0
        %8512 = vmatpush.xpose.msra.mxu0 0.0
        %8513 = vmatpush.xpose.msra.mxu0 0.0
        %8514 = vmatpush.xpose.msra.mxu0 0.0
        %8515 = vmatpush.xpose.msra.mxu0 0.0
        %8516 = vmatpush.xpose.msra.mxu0 0.0
        %8517 = vmatpush.xpose.msra.mxu0 0.0
        %8518 = vmatpush.xpose.msra.mxu0 0.0
        %8519 = vmatpush.xpose.msra.mxu0 0.0
        %8520 = vmatpush.xpose.msra.mxu0 %v1043
        %8521 = vmatpush.xpose.msra.mxu0 %v659
        %8522 = vmatmul.f32.gmra.mxu0 %v1606
        %v8523 = vpop.f32.mrf.mxu0
        %v8524 = vadd.f32 %v8504, %v8523
        %8525 = vdwg.mxu0
        %8526 = vmatpush.xpose.msra.mxu0 0.0
        %8527 = vmatpush.xpose.msra.mxu0 0.0
        %8528 = vmatpush.xpose.msra.mxu0 0.0
        %8529 = vmatpush.xpose.msra.mxu0 0.0
        %8530 = vmatpush.xpose.msra.mxu0 0.0
        %8531 = vmatpush.xpose.msra.mxu0 0.0
        %8532 = vmatpush.xpose.msra.mxu0 0.0
        %8533 = vmatpush.xpose.msra.mxu0 0.0
        %8534 = vmatpush.xpose.msra.mxu0 0.0
        %8535 = vmatpush.xpose.msra.mxu0 0.0
        %8536 = vmatpush.xpose.msra.mxu0 0.0
        %8537 = vmatpush.xpose.msra.mxu0 0.0
        %8538 = vmatpush.xpose.msra.mxu0 0.0
        %8539 = vmatpush.xpose.msra.mxu0 0.0
        %8540 = vmatpush.xpose.msra.mxu0 %v1044
        %8541 = vmatpush.xpose.msra.mxu0 %v660
        %8542 = vmatmul.f32.gmra.mxu0 %v1607
        %v8543 = vpop.f32.mrf.mxu0
        %v8544 = vadd.f32 %v8524, %v8543
        %8545 = vdwg.mxu0
        %8546 = vmatpush.xpose.msra.mxu0 0.0
        %8547 = vmatpush.xpose.msra.mxu0 0.0
        %8548 = vmatpush.xpose.msra.mxu0 0.0
        %8549 = vmatpush.xpose.msra.mxu0 0.0
        %8550 = vmatpush.xpose.msra.mxu0 0.0
        %8551 = vmatpush.xpose.msra.mxu0 0.0
        %8552 = vmatpush.xpose.msra.mxu0 0.0
        %8553 = vmatpush.xpose.msra.mxu0 0.0
        %8554 = vmatpush.xpose.msra.mxu0 0.0
        %8555 = vmatpush.xpose.msra.mxu0 0.0
        %8556 = vmatpush.xpose.msra.mxu0 0.0
        %8557 = vmatpush.xpose.msra.mxu0 0.0
        %8558 = vmatpush.xpose.msra.mxu0 0.0
        %8559 = vmatpush.xpose.msra.mxu0 0.0
        %8560 = vmatpush.xpose.msra.mxu0 %v1045
        %8561 = vmatpush.xpose.msra.mxu0 %v661
        %8562 = vmatmul.f32.gmra.mxu0 %v1608
        %v8563 = vpop.f32.mrf.mxu0
        %v8564 = vadd.f32 %v8544, %v8563
        %8565 = vdwg.mxu0
        %8566 = vmatpush.xpose.msra.mxu0 0.0
        %8567 = vmatpush.xpose.msra.mxu0 0.0
        %8568 = vmatpush.xpose.msra.mxu0 0.0
        %8569 = vmatpush.xpose.msra.mxu0 0.0
        %8570 = vmatpush.xpose.msra.mxu0 0.0
        %8571 = vmatpush.xpose.msra.mxu0 0.0
        %8572 = vmatpush.xpose.msra.mxu0 0.0
        %8573 = vmatpush.xpose.msra.mxu0 0.0
        %8574 = vmatpush.xpose.msra.mxu0 0.0
        %8575 = vmatpush.xpose.msra.mxu0 0.0
        %8576 = vmatpush.xpose.msra.mxu0 0.0
        %8577 = vmatpush.xpose.msra.mxu0 0.0
        %8578 = vmatpush.xpose.msra.mxu0 0.0
        %8579 = vmatpush.xpose.msra.mxu0 0.0
        %8580 = vmatpush.xpose.msra.mxu0 %v1046
        %8581 = vmatpush.xpose.msra.mxu0 %v662
        %8582 = vmatmul.f32.gmra.mxu0 %v1609
        %v8583 = vpop.f32.mrf.mxu0
        %v8584 = vadd.f32 %v8564, %v8583
        %8585 = vdwg.mxu0
        %8586 = vmatpush.xpose.msra.mxu0 0.0
        %8587 = vmatpush.xpose.msra.mxu0 0.0
        %8588 = vmatpush.xpose.msra.mxu0 0.0
        %8589 = vmatpush.xpose.msra.mxu0 0.0
        %8590 = vmatpush.xpose.msra.mxu0 0.0
        %8591 = vmatpush.xpose.msra.mxu0 0.0
        %8592 = vmatpush.xpose.msra.mxu0 0.0
        %8593 = vmatpush.xpose.msra.mxu0 0.0
        %8594 = vmatpush.xpose.msra.mxu0 0.0
        %8595 = vmatpush.xpose.msra.mxu0 0.0
        %8596 = vmatpush.xpose.msra.mxu0 0.0
        %8597 = vmatpush.xpose.msra.mxu0 0.0
        %8598 = vmatpush.xpose.msra.mxu0 0.0
        %8599 = vmatpush.xpose.msra.mxu0 0.0
        %8600 = vmatpush.xpose.msra.mxu0 %v1047
        %8601 = vmatpush.xpose.msra.mxu0 %v663
        %8602 = vmatmul.f32.gmra.mxu0 %v1610
        %v8603 = vpop.f32.mrf.mxu0
        %v8604 = vadd.f32 %v8584, %v8603
        %8605 = vdwg.mxu0
        %8606 = vmatpush.xpose.msra.mxu0 0.0
        %8607 = vmatpush.xpose.msra.mxu0 0.0
        %8608 = vmatpush.xpose.msra.mxu0 0.0
        %8609 = vmatpush.xpose.msra.mxu0 0.0
        %8610 = vmatpush.xpose.msra.mxu0 0.0
        %8611 = vmatpush.xpose.msra.mxu0 0.0
        %8612 = vmatpush.xpose.msra.mxu0 0.0
        %8613 = vmatpush.xpose.msra.mxu0 0.0
        %8614 = vmatpush.xpose.msra.mxu0 0.0
        %8615 = vmatpush.xpose.msra.mxu0 0.0
        %8616 = vmatpush.xpose.msra.mxu0 0.0
        %8617 = vmatpush.xpose.msra.mxu0 0.0
        %8618 = vmatpush.xpose.msra.mxu0 0.0
        %8619 = vmatpush.xpose.msra.mxu0 0.0
        %8620 = vmatpush.xpose.msra.mxu0 %v1048
        %8621 = vmatpush.xpose.msra.mxu0 %v664
        %8622 = vmatmul.f32.gmra.mxu0 %v1611
        %v8623 = vpop.f32.mrf.mxu0
        %v8624 = vadd.f32 %v8604, %v8623
        %8625 = vdwg.mxu0
        %8626 = vmatpush.xpose.msra.mxu0 0.0
        %8627 = vmatpush.xpose.msra.mxu0 0.0
        %8628 = vmatpush.xpose.msra.mxu0 0.0
        %8629 = vmatpush.xpose.msra.mxu0 0.0
        %8630 = vmatpush.xpose.msra.mxu0 0.0
        %8631 = vmatpush.xpose.msra.mxu0 0.0
        %8632 = vmatpush.xpose.msra.mxu0 0.0
        %8633 = vmatpush.xpose.msra.mxu0 0.0
        %8634 = vmatpush.xpose.msra.mxu0 0.0
        %8635 = vmatpush.xpose.msra.mxu0 0.0
        %8636 = vmatpush.xpose.msra.mxu0 0.0
        %8637 = vmatpush.xpose.msra.mxu0 0.0
        %8638 = vmatpush.xpose.msra.mxu0 0.0
        %8639 = vmatpush.xpose.msra.mxu0 0.0
        %8640 = vmatpush.xpose.msra.mxu0 %v1049
        %8641 = vmatpush.xpose.msra.mxu0 %v665
        %8642 = vmatmul.f32.gmra.mxu0 %v1614
        %v8643 = vpop.f32.mrf.mxu0
        %v8644 = vadd.f32 %v8624, %v8643
        %8645 = vdwg.mxu0
        %8646 = vmatpush.xpose.msra.mxu0 0.0
        %8647 = vmatpush.xpose.msra.mxu0 0.0
        %8648 = vmatpush.xpose.msra.mxu0 0.0
        %8649 = vmatpush.xpose.msra.mxu0 0.0
        %8650 = vmatpush.xpose.msra.mxu0 0.0
        %8651 = vmatpush.xpose.msra.mxu0 0.0
        %8652 = vmatpush.xpose.msra.mxu0 0.0
        %8653 = vmatpush.xpose.msra.mxu0 0.0
        %8654 = vmatpush.xpose.msra.mxu0 0.0
        %8655 = vmatpush.xpose.msra.mxu0 0.0
        %8656 = vmatpush.xpose.msra.mxu0 0.0
        %8657 = vmatpush.xpose.msra.mxu0 0.0
        %8658 = vmatpush.xpose.msra.mxu0 0.0
        %8659 = vmatpush.xpose.msra.mxu0 0.0
        %8660 = vmatpush.xpose.msra.mxu0 %v1050
        %8661 = vmatpush.xpose.msra.mxu0 %v666
        %8662 = vmatmul.f32.gmra.mxu0 %v1615
        %v8663 = vpop.f32.mrf.mxu0
        %v8664 = vadd.f32 %v8644, %v8663
        %8665 = vdwg.mxu0
        %8666 = vmatpush.xpose.msra.mxu0 0.0
        %8667 = vmatpush.xpose.msra.mxu0 0.0
        %8668 = vmatpush.xpose.msra.mxu0 0.0
        %8669 = vmatpush.xpose.msra.mxu0 0.0
        %8670 = vmatpush.xpose.msra.mxu0 0.0
        %8671 = vmatpush.xpose.msra.mxu0 0.0
        %8672 = vmatpush.xpose.msra.mxu0 0.0
        %8673 = vmatpush.xpose.msra.mxu0 0.0
        %8674 = vmatpush.xpose.msra.mxu0 0.0
        %8675 = vmatpush.xpose.msra.mxu0 0.0
        %8676 = vmatpush.xpose.msra.mxu0 0.0
        %8677 = vmatpush.xpose.msra.mxu0 0.0
        %8678 = vmatpush.xpose.msra.mxu0 0.0
        %8679 = vmatpush.xpose.msra.mxu0 0.0
        %8680 = vmatpush.xpose.msra.mxu0 %v1051
        %8681 = vmatpush.xpose.msra.mxu0 %v667
        %8682 = vmatmul.f32.gmra.mxu0 %v1616
        %v8683 = vpop.f32.mrf.mxu0
        %v8684 = vadd.f32 %v8664, %v8683
        %8685 = vdwg.mxu0
        %8686 = vmatpush.xpose.msra.mxu0 0.0
        %8687 = vmatpush.xpose.msra.mxu0 0.0
        %8688 = vmatpush.xpose.msra.mxu0 0.0
        %8689 = vmatpush.xpose.msra.mxu0 0.0
        %8690 = vmatpush.xpose.msra.mxu0 0.0
        %8691 = vmatpush.xpose.msra.mxu0 0.0
        %8692 = vmatpush.xpose.msra.mxu0 0.0
        %8693 = vmatpush.xpose.msra.mxu0 0.0
        %8694 = vmatpush.xpose.msra.mxu0 0.0
        %8695 = vmatpush.xpose.msra.mxu0 0.0
        %8696 = vmatpush.xpose.msra.mxu0 0.0
        %8697 = vmatpush.xpose.msra.mxu0 0.0
        %8698 = vmatpush.xpose.msra.mxu0 0.0
        %8699 = vmatpush.xpose.msra.mxu0 0.0
        %8700 = vmatpush.xpose.msra.mxu0 %v1052
        %8701 = vmatpush.xpose.msra.mxu0 %v668
        %8702 = vmatmul.f32.gmra.mxu0 %v1617
        %v8703 = vpop.f32.mrf.mxu0
        %v8704 = vadd.f32 %v8684, %v8703
        %8705 = vdwg.mxu0
        %8706 = vmatpush.xpose.msra.mxu0 0.0
        %8707 = vmatpush.xpose.msra.mxu0 0.0
        %8708 = vmatpush.xpose.msra.mxu0 0.0
        %8709 = vmatpush.xpose.msra.mxu0 0.0
        %8710 = vmatpush.xpose.msra.mxu0 0.0
        %8711 = vmatpush.xpose.msra.mxu0 0.0
        %8712 = vmatpush.xpose.msra.mxu0 0.0
        %8713 = vmatpush.xpose.msra.mxu0 0.0
        %8714 = vmatpush.xpose.msra.mxu0 0.0
        %8715 = vmatpush.xpose.msra.mxu0 0.0
        %8716 = vmatpush.xpose.msra.mxu0 0.0
        %8717 = vmatpush.xpose.msra.mxu0 0.0
        %8718 = vmatpush.xpose.msra.mxu0 0.0
        %8719 = vmatpush.xpose.msra.mxu0 0.0
        %8720 = vmatpush.xpose.msra.mxu0 %v1053
        %8721 = vmatpush.xpose.msra.mxu0 %v669
        %8722 = vmatmul.f32.gmra.mxu0 %v1618
        %v8723 = vpop.f32.mrf.mxu0
        %v8724 = vadd.f32 %v8704, %v8723
        %8725 = vdwg.mxu0
        %8726 = vmatpush.xpose.msra.mxu0 0.0
        %8727 = vmatpush.xpose.msra.mxu0 0.0
        %8728 = vmatpush.xpose.msra.mxu0 0.0
        %8729 = vmatpush.xpose.msra.mxu0 0.0
        %8730 = vmatpush.xpose.msra.mxu0 0.0
        %8731 = vmatpush.xpose.msra.mxu0 0.0
        %8732 = vmatpush.xpose.msra.mxu0 0.0
        %8733 = vmatpush.xpose.msra.mxu0 0.0
        %8734 = vmatpush.xpose.msra.mxu0 0.0
        %8735 = vmatpush.xpose.msra.mxu0 0.0
        %8736 = vmatpush.xpose.msra.mxu0 0.0
        %8737 = vmatpush.xpose.msra.mxu0 0.0
        %8738 = vmatpush.xpose.msra.mxu0 0.0
        %8739 = vmatpush.xpose.msra.mxu0 0.0
        %8740 = vmatpush.xpose.msra.mxu0 %v1054
        %8741 = vmatpush.xpose.msra.mxu0 %v670
        %8742 = vmatmul.f32.gmra.mxu0 %v1619
        %v8743 = vpop.f32.mrf.mxu0
        %v8744 = vadd.f32 %v8724, %v8743
        %8745 = vdwg.mxu0
        %8746 = vmatpush.xpose.msra.mxu0 0.0
        %8747 = vmatpush.xpose.msra.mxu0 0.0
        %8748 = vmatpush.xpose.msra.mxu0 0.0
        %8749 = vmatpush.xpose.msra.mxu0 0.0
        %8750 = vmatpush.xpose.msra.mxu0 0.0
        %8751 = vmatpush.xpose.msra.mxu0 0.0
        %8752 = vmatpush.xpose.msra.mxu0 0.0
        %8753 = vmatpush.xpose.msra.mxu0 0.0
        %8754 = vmatpush.xpose.msra.mxu0 0.0
        %8755 = vmatpush.xpose.msra.mxu0 0.0
        %8756 = vmatpush.xpose.msra.mxu0 0.0
        %8757 = vmatpush.xpose.msra.mxu0 0.0
        %8758 = vmatpush.xpose.msra.mxu0 0.0
        %8759 = vmatpush.xpose.msra.mxu0 0.0
        %8760 = vmatpush.xpose.msra.mxu0 %v1055
        %8761 = vmatpush.xpose.msra.mxu0 %v671
        %8762 = vmatmul.f32.gmra.mxu0 %v1620
        %v8763 = vpop.f32.mrf.mxu0
        %v8764 = vadd.f32 %v8744, %v8763
        %8765 = vdwg.mxu0
        %8766 = vmatpush.xpose.msra.mxu0 0.0
        %8767 = vmatpush.xpose.msra.mxu0 0.0
        %8768 = vmatpush.xpose.msra.mxu0 0.0
        %8769 = vmatpush.xpose.msra.mxu0 0.0
        %8770 = vmatpush.xpose.msra.mxu0 0.0
        %8771 = vmatpush.xpose.msra.mxu0 0.0
        %8772 = vmatpush.xpose.msra.mxu0 0.0
        %8773 = vmatpush.xpose.msra.mxu0 0.0
        %8774 = vmatpush.xpose.msra.mxu0 0.0
        %8775 = vmatpush.xpose.msra.mxu0 0.0
        %8776 = vmatpush.xpose.msra.mxu0 0.0
        %8777 = vmatpush.xpose.msra.mxu0 0.0
        %8778 = vmatpush.xpose.msra.mxu0 0.0
        %8779 = vmatpush.xpose.msra.mxu0 0.0
        %8780 = vmatpush.xpose.msra.mxu0 %v1056
        %8781 = vmatpush.xpose.msra.mxu0 %v672
        %8782 = vmatmul.f32.gmra.mxu0 %v1621
        %v8783 = vpop.f32.mrf.mxu0
        %v8784 = vadd.f32 %v8764, %v8783
        %8785 = vdwg.mxu0
        %8786 = vmatpush.xpose.msra.mxu0 0.0
        %8787 = vmatpush.xpose.msra.mxu0 0.0
        %8788 = vmatpush.xpose.msra.mxu0 0.0
        %8789 = vmatpush.xpose.msra.mxu0 0.0
        %8790 = vmatpush.xpose.msra.mxu0 0.0
        %8791 = vmatpush.xpose.msra.mxu0 0.0
        %8792 = vmatpush.xpose.msra.mxu0 0.0
        %8793 = vmatpush.xpose.msra.mxu0 0.0
        %8794 = vmatpush.xpose.msra.mxu0 0.0
        %8795 = vmatpush.xpose.msra.mxu0 0.0
        %8796 = vmatpush.xpose.msra.mxu0 0.0
        %8797 = vmatpush.xpose.msra.mxu0 0.0
        %8798 = vmatpush.xpose.msra.mxu0 0.0
        %8799 = vmatpush.xpose.msra.mxu0 0.0
        %8800 = vmatpush.xpose.msra.mxu0 %v1057
        %8801 = vmatpush.xpose.msra.mxu0 %v673
        %8802 = vmatmul.f32.gmra.mxu0 %v1624
        %v8803 = vpop.f32.mrf.mxu0
        %v8804 = vadd.f32 %v8784, %v8803
        %8805 = vdwg.mxu0
        %8806 = vmatpush.xpose.msra.mxu0 0.0
        %8807 = vmatpush.xpose.msra.mxu0 0.0
        %8808 = vmatpush.xpose.msra.mxu0 0.0
        %8809 = vmatpush.xpose.msra.mxu0 0.0
        %8810 = vmatpush.xpose.msra.mxu0 0.0
        %8811 = vmatpush.xpose.msra.mxu0 0.0
        %8812 = vmatpush.xpose.msra.mxu0 0.0
        %8813 = vmatpush.xpose.msra.mxu0 0.0
        %8814 = vmatpush.xpose.msra.mxu0 0.0
        %8815 = vmatpush.xpose.msra.mxu0 0.0
        %8816 = vmatpush.xpose.msra.mxu0 0.0
        %8817 = vmatpush.xpose.msra.mxu0 0.0
        %8818 = vmatpush.xpose.msra.mxu0 0.0
        %8819 = vmatpush.xpose.msra.mxu0 0.0
        %8820 = vmatpush.xpose.msra.mxu0 %v1058
        %8821 = vmatpush.xpose.msra.mxu0 %v674
        %8822 = vmatmul.f32.gmra.mxu0 %v1625
        %v8823 = vpop.f32.mrf.mxu0
        %v8824 = vadd.f32 %v8804, %v8823
        %8825 = vdwg.mxu0
        %8826 = vmatpush.xpose.msra.mxu0 0.0
        %8827 = vmatpush.xpose.msra.mxu0 0.0
        %8828 = vmatpush.xpose.msra.mxu0 0.0
        %8829 = vmatpush.xpose.msra.mxu0 0.0
        %8830 = vmatpush.xpose.msra.mxu0 0.0
        %8831 = vmatpush.xpose.msra.mxu0 0.0
        %8832 = vmatpush.xpose.msra.mxu0 0.0
        %8833 = vmatpush.xpose.msra.mxu0 0.0
        %8834 = vmatpush.xpose.msra.mxu0 0.0
        %8835 = vmatpush.xpose.msra.mxu0 0.0
        %8836 = vmatpush.xpose.msra.mxu0 0.0
        %8837 = vmatpush.xpose.msra.mxu0 0.0
        %8838 = vmatpush.xpose.msra.mxu0 0.0
        %8839 = vmatpush.xpose.msra.mxu0 0.0
        %8840 = vmatpush.xpose.msra.mxu0 %v1059
        %8841 = vmatpush.xpose.msra.mxu0 %v675
        %8842 = vmatmul.f32.gmra.mxu0 %v1626
        %v8843 = vpop.f32.mrf.mxu0
        %v8844 = vadd.f32 %v8824, %v8843
        %8845 = vdwg.mxu0
        %8846 = vmatpush.xpose.msra.mxu0 0.0
        %8847 = vmatpush.xpose.msra.mxu0 0.0
        %8848 = vmatpush.xpose.msra.mxu0 0.0
        %8849 = vmatpush.xpose.msra.mxu0 0.0
        %8850 = vmatpush.xpose.msra.mxu0 0.0
        %8851 = vmatpush.xpose.msra.mxu0 0.0
        %8852 = vmatpush.xpose.msra.mxu0 0.0
        %8853 = vmatpush.xpose.msra.mxu0 0.0
        %8854 = vmatpush.xpose.msra.mxu0 0.0
        %8855 = vmatpush.xpose.msra.mxu0 0.0
        %8856 = vmatpush.xpose.msra.mxu0 0.0
        %8857 = vmatpush.xpose.msra.mxu0 0.0
        %8858 = vmatpush.xpose.msra.mxu0 0.0
        %8859 = vmatpush.xpose.msra.mxu0 0.0
        %8860 = vmatpush.xpose.msra.mxu0 %v1060
        %8861 = vmatpush.xpose.msra.mxu0 %v676
        %8862 = vmatmul.f32.gmra.mxu0 %v1627
        %v8863 = vpop.f32.mrf.mxu0
        %v8864 = vadd.f32 %v8844, %v8863
        %8865 = vdwg.mxu0
        %8866 = vmatpush.xpose.msra.mxu0 0.0
        %8867 = vmatpush.xpose.msra.mxu0 0.0
        %8868 = vmatpush.xpose.msra.mxu0 0.0
        %8869 = vmatpush.xpose.msra.mxu0 0.0
        %8870 = vmatpush.xpose.msra.mxu0 0.0
        %8871 = vmatpush.xpose.msra.mxu0 0.0
        %8872 = vmatpush.xpose.msra.mxu0 0.0
        %8873 = vmatpush.xpose.msra.mxu0 0.0
        %8874 = vmatpush.xpose.msra.mxu0 0.0
        %8875 = vmatpush.xpose.msra.mxu0 0.0
        %8876 = vmatpush.xpose.msra.mxu0 0.0
        %8877 = vmatpush.xpose.msra.mxu0 0.0
        %8878 = vmatpush.xpose.msra.mxu0 0.0
        %8879 = vmatpush.xpose.msra.mxu0 0.0
        %8880 = vmatpush.xpose.msra.mxu0 %v1061
        %8881 = vmatpush.xpose.msra.mxu0 %v677
        %8882 = vmatmul.f32.gmra.mxu0 %v1628
        %v8883 = vpop.f32.mrf.mxu0
        %v8884 = vadd.f32 %v8864, %v8883
        %8885 = vdwg.mxu0
        %8886 = vmatpush.xpose.msra.mxu0 0.0
        %8887 = vmatpush.xpose.msra.mxu0 0.0
        %8888 = vmatpush.xpose.msra.mxu0 0.0
        %8889 = vmatpush.xpose.msra.mxu0 0.0
        %8890 = vmatpush.xpose.msra.mxu0 0.0
        %8891 = vmatpush.xpose.msra.mxu0 0.0
        %8892 = vmatpush.xpose.msra.mxu0 0.0
        %8893 = vmatpush.xpose.msra.mxu0 0.0
        %8894 = vmatpush.xpose.msra.mxu0 0.0
        %8895 = vmatpush.xpose.msra.mxu0 0.0
        %8896 = vmatpush.xpose.msra.mxu0 0.0
        %8897 = vmatpush.xpose.msra.mxu0 0.0
        %8898 = vmatpush.xpose.msra.mxu0 0.0
        %8899 = vmatpush.xpose.msra.mxu0 0.0
        %8900 = vmatpush.xpose.msra.mxu0 %v1062
        %8901 = vmatpush.xpose.msra.mxu0 %v678
        %8902 = vmatmul.f32.gmra.mxu0 %v1629
        %v8903 = vpop.f32.mrf.mxu0
        %v8904 = vadd.f32 %v8884, %v8903
        %8905 = vdwg.mxu0
        %8906 = vmatpush.xpose.msra.mxu0 0.0
        %8907 = vmatpush.xpose.msra.mxu0 0.0
        %8908 = vmatpush.xpose.msra.mxu0 0.0
        %8909 = vmatpush.xpose.msra.mxu0 0.0
        %8910 = vmatpush.xpose.msra.mxu0 0.0
        %8911 = vmatpush.xpose.msra.mxu0 0.0
        %8912 = vmatpush.xpose.msra.mxu0 0.0
        %8913 = vmatpush.xpose.msra.mxu0 0.0
        %8914 = vmatpush.xpose.msra.mxu0 0.0
        %8915 = vmatpush.xpose.msra.mxu0 0.0
        %8916 = vmatpush.xpose.msra.mxu0 0.0
        %8917 = vmatpush.xpose.msra.mxu0 0.0
        %8918 = vmatpush.xpose.msra.mxu0 0.0
        %8919 = vmatpush.xpose.msra.mxu0 0.0
        %8920 = vmatpush.xpose.msra.mxu0 %v1063
        %8921 = vmatpush.xpose.msra.mxu0 %v679
        %8922 = vmatmul.f32.gmra.mxu0 %v1630
        %v8923 = vpop.f32.mrf.mxu0
        %v8924 = vadd.f32 %v8904, %v8923
        %8925 = vdwg.mxu0
        %8926 = vmatpush.xpose.msra.mxu0 0.0
        %8927 = vmatpush.xpose.msra.mxu0 0.0
        %8928 = vmatpush.xpose.msra.mxu0 0.0
        %8929 = vmatpush.xpose.msra.mxu0 0.0
        %8930 = vmatpush.xpose.msra.mxu0 0.0
        %8931 = vmatpush.xpose.msra.mxu0 0.0
        %8932 = vmatpush.xpose.msra.mxu0 0.0
        %8933 = vmatpush.xpose.msra.mxu0 0.0
        %8934 = vmatpush.xpose.msra.mxu0 0.0
        %8935 = vmatpush.xpose.msra.mxu0 0.0
        %8936 = vmatpush.xpose.msra.mxu0 0.0
        %8937 = vmatpush.xpose.msra.mxu0 0.0
        %8938 = vmatpush.xpose.msra.mxu0 0.0
        %8939 = vmatpush.xpose.msra.mxu0 0.0
        %8940 = vmatpush.xpose.msra.mxu0 %v1064
        %8941 = vmatpush.xpose.msra.mxu0 %v680
        %8942 = vmatmul.f32.gmra.mxu0 %v1631
        %v8943 = vpop.f32.mrf.mxu0
        %v8944 = vadd.f32 %v8924, %v8943
        %8945 = vdwg.mxu0
        %8946 = vmatpush.xpose.msra.mxu0 0.0
        %8947 = vmatpush.xpose.msra.mxu0 0.0
        %8948 = vmatpush.xpose.msra.mxu0 0.0
        %8949 = vmatpush.xpose.msra.mxu0 0.0
        %8950 = vmatpush.xpose.msra.mxu0 0.0
        %8951 = vmatpush.xpose.msra.mxu0 0.0
        %8952 = vmatpush.xpose.msra.mxu0 0.0
        %8953 = vmatpush.xpose.msra.mxu0 0.0
        %8954 = vmatpush.xpose.msra.mxu0 0.0
        %8955 = vmatpush.xpose.msra.mxu0 0.0
        %8956 = vmatpush.xpose.msra.mxu0 0.0
        %8957 = vmatpush.xpose.msra.mxu0 0.0
        %8958 = vmatpush.xpose.msra.mxu0 0.0
        %8959 = vmatpush.xpose.msra.mxu0 0.0
        %8960 = vmatpush.xpose.msra.mxu0 %v1065
        %8961 = vmatpush.xpose.msra.mxu0 %v681
        %8962 = vmatmul.f32.gmra.mxu0 %v1634
        %v8963 = vpop.f32.mrf.mxu0
        %v8964 = vadd.f32 %v8944, %v8963
        %8965 = vdwg.mxu0
        %8966 = vmatpush.xpose.msra.mxu0 0.0
        %8967 = vmatpush.xpose.msra.mxu0 0.0
        %8968 = vmatpush.xpose.msra.mxu0 0.0
        %8969 = vmatpush.xpose.msra.mxu0 0.0
        %8970 = vmatpush.xpose.msra.mxu0 0.0
        %8971 = vmatpush.xpose.msra.mxu0 0.0
        %8972 = vmatpush.xpose.msra.mxu0 0.0
        %8973 = vmatpush.xpose.msra.mxu0 0.0
        %8974 = vmatpush.xpose.msra.mxu0 0.0
        %8975 = vmatpush.xpose.msra.mxu0 0.0
        %8976 = vmatpush.xpose.msra.mxu0 0.0
        %8977 = vmatpush.xpose.msra.mxu0 0.0
        %8978 = vmatpush.xpose.msra.mxu0 0.0
        %8979 = vmatpush.xpose.msra.mxu0 0.0
        %8980 = vmatpush.xpose.msra.mxu0 %v1066
        %8981 = vmatpush.xpose.msra.mxu0 %v682
        %8982 = vmatmul.f32.gmra.mxu0 %v1635
        %v8983 = vpop.f32.mrf.mxu0
        %v8984 = vadd.f32 %v8964, %v8983
        %8985 = vdwg.mxu0
        %8986 = vmatpush.xpose.msra.mxu0 0.0
        %8987 = vmatpush.xpose.msra.mxu0 0.0
        %8988 = vmatpush.xpose.msra.mxu0 0.0
        %8989 = vmatpush.xpose.msra.mxu0 0.0
        %8990 = vmatpush.xpose.msra.mxu0 0.0
        %8991 = vmatpush.xpose.msra.mxu0 0.0
        %8992 = vmatpush.xpose.msra.mxu0 0.0
        %8993 = vmatpush.xpose.msra.mxu0 0.0
        %8994 = vmatpush.xpose.msra.mxu0 0.0
        %8995 = vmatpush.xpose.msra.mxu0 0.0
        %8996 = vmatpush.xpose.msra.mxu0 0.0
        %8997 = vmatpush.xpose.msra.mxu0 0.0
        %8998 = vmatpush.xpose.msra.mxu0 0.0
        %8999 = vmatpush.xpose.msra.mxu0 0.0
        %9000 = vmatpush.xpose.msra.mxu0 %v1067
        %9001 = vmatpush.xpose.msra.mxu0 %v683
        %9002 = vmatmul.f32.gmra.mxu0 %v1636
        %v9003 = vpop.f32.mrf.mxu0
        %v9004 = vadd.f32 %v8984, %v9003
        %9005 = vdwg.mxu0
        %9006 = vmatpush.xpose.msra.mxu0 0.0
        %9007 = vmatpush.xpose.msra.mxu0 0.0
        %9008 = vmatpush.xpose.msra.mxu0 0.0
        %9009 = vmatpush.xpose.msra.mxu0 0.0
        %9010 = vmatpush.xpose.msra.mxu0 0.0
        %9011 = vmatpush.xpose.msra.mxu0 0.0
        %9012 = vmatpush.xpose.msra.mxu0 0.0
        %9013 = vmatpush.xpose.msra.mxu0 0.0
        %9014 = vmatpush.xpose.msra.mxu0 0.0
        %9015 = vmatpush.xpose.msra.mxu0 0.0
        %9016 = vmatpush.xpose.msra.mxu0 0.0
        %9017 = vmatpush.xpose.msra.mxu0 0.0
        %9018 = vmatpush.xpose.msra.mxu0 0.0
        %9019 = vmatpush.xpose.msra.mxu0 0.0
        %9020 = vmatpush.xpose.msra.mxu0 %v1068
        %9021 = vmatpush.xpose.msra.mxu0 %v684
        %9022 = vmatmul.f32.gmra.mxu0 %v1637
        %v9023 = vpop.f32.mrf.mxu0
        %v9024 = vadd.f32 %v9004, %v9023
        %9025 = vdwg.mxu0
        %9026 = vmatpush.xpose.msra.mxu0 0.0
        %9027 = vmatpush.xpose.msra.mxu0 0.0
        %9028 = vmatpush.xpose.msra.mxu0 0.0
        %9029 = vmatpush.xpose.msra.mxu0 0.0
        %9030 = vmatpush.xpose.msra.mxu0 0.0
        %9031 = vmatpush.xpose.msra.mxu0 0.0
        %9032 = vmatpush.xpose.msra.mxu0 0.0
        %9033 = vmatpush.xpose.msra.mxu0 0.0
        %9034 = vmatpush.xpose.msra.mxu0 0.0
        %9035 = vmatpush.xpose.msra.mxu0 0.0
        %9036 = vmatpush.xpose.msra.mxu0 0.0
        %9037 = vmatpush.xpose.msra.mxu0 0.0
        %9038 = vmatpush.xpose.msra.mxu0 0.0
        %9039 = vmatpush.xpose.msra.mxu0 0.0
        %9040 = vmatpush.xpose.msra.mxu0 %v1069
        %9041 = vmatpush.xpose.msra.mxu0 %v685
        %9042 = vmatmul.f32.gmra.mxu0 %v1638
        %v9043 = vpop.f32.mrf.mxu0
        %v9044 = vadd.f32 %v9024, %v9043
        %9045 = vdwg.mxu0
        %9046 = vmatpush.xpose.msra.mxu0 0.0
        %9047 = vmatpush.xpose.msra.mxu0 0.0
        %9048 = vmatpush.xpose.msra.mxu0 0.0
        %9049 = vmatpush.xpose.msra.mxu0 0.0
        %9050 = vmatpush.xpose.msra.mxu0 0.0
        %9051 = vmatpush.xpose.msra.mxu0 0.0
        %9052 = vmatpush.xpose.msra.mxu0 0.0
        %9053 = vmatpush.xpose.msra.mxu0 0.0
        %9054 = vmatpush.xpose.msra.mxu0 0.0
        %9055 = vmatpush.xpose.msra.mxu0 0.0
        %9056 = vmatpush.xpose.msra.mxu0 0.0
        %9057 = vmatpush.xpose.msra.mxu0 0.0
        %9058 = vmatpush.xpose.msra.mxu0 0.0
        %9059 = vmatpush.xpose.msra.mxu0 0.0
        %9060 = vmatpush.xpose.msra.mxu0 %v1070
        %9061 = vmatpush.xpose.msra.mxu0 %v686
        %9062 = vmatmul.f32.gmra.mxu0 %v1639
        %v9063 = vpop.f32.mrf.mxu0
        %v9064 = vadd.f32 %v9044, %v9063
        %9065 = vdwg.mxu0
        %9066 = vmatpush.xpose.msra.mxu0 0.0
        %9067 = vmatpush.xpose.msra.mxu0 0.0
        %9068 = vmatpush.xpose.msra.mxu0 0.0
        %9069 = vmatpush.xpose.msra.mxu0 0.0
        %9070 = vmatpush.xpose.msra.mxu0 0.0
        %9071 = vmatpush.xpose.msra.mxu0 0.0
        %9072 = vmatpush.xpose.msra.mxu0 0.0
        %9073 = vmatpush.xpose.msra.mxu0 0.0
        %9074 = vmatpush.xpose.msra.mxu0 0.0
        %9075 = vmatpush.xpose.msra.mxu0 0.0
        %9076 = vmatpush.xpose.msra.mxu0 0.0
        %9077 = vmatpush.xpose.msra.mxu0 0.0
        %9078 = vmatpush.xpose.msra.mxu0 0.0
        %9079 = vmatpush.xpose.msra.mxu0 0.0
        %9080 = vmatpush.xpose.msra.mxu0 %v1071
        %9081 = vmatpush.xpose.msra.mxu0 %v687
        %9082 = vmatmul.f32.gmra.mxu0 %v1640
        %v9083 = vpop.f32.mrf.mxu0
        %v9084 = vadd.f32 %v9064, %v9083
        %9085 = vdwg.mxu0
        %9086 = vmatpush.xpose.msra.mxu0 0.0
        %9087 = vmatpush.xpose.msra.mxu0 0.0
        %9088 = vmatpush.xpose.msra.mxu0 0.0
        %9089 = vmatpush.xpose.msra.mxu0 0.0
        %9090 = vmatpush.xpose.msra.mxu0 0.0
        %9091 = vmatpush.xpose.msra.mxu0 0.0
        %9092 = vmatpush.xpose.msra.mxu0 0.0
        %9093 = vmatpush.xpose.msra.mxu0 0.0
        %9094 = vmatpush.xpose.msra.mxu0 0.0
        %9095 = vmatpush.xpose.msra.mxu0 0.0
        %9096 = vmatpush.xpose.msra.mxu0 0.0
        %9097 = vmatpush.xpose.msra.mxu0 0.0
        %9098 = vmatpush.xpose.msra.mxu0 0.0
        %9099 = vmatpush.xpose.msra.mxu0 0.0
        %9100 = vmatpush.xpose.msra.mxu0 %v1072
        %9101 = vmatpush.xpose.msra.mxu0 %v688
        %9102 = vmatmul.f32.gmra.mxu0 %v1641
        %v9103 = vpop.f32.mrf.mxu0
        %v9104 = vadd.f32 %v9084, %v9103
        %9105 = vdwg.mxu0
        %9106 = vmatpush.xpose.msra.mxu0 0.0
        %9107 = vmatpush.xpose.msra.mxu0 0.0
        %9108 = vmatpush.xpose.msra.mxu0 0.0
        %9109 = vmatpush.xpose.msra.mxu0 0.0
        %9110 = vmatpush.xpose.msra.mxu0 0.0
        %9111 = vmatpush.xpose.msra.mxu0 0.0
        %9112 = vmatpush.xpose.msra.mxu0 0.0
        %9113 = vmatpush.xpose.msra.mxu0 0.0
        %9114 = vmatpush.xpose.msra.mxu0 0.0
        %9115 = vmatpush.xpose.msra.mxu0 0.0
        %9116 = vmatpush.xpose.msra.mxu0 0.0
        %9117 = vmatpush.xpose.msra.mxu0 0.0
        %9118 = vmatpush.xpose.msra.mxu0 0.0
        %9119 = vmatpush.xpose.msra.mxu0 0.0
        %9120 = vmatpush.xpose.msra.mxu0 %v1073
        %9121 = vmatpush.xpose.msra.mxu0 %v689
        %9122 = vmatmul.f32.gmra.mxu0 %v1644
        %v9123 = vpop.f32.mrf.mxu0
        %v9124 = vadd.f32 %v9104, %v9123
        %9125 = vdwg.mxu0
        %9126 = vmatpush.xpose.msra.mxu0 0.0
        %9127 = vmatpush.xpose.msra.mxu0 0.0
        %9128 = vmatpush.xpose.msra.mxu0 0.0
        %9129 = vmatpush.xpose.msra.mxu0 0.0
        %9130 = vmatpush.xpose.msra.mxu0 0.0
        %9131 = vmatpush.xpose.msra.mxu0 0.0
        %9132 = vmatpush.xpose.msra.mxu0 0.0
        %9133 = vmatpush.xpose.msra.mxu0 0.0
        %9134 = vmatpush.xpose.msra.mxu0 0.0
        %9135 = vmatpush.xpose.msra.mxu0 0.0
        %9136 = vmatpush.xpose.msra.mxu0 0.0
        %9137 = vmatpush.xpose.msra.mxu0 0.0
        %9138 = vmatpush.xpose.msra.mxu0 0.0
        %9139 = vmatpush.xpose.msra.mxu0 0.0
        %9140 = vmatpush.xpose.msra.mxu0 %v1074
        %9141 = vmatpush.xpose.msra.mxu0 %v690
        %9142 = vmatmul.f32.gmra.mxu0 %v1645
        %v9143 = vpop.f32.mrf.mxu0
        %v9144 = vadd.f32 %v9124, %v9143
        %9145 = vdwg.mxu0
        %9146 = vmatpush.xpose.msra.mxu0 0.0
        %9147 = vmatpush.xpose.msra.mxu0 0.0
        %9148 = vmatpush.xpose.msra.mxu0 0.0
        %9149 = vmatpush.xpose.msra.mxu0 0.0
        %9150 = vmatpush.xpose.msra.mxu0 0.0
        %9151 = vmatpush.xpose.msra.mxu0 0.0
        %9152 = vmatpush.xpose.msra.mxu0 0.0
        %9153 = vmatpush.xpose.msra.mxu0 0.0
        %9154 = vmatpush.xpose.msra.mxu0 0.0
        %9155 = vmatpush.xpose.msra.mxu0 0.0
        %9156 = vmatpush.xpose.msra.mxu0 0.0
        %9157 = vmatpush.xpose.msra.mxu0 0.0
        %9158 = vmatpush.xpose.msra.mxu0 0.0
        %9159 = vmatpush.xpose.msra.mxu0 0.0
        %9160 = vmatpush.xpose.msra.mxu0 %v1075
        %9161 = vmatpush.xpose.msra.mxu0 %v691
        %9162 = vmatmul.f32.gmra.mxu0 %v1646
        %v9163 = vpop.f32.mrf.mxu0
        %v9164 = vadd.f32 %v9144, %v9163
        %9165 = vdwg.mxu0
        %9166 = vmatpush.xpose.msra.mxu0 0.0
        %9167 = vmatpush.xpose.msra.mxu0 0.0
        %9168 = vmatpush.xpose.msra.mxu0 0.0
        %9169 = vmatpush.xpose.msra.mxu0 0.0
        %9170 = vmatpush.xpose.msra.mxu0 0.0
        %9171 = vmatpush.xpose.msra.mxu0 0.0
        %9172 = vmatpush.xpose.msra.mxu0 0.0
        %9173 = vmatpush.xpose.msra.mxu0 0.0
        %9174 = vmatpush.xpose.msra.mxu0 0.0
        %9175 = vmatpush.xpose.msra.mxu0 0.0
        %9176 = vmatpush.xpose.msra.mxu0 0.0
        %9177 = vmatpush.xpose.msra.mxu0 0.0
        %9178 = vmatpush.xpose.msra.mxu0 0.0
        %9179 = vmatpush.xpose.msra.mxu0 0.0
        %9180 = vmatpush.xpose.msra.mxu0 %v1076
        %9181 = vmatpush.xpose.msra.mxu0 %v692
        %9182 = vmatmul.f32.gmra.mxu0 %v1647
        %v9183 = vpop.f32.mrf.mxu0
        %v9184 = vadd.f32 %v9164, %v9183
        %9185 = vdwg.mxu0
        %9186 = vmatpush.xpose.msra.mxu0 0.0
        %9187 = vmatpush.xpose.msra.mxu0 0.0
        %9188 = vmatpush.xpose.msra.mxu0 0.0
        %9189 = vmatpush.xpose.msra.mxu0 0.0
        %9190 = vmatpush.xpose.msra.mxu0 0.0
        %9191 = vmatpush.xpose.msra.mxu0 0.0
        %9192 = vmatpush.xpose.msra.mxu0 0.0
        %9193 = vmatpush.xpose.msra.mxu0 0.0
        %9194 = vmatpush.xpose.msra.mxu0 0.0
        %9195 = vmatpush.xpose.msra.mxu0 0.0
        %9196 = vmatpush.xpose.msra.mxu0 0.0
        %9197 = vmatpush.xpose.msra.mxu0 0.0
        %9198 = vmatpush.xpose.msra.mxu0 0.0
        %9199 = vmatpush.xpose.msra.mxu0 0.0
        %9200 = vmatpush.xpose.msra.mxu0 %v1077
        %9201 = vmatpush.xpose.msra.mxu0 %v693
        %9202 = vmatmul.f32.gmra.mxu0 %v1648
        %v9203 = vpop.f32.mrf.mxu0
        %v9204 = vadd.f32 %v9184, %v9203
        %9205 = vdwg.mxu0
        %9206 = vmatpush.xpose.msra.mxu0 0.0
        %9207 = vmatpush.xpose.msra.mxu0 0.0
        %9208 = vmatpush.xpose.msra.mxu0 0.0
        %9209 = vmatpush.xpose.msra.mxu0 0.0
        %9210 = vmatpush.xpose.msra.mxu0 0.0
        %9211 = vmatpush.xpose.msra.mxu0 0.0
        %9212 = vmatpush.xpose.msra.mxu0 0.0
        %9213 = vmatpush.xpose.msra.mxu0 0.0
        %9214 = vmatpush.xpose.msra.mxu0 0.0
        %9215 = vmatpush.xpose.msra.mxu0 0.0
        %9216 = vmatpush.xpose.msra.mxu0 0.0
        %9217 = vmatpush.xpose.msra.mxu0 0.0
        %9218 = vmatpush.xpose.msra.mxu0 0.0
        %9219 = vmatpush.xpose.msra.mxu0 0.0
        %9220 = vmatpush.xpose.msra.mxu0 %v1078
        %9221 = vmatpush.xpose.msra.mxu0 %v694
        %9222 = vmatmul.f32.gmra.mxu0 %v1649
        %v9223 = vpop.f32.mrf.mxu0
        %v9224 = vadd.f32 %v9204, %v9223
        %9225 = vdwg.mxu0
        %9226 = vmatpush.xpose.msra.mxu0 0.0
        %9227 = vmatpush.xpose.msra.mxu0 0.0
        %9228 = vmatpush.xpose.msra.mxu0 0.0
        %9229 = vmatpush.xpose.msra.mxu0 0.0
        %9230 = vmatpush.xpose.msra.mxu0 0.0
        %9231 = vmatpush.xpose.msra.mxu0 0.0
        %9232 = vmatpush.xpose.msra.mxu0 0.0
        %9233 = vmatpush.xpose.msra.mxu0 0.0
        %9234 = vmatpush.xpose.msra.mxu0 0.0
        %9235 = vmatpush.xpose.msra.mxu0 0.0
        %9236 = vmatpush.xpose.msra.mxu0 0.0
        %9237 = vmatpush.xpose.msra.mxu0 0.0
        %9238 = vmatpush.xpose.msra.mxu0 0.0
        %9239 = vmatpush.xpose.msra.mxu0 0.0
        %9240 = vmatpush.xpose.msra.mxu0 %v1079
        %9241 = vmatpush.xpose.msra.mxu0 %v695
        %9242 = vmatmul.f32.gmra.mxu0 %v1650
        %v9243 = vpop.f32.mrf.mxu0
        %v9244 = vadd.f32 %v9224, %v9243
        %9245 = vdwg.mxu0
        %9246 = vmatpush.xpose.msra.mxu0 0.0
        %9247 = vmatpush.xpose.msra.mxu0 0.0
        %9248 = vmatpush.xpose.msra.mxu0 0.0
        %9249 = vmatpush.xpose.msra.mxu0 0.0
        %9250 = vmatpush.xpose.msra.mxu0 0.0
        %9251 = vmatpush.xpose.msra.mxu0 0.0
        %9252 = vmatpush.xpose.msra.mxu0 0.0
        %9253 = vmatpush.xpose.msra.mxu0 0.0
        %9254 = vmatpush.xpose.msra.mxu0 0.0
        %9255 = vmatpush.xpose.msra.mxu0 0.0
        %9256 = vmatpush.xpose.msra.mxu0 0.0
        %9257 = vmatpush.xpose.msra.mxu0 0.0
        %9258 = vmatpush.xpose.msra.mxu0 0.0
        %9259 = vmatpush.xpose.msra.mxu0 0.0
        %9260 = vmatpush.xpose.msra.mxu0 %v1080
        %9261 = vmatpush.xpose.msra.mxu0 %v696
        %9262 = vmatmul.f32.gmra.mxu0 %v1651
        %v9263 = vpop.f32.mrf.mxu0
        %v9264 = vadd.f32 %v9244, %v9263
        %9265 = vdwg.mxu0
        %9266 = vmatpush.xpose.msra.mxu0 0.0
        %9267 = vmatpush.xpose.msra.mxu0 0.0
        %9268 = vmatpush.xpose.msra.mxu0 0.0
        %9269 = vmatpush.xpose.msra.mxu0 0.0
        %9270 = vmatpush.xpose.msra.mxu0 0.0
        %9271 = vmatpush.xpose.msra.mxu0 0.0
        %9272 = vmatpush.xpose.msra.mxu0 0.0
        %9273 = vmatpush.xpose.msra.mxu0 0.0
        %9274 = vmatpush.xpose.msra.mxu0 0.0
        %9275 = vmatpush.xpose.msra.mxu0 0.0
        %9276 = vmatpush.xpose.msra.mxu0 0.0
        %9277 = vmatpush.xpose.msra.mxu0 0.0
        %9278 = vmatpush.xpose.msra.mxu0 0.0
        %9279 = vmatpush.xpose.msra.mxu0 0.0
        %9280 = vmatpush.xpose.msra.mxu0 %v1081
        %9281 = vmatpush.xpose.msra.mxu0 %v697
        %9282 = vmatmul.f32.gmra.mxu0 %v1654
        %v9283 = vpop.f32.mrf.mxu0
        %v9284 = vadd.f32 %v9264, %v9283
        %9285 = vdwg.mxu0
        %9286 = vmatpush.xpose.msra.mxu0 0.0
        %9287 = vmatpush.xpose.msra.mxu0 0.0
        %9288 = vmatpush.xpose.msra.mxu0 0.0
        %9289 = vmatpush.xpose.msra.mxu0 0.0
        %9290 = vmatpush.xpose.msra.mxu0 0.0
        %9291 = vmatpush.xpose.msra.mxu0 0.0
        %9292 = vmatpush.xpose.msra.mxu0 0.0
        %9293 = vmatpush.xpose.msra.mxu0 0.0
        %9294 = vmatpush.xpose.msra.mxu0 0.0
        %9295 = vmatpush.xpose.msra.mxu0 0.0
        %9296 = vmatpush.xpose.msra.mxu0 0.0
        %9297 = vmatpush.xpose.msra.mxu0 0.0
        %9298 = vmatpush.xpose.msra.mxu0 0.0
        %9299 = vmatpush.xpose.msra.mxu0 0.0
        %9300 = vmatpush.xpose.msra.mxu0 %v1082
        %9301 = vmatpush.xpose.msra.mxu0 %v698
        %9302 = vmatmul.f32.gmra.mxu0 %v1655
        %v9303 = vpop.f32.mrf.mxu0
        %v9304 = vadd.f32 %v9284, %v9303
        %9305 = vdwg.mxu0
        %9306 = vmatpush.xpose.msra.mxu0 0.0
        %9307 = vmatpush.xpose.msra.mxu0 0.0
        %9308 = vmatpush.xpose.msra.mxu0 0.0
        %9309 = vmatpush.xpose.msra.mxu0 0.0
        %9310 = vmatpush.xpose.msra.mxu0 0.0
        %9311 = vmatpush.xpose.msra.mxu0 0.0
        %9312 = vmatpush.xpose.msra.mxu0 0.0
        %9313 = vmatpush.xpose.msra.mxu0 0.0
        %9314 = vmatpush.xpose.msra.mxu0 0.0
        %9315 = vmatpush.xpose.msra.mxu0 0.0
        %9316 = vmatpush.xpose.msra.mxu0 0.0
        %9317 = vmatpush.xpose.msra.mxu0 0.0
        %9318 = vmatpush.xpose.msra.mxu0 0.0
        %9319 = vmatpush.xpose.msra.mxu0 0.0
        %9320 = vmatpush.xpose.msra.mxu0 %v1083
        %9321 = vmatpush.xpose.msra.mxu0 %v699
        %9322 = vmatmul.f32.gmra.mxu0 %v1656
        %v9323 = vpop.f32.mrf.mxu0
        %v9324 = vadd.f32 %v9304, %v9323
        %9325 = vdwg.mxu0
        %9326 = vmatpush.xpose.msra.mxu0 0.0
        %9327 = vmatpush.xpose.msra.mxu0 0.0
        %9328 = vmatpush.xpose.msra.mxu0 0.0
        %9329 = vmatpush.xpose.msra.mxu0 0.0
        %9330 = vmatpush.xpose.msra.mxu0 0.0
        %9331 = vmatpush.xpose.msra.mxu0 0.0
        %9332 = vmatpush.xpose.msra.mxu0 0.0
        %9333 = vmatpush.xpose.msra.mxu0 0.0
        %9334 = vmatpush.xpose.msra.mxu0 0.0
        %9335 = vmatpush.xpose.msra.mxu0 0.0
        %9336 = vmatpush.xpose.msra.mxu0 0.0
        %9337 = vmatpush.xpose.msra.mxu0 0.0
        %9338 = vmatpush.xpose.msra.mxu0 0.0
        %9339 = vmatpush.xpose.msra.mxu0 0.0
        %9340 = vmatpush.xpose.msra.mxu0 %v1084
        %9341 = vmatpush.xpose.msra.mxu0 %v700
        %9342 = vmatmul.f32.gmra.mxu0 %v1657
        %v9343 = vpop.f32.mrf.mxu0
        %v9344 = vadd.f32 %v9324, %v9343
        %9345 = vdwg.mxu0
        %9346 = vmatpush.xpose.msra.mxu0 0.0
        %9347 = vmatpush.xpose.msra.mxu0 0.0
        %9348 = vmatpush.xpose.msra.mxu0 0.0
        %9349 = vmatpush.xpose.msra.mxu0 0.0
        %9350 = vmatpush.xpose.msra.mxu0 0.0
        %9351 = vmatpush.xpose.msra.mxu0 0.0
        %9352 = vmatpush.xpose.msra.mxu0 0.0
        %9353 = vmatpush.xpose.msra.mxu0 0.0
        %9354 = vmatpush.xpose.msra.mxu0 0.0
        %9355 = vmatpush.xpose.msra.mxu0 0.0
        %9356 = vmatpush.xpose.msra.mxu0 0.0
        %9357 = vmatpush.xpose.msra.mxu0 0.0
        %9358 = vmatpush.xpose.msra.mxu0 0.0
        %9359 = vmatpush.xpose.msra.mxu0 0.0
        %9360 = vmatpush.xpose.msra.mxu0 %v1085
        %9361 = vmatpush.xpose.msra.mxu0 %v701
        %9362 = vmatmul.f32.gmra.mxu0 %v1658
        %v9363 = vpop.f32.mrf.mxu0
        %v9364 = vadd.f32 %v9344, %v9363
        %9365 = vdwg.mxu0
        %9366 = vmatpush.xpose.msra.mxu0 0.0
        %9367 = vmatpush.xpose.msra.mxu0 0.0
        %9368 = vmatpush.xpose.msra.mxu0 0.0
        %9369 = vmatpush.xpose.msra.mxu0 0.0
        %9370 = vmatpush.xpose.msra.mxu0 0.0
        %9371 = vmatpush.xpose.msra.mxu0 0.0
        %9372 = vmatpush.xpose.msra.mxu0 0.0
        %9373 = vmatpush.xpose.msra.mxu0 0.0
        %9374 = vmatpush.xpose.msra.mxu0 0.0
        %9375 = vmatpush.xpose.msra.mxu0 0.0
        %9376 = vmatpush.xpose.msra.mxu0 0.0
        %9377 = vmatpush.xpose.msra.mxu0 0.0
        %9378 = vmatpush.xpose.msra.mxu0 0.0
        %9379 = vmatpush.xpose.msra.mxu0 0.0
        %9380 = vmatpush.xpose.msra.mxu0 %v1086
        %9381 = vmatpush.xpose.msra.mxu0 %v702
        %9382 = vmatmul.f32.gmra.mxu0 %v1659
        %v9383 = vpop.f32.mrf.mxu0
        %v9384 = vadd.f32 %v9364, %v9383
        %9385 = vdwg.mxu0
        %9386 = vmatpush.xpose.msra.mxu0 0.0
        %9387 = vmatpush.xpose.msra.mxu0 0.0
        %9388 = vmatpush.xpose.msra.mxu0 0.0
        %9389 = vmatpush.xpose.msra.mxu0 0.0
        %9390 = vmatpush.xpose.msra.mxu0 0.0
        %9391 = vmatpush.xpose.msra.mxu0 0.0
        %9392 = vmatpush.xpose.msra.mxu0 0.0
        %9393 = vmatpush.xpose.msra.mxu0 0.0
        %9394 = vmatpush.xpose.msra.mxu0 0.0
        %9395 = vmatpush.xpose.msra.mxu0 0.0
        %9396 = vmatpush.xpose.msra.mxu0 0.0
        %9397 = vmatpush.xpose.msra.mxu0 0.0
        %9398 = vmatpush.xpose.msra.mxu0 0.0
        %9399 = vmatpush.xpose.msra.mxu0 0.0
        %9400 = vmatpush.xpose.msra.mxu0 %v1087
        %9401 = vmatpush.xpose.msra.mxu0 %v703
        %9402 = vmatmul.f32.gmra.mxu0 %v1660
        %v9403 = vpop.f32.mrf.mxu0
        %v9404 = vadd.f32 %v9384, %v9403
        %9405 = vdwg.mxu0
        %9406 = vmatpush.xpose.msra.mxu0 0.0
        %9407 = vmatpush.xpose.msra.mxu0 0.0
        %9408 = vmatpush.xpose.msra.mxu0 0.0
        %9409 = vmatpush.xpose.msra.mxu0 0.0
        %9410 = vmatpush.xpose.msra.mxu0 0.0
        %9411 = vmatpush.xpose.msra.mxu0 0.0
        %9412 = vmatpush.xpose.msra.mxu0 0.0
        %9413 = vmatpush.xpose.msra.mxu0 0.0
        %9414 = vmatpush.xpose.msra.mxu0 0.0
        %9415 = vmatpush.xpose.msra.mxu0 0.0
        %9416 = vmatpush.xpose.msra.mxu0 0.0
        %9417 = vmatpush.xpose.msra.mxu0 0.0
        %9418 = vmatpush.xpose.msra.mxu0 0.0
        %9419 = vmatpush.xpose.msra.mxu0 0.0
        %9420 = vmatpush.xpose.msra.mxu0 %v1088
        %9421 = vmatpush.xpose.msra.mxu0 %v704
        %9422 = vmatmul.f32.gmra.mxu0 %v1661
        %v9423 = vpop.f32.mrf.mxu0
        %v9424 = vadd.f32 %v9404, %v9423
        %9425 = vdwg.mxu0
        %9426 = vmatpush.xpose.msra.mxu0 0.0
        %9427 = vmatpush.xpose.msra.mxu0 0.0
        %9428 = vmatpush.xpose.msra.mxu0 0.0
        %9429 = vmatpush.xpose.msra.mxu0 0.0
        %9430 = vmatpush.xpose.msra.mxu0 0.0
        %9431 = vmatpush.xpose.msra.mxu0 0.0
        %9432 = vmatpush.xpose.msra.mxu0 0.0
        %9433 = vmatpush.xpose.msra.mxu0 0.0
        %9434 = vmatpush.xpose.msra.mxu0 0.0
        %9435 = vmatpush.xpose.msra.mxu0 0.0
        %9436 = vmatpush.xpose.msra.mxu0 0.0
        %9437 = vmatpush.xpose.msra.mxu0 0.0
        %9438 = vmatpush.xpose.msra.mxu0 0.0
        %9439 = vmatpush.xpose.msra.mxu0 0.0
        %9440 = vmatpush.xpose.msra.mxu0 %v1089
        %9441 = vmatpush.xpose.msra.mxu0 %v705
        %9442 = vmatmul.f32.gmra.mxu0 %v1664
        %v9443 = vpop.f32.mrf.mxu0
        %v9444 = vadd.f32 %v9424, %v9443
        %9445 = vdwg.mxu0
        %9446 = vmatpush.xpose.msra.mxu0 0.0
        %9447 = vmatpush.xpose.msra.mxu0 0.0
        %9448 = vmatpush.xpose.msra.mxu0 0.0
        %9449 = vmatpush.xpose.msra.mxu0 0.0
        %9450 = vmatpush.xpose.msra.mxu0 0.0
        %9451 = vmatpush.xpose.msra.mxu0 0.0
        %9452 = vmatpush.xpose.msra.mxu0 0.0
        %9453 = vmatpush.xpose.msra.mxu0 0.0
        %9454 = vmatpush.xpose.msra.mxu0 0.0
        %9455 = vmatpush.xpose.msra.mxu0 0.0
        %9456 = vmatpush.xpose.msra.mxu0 0.0
        %9457 = vmatpush.xpose.msra.mxu0 0.0
        %9458 = vmatpush.xpose.msra.mxu0 0.0
        %9459 = vmatpush.xpose.msra.mxu0 0.0
        %9460 = vmatpush.xpose.msra.mxu0 %v1090
        %9461 = vmatpush.xpose.msra.mxu0 %v706
        %9462 = vmatmul.f32.gmra.mxu0 %v1665
        %v9463 = vpop.f32.mrf.mxu0
        %v9464 = vadd.f32 %v9444, %v9463
        %9465 = vdwg.mxu0
        %9466 = vmatpush.xpose.msra.mxu0 0.0
        %9467 = vmatpush.xpose.msra.mxu0 0.0
        %9468 = vmatpush.xpose.msra.mxu0 0.0
        %9469 = vmatpush.xpose.msra.mxu0 0.0
        %9470 = vmatpush.xpose.msra.mxu0 0.0
        %9471 = vmatpush.xpose.msra.mxu0 0.0
        %9472 = vmatpush.xpose.msra.mxu0 0.0
        %9473 = vmatpush.xpose.msra.mxu0 0.0
        %9474 = vmatpush.xpose.msra.mxu0 0.0
        %9475 = vmatpush.xpose.msra.mxu0 0.0
        %9476 = vmatpush.xpose.msra.mxu0 0.0
        %9477 = vmatpush.xpose.msra.mxu0 0.0
        %9478 = vmatpush.xpose.msra.mxu0 0.0
        %9479 = vmatpush.xpose.msra.mxu0 0.0
        %9480 = vmatpush.xpose.msra.mxu0 %v1091
        %9481 = vmatpush.xpose.msra.mxu0 %v707
        %9482 = vmatmul.f32.gmra.mxu0 %v1666
        %v9483 = vpop.f32.mrf.mxu0
        %v9484 = vadd.f32 %v9464, %v9483
        %9485 = vdwg.mxu0
        %9486 = vmatpush.xpose.msra.mxu0 0.0
        %9487 = vmatpush.xpose.msra.mxu0 0.0
        %9488 = vmatpush.xpose.msra.mxu0 0.0
        %9489 = vmatpush.xpose.msra.mxu0 0.0
        %9490 = vmatpush.xpose.msra.mxu0 0.0
        %9491 = vmatpush.xpose.msra.mxu0 0.0
        %9492 = vmatpush.xpose.msra.mxu0 0.0
        %9493 = vmatpush.xpose.msra.mxu0 0.0
        %9494 = vmatpush.xpose.msra.mxu0 0.0
        %9495 = vmatpush.xpose.msra.mxu0 0.0
        %9496 = vmatpush.xpose.msra.mxu0 0.0
        %9497 = vmatpush.xpose.msra.mxu0 0.0
        %9498 = vmatpush.xpose.msra.mxu0 0.0
        %9499 = vmatpush.xpose.msra.mxu0 0.0
        %9500 = vmatpush.xpose.msra.mxu0 %v1092
        %9501 = vmatpush.xpose.msra.mxu0 %v708
        %9502 = vmatmul.f32.gmra.mxu0 %v1667
        %v9503 = vpop.f32.mrf.mxu0
        %v9504 = vadd.f32 %v9484, %v9503
        %9505 = vdwg.mxu0
        %9506 = vmatpush.xpose.msra.mxu0 0.0
        %9507 = vmatpush.xpose.msra.mxu0 0.0
        %9508 = vmatpush.xpose.msra.mxu0 0.0
        %9509 = vmatpush.xpose.msra.mxu0 0.0
        %9510 = vmatpush.xpose.msra.mxu0 0.0
        %9511 = vmatpush.xpose.msra.mxu0 0.0
        %9512 = vmatpush.xpose.msra.mxu0 0.0
        %9513 = vmatpush.xpose.msra.mxu0 0.0
        %9514 = vmatpush.xpose.msra.mxu0 0.0
        %9515 = vmatpush.xpose.msra.mxu0 0.0
        %9516 = vmatpush.xpose.msra.mxu0 0.0
        %9517 = vmatpush.xpose.msra.mxu0 0.0
        %9518 = vmatpush.xpose.msra.mxu0 0.0
        %9519 = vmatpush.xpose.msra.mxu0 0.0
        %9520 = vmatpush.xpose.msra.mxu0 %v1093
        %9521 = vmatpush.xpose.msra.mxu0 %v709
        %9522 = vmatmul.f32.gmra.mxu0 %v1668
        %v9523 = vpop.f32.mrf.mxu0
        %v9524 = vadd.f32 %v9504, %v9523
        %9525 = vdwg.mxu0
        %9526 = vmatpush.xpose.msra.mxu0 0.0
        %9527 = vmatpush.xpose.msra.mxu0 0.0
        %9528 = vmatpush.xpose.msra.mxu0 0.0
        %9529 = vmatpush.xpose.msra.mxu0 0.0
        %9530 = vmatpush.xpose.msra.mxu0 0.0
        %9531 = vmatpush.xpose.msra.mxu0 0.0
        %9532 = vmatpush.xpose.msra.mxu0 0.0
        %9533 = vmatpush.xpose.msra.mxu0 0.0
        %9534 = vmatpush.xpose.msra.mxu0 0.0
        %9535 = vmatpush.xpose.msra.mxu0 0.0
        %9536 = vmatpush.xpose.msra.mxu0 0.0
        %9537 = vmatpush.xpose.msra.mxu0 0.0
        %9538 = vmatpush.xpose.msra.mxu0 0.0
        %9539 = vmatpush.xpose.msra.mxu0 0.0
        %9540 = vmatpush.xpose.msra.mxu0 %v1094
        %9541 = vmatpush.xpose.msra.mxu0 %v710
        %9542 = vmatmul.f32.gmra.mxu0 %v1669
        %v9543 = vpop.f32.mrf.mxu0
        %v9544 = vadd.f32 %v9524, %v9543
        %9545 = vdwg.mxu0
        %9546 = vmatpush.xpose.msra.mxu0 0.0
        %9547 = vmatpush.xpose.msra.mxu0 0.0
        %9548 = vmatpush.xpose.msra.mxu0 0.0
        %9549 = vmatpush.xpose.msra.mxu0 0.0
        %9550 = vmatpush.xpose.msra.mxu0 0.0
        %9551 = vmatpush.xpose.msra.mxu0 0.0
        %9552 = vmatpush.xpose.msra.mxu0 0.0
        %9553 = vmatpush.xpose.msra.mxu0 0.0
        %9554 = vmatpush.xpose.msra.mxu0 0.0
        %9555 = vmatpush.xpose.msra.mxu0 0.0
        %9556 = vmatpush.xpose.msra.mxu0 0.0
        %9557 = vmatpush.xpose.msra.mxu0 0.0
        %9558 = vmatpush.xpose.msra.mxu0 0.0
        %9559 = vmatpush.xpose.msra.mxu0 0.0
        %9560 = vmatpush.xpose.msra.mxu0 %v1095
        %9561 = vmatpush.xpose.msra.mxu0 %v711
        %9562 = vmatmul.f32.gmra.mxu0 %v1670
        %v9563 = vpop.f32.mrf.mxu0
        %v9564 = vadd.f32 %v9544, %v9563
        %9565 = vdwg.mxu0
        %9566 = vmatpush.xpose.msra.mxu0 0.0
        %9567 = vmatpush.xpose.msra.mxu0 0.0
        %9568 = vmatpush.xpose.msra.mxu0 0.0
        %9569 = vmatpush.xpose.msra.mxu0 0.0
        %9570 = vmatpush.xpose.msra.mxu0 0.0
        %9571 = vmatpush.xpose.msra.mxu0 0.0
        %9572 = vmatpush.xpose.msra.mxu0 0.0
        %9573 = vmatpush.xpose.msra.mxu0 0.0
        %9574 = vmatpush.xpose.msra.mxu0 0.0
        %9575 = vmatpush.xpose.msra.mxu0 0.0
        %9576 = vmatpush.xpose.msra.mxu0 0.0
        %9577 = vmatpush.xpose.msra.mxu0 0.0
        %9578 = vmatpush.xpose.msra.mxu0 0.0
        %9579 = vmatpush.xpose.msra.mxu0 0.0
        %9580 = vmatpush.xpose.msra.mxu0 %v1096
        %9581 = vmatpush.xpose.msra.mxu0 %v712
        %9582 = vmatmul.f32.gmra.mxu0 %v1671
        %v9583 = vpop.f32.mrf.mxu0
        %v9584 = vadd.f32 %v9564, %v9583
        %9585 = vdwg.mxu0
        %9586 = vmatpush.xpose.msra.mxu0 0.0
        %9587 = vmatpush.xpose.msra.mxu0 0.0
        %9588 = vmatpush.xpose.msra.mxu0 0.0
        %9589 = vmatpush.xpose.msra.mxu0 0.0
        %9590 = vmatpush.xpose.msra.mxu0 0.0
        %9591 = vmatpush.xpose.msra.mxu0 0.0
        %9592 = vmatpush.xpose.msra.mxu0 0.0
        %9593 = vmatpush.xpose.msra.mxu0 0.0
        %9594 = vmatpush.xpose.msra.mxu0 0.0
        %9595 = vmatpush.xpose.msra.mxu0 0.0
        %9596 = vmatpush.xpose.msra.mxu0 0.0
        %9597 = vmatpush.xpose.msra.mxu0 0.0
        %9598 = vmatpush.xpose.msra.mxu0 0.0
        %9599 = vmatpush.xpose.msra.mxu0 0.0
        %9600 = vmatpush.xpose.msra.mxu0 %v1097
        %9601 = vmatpush.xpose.msra.mxu0 %v713
        %9602 = vmatmul.f32.gmra.mxu0 %v1674
        %v9603 = vpop.f32.mrf.mxu0
        %v9604 = vadd.f32 %v9584, %v9603
        %9605 = vdwg.mxu0
        %9606 = vmatpush.xpose.msra.mxu0 0.0
        %9607 = vmatpush.xpose.msra.mxu0 0.0
        %9608 = vmatpush.xpose.msra.mxu0 0.0
        %9609 = vmatpush.xpose.msra.mxu0 0.0
        %9610 = vmatpush.xpose.msra.mxu0 0.0
        %9611 = vmatpush.xpose.msra.mxu0 0.0
        %9612 = vmatpush.xpose.msra.mxu0 0.0
        %9613 = vmatpush.xpose.msra.mxu0 0.0
        %9614 = vmatpush.xpose.msra.mxu0 0.0
        %9615 = vmatpush.xpose.msra.mxu0 0.0
        %9616 = vmatpush.xpose.msra.mxu0 0.0
        %9617 = vmatpush.xpose.msra.mxu0 0.0
        %9618 = vmatpush.xpose.msra.mxu0 0.0
        %9619 = vmatpush.xpose.msra.mxu0 0.0
        %9620 = vmatpush.xpose.msra.mxu0 %v1098
        %9621 = vmatpush.xpose.msra.mxu0 %v714
        %9622 = vmatmul.f32.gmra.mxu0 %v1675
        %v9623 = vpop.f32.mrf.mxu0
        %v9624 = vadd.f32 %v9604, %v9623
        %9625 = vdwg.mxu0
        %9626 = vmatpush.xpose.msra.mxu0 0.0
        %9627 = vmatpush.xpose.msra.mxu0 0.0
        %9628 = vmatpush.xpose.msra.mxu0 0.0
        %9629 = vmatpush.xpose.msra.mxu0 0.0
        %9630 = vmatpush.xpose.msra.mxu0 0.0
        %9631 = vmatpush.xpose.msra.mxu0 0.0
        %9632 = vmatpush.xpose.msra.mxu0 0.0
        %9633 = vmatpush.xpose.msra.mxu0 0.0
        %9634 = vmatpush.xpose.msra.mxu0 0.0
        %9635 = vmatpush.xpose.msra.mxu0 0.0
        %9636 = vmatpush.xpose.msra.mxu0 0.0
        %9637 = vmatpush.xpose.msra.mxu0 0.0
        %9638 = vmatpush.xpose.msra.mxu0 0.0
        %9639 = vmatpush.xpose.msra.mxu0 0.0
        %9640 = vmatpush.xpose.msra.mxu0 %v1099
        %9641 = vmatpush.xpose.msra.mxu0 %v715
        %9642 = vmatmul.f32.gmra.mxu0 %v1676
        %v9643 = vpop.f32.mrf.mxu0
        %v9644 = vadd.f32 %v9624, %v9643
        %9645 = vdwg.mxu0
        %9646 = vmatpush.xpose.msra.mxu0 0.0
        %9647 = vmatpush.xpose.msra.mxu0 0.0
        %9648 = vmatpush.xpose.msra.mxu0 0.0
        %9649 = vmatpush.xpose.msra.mxu0 0.0
        %9650 = vmatpush.xpose.msra.mxu0 0.0
        %9651 = vmatpush.xpose.msra.mxu0 0.0
        %9652 = vmatpush.xpose.msra.mxu0 0.0
        %9653 = vmatpush.xpose.msra.mxu0 0.0
        %9654 = vmatpush.xpose.msra.mxu0 0.0
        %9655 = vmatpush.xpose.msra.mxu0 0.0
        %9656 = vmatpush.xpose.msra.mxu0 0.0
        %9657 = vmatpush.xpose.msra.mxu0 0.0
        %9658 = vmatpush.xpose.msra.mxu0 0.0
        %9659 = vmatpush.xpose.msra.mxu0 0.0
        %9660 = vmatpush.xpose.msra.mxu0 %v1100
        %9661 = vmatpush.xpose.msra.mxu0 %v716
        %9662 = vmatmul.f32.gmra.mxu0 %v1677
        %v9663 = vpop.f32.mrf.mxu0
        %v9664 = vadd.f32 %v9644, %v9663
        %9665 = vdwg.mxu0
        %9666 = vmatpush.xpose.msra.mxu0 0.0
        %9667 = vmatpush.xpose.msra.mxu0 0.0
        %9668 = vmatpush.xpose.msra.mxu0 0.0
        %9669 = vmatpush.xpose.msra.mxu0 0.0
        %9670 = vmatpush.xpose.msra.mxu0 0.0
        %9671 = vmatpush.xpose.msra.mxu0 0.0
        %9672 = vmatpush.xpose.msra.mxu0 0.0
        %9673 = vmatpush.xpose.msra.mxu0 0.0
        %9674 = vmatpush.xpose.msra.mxu0 0.0
        %9675 = vmatpush.xpose.msra.mxu0 0.0
        %9676 = vmatpush.xpose.msra.mxu0 0.0
        %9677 = vmatpush.xpose.msra.mxu0 0.0
        %9678 = vmatpush.xpose.msra.mxu0 0.0
        %9679 = vmatpush.xpose.msra.mxu0 0.0
        %9680 = vmatpush.xpose.msra.mxu0 %v1101
        %9681 = vmatpush.xpose.msra.mxu0 %v717
        %9682 = vmatmul.f32.gmra.mxu0 %v1678
        %v9683 = vpop.f32.mrf.mxu0
        %v9684 = vadd.f32 %v9664, %v9683
        %9685 = vdwg.mxu0
        %9686 = vmatpush.xpose.msra.mxu0 0.0
        %9687 = vmatpush.xpose.msra.mxu0 0.0
        %9688 = vmatpush.xpose.msra.mxu0 0.0
        %9689 = vmatpush.xpose.msra.mxu0 0.0
        %9690 = vmatpush.xpose.msra.mxu0 0.0
        %9691 = vmatpush.xpose.msra.mxu0 0.0
        %9692 = vmatpush.xpose.msra.mxu0 0.0
        %9693 = vmatpush.xpose.msra.mxu0 0.0
        %9694 = vmatpush.xpose.msra.mxu0 0.0
        %9695 = vmatpush.xpose.msra.mxu0 0.0
        %9696 = vmatpush.xpose.msra.mxu0 0.0
        %9697 = vmatpush.xpose.msra.mxu0 0.0
        %9698 = vmatpush.xpose.msra.mxu0 0.0
        %9699 = vmatpush.xpose.msra.mxu0 0.0
        %9700 = vmatpush.xpose.msra.mxu0 %v1102
        %9701 = vmatpush.xpose.msra.mxu0 %v718
        %9702 = vmatmul.f32.gmra.mxu0 %v1679
        %v9703 = vpop.f32.mrf.mxu0
        %v9704 = vadd.f32 %v9684, %v9703
        %9705 = vdwg.mxu0
        %9706 = vmatpush.xpose.msra.mxu0 0.0
        %9707 = vmatpush.xpose.msra.mxu0 0.0
        %9708 = vmatpush.xpose.msra.mxu0 0.0
        %9709 = vmatpush.xpose.msra.mxu0 0.0
        %9710 = vmatpush.xpose.msra.mxu0 0.0
        %9711 = vmatpush.xpose.msra.mxu0 0.0
        %9712 = vmatpush.xpose.msra.mxu0 0.0
        %9713 = vmatpush.xpose.msra.mxu0 0.0
        %9714 = vmatpush.xpose.msra.mxu0 0.0
        %9715 = vmatpush.xpose.msra.mxu0 0.0
        %9716 = vmatpush.xpose.msra.mxu0 0.0
        %9717 = vmatpush.xpose.msra.mxu0 0.0
        %9718 = vmatpush.xpose.msra.mxu0 0.0
        %9719 = vmatpush.xpose.msra.mxu0 0.0
        %9720 = vmatpush.xpose.msra.mxu0 %v1103
        %9721 = vmatpush.xpose.msra.mxu0 %v719
        %9722 = vmatmul.f32.gmra.mxu0 %v1680
        %v9723 = vpop.f32.mrf.mxu0
        %v9724 = vadd.f32 %v9704, %v9723
        %9725 = vdwg.mxu0
        %9726 = vmatpush.xpose.msra.mxu0 0.0
        %9727 = vmatpush.xpose.msra.mxu0 0.0
        %9728 = vmatpush.xpose.msra.mxu0 0.0
        %9729 = vmatpush.xpose.msra.mxu0 0.0
        %9730 = vmatpush.xpose.msra.mxu0 0.0
        %9731 = vmatpush.xpose.msra.mxu0 0.0
        %9732 = vmatpush.xpose.msra.mxu0 0.0
        %9733 = vmatpush.xpose.msra.mxu0 0.0
        %9734 = vmatpush.xpose.msra.mxu0 0.0
        %9735 = vmatpush.xpose.msra.mxu0 0.0
        %9736 = vmatpush.xpose.msra.mxu0 0.0
        %9737 = vmatpush.xpose.msra.mxu0 0.0
        %9738 = vmatpush.xpose.msra.mxu0 0.0
        %9739 = vmatpush.xpose.msra.mxu0 0.0
        %9740 = vmatpush.xpose.msra.mxu0 %v1104
        %9741 = vmatpush.xpose.msra.mxu0 %v720
        %9742 = vmatmul.f32.gmra.mxu0 %v1681
        %v9743 = vpop.f32.mrf.mxu0
        %v9744 = vadd.f32 %v9724, %v9743
        %9745 = vdwg.mxu0
        %v9746 = vadd.f32 %v240, %v9744
        %vm9747 = vcmask 74752
        %9748 = vst.msk [vmem:[#allocation2] sm:$0x3] %vm9747, %v9746
        %p9749 = scmp.eq.s32.totalorder %s27, 1
        // Predicated region
        $region41: #{tpu_custom_call.1} parent=27 // pred_check
          %p9750 = pneg %p9749
        $region42: #{tpu_custom_call.1} parent=27 // pred_check_branch
          %9752 = sbr.rel (%p9750) target = $region44
        $region43: #{tpu_custom_call.1} parent=27 // pred_region
          %v9753 = vld [vmem:[#allocation2] sm:$0x3]
          %9754 = vst.msk [vmem:[%s227] sm:$0x3] %vm9747, %v9753
        $region44: #{tpu_custom_call.1} parent=27 // pred_fallthru
          _
        %s9755 = sand.u32 %s102, 1
        %s9756 = scalar_lea.sflag [#allocation5], %s9755
        %s9757 = sand.u32 %s102, 1
        %s9758 = smul.addr %s9757, 2
        %s9759 = scalar_lea.vmem [#allocation8], %s9758
        // Predicated region
        $region45: #{tpu_custom_call.1} parent=27 // pred_check
          %p9760 = pneg %p112
        $region46: #{tpu_custom_call.1} parent=27 // pred_check_branch
          %9762 = sbr.rel (%p9760) target = $region48
        $region47: #{tpu_custom_call.1} parent=27 // pred_region
          %9764 = vsyncadd %s9756, 0
          %s9765 = smul.addr %s26, 2
          %s9766 = scalar_lea.hbm %s2, %s9765
          %s9768 = sshll.u32 %s9759, 4
          %s9769 = int_to_ptr.vmem [resolvable:$true] %s9768
          %s9770 = sshll.u32 %s9766, 4
          %s9771 = int_to_ptr.hbm [resolvable:$true] %s9770
          %9773 = dma.vmem_to_hbm [thread:$0]  %s9769, 32, %s9771, %s9756
        $region48: #{tpu_custom_call.1} parent=27 // pred_fallthru
          _
      $region28: #{tpu_custom_call.1} parent=5 // pred_fallthru
        _
      %p9774 = scmp.le.s32.totalorder 2, %s17
      // Predicated region
      $region49: #{tpu_custom_call.1} parent=5 // pred_check
        %p9775 = pneg %p9774
      $region50: #{tpu_custom_call.1} parent=5 // pred_check_branch
        %9777 = sbr.rel (%p9775) target = $region52
      $region51: #{tpu_custom_call.1} parent=5 // pred_region
        %s9778 = ssub.s32 %s17, 2
        // Predicated region
        $region53: #{tpu_custom_call.1} parent=51 // pred_check
          %p9779 = pneg %p118
        $region54: #{tpu_custom_call.1} parent=51 // pred_check_branch
          %9781 = sbr.rel (%p9779) target = $region56
        $region55: #{tpu_custom_call.1} parent=51 // pred_region
          %s9782 = sand.u32 %s103, 1
          %s9783 = scalar_lea.sflag [#allocation5], %s9782
          %s9784 = sand.u32 %s103, 1
          %s9785 = smul.addr %s9784, 2
          %s9786 = scalar_lea.vmem [#allocation8], %s9785
          %9788 = dma.done %s9783, 32
        $region56: #{tpu_custom_call.1} parent=51 // pred_fallthru
          _
      $region52: #{tpu_custom_call.1} parent=5 // pred_fallthru
        _
    $region6: #{tpu_custom_call.1} parent=1 // loop_footer
      %s21 = sadd.s32 1, %s17
    $region7: #{tpu_custom_call.1} parent=1 // loop_footer_branch
      %16 = sbr.rel target = $region3
    $region8: #{tpu_custom_call.1} parent=1 // loop_exit
      _
    %9789 = vsyncpa [#allocation4], 1
    %s9790 = scalar_lea.sflag [#allocation4], 1
    %9791 = vsyncpa %s9790, 1
    %9792 = vsyncpa [#allocation7], 1
    %s9793 = scalar_lea.sflag [#allocation7], 1
    %9794 = vsyncpa %s9793, 1
    %9795 = vsyncpa [#allocation5], 1
    %s9796 = scalar_lea.sflag [#allocation5], 1
    %9797 = vsyncpa %s9796, 1

</llo_original>
